<compile_context>
chip_gen: v7x
topology: tpu7x:2x2x1
jax: 0.10.0
libtpu: 0.0.40
codegen_flags: <defaults>
</compile_context>

<pallas_src>
import functools

import jax
import jax.numpy as jnp
from jax.experimental import pallas as pl
from jax.experimental.pallas import tpu as pltpu

# ----------------------------- tiny ViT config -----------------------------
IMAGE_SIZE = 16
PATCH = 4
CHANNELS = 3
HIDDEN = 32
HEADS = 4
HEAD_DIM = HIDDEN // HEADS
INTERMEDIATE = 64
LAYERS = 2
LN_EPS = 1e-12          # HF ViT default layer_norm_eps
NUM_CLASSES = 10

NUM_PATCHES = (IMAGE_SIZE // PATCH) ** 2          # 16
SEQ = NUM_PATCHES + 1                             # 17 (cls + patches)
PATCH_DIM = CHANNELS * PATCH * PATCH              # 48

SLAB_LANES = 128        # lane width of the packed parameter slabs
OUT_LANES = 128         # fused output row: [embedding | logits | zero pad]
NEG_INF = -1e30


# ----------------------------- slab layout ----------------------------------
def _slab_layouts(num_layers, seq_pad):
    """Static row offsets of every parameter inside the two packed slabs."""
    # Weight-matrix slab (bf16-friendly: every row offset is a multiple of 16).
    w_items = [("patch_w", PATCH_DIM, HIDDEN)]
    for l in range(num_layers):
        w_items += [(f"qkv_w_{l}", HIDDEN, 3 * HIDDEN),
                    (f"o_w_{l}", HIDDEN, HIDDEN),
                    (f"fc1_w_{l}", HIDDEN, INTERMEDIATE),
                    (f"fc2_w_{l}", INTERMEDIATE, HIDDEN)]
    w_items.append(("head_w", HIDDEN, NUM_CLASSES))

    # Vector / small-tensor slab (stays f32; embed_add first so it is 8-row aligned).
    v_items = [("embed_add", seq_pad, HIDDEN)]
    for l in range(num_layers):
        v_items += [(f"ln1_g_{l}", 1, HIDDEN), (f"ln1_b_{l}", 1, HIDDEN),
                    (f"qkv_b_{l}", 1, 3 * HIDDEN), (f"o_b_{l}", 1, HIDDEN),
                    (f"ln2_g_{l}", 1, HIDDEN), (f"ln2_b_{l}", 1, HIDDEN),
                    (f"fc1_b_{l}", 1, INTERMEDIATE), (f"fc2_b_{l}", 1, HIDDEN)]
    v_items += [("lnf_g", 1, HIDDEN), ("lnf_b", 1, HIDDEN), ("head_b", 1, NUM_CLASSES)]

    def offsets(items):
        off, r = {}, 0
        for name, rows, cols in items:
            off[name] = (r, rows, cols)
            r += rows
        return off, r

    w_off, w_rows = offsets(w_items)
    v_off, v_rows = offsets(v_items)
    return w_off, w_rows, v_off, v_rows


# ------------------------------- fused kernel -------------------------------
def _ln(x, g, b):
    mean = jnp.mean(x, axis=-1, keepdims=True)
    var = jnp.mean((x - mean) ** 2, axis=-1, keepdims=True)
    return (x - mean) * jax.lax.rsqrt(var + LN_EPS) * g + b


def _vit_fwd_kernel(patches_ref, w_ref, v_ref, out_ref, *,
                    num_layers, bb, seq_len, seq_pad, w_off, v_off):
    f32 = jnp.float32
    wdt = w_ref.dtype                       # MXU operand dtype (bf16 or f32)

    def W(name):                            # static slab slices -> no runtime cost
        r, rows, cols = w_off[name]
        return w_ref[r:r + rows, 0:cols]

    def V(name):
        r, rows, cols = v_off[name]
        return v_ref[r:r + rows, 0:cols]

    # --- patch embedding; cls token / pos-embed / patch bias folded into embed_add ---
    x = jnp.dot(patches_ref[...].astype(wdt), W("patch_w"),
                preferred_element_type=f32)                       # (bb*S_PAD, HIDDEN)
    ea = V("embed_add")                                           # (S_PAD, HIDDEN)
    x = x + (ea if bb == 1 else jnp.concatenate([ea] * bb, axis=0))

    # additive mask for padded key positions (columns >= seq_len), hoisted
    key_pos = jax.lax.broadcasted_iota(jnp.int32, (1, seq_pad), 1)
    key_bias = jnp.where(key_pos < seq_len, 0.0, NEG_INF).astype(f32)

    for l in range(num_layers):
        # ----------------------------- self-attention -----------------------------
        h1 = _ln(x, V(f"ln1_g_{l}"), V(f"ln1_b_{l}"))
        qkv = jnp.dot(h1.astype(wdt), W(f"qkv_w_{l}"),
                      preferred_element_type=f32) + V(f"qkv_b_{l}")   # (bb*S_PAD, 96)
        o_w = W(f"o_w_{l}")
        attn_rows = []
        for i in range(bb):                                       # per-image attention
            r0 = i * seq_pad
            q = qkv[r0:r0 + seq_pad, 0:HIDDEN]                     # pre-scaled by 1/sqrt(Dh)
            k = qkv[r0:r0 + seq_pad, HIDDEN:2 * HIDDEN]
            v = qkv[r0:r0 + seq_pad, 2 * HIDDEN:3 * HIDDEN]
            # Per-head scores stacked along sublanes: one max/exp/sum/reciprocal
            # for all heads instead of 4 serialized softmaxes.
            scores = jnp.concatenate(
                [jax.lax.dot_general(
                    q[:, h * HEAD_DIM:(h + 1) * HEAD_DIM],
                    k[:, h * HEAD_DIM:(h + 1) * HEAD_DIM],
                    (((1,), (1,)), ((), ())), preferred_element_type=f32)
                 for h in range(HEADS)], axis=0)                   # (HEADS*S_PAD, S_PAD)
            scores = scores + key_bias
            m = jnp.max(scores, axis=-1, keepdims=True)
            p = jnp.exp(scores - m)
            recip = pl.reciprocal(jnp.sum(p, axis=-1, keepdims=True), approx=True)
            # Per-head context packed back to lanes -> single 32-deep o_w matmul.
            ctx = jnp.concatenate(
                [jnp.dot(p[h * seq_pad:(h + 1) * seq_pad, :],
                         v[:, h * HEAD_DIM:(h + 1) * HEAD_DIM],
                         preferred_element_type=f32)
                 * recip[h * seq_pad:(h + 1) * seq_pad, :]
                 for h in range(HEADS)], axis=-1)                  # (S_PAD, HIDDEN)
            attn_rows.append(jnp.dot(ctx.astype(wdt), o_w, preferred_element_type=f32))
        attn = attn_rows[0] if bb == 1 else jnp.concatenate(attn_rows, axis=0)
        x = x + attn + V(f"o_b_{l}")                               # residual 1

        # ----------------------------------- MLP -----------------------------------
        h2 = _ln(x, V(f"ln2_g_{l}"), V(f"ln2_b_{l}"))
        m1 = jnp.dot(h2.astype(wdt), W(f"fc1_w_{l}"),
                     preferred_element_type=f32) + V(f"fc1_b_{l}")
        # TODO(synk): HF ViT uses exact (erf) GELU; tanh approximation used here
        # for Mosaic-safe lowering (numerically ~1e-3 close).
        m1 = jax.nn.gelu(m1, approximate=True)
        m2 = jnp.dot(m1.astype(wdt), W(f"fc2_w_{l}"),
                     preferred_element_type=f32) + V(f"fc2_b_{l}")
        x = x + m2                                                 # residual 2

    # --- final layernorm -> gather per-image CLS rows -> classification head ---
    xf = _ln(x, V("lnf_g"), V("lnf_b"))
    cls_rows = [xf[i * seq_pad:i * seq_pad + 1, :] for i in range(bb)]
    cls = cls_rows[0] if bb == 1 else jnp.concatenate(cls_rows, axis=0)   # (bb, HIDDEN)
    logits = jnp.dot(cls.astype(wdt), W("head_w"),
                     preferred_element_type=f32) + V("head_b")            # (bb, NUM_CLASSES)

    # single lane-packed store: [embedding | logits | zero pad]
    pad = jnp.zeros((bb, OUT_LANES - HIDDEN - NUM_CLASSES), f32)
    packed = jnp.concatenate([cls, logits, pad], axis=-1)                 # (bb, 128)
    out_ref[...] = packed.reshape(1, bb, OUT_LANES).astype(out_ref.dtype)


# ------------------------------ parameter init ------------------------------
def init_params(key):
    def nrm(k, shape, std=0.02):
        return (std * jax.random.normal(k, shape)).astype(jnp.float32)

    keys = iter(jax.random.split(key, 16 + LAYERS * 16))
    params = {
        "patch_w": nrm(next(keys), (PATCH_DIM, HIDDEN)),
        "patch_b": jnp.zeros((HIDDEN,), jnp.float32),
        "cls": nrm(next(keys), (1, 1, HIDDEN)),
        "pos": nrm(next(keys), (1, NUM_PATCHES + 1, HIDDEN)),
        "lnf_g": jnp.ones((HIDDEN,), jnp.float32),
        "lnf_b": jnp.zeros((HIDDEN,), jnp.float32),
        "head_w": nrm(next(keys), (HIDDEN, NUM_CLASSES)),
        "head_b": jnp.zeros((NUM_CLASSES,), jnp.float32),
        "layers": [],
    }
    for _ in range(LAYERS):
        params["layers"].append({
            "ln1_g": jnp.ones((HIDDEN,), jnp.float32),
            "ln1_b": jnp.zeros((HIDDEN,), jnp.float32),
            "ln2_g": jnp.ones((HIDDEN,), jnp.float32),
            "ln2_b": jnp.zeros((HIDDEN,), jnp.float32),
            "q_w": nrm(next(keys), (HIDDEN, HIDDEN)),
            "q_b": jnp.zeros((HIDDEN,), jnp.float32),
            "k_w": nrm(next(keys), (HIDDEN, HIDDEN)),
            "k_b": jnp.zeros((HIDDEN,), jnp.float32),
            "v_w": nrm(next(keys), (HIDDEN, HIDDEN)),
            "v_b": jnp.zeros((HIDDEN,), jnp.float32),
            "o_w": nrm(next(keys), (HIDDEN, HIDDEN)),
            "o_b": jnp.zeros((HIDDEN,), jnp.float32),
            "fc1_w": nrm(next(keys), (HIDDEN, INTERMEDIATE)),
            "fc1_b": jnp.zeros((INTERMEDIATE,), jnp.float32),
            "fc2_w": nrm(next(keys), (INTERMEDIATE, HIDDEN)),
            "fc2_b": jnp.zeros((HIDDEN,), jnp.float32),
        })
    return params


# ------------------------------ operand packing ------------------------------
def _pack_operands(params, seq, seq_pad, param_dtype):
    num_layers = len(params["layers"])
    w_off, w_rows, v_off, v_rows = _slab_layouts(num_layers, seq_pad)
    scale = float(HEAD_DIM) ** -0.5

    w_slab = jnp.zeros((w_rows, SLAB_LANES), jnp.float32)
    v_slab = jnp.zeros((v_rows, SLAB_LANES), jnp.float32)

    def put_w(name, mat):
        nonlocal w_slab
        r, rows, cols = w_off[name]
        w_slab = w_slab.at[r:r + rows, :cols].set(mat)

    def put_v(name, val):
        nonlocal v_slab
        r, rows, cols = v_off[name]
        v_slab = v_slab.at[r:r + rows, :cols].set(val.reshape(rows, cols))

    # fold cls token, position embeddings and patch bias into one additive block
    pos = params["pos"][0]
    embed_add = jnp.zeros((seq_pad, HIDDEN), jnp.float32)
    embed_add = embed_add.at[0].set(params["cls"][0, 0] + pos[0])
    embed_add = embed_add.at[1:seq].set(pos[1:] + params["patch_b"][None, :])
    put_v("embed_add", embed_add)

    put_w("patch_w", params["patch_w"])
    for l, layer in enumerate(params["layers"]):
        qkv_w = jnp.concatenate([layer["q_w"] * scale, layer["k_w"], layer["v_w"]], axis=1)
        qkv_b = jnp.concatenate([layer["q_b"] * scale, layer["k_b"], layer["v_b"]])
        put_w(f"qkv_w_{l}", qkv_w)
        put_w(f"o_w_{l}", layer["o_w"])
        put_w(f"fc1_w_{l}", layer["fc1_w"])
        put_w(f"fc2_w_{l}", layer["fc2_w"])
        put_v(f"ln1_g_{l}", layer["ln1_g"]); put_v(f"ln1_b_{l}", layer["ln1_b"])
        put_v(f"qkv_b_{l}", qkv_b)
        put_v(f"o_b_{l}", layer["o_b"])
        put_v(f"ln2_g_{l}", layer["ln2_g"]); put_v(f"ln2_b_{l}", layer["ln2_b"])
        put_v(f"fc1_b_{l}", layer["fc1_b"]); put_v(f"fc2_b_{l}", layer["fc2_b"])
    put_w("head_w", params["head_w"])
    put_v("lnf_g", params["lnf_g"]); put_v("lnf_b", params["lnf_b"])
    put_v("head_b", params["head_b"])

    return w_slab.astype(param_dtype), v_slab, w_off, v_off


# ------------------------------- forward pass -------------------------------
def vit_embedding_extractor(images, params, *, batch_block=None,
                            param_dtype=jnp.bfloat16):
    """images: (B, C, H, W) f32 -> (cls embeddings (B, HIDDEN), logits (B, NUM_CLASSES))."""
    b, c, h, w = images.shape
    hp, wp = h // PATCH, w // PATCH
    n = hp * wp
    seq = n + 1
    seq_pad = ((seq + 7) // 8) * 8
    patch_dim = c * PATCH * PATCH

    if batch_block is None:
        # Amortize per-step overhead / MXU weight pushes, but keep >= 2 grid steps
        # so v7x's two TensorCores both receive work (harmless on v5e/v6e).
        batch_block = max(1, min(8, pl.cdiv(b, 2)))
    bb = batch_block
    b_pad = pl.cdiv(b, bb) * bb
    grid = b_pad // bb

    # --- patch extraction (Conv2d k=stride=PATCH as unfold); row 0 (cls) and
    #     padded rows are zero so the in-kernel matmul leaves them untouched ---
    patches = images.reshape(b, c, hp, PATCH, wp, PATCH)
    patches = patches.transpose(0, 2, 4, 1, 3, 5).reshape(b, n, patch_dim)
    patches = jnp.pad(patches, ((0, b_pad - b), (1, seq_pad - seq), (0, 0)))
    patches = patches.reshape(b_pad * seq_pad, patch_dim)            # (B_pad*S_PAD, PD)

    w_slab, v_slab, w_off, v_off = _pack_operands(params, seq, seq_pad, param_dtype)

    kernel = functools.partial(
        _vit_fwd_kernel, num_layers=len(params["layers"]), bb=bb,
        seq_len=seq, seq_pad=seq_pad, w_off=w_off, v_off=v_off)

    packed = pl.pallas_call(
        kernel,
        out_shape=jax.ShapeDtypeStruct((grid, bb, OUT_LANES), jnp.float32),
        grid_spec=pltpu.PrefetchScalarGridSpec(
            num_scalar_prefetch=0,
            grid=(grid,),
            in_specs=[
                pl.BlockSpec((bb * seq_pad, patch_dim), lambda i: (i, 0)),
                pl.BlockSpec(w_slab.shape, lambda i: (0, 0)),
                pl.BlockSpec(v_slab.shape, lambda i: (0, 0)),
            ],
            out_specs=pl.BlockSpec((1, bb, OUT_LANES), lambda i: (i, 0, 0))),
        compiler_params=pltpu.CompilerParams(
            dimension_semantics=("parallel",)),     # shards steps across v7x's 2 TCs
    )(patches, w_slab, v_slab)

    packed = packed.reshape(b_pad, OUT_LANES)
    return packed[:b, :HIDDEN], packed[:b, HIDDEN:HIDDEN + NUM_CLASSES]


# ----------------------------------- main -----------------------------------
if __name__ == "__main__":
    key = jax.random.PRNGKey(0)
    k_img, k_param = jax.random.split(key)
    B = 4
    images = jax.random.normal(k_img, (B, CHANNELS, IMAGE_SIZE, IMAGE_SIZE), jnp.float32)
    params = init_params(k_param)

    fwd = jax.jit(vit_embedding_extractor)      # auto batch_block: 2 images/step, grid=2
    embeddings, logits = fwd(images, params)
    jax.block_until_ready((embeddings, logits))

    assert embeddings.shape == (B, HIDDEN)
    assert logits.shape == (B, NUM_CLASSES)
    assert bool(jnp.all(jnp.isfinite(embeddings))) and bool(jnp.all(jnp.isfinite(logits)))
    print("KERNEL_OK")
</pallas_src>

<mosaic_0001>
module attributes {stable_mosaic.version = 11 : i64} {
  func.func @_vit_fwd_kernel(%arg0: i32, %arg1: memref<48x48xf32, #tpu.memory_space<vmem>>, %arg2: memref<400x128xbf16, #tpu.memory_space<vmem>>, %arg3: memref<43x128xf32, #tpu.memory_space<vmem>>, %arg4: memref<1x2x128xf32, #tpu.memory_space<vmem>>) attributes {dimension_semantics = [#tpu.dimension_semantics<parallel>], iteration_bounds = array<i64: 2>, scalar_prefetch = 0 : i64, scratch_operands = 0 : i64, tpu.core_type = #tpu.core_type<tc>, window_params = [{transform_indices = @transform_0, window_bounds = array<i64: 48, 48>}, {pipeline_mode = #tpu.pipeline_mode<synchronous>, transform_indices = @transform_1, window_bounds = array<i64: 400, 128>}, {pipeline_mode = #tpu.pipeline_mode<synchronous>, transform_indices = @transform_2, window_bounds = array<i64: 43, 128>}, {transform_indices = @transform_3, window_bounds = array<i64: 1, 2, 128>}]} {
    %c0 = arith.constant 0 : index
    %c0_0 = arith.constant 0 : index
    %0 = vector.load %arg1[%c0, %c0_0] : memref<48x48xf32, #tpu.memory_space<vmem>>, vector<48x48xf32>
    %1 = arith.truncf %0 : vector<48x48xf32> to vector<48x48xbf16>
    %c0_1 = arith.constant 0 : index
    %c0_2 = arith.constant 0 : index
    %2 = vector.load %arg2[%c0_1, %c0_2] : memref<400x128xbf16, #tpu.memory_space<vmem>>, vector<48x32xbf16>
    %cst = arith.constant dense<0.000000e+00> : vector<48x32xf32>
    %3 = tpu.matmul %1, %2, %cst {dimension_numbers = #tpu.dot_dimension_numbers<[1], [0], [0], [1], [0, 0, 1, 1], [], []>} : vector<48x48xbf16>, vector<48x32xbf16>, vector<48x32xf32> -> vector<48x32xf32>
    %c0_3 = arith.constant 0 : index
    %c0_4 = arith.constant 0 : index
    %4 = vector.load %arg3[%c0_3, %c0_4] : memref<43x128xf32, #tpu.memory_space<vmem>>, vector<24x32xf32>
    %5 = tpu.concatenate %4, %4 in 0 : vector<24x32xf32>, vector<24x32xf32> -> vector<48x32xf32>
    %6 = arith.addf %3, %5 : vector<48x32xf32>
    %7 = tpu.iota {dimensions = array<i32: 1>} : vector<1x24xi32>
    %c17_i32 = arith.constant 17 : i32
    %8 = vector.broadcast %c17_i32 : i32 to vector<1x24xi32>
    %9 = arith.cmpi slt, %7, %8 : vector<1x24xi32>
    %cst_5 = arith.constant 0.000000e+00 : f32
    %cst_6 = arith.constant -1.000000e+30 : f32
    %10 = vector.broadcast %cst_5 : f32 to vector<1x24xf32>
    %11 = vector.broadcast %cst_6 : f32 to vector<1x24xf32>
    %12 = arith.select %9, %10, %11 : vector<1x24xi1>, vector<1x24xf32>
    %c24 = arith.constant 24 : index
    %c0_7 = arith.constant 0 : index
    %13 = vector.load %arg3[%c24, %c0_7] : memref<43x128xf32, #tpu.memory_space<vmem>>, vector<1x32xf32>
    %c25 = arith.constant 25 : index
    %c0_8 = arith.constant 0 : index
    %14 = vector.load %arg3[%c25, %c0_8] : memref<43x128xf32, #tpu.memory_space<vmem>>, vector<1x32xf32>
    %cst_9 = arith.constant dense<0.000000e+00> : vector<48xf32>
    %15 = vector.multi_reduction <add>, %6, %cst_9 [1] : vector<48x32xf32> to vector<48xf32>
    %16 = vector.shape_cast %15 : vector<48xf32> to vector<48x1xf32>
    %cst_10 = arith.constant 3.200000e+01 : f32
    %17 = vector.broadcast %cst_10 : f32 to vector<48x1xf32>
    %18 = arith.divf %16, %17 : vector<48x1xf32>
    %19 = vector.broadcast %18 : vector<48x1xf32> to vector<48x32xf32>
    %20 = arith.subf %6, %19 : vector<48x32xf32>
    %21 = arith.mulf %20, %20 : vector<48x32xf32>
    %cst_11 = arith.constant dense<0.000000e+00> : vector<48xf32>
    %22 = vector.multi_reduction <add>, %21, %cst_11 [1] : vector<48x32xf32> to vector<48xf32>
    %23 = vector.shape_cast %22 : vector<48xf32> to vector<48x1xf32>
    %cst_12 = arith.constant 3.200000e+01 : f32
    %24 = vector.broadcast %cst_12 : f32 to vector<48x1xf32>
    %25 = arith.divf %23, %24 : vector<48x1xf32>
    %26 = vector.broadcast %18 : vector<48x1xf32> to vector<48x32xf32>
    %27 = arith.subf %6, %26 : vector<48x32xf32>
    %cst_13 = arith.constant 9.99999996E-13 : f32
    %28 = vector.broadcast %cst_13 : f32 to vector<48x1xf32>
    %29 = arith.addf %25, %28 : vector<48x1xf32>
    %30 = math.rsqrt %29 : vector<48x1xf32>
    %31 = vector.broadcast %30 : vector<48x1xf32> to vector<48x32xf32>
    %32 = arith.mulf %27, %31 : vector<48x32xf32>
    %33 = vector.broadcast %13 : vector<1x32xf32> to vector<48x32xf32>
    %34 = arith.mulf %32, %33 : vector<48x32xf32>
    %35 = vector.broadcast %14 : vector<1x32xf32> to vector<48x32xf32>
    %36 = arith.addf %34, %35 : vector<48x32xf32>
    %37 = arith.truncf %36 : vector<48x32xf32> to vector<48x32xbf16>
    %c48 = arith.constant 48 : index
    %c0_14 = arith.constant 0 : index
    %38 = vector.load %arg2[%c48, %c0_14] : memref<400x128xbf16, #tpu.memory_space<vmem>>, vector<32x96xbf16>
    %cst_15 = arith.constant dense<0.000000e+00> : vector<48x96xf32>
    %39 = tpu.matmul %37, %38, %cst_15 {dimension_numbers = #tpu.dot_dimension_numbers<[1], [0], [0], [1], [0, 0, 1, 1], [], []>} : vector<48x32xbf16>, vector<32x96xbf16>, vector<48x96xf32> -> vector<48x96xf32>
    %c26 = arith.constant 26 : index
    %c0_16 = arith.constant 0 : index
    %40 = vector.load %arg3[%c26, %c0_16] : memref<43x128xf32, #tpu.memory_space<vmem>>, vector<1x96xf32>
    %41 = vector.broadcast %40 : vector<1x96xf32> to vector<48x96xf32>
    %42 = arith.addf %39, %41 : vector<48x96xf32>
    %c80 = arith.constant 80 : index
    %c0_17 = arith.constant 0 : index
    %43 = vector.load %arg2[%c80, %c0_17] : memref<400x128xbf16, #tpu.memory_space<vmem>>, vector<32x32xbf16>
    %44 = vector.extract_strided_slice %42 {offsets = [0, 0], sizes = [24, 32], strides = [1, 1]} : vector<48x96xf32> to vector<24x32xf32>
    %45 = vector.extract_strided_slice %42 {offsets = [0, 32], sizes = [24, 32], strides = [1, 1]} : vector<48x96xf32> to vector<24x32xf32>
    %46 = vector.extract_strided_slice %42 {offsets = [0, 64], sizes = [24, 32], strides = [1, 1]} : vector<48x96xf32> to vector<24x32xf32>
    %47 = vector.extract_strided_slice %44 {offsets = [0, 0], sizes = [24, 8], strides = [1, 1]} : vector<24x32xf32> to vector<24x8xf32>
    %48 = vector.extract_strided_slice %45 {offsets = [0, 0], sizes = [24, 8], strides = [1, 1]} : vector<24x32xf32> to vector<24x8xf32>
    %cst_18 = arith.constant dense<0.000000e+00> : vector<24x24xf32>
    %49 = tpu.matmul %47, %48, %cst_18 {dimension_numbers = #tpu.dot_dimension_numbers<[1], [1], [0], [0], [0, 0, 1, 0], [], []>} : vector<24x8xf32>, vector<24x8xf32>, vector<24x24xf32> -> vector<24x24xf32>
    %50 = vector.extract_strided_slice %44 {offsets = [0, 8], sizes = [24, 8], strides = [1, 1]} : vector<24x32xf32> to vector<24x8xf32>
    %51 = vector.extract_strided_slice %45 {offsets = [0, 8], sizes = [24, 8], strides = [1, 1]} : vector<24x32xf32> to vector<24x8xf32>
    %cst_19 = arith.constant dense<0.000000e+00> : vector<24x24xf32>
    %52 = tpu.matmul %50, %51, %cst_19 {dimension_numbers = #tpu.dot_dimension_numbers<[1], [1], [0], [0], [0, 0, 1, 0], [], []>} : vector<24x8xf32>, vector<24x8xf32>, vector<24x24xf32> -> vector<24x24xf32>
    %53 = vector.extract_strided_slice %44 {offsets = [0, 16], sizes = [24, 8], strides = [1, 1]} : vector<24x32xf32> to vector<24x8xf32>
    %54 = vector.extract_strided_slice %45 {offsets = [0, 16], sizes = [24, 8], strides = [1, 1]} : vector<24x32xf32> to vector<24x8xf32>
    %cst_20 = arith.constant dense<0.000000e+00> : vector<24x24xf32>
    %55 = tpu.matmul %53, %54, %cst_20 {dimension_numbers = #tpu.dot_dimension_numbers<[1], [1], [0], [0], [0, 0, 1, 0], [], []>} : vector<24x8xf32>, vector<24x8xf32>, vector<24x24xf32> -> vector<24x24xf32>
    %56 = vector.extract_strided_slice %44 {offsets = [0, 24], sizes = [24, 8], strides = [1, 1]} : vector<24x32xf32> to vector<24x8xf32>
    %57 = vector.extract_strided_slice %45 {offsets = [0, 24], sizes = [24, 8], strides = [1, 1]} : vector<24x32xf32> to vector<24x8xf32>
    %cst_21 = arith.constant dense<0.000000e+00> : vector<24x24xf32>
    %58 = tpu.matmul %56, %57, %cst_21 {dimension_numbers = #tpu.dot_dimension_numbers<[1], [1], [0], [0], [0, 0, 1, 0], [], []>} : vector<24x8xf32>, vector<24x8xf32>, vector<24x24xf32> -> vector<24x24xf32>
    %59 = tpu.concatenate %49, %52, %55, %58 in 0 : vector<24x24xf32>, vector<24x24xf32>, vector<24x24xf32>, vector<24x24xf32> -> vector<96x24xf32>
    %60 = vector.broadcast %12 : vector<1x24xf32> to vector<96x24xf32>
    %61 = arith.addf %59, %60 : vector<96x24xf32>
    %cst_22 = arith.constant dense<0xFF800000> : vector<96xf32>
    %62 = vector.multi_reduction <maximumf>, %61, %cst_22 [1] : vector<96x24xf32> to vector<96xf32>
    %63 = vector.shape_cast %62 : vector<96xf32> to vector<96x1xf32>
    %64 = vector.broadcast %63 : vector<96x1xf32> to vector<96x24xf32>
    %65 = arith.subf %61, %64 : vector<96x24xf32>
    %66 = math.exp %65 : vector<96x24xf32>
    %cst_23 = arith.constant dense<0.000000e+00> : vector<96xf32>
    %67 = vector.multi_reduction <add>, %66, %cst_23 [1] : vector<96x24xf32> to vector<96xf32>
    %68 = vector.shape_cast %67 : vector<96xf32> to vector<96x1xf32>
    %69 = tpu.reciprocal %68 {approx = true} : vector<96x1xf32> -> vector<96x1xf32>
    %70 = vector.extract_strided_slice %66 {offsets = [0, 0], sizes = [24, 24], strides = [1, 1]} : vector<96x24xf32> to vector<24x24xf32>
    %71 = vector.extract_strided_slice %46 {offsets = [0, 0], sizes = [24, 8], strides = [1, 1]} : vector<24x32xf32> to vector<24x8xf32>
    %cst_24 = arith.constant dense<0.000000e+00> : vector<24x8xf32>
    %72 = tpu.matmul %70, %71, %cst_24 {dimension_numbers = #tpu.dot_dimension_numbers<[1], [0], [0], [1], [0, 0, 1, 1], [], []>} : vector<24x24xf32>, vector<24x8xf32>, vector<24x8xf32> -> vector<24x8xf32>
    %73 = vector.extract_strided_slice %69 {offsets = [0, 0], sizes = [24, 1], strides = [1, 1]} : vector<96x1xf32> to vector<24x1xf32>
    %74 = vector.broadcast %73 : vector<24x1xf32> to vector<24x8xf32>
    %75 = arith.mulf %72, %74 : vector<24x8xf32>
    %76 = vector.extract_strided_slice %66 {offsets = [24, 0], sizes = [24, 24], strides = [1, 1]} : vector<96x24xf32> to vector<24x24xf32>
    %77 = vector.extract_strided_slice %46 {offsets = [0, 8], sizes = [24, 8], strides = [1, 1]} : vector<24x32xf32> to vector<24x8xf32>
    %cst_25 = arith.constant dense<0.000000e+00> : vector<24x8xf32>
    %78 = tpu.matmul %76, %77, %cst_25 {dimension_numbers = #tpu.dot_dimension_numbers<[1], [0], [0], [1], [0, 0, 1, 1], [], []>} : vector<24x24xf32>, vector<24x8xf32>, vector<24x8xf32> -> vector<24x8xf32>
    %79 = vector.extract_strided_slice %69 {offsets = [24, 0], sizes = [24, 1], strides = [1, 1]} : vector<96x1xf32> to vector<24x1xf32>
    %80 = vector.broadcast %79 : vector<24x1xf32> to vector<24x8xf32>
    %81 = arith.mulf %78, %80 : vector<24x8xf32>
    %82 = vector.extract_strided_slice %66 {offsets = [48, 0], sizes = [24, 24], strides = [1, 1]} : vector<96x24xf32> to vector<24x24xf32>
    %83 = vector.extract_strided_slice %46 {offsets = [0, 16], sizes = [24, 8], strides = [1, 1]} : vector<24x32xf32> to vector<24x8xf32>
    %cst_26 = arith.constant dense<0.000000e+00> : vector<24x8xf32>
    %84 = tpu.matmul %82, %83, %cst_26 {dimension_numbers = #tpu.dot_dimension_numbers<[1], [0], [0], [1], [0, 0, 1, 1], [], []>} : vector<24x24xf32>, vector<24x8xf32>, vector<24x8xf32> -> vector<24x8xf32>
    %85 = vector.extract_strided_slice %69 {offsets = [48, 0], sizes = [24, 1], strides = [1, 1]} : vector<96x1xf32> to vector<24x1xf32>
    %86 = vector.broadcast %85 : vector<24x1xf32> to vector<24x8xf32>
    %87 = arith.mulf %84, %86 : vector<24x8xf32>
    %88 = vector.extract_strided_slice %66 {offsets = [72, 0], sizes = [24, 24], strides = [1, 1]} : vector<96x24xf32> to vector<24x24xf32>
    %89 = vector.extract_strided_slice %46 {offsets = [0, 24], sizes = [24, 8], strides = [1, 1]} : vector<24x32xf32> to vector<24x8xf32>
    %cst_27 = arith.constant dense<0.000000e+00> : vector<24x8xf32>
    %90 = tpu.matmul %88, %89, %cst_27 {dimension_numbers = #tpu.dot_dimension_numbers<[1], [0], [0], [1], [0, 0, 1, 1], [], []>} : vector<24x24xf32>, vector<24x8xf32>, vector<24x8xf32> -> vector<24x8xf32>
    %91 = vector.extract_strided_slice %69 {offsets = [72, 0], sizes = [24, 1], strides = [1, 1]} : vector<96x1xf32> to vector<24x1xf32>
    %92 = vector.broadcast %91 : vector<24x1xf32> to vector<24x8xf32>
    %93 = arith.mulf %90, %92 : vector<24x8xf32>
    %94 = tpu.concatenate %75, %81, %87, %93 in 1 : vector<24x8xf32>, vector<24x8xf32>, vector<24x8xf32>, vector<24x8xf32> -> vector<24x32xf32>
    %95 = arith.truncf %94 : vector<24x32xf32> to vector<24x32xbf16>
    %cst_28 = arith.constant dense<0.000000e+00> : vector<24x32xf32>
    %96 = tpu.matmul %95, %43, %cst_28 {dimension_numbers = #tpu.dot_dimension_numbers<[1], [0], [0], [1], [0, 0, 1, 1], [], []>} : vector<24x32xbf16>, vector<32x32xbf16>, vector<24x32xf32> -> vector<24x32xf32>
    %97 = vector.extract_strided_slice %42 {offsets = [24, 0], sizes = [24, 32], strides = [1, 1]} : vector<48x96xf32> to vector<24x32xf32>
    %98 = vector.extract_strided_slice %42 {offsets = [24, 32], sizes = [24, 32], strides = [1, 1]} : vector<48x96xf32> to vector<24x32xf32>
    %99 = vector.extract_strided_slice %42 {offsets = [24, 64], sizes = [24, 32], strides = [1, 1]} : vector<48x96xf32> to vector<24x32xf32>
    %100 = vector.extract_strided_slice %97 {offsets = [0, 0], sizes = [24, 8], strides = [1, 1]} : vector<24x32xf32> to vector<24x8xf32>
    %101 = vector.extract_strided_slice %98 {offsets = [0, 0], sizes = [24, 8], strides = [1, 1]} : vector<24x32xf32> to vector<24x8xf32>
    %cst_29 = arith.constant dense<0.000000e+00> : vector<24x24xf32>
    %102 = tpu.matmul %100, %101, %cst_29 {dimension_numbers = #tpu.dot_dimension_numbers<[1], [1], [0], [0], [0, 0, 1, 0], [], []>} : vector<24x8xf32>, vector<24x8xf32>, vector<24x24xf32> -> vector<24x24xf32>
    %103 = vector.extract_strided_slice %97 {offsets = [0, 8], sizes = [24, 8], strides = [1, 1]} : vector<24x32xf32> to vector<24x8xf32>
    %104 = vector.extract_strided_slice %98 {offsets = [0, 8], sizes = [24, 8], strides = [1, 1]} : vector<24x32xf32> to vector<24x8xf32>
    %cst_30 = arith.constant dense<0.000000e+00> : vector<24x24xf32>
    %105 = tpu.matmul %103, %104, %cst_30 {dimension_numbers = #tpu.dot_dimension_numbers<[1], [1], [0], [0], [0, 0, 1, 0], [], []>} : vector<24x8xf32>, vector<24x8xf32>, vector<24x24xf32> -> vector<24x24xf32>
    %106 = vector.extract_strided_slice %97 {offsets = [0, 16], sizes = [24, 8], strides = [1, 1]} : vector<24x32xf32> to vector<24x8xf32>
    %107 = vector.extract_strided_slice %98 {offsets = [0, 16], sizes = [24, 8], strides = [1, 1]} : vector<24x32xf32> to vector<24x8xf32>
    %cst_31 = arith.constant dense<0.000000e+00> : vector<24x24xf32>
    %108 = tpu.matmul %106, %107, %cst_31 {dimension_numbers = #tpu.dot_dimension_numbers<[1], [1], [0], [0], [0, 0, 1, 0], [], []>} : vector<24x8xf32>, vector<24x8xf32>, vector<24x24xf32> -> vector<24x24xf32>
    %109 = vector.extract_strided_slice %97 {offsets = [0, 24], sizes = [24, 8], strides = [1, 1]} : vector<24x32xf32> to vector<24x8xf32>
    %110 = vector.extract_strided_slice %98 {offsets = [0, 24], sizes = [24, 8], strides = [1, 1]} : vector<24x32xf32> to vector<24x8xf32>
    %cst_32 = arith.constant dense<0.000000e+00> : vector<24x24xf32>
    %111 = tpu.matmul %109, %110, %cst_32 {dimension_numbers = #tpu.dot_dimension_numbers<[1], [1], [0], [0], [0, 0, 1, 0], [], []>} : vector<24x8xf32>, vector<24x8xf32>, vector<24x24xf32> -> vector<24x24xf32>
    %112 = tpu.concatenate %102, %105, %108, %111 in 0 : vector<24x24xf32>, vector<24x24xf32>, vector<24x24xf32>, vector<24x24xf32> -> vector<96x24xf32>
    %113 = vector.broadcast %12 : vector<1x24xf32> to vector<96x24xf32>
    %114 = arith.addf %112, %113 : vector<96x24xf32>
    %cst_33 = arith.constant dense<0xFF800000> : vector<96xf32>
    %115 = vector.multi_reduction <maximumf>, %114, %cst_33 [1] : vector<96x24xf32> to vector<96xf32>
    %116 = vector.shape_cast %115 : vector<96xf32> to vector<96x1xf32>
    %117 = vector.broadcast %116 : vector<96x1xf32> to vector<96x24xf32>
    %118 = arith.subf %114, %117 : vector<96x24xf32>
    %119 = math.exp %118 : vector<96x24xf32>
    %cst_34 = arith.constant dense<0.000000e+00> : vector<96xf32>
    %120 = vector.multi_reduction <add>, %119, %cst_34 [1] : vector<96x24xf32> to vector<96xf32>
    %121 = vector.shape_cast %120 : vector<96xf32> to vector<96x1xf32>
    %122 = tpu.reciprocal %121 {approx = true} : vector<96x1xf32> -> vector<96x1xf32>
    %123 = vector.extract_strided_slice %119 {offsets = [0, 0], sizes = [24, 24], strides = [1, 1]} : vector<96x24xf32> to vector<24x24xf32>
    %124 = vector.extract_strided_slice %99 {offsets = [0, 0], sizes = [24, 8], strides = [1, 1]} : vector<24x32xf32> to vector<24x8xf32>
    %cst_35 = arith.constant dense<0.000000e+00> : vector<24x8xf32>
    %125 = tpu.matmul %123, %124, %cst_35 {dimension_numbers = #tpu.dot_dimension_numbers<[1], [0], [0], [1], [0, 0, 1, 1], [], []>} : vector<24x24xf32>, vector<24x8xf32>, vector<24x8xf32> -> vector<24x8xf32>
    %126 = vector.extract_strided_slice %122 {offsets = [0, 0], sizes = [24, 1], strides = [1, 1]} : vector<96x1xf32> to vector<24x1xf32>
    %127 = vector.broadcast %126 : vector<24x1xf32> to vector<24x8xf32>
    %128 = arith.mulf %125, %127 : vector<24x8xf32>
    %129 = vector.extract_strided_slice %119 {offsets = [24, 0], sizes = [24, 24], strides = [1, 1]} : vector<96x24xf32> to vector<24x24xf32>
    %130 = vector.extract_strided_slice %99 {offsets = [0, 8], sizes = [24, 8], strides = [1, 1]} : vector<24x32xf32> to vector<24x8xf32>
    %cst_36 = arith.constant dense<0.000000e+00> : vector<24x8xf32>
    %131 = tpu.matmul %129, %130, %cst_36 {dimension_numbers = #tpu.dot_dimension_numbers<[1], [0], [0], [1], [0, 0, 1, 1], [], []>} : vector<24x24xf32>, vector<24x8xf32>, vector<24x8xf32> -> vector<24x8xf32>
    %132 = vector.extract_strided_slice %122 {offsets = [24, 0], sizes = [24, 1], strides = [1, 1]} : vector<96x1xf32> to vector<24x1xf32>
    %133 = vector.broadcast %132 : vector<24x1xf32> to vector<24x8xf32>
    %134 = arith.mulf %131, %133 : vector<24x8xf32>
    %135 = vector.extract_strided_slice %119 {offsets = [48, 0], sizes = [24, 24], strides = [1, 1]} : vector<96x24xf32> to vector<24x24xf32>
    %136 = vector.extract_strided_slice %99 {offsets = [0, 16], sizes = [24, 8], strides = [1, 1]} : vector<24x32xf32> to vector<24x8xf32>
    %cst_37 = arith.constant dense<0.000000e+00> : vector<24x8xf32>
    %137 = tpu.matmul %135, %136, %cst_37 {dimension_numbers = #tpu.dot_dimension_numbers<[1], [0], [0], [1], [0, 0, 1, 1], [], []>} : vector<24x24xf32>, vector<24x8xf32>, vector<24x8xf32> -> vector<24x8xf32>
    %138 = vector.extract_strided_slice %122 {offsets = [48, 0], sizes = [24, 1], strides = [1, 1]} : vector<96x1xf32> to vector<24x1xf32>
    %139 = vector.broadcast %138 : vector<24x1xf32> to vector<24x8xf32>
    %140 = arith.mulf %137, %139 : vector<24x8xf32>
    %141 = vector.extract_strided_slice %119 {offsets = [72, 0], sizes = [24, 24], strides = [1, 1]} : vector<96x24xf32> to vector<24x24xf32>
    %142 = vector.extract_strided_slice %99 {offsets = [0, 24], sizes = [24, 8], strides = [1, 1]} : vector<24x32xf32> to vector<24x8xf32>
    %cst_38 = arith.constant dense<0.000000e+00> : vector<24x8xf32>
    %143 = tpu.matmul %141, %142, %cst_38 {dimension_numbers = #tpu.dot_dimension_numbers<[1], [0], [0], [1], [0, 0, 1, 1], [], []>} : vector<24x24xf32>, vector<24x8xf32>, vector<24x8xf32> -> vector<24x8xf32>
    %144 = vector.extract_strided_slice %122 {offsets = [72, 0], sizes = [24, 1], strides = [1, 1]} : vector<96x1xf32> to vector<24x1xf32>
    %145 = vector.broadcast %144 : vector<24x1xf32> to vector<24x8xf32>
    %146 = arith.mulf %143, %145 : vector<24x8xf32>
    %147 = tpu.concatenate %128, %134, %140, %146 in 1 : vector<24x8xf32>, vector<24x8xf32>, vector<24x8xf32>, vector<24x8xf32> -> vector<24x32xf32>
    %148 = arith.truncf %147 : vector<24x32xf32> to vector<24x32xbf16>
    %cst_39 = arith.constant dense<0.000000e+00> : vector<24x32xf32>
    %149 = tpu.matmul %148, %43, %cst_39 {dimension_numbers = #tpu.dot_dimension_numbers<[1], [0], [0], [1], [0, 0, 1, 1], [], []>} : vector<24x32xbf16>, vector<32x32xbf16>, vector<24x32xf32> -> vector<24x32xf32>
    %150 = tpu.concatenate %96, %149 in 0 : vector<24x32xf32>, vector<24x32xf32> -> vector<48x32xf32>
    %151 = arith.addf %6, %150 : vector<48x32xf32>
    %c27 = arith.constant 27 : index
    %c0_40 = arith.constant 0 : index
    %152 = vector.load %arg3[%c27, %c0_40] : memref<43x128xf32, #tpu.memory_space<vmem>>, vector<1x32xf32>
    %153 = vector.broadcast %152 : vector<1x32xf32> to vector<48x32xf32>
    %154 = arith.addf %151, %153 : vector<48x32xf32>
    %c28 = arith.constant 28 : index
    %c0_41 = arith.constant 0 : index
    %155 = vector.load %arg3[%c28, %c0_41] : memref<43x128xf32, #tpu.memory_space<vmem>>, vector<1x32xf32>
    %c29 = arith.constant 29 : index
    %c0_42 = arith.constant 0 : index
    %156 = vector.load %arg3[%c29, %c0_42] : memref<43x128xf32, #tpu.memory_space<vmem>>, vector<1x32xf32>
    %cst_43 = arith.constant dense<0.000000e+00> : vector<48xf32>
    %157 = vector.multi_reduction <add>, %154, %cst_43 [1] : vector<48x32xf32> to vector<48xf32>
    %158 = vector.shape_cast %157 : vector<48xf32> to vector<48x1xf32>
    %cst_44 = arith.constant 3.200000e+01 : f32
    %159 = vector.broadcast %cst_44 : f32 to vector<48x1xf32>
    %160 = arith.divf %158, %159 : vector<48x1xf32>
    %161 = vector.broadcast %160 : vector<48x1xf32> to vector<48x32xf32>
    %162 = arith.subf %154, %161 : vector<48x32xf32>
    %163 = arith.mulf %162, %162 : vector<48x32xf32>
    %cst_45 = arith.constant dense<0.000000e+00> : vector<48xf32>
    %164 = vector.multi_reduction <add>, %163, %cst_45 [1] : vector<48x32xf32> to vector<48xf32>
    %165 = vector.shape_cast %164 : vector<48xf32> to vector<48x1xf32>
    %cst_46 = arith.constant 3.200000e+01 : f32
    %166 = vector.broadcast %cst_46 : f32 to vector<48x1xf32>
    %167 = arith.divf %165, %166 : vector<48x1xf32>
    %168 = vector.broadcast %160 : vector<48x1xf32> to vector<48x32xf32>
    %169 = arith.subf %154, %168 : vector<48x32xf32>
    %cst_47 = arith.constant 9.99999996E-13 : f32
    %170 = vector.broadcast %cst_47 : f32 to vector<48x1xf32>
    %171 = arith.addf %167, %170 : vector<48x1xf32>
    %172 = math.rsqrt %171 : vector<48x1xf32>
    %173 = vector.broadcast %172 : vector<48x1xf32> to vector<48x32xf32>
    %174 = arith.mulf %169, %173 : vector<48x32xf32>
    %175 = vector.broadcast %155 : vector<1x32xf32> to vector<48x32xf32>
    %176 = arith.mulf %174, %175 : vector<48x32xf32>
    %177 = vector.broadcast %156 : vector<1x32xf32> to vector<48x32xf32>
    %178 = arith.addf %176, %177 : vector<48x32xf32>
    %179 = arith.truncf %178 : vector<48x32xf32> to vector<48x32xbf16>
    %c112 = arith.constant 112 : index
    %c0_48 = arith.constant 0 : index
    %180 = vector.load %arg2[%c112, %c0_48] : memref<400x128xbf16, #tpu.memory_space<vmem>>, vector<32x64xbf16>
    %cst_49 = arith.constant dense<0.000000e+00> : vector<48x64xf32>
    %181 = tpu.matmul %179, %180, %cst_49 {dimension_numbers = #tpu.dot_dimension_numbers<[1], [0], [0], [1], [0, 0, 1, 1], [], []>} : vector<48x32xbf16>, vector<32x64xbf16>, vector<48x64xf32> -> vector<48x64xf32>
    %c30 = arith.constant 30 : index
    %c0_50 = arith.constant 0 : index
    %182 = vector.load %arg3[%c30, %c0_50] : memref<43x128xf32, #tpu.memory_space<vmem>>, vector<1x64xf32>
    %183 = vector.broadcast %182 : vector<1x64xf32> to vector<48x64xf32>
    %184 = arith.addf %181, %183 : vector<48x64xf32>
    %185 = arith.mulf %184, %184 : vector<48x64xf32>
    %186 = arith.mulf %184, %185 : vector<48x64xf32>
    %cst_51 = arith.constant 4.471500e-02 : f32
    %187 = vector.broadcast %cst_51 : f32 to vector<48x64xf32>
    %188 = arith.mulf %187, %186 : vector<48x64xf32>
    %189 = arith.addf %184, %188 : vector<48x64xf32>
    %cst_52 = arith.constant 0.797884583 : f32
    %190 = vector.broadcast %cst_52 : f32 to vector<48x64xf32>
    %191 = arith.mulf %190, %189 : vector<48x64xf32>
    %192 = math.tanh %191 : vector<48x64xf32>
    %cst_53 = arith.constant 1.000000e+00 : f32
    %193 = vector.broadcast %cst_53 : f32 to vector<48x64xf32>
    %194 = arith.addf %193, %192 : vector<48x64xf32>
    %cst_54 = arith.constant 5.000000e-01 : f32
    %195 = vector.broadcast %cst_54 : f32 to vector<48x64xf32>
    %196 = arith.mulf %195, %194 : vector<48x64xf32>
    %197 = arith.mulf %184, %196 : vector<48x64xf32>
    %198 = arith.truncf %197 : vector<48x64xf32> to vector<48x64xbf16>
    %c144 = arith.constant 144 : index
    %c0_55 = arith.constant 0 : index
    %199 = vector.load %arg2[%c144, %c0_55] : memref<400x128xbf16, #tpu.memory_space<vmem>>, vector<64x32xbf16>
    %cst_56 = arith.constant dense<0.000000e+00> : vector<48x32xf32>
    %200 = tpu.matmul %198, %199, %cst_56 {dimension_numbers = #tpu.dot_dimension_numbers<[1], [0], [0], [1], [0, 0, 1, 1], [], []>} : vector<48x64xbf16>, vector<64x32xbf16>, vector<48x32xf32> -> vector<48x32xf32>
    %c31 = arith.constant 31 : index
    %c0_57 = arith.constant 0 : index
    %201 = vector.load %arg3[%c31, %c0_57] : memref<43x128xf32, #tpu.memory_space<vmem>>, vector<1x32xf32>
    %202 = vector.broadcast %201 : vector<1x32xf32> to vector<48x32xf32>
    %203 = arith.addf %200, %202 : vector<48x32xf32>
    %204 = arith.addf %154, %203 : vector<48x32xf32>
    %c32 = arith.constant 32 : index
    %c0_58 = arith.constant 0 : index
    %205 = vector.load %arg3[%c32, %c0_58] : memref<43x128xf32, #tpu.memory_space<vmem>>, vector<1x32xf32>
    %c33 = arith.constant 33 : index
    %c0_59 = arith.constant 0 : index
    %206 = vector.load %arg3[%c33, %c0_59] : memref<43x128xf32, #tpu.memory_space<vmem>>, vector<1x32xf32>
    %cst_60 = arith.constant dense<0.000000e+00> : vector<48xf32>
    %207 = vector.multi_reduction <add>, %204, %cst_60 [1] : vector<48x32xf32> to vector<48xf32>
    %208 = vector.shape_cast %207 : vector<48xf32> to vector<48x1xf32>
    %cst_61 = arith.constant 3.200000e+01 : f32
    %209 = vector.broadcast %cst_61 : f32 to vector<48x1xf32>
    %210 = arith.divf %208, %209 : vector<48x1xf32>
    %211 = vector.broadcast %210 : vector<48x1xf32> to vector<48x32xf32>
    %212 = arith.subf %204, %211 : vector<48x32xf32>
    %213 = arith.mulf %212, %212 : vector<48x32xf32>
    %cst_62 = arith.constant dense<0.000000e+00> : vector<48xf32>
    %214 = vector.multi_reduction <add>, %213, %cst_62 [1] : vector<48x32xf32> to vector<48xf32>
    %215 = vector.shape_cast %214 : vector<48xf32> to vector<48x1xf32>
    %cst_63 = arith.constant 3.200000e+01 : f32
    %216 = vector.broadcast %cst_63 : f32 to vector<48x1xf32>
    %217 = arith.divf %215, %216 : vector<48x1xf32>
    %218 = vector.broadcast %210 : vector<48x1xf32> to vector<48x32xf32>
    %219 = arith.subf %204, %218 : vector<48x32xf32>
    %cst_64 = arith.constant 9.99999996E-13 : f32
    %220 = vector.broadcast %cst_64 : f32 to vector<48x1xf32>
    %221 = arith.addf %217, %220 : vector<48x1xf32>
    %222 = math.rsqrt %221 : vector<48x1xf32>
    %223 = vector.broadcast %222 : vector<48x1xf32> to vector<48x32xf32>
    %224 = arith.mulf %219, %223 : vector<48x32xf32>
    %225 = vector.broadcast %205 : vector<1x32xf32> to vector<48x32xf32>
    %226 = arith.mulf %224, %225 : vector<48x32xf32>
    %227 = vector.broadcast %206 : vector<1x32xf32> to vector<48x32xf32>
    %228 = arith.addf %226, %227 : vector<48x32xf32>
    %229 = arith.truncf %228 : vector<48x32xf32> to vector<48x32xbf16>
    %c208 = arith.constant 208 : index
    %c0_65 = arith.constant 0 : index
    %230 = vector.load %arg2[%c208, %c0_65] : memref<400x128xbf16, #tpu.memory_space<vmem>>, vector<32x96xbf16>
    %cst_66 = arith.constant dense<0.000000e+00> : vector<48x96xf32>
    %231 = tpu.matmul %229, %230, %cst_66 {dimension_numbers = #tpu.dot_dimension_numbers<[1], [0], [0], [1], [0, 0, 1, 1], [], []>} : vector<48x32xbf16>, vector<32x96xbf16>, vector<48x96xf32> -> vector<48x96xf32>
    %c34 = arith.constant 34 : index
    %c0_67 = arith.constant 0 : index
    %232 = vector.load %arg3[%c34, %c0_67] : memref<43x128xf32, #tpu.memory_space<vmem>>, vector<1x96xf32>
    %233 = vector.broadcast %232 : vector<1x96xf32> to vector<48x96xf32>
    %234 = arith.addf %231, %233 : vector<48x96xf32>
    %c240 = arith.constant 240 : index
    %c0_68 = arith.constant 0 : index
    %235 = vector.load %arg2[%c240, %c0_68] : memref<400x128xbf16, #tpu.memory_space<vmem>>, vector<32x32xbf16>
    %236 = vector.extract_strided_slice %234 {offsets = [0, 0], sizes = [24, 32], strides = [1, 1]} : vector<48x96xf32> to vector<24x32xf32>
    %237 = vector.extract_strided_slice %234 {offsets = [0, 32], sizes = [24, 32], strides = [1, 1]} : vector<48x96xf32> to vector<24x32xf32>
    %238 = vector.extract_strided_slice %234 {offsets = [0, 64], sizes = [24, 32], strides = [1, 1]} : vector<48x96xf32> to vector<24x32xf32>
    %239 = vector.extract_strided_slice %236 {offsets = [0, 0], sizes = [24, 8], strides = [1, 1]} : vector<24x32xf32> to vector<24x8xf32>
    %240 = vector.extract_strided_slice %237 {offsets = [0, 0], sizes = [24, 8], strides = [1, 1]} : vector<24x32xf32> to vector<24x8xf32>
    %cst_69 = arith.constant dense<0.000000e+00> : vector<24x24xf32>
    %241 = tpu.matmul %239, %240, %cst_69 {dimension_numbers = #tpu.dot_dimension_numbers<[1], [1], [0], [0], [0, 0, 1, 0], [], []>} : vector<24x8xf32>, vector<24x8xf32>, vector<24x24xf32> -> vector<24x24xf32>
    %242 = vector.extract_strided_slice %236 {offsets = [0, 8], sizes = [24, 8], strides = [1, 1]} : vector<24x32xf32> to vector<24x8xf32>
    %243 = vector.extract_strided_slice %237 {offsets = [0, 8], sizes = [24, 8], strides = [1, 1]} : vector<24x32xf32> to vector<24x8xf32>
    %cst_70 = arith.constant dense<0.000000e+00> : vector<24x24xf32>
    %244 = tpu.matmul %242, %243, %cst_70 {dimension_numbers = #tpu.dot_dimension_numbers<[1], [1], [0], [0], [0, 0, 1, 0], [], []>} : vector<24x8xf32>, vector<24x8xf32>, vector<24x24xf32> -> vector<24x24xf32>
    %245 = vector.extract_strided_slice %236 {offsets = [0, 16], sizes = [24, 8], strides = [1, 1]} : vector<24x32xf32> to vector<24x8xf32>
    %246 = vector.extract_strided_slice %237 {offsets = [0, 16], sizes = [24, 8], strides = [1, 1]} : vector<24x32xf32> to vector<24x8xf32>
    %cst_71 = arith.constant dense<0.000000e+00> : vector<24x24xf32>
    %247 = tpu.matmul %245, %246, %cst_71 {dimension_numbers = #tpu.dot_dimension_numbers<[1], [1], [0], [0], [0, 0, 1, 0], [], []>} : vector<24x8xf32>, vector<24x8xf32>, vector<24x24xf32> -> vector<24x24xf32>
    %248 = vector.extract_strided_slice %236 {offsets = [0, 24], sizes = [24, 8], strides = [1, 1]} : vector<24x32xf32> to vector<24x8xf32>
    %249 = vector.extract_strided_slice %237 {offsets = [0, 24], sizes = [24, 8], strides = [1, 1]} : vector<24x32xf32> to vector<24x8xf32>
    %cst_72 = arith.constant dense<0.000000e+00> : vector<24x24xf32>
    %250 = tpu.matmul %248, %249, %cst_72 {dimension_numbers = #tpu.dot_dimension_numbers<[1], [1], [0], [0], [0, 0, 1, 0], [], []>} : vector<24x8xf32>, vector<24x8xf32>, vector<24x24xf32> -> vector<24x24xf32>
    %251 = tpu.concatenate %241, %244, %247, %250 in 0 : vector<24x24xf32>, vector<24x24xf32>, vector<24x24xf32>, vector<24x24xf32> -> vector<96x24xf32>
    %252 = vector.broadcast %12 : vector<1x24xf32> to vector<96x24xf32>
    %253 = arith.addf %251, %252 : vector<96x24xf32>
    %cst_73 = arith.constant dense<0xFF800000> : vector<96xf32>
    %254 = vector.multi_reduction <maximumf>, %253, %cst_73 [1] : vector<96x24xf32> to vector<96xf32>
    %255 = vector.shape_cast %254 : vector<96xf32> to vector<96x1xf32>
    %256 = vector.broadcast %255 : vector<96x1xf32> to vector<96x24xf32>
    %257 = arith.subf %253, %256 : vector<96x24xf32>
    %258 = math.exp %257 : vector<96x24xf32>
    %cst_74 = arith.constant dense<0.000000e+00> : vector<96xf32>
    %259 = vector.multi_reduction <add>, %258, %cst_74 [1] : vector<96x24xf32> to vector<96xf32>
    %260 = vector.shape_cast %259 : vector<96xf32> to vector<96x1xf32>
    %261 = tpu.reciprocal %260 {approx = true} : vector<96x1xf32> -> vector<96x1xf32>
    %262 = vector.extract_strided_slice %258 {offsets = [0, 0], sizes = [24, 24], strides = [1, 1]} : vector<96x24xf32> to vector<24x24xf32>
    %263 = vector.extract_strided_slice %238 {offsets = [0, 0], sizes = [24, 8], strides = [1, 1]} : vector<24x32xf32> to vector<24x8xf32>
    %cst_75 = arith.constant dense<0.000000e+00> : vector<24x8xf32>
    %264 = tpu.matmul %262, %263, %cst_75 {dimension_numbers = #tpu.dot_dimension_numbers<[1], [0], [0], [1], [0, 0, 1, 1], [], []>} : vector<24x24xf32>, vector<24x8xf32>, vector<24x8xf32> -> vector<24x8xf32>
    %265 = vector.extract_strided_slice %261 {offsets = [0, 0], sizes = [24, 1], strides = [1, 1]} : vector<96x1xf32> to vector<24x1xf32>
    %266 = vector.broadcast %265 : vector<24x1xf32> to vector<24x8xf32>
    %267 = arith.mulf %264, %266 : vector<24x8xf32>
    %268 = vector.extract_strided_slice %258 {offsets = [24, 0], sizes = [24, 24], strides = [1, 1]} : vector<96x24xf32> to vector<24x24xf32>
    %269 = vector.extract_strided_slice %238 {offsets = [0, 8], sizes = [24, 8], strides = [1, 1]} : vector<24x32xf32> to vector<24x8xf32>
    %cst_76 = arith.constant dense<0.000000e+00> : vector<24x8xf32>
    %270 = tpu.matmul %268, %269, %cst_76 {dimension_numbers = #tpu.dot_dimension_numbers<[1], [0], [0], [1], [0, 0, 1, 1], [], []>} : vector<24x24xf32>, vector<24x8xf32>, vector<24x8xf32> -> vector<24x8xf32>
    %271 = vector.extract_strided_slice %261 {offsets = [24, 0], sizes = [24, 1], strides = [1, 1]} : vector<96x1xf32> to vector<24x1xf32>
    %272 = vector.broadcast %271 : vector<24x1xf32> to vector<24x8xf32>
    %273 = arith.mulf %270, %272 : vector<24x8xf32>
    %274 = vector.extract_strided_slice %258 {offsets = [48, 0], sizes = [24, 24], strides = [1, 1]} : vector<96x24xf32> to vector<24x24xf32>
    %275 = vector.extract_strided_slice %238 {offsets = [0, 16], sizes = [24, 8], strides = [1, 1]} : vector<24x32xf32> to vector<24x8xf32>
    %cst_77 = arith.constant dense<0.000000e+00> : vector<24x8xf32>
    %276 = tpu.matmul %274, %275, %cst_77 {dimension_numbers = #tpu.dot_dimension_numbers<[1], [0], [0], [1], [0, 0, 1, 1], [], []>} : vector<24x24xf32>, vector<24x8xf32>, vector<24x8xf32> -> vector<24x8xf32>
    %277 = vector.extract_strided_slice %261 {offsets = [48, 0], sizes = [24, 1], strides = [1, 1]} : vector<96x1xf32> to vector<24x1xf32>
    %278 = vector.broadcast %277 : vector<24x1xf32> to vector<24x8xf32>
    %279 = arith.mulf %276, %278 : vector<24x8xf32>
    %280 = vector.extract_strided_slice %258 {offsets = [72, 0], sizes = [24, 24], strides = [1, 1]} : vector<96x24xf32> to vector<24x24xf32>
    %281 = vector.extract_strided_slice %238 {offsets = [0, 24], sizes = [24, 8], strides = [1, 1]} : vector<24x32xf32> to vector<24x8xf32>
    %cst_78 = arith.constant dense<0.000000e+00> : vector<24x8xf32>
    %282 = tpu.matmul %280, %281, %cst_78 {dimension_numbers = #tpu.dot_dimension_numbers<[1], [0], [0], [1], [0, 0, 1, 1], [], []>} : vector<24x24xf32>, vector<24x8xf32>, vector<24x8xf32> -> vector<24x8xf32>
    %283 = vector.extract_strided_slice %261 {offsets = [72, 0], sizes = [24, 1], strides = [1, 1]} : vector<96x1xf32> to vector<24x1xf32>
    %284 = vector.broadcast %283 : vector<24x1xf32> to vector<24x8xf32>
    %285 = arith.mulf %282, %284 : vector<24x8xf32>
    %286 = tpu.concatenate %267, %273, %279, %285 in 1 : vector<24x8xf32>, vector<24x8xf32>, vector<24x8xf32>, vector<24x8xf32> -> vector<24x32xf32>
    %287 = arith.truncf %286 : vector<24x32xf32> to vector<24x32xbf16>
    %cst_79 = arith.constant dense<0.000000e+00> : vector<24x32xf32>
    %288 = tpu.matmul %287, %235, %cst_79 {dimension_numbers = #tpu.dot_dimension_numbers<[1], [0], [0], [1], [0, 0, 1, 1], [], []>} : vector<24x32xbf16>, vector<32x32xbf16>, vector<24x32xf32> -> vector<24x32xf32>
    %289 = vector.extract_strided_slice %234 {offsets = [24, 0], sizes = [24, 32], strides = [1, 1]} : vector<48x96xf32> to vector<24x32xf32>
    %290 = vector.extract_strided_slice %234 {offsets = [24, 32], sizes = [24, 32], strides = [1, 1]} : vector<48x96xf32> to vector<24x32xf32>
    %291 = vector.extract_strided_slice %234 {offsets = [24, 64], sizes = [24, 32], strides = [1, 1]} : vector<48x96xf32> to vector<24x32xf32>
    %292 = vector.extract_strided_slice %289 {offsets = [0, 0], sizes = [24, 8], strides = [1, 1]} : vector<24x32xf32> to vector<24x8xf32>
    %293 = vector.extract_strided_slice %290 {offsets = [0, 0], sizes = [24, 8], strides = [1, 1]} : vector<24x32xf32> to vector<24x8xf32>
    %cst_80 = arith.constant dense<0.000000e+00> : vector<24x24xf32>
    %294 = tpu.matmul %292, %293, %cst_80 {dimension_numbers = #tpu.dot_dimension_numbers<[1], [1], [0], [0], [0, 0, 1, 0], [], []>} : vector<24x8xf32>, vector<24x8xf32>, vector<24x24xf32> -> vector<24x24xf32>
    %295 = vector.extract_strided_slice %289 {offsets = [0, 8], sizes = [24, 8], strides = [1, 1]} : vector<24x32xf32> to vector<24x8xf32>
    %296 = vector.extract_strided_slice %290 {offsets = [0, 8], sizes = [24, 8], strides = [1, 1]} : vector<24x32xf32> to vector<24x8xf32>
    %cst_81 = arith.constant dense<0.000000e+00> : vector<24x24xf32>
    %297 = tpu.matmul %295, %296, %cst_81 {dimension_numbers = #tpu.dot_dimension_numbers<[1], [1], [0], [0], [0, 0, 1, 0], [], []>} : vector<24x8xf32>, vector<24x8xf32>, vector<24x24xf32> -> vector<24x24xf32>
    %298 = vector.extract_strided_slice %289 {offsets = [0, 16], sizes = [24, 8], strides = [1, 1]} : vector<24x32xf32> to vector<24x8xf32>
    %299 = vector.extract_strided_slice %290 {offsets = [0, 16], sizes = [24, 8], strides = [1, 1]} : vector<24x32xf32> to vector<24x8xf32>
    %cst_82 = arith.constant dense<0.000000e+00> : vector<24x24xf32>
    %300 = tpu.matmul %298, %299, %cst_82 {dimension_numbers = #tpu.dot_dimension_numbers<[1], [1], [0], [0], [0, 0, 1, 0], [], []>} : vector<24x8xf32>, vector<24x8xf32>, vector<24x24xf32> -> vector<24x24xf32>
    %301 = vector.extract_strided_slice %289 {offsets = [0, 24], sizes = [24, 8], strides = [1, 1]} : vector<24x32xf32> to vector<24x8xf32>
    %302 = vector.extract_strided_slice %290 {offsets = [0, 24], sizes = [24, 8], strides = [1, 1]} : vector<24x32xf32> to vector<24x8xf32>
    %cst_83 = arith.constant dense<0.000000e+00> : vector<24x24xf32>
    %303 = tpu.matmul %301, %302, %cst_83 {dimension_numbers = #tpu.dot_dimension_numbers<[1], [1], [0], [0], [0, 0, 1, 0], [], []>} : vector<24x8xf32>, vector<24x8xf32>, vector<24x24xf32> -> vector<24x24xf32>
    %304 = tpu.concatenate %294, %297, %300, %303 in 0 : vector<24x24xf32>, vector<24x24xf32>, vector<24x24xf32>, vector<24x24xf32> -> vector<96x24xf32>
    %305 = vector.broadcast %12 : vector<1x24xf32> to vector<96x24xf32>
    %306 = arith.addf %304, %305 : vector<96x24xf32>
    %cst_84 = arith.constant dense<0xFF800000> : vector<96xf32>
    %307 = vector.multi_reduction <maximumf>, %306, %cst_84 [1] : vector<96x24xf32> to vector<96xf32>
    %308 = vector.shape_cast %307 : vector<96xf32> to vector<96x1xf32>
    %309 = vector.broadcast %308 : vector<96x1xf32> to vector<96x24xf32>
    %310 = arith.subf %306, %309 : vector<96x24xf32>
    %311 = math.exp %310 : vector<96x24xf32>
    %cst_85 = arith.constant dense<0.000000e+00> : vector<96xf32>
    %312 = vector.multi_reduction <add>, %311, %cst_85 [1] : vector<96x24xf32> to vector<96xf32>
    %313 = vector.shape_cast %312 : vector<96xf32> to vector<96x1xf32>
    %314 = tpu.reciprocal %313 {approx = true} : vector<96x1xf32> -> vector<96x1xf32>
    %315 = vector.extract_strided_slice %311 {offsets = [0, 0], sizes = [24, 24], strides = [1, 1]} : vector<96x24xf32> to vector<24x24xf32>
    %316 = vector.extract_strided_slice %291 {offsets = [0, 0], sizes = [24, 8], strides = [1, 1]} : vector<24x32xf32> to vector<24x8xf32>
    %cst_86 = arith.constant dense<0.000000e+00> : vector<24x8xf32>
    %317 = tpu.matmul %315, %316, %cst_86 {dimension_numbers = #tpu.dot_dimension_numbers<[1], [0], [0], [1], [0, 0, 1, 1], [], []>} : vector<24x24xf32>, vector<24x8xf32>, vector<24x8xf32> -> vector<24x8xf32>
    %318 = vector.extract_strided_slice %314 {offsets = [0, 0], sizes = [24, 1], strides = [1, 1]} : vector<96x1xf32> to vector<24x1xf32>
    %319 = vector.broadcast %318 : vector<24x1xf32> to vector<24x8xf32>
    %320 = arith.mulf %317, %319 : vector<24x8xf32>
    %321 = vector.extract_strided_slice %311 {offsets = [24, 0], sizes = [24, 24], strides = [1, 1]} : vector<96x24xf32> to vector<24x24xf32>
    %322 = vector.extract_strided_slice %291 {offsets = [0, 8], sizes = [24, 8], strides = [1, 1]} : vector<24x32xf32> to vector<24x8xf32>
    %cst_87 = arith.constant dense<0.000000e+00> : vector<24x8xf32>
    %323 = tpu.matmul %321, %322, %cst_87 {dimension_numbers = #tpu.dot_dimension_numbers<[1], [0], [0], [1], [0, 0, 1, 1], [], []>} : vector<24x24xf32>, vector<24x8xf32>, vector<24x8xf32> -> vector<24x8xf32>
    %324 = vector.extract_strided_slice %314 {offsets = [24, 0], sizes = [24, 1], strides = [1, 1]} : vector<96x1xf32> to vector<24x1xf32>
    %325 = vector.broadcast %324 : vector<24x1xf32> to vector<24x8xf32>
    %326 = arith.mulf %323, %325 : vector<24x8xf32>
    %327 = vector.extract_strided_slice %311 {offsets = [48, 0], sizes = [24, 24], strides = [1, 1]} : vector<96x24xf32> to vector<24x24xf32>
    %328 = vector.extract_strided_slice %291 {offsets = [0, 16], sizes = [24, 8], strides = [1, 1]} : vector<24x32xf32> to vector<24x8xf32>
    %cst_88 = arith.constant dense<0.000000e+00> : vector<24x8xf32>
    %329 = tpu.matmul %327, %328, %cst_88 {dimension_numbers = #tpu.dot_dimension_numbers<[1], [0], [0], [1], [0, 0, 1, 1], [], []>} : vector<24x24xf32>, vector<24x8xf32>, vector<24x8xf32> -> vector<24x8xf32>
    %330 = vector.extract_strided_slice %314 {offsets = [48, 0], sizes = [24, 1], strides = [1, 1]} : vector<96x1xf32> to vector<24x1xf32>
    %331 = vector.broadcast %330 : vector<24x1xf32> to vector<24x8xf32>
    %332 = arith.mulf %329, %331 : vector<24x8xf32>
    %333 = vector.extract_strided_slice %311 {offsets = [72, 0], sizes = [24, 24], strides = [1, 1]} : vector<96x24xf32> to vector<24x24xf32>
    %334 = vector.extract_strided_slice %291 {offsets = [0, 24], sizes = [24, 8], strides = [1, 1]} : vector<24x32xf32> to vector<24x8xf32>
    %cst_89 = arith.constant dense<0.000000e+00> : vector<24x8xf32>
    %335 = tpu.matmul %333, %334, %cst_89 {dimension_numbers = #tpu.dot_dimension_numbers<[1], [0], [0], [1], [0, 0, 1, 1], [], []>} : vector<24x24xf32>, vector<24x8xf32>, vector<24x8xf32> -> vector<24x8xf32>
    %336 = vector.extract_strided_slice %314 {offsets = [72, 0], sizes = [24, 1], strides = [1, 1]} : vector<96x1xf32> to vector<24x1xf32>
    %337 = vector.broadcast %336 : vector<24x1xf32> to vector<24x8xf32>
    %338 = arith.mulf %335, %337 : vector<24x8xf32>
    %339 = tpu.concatenate %320, %326, %332, %338 in 1 : vector<24x8xf32>, vector<24x8xf32>, vector<24x8xf32>, vector<24x8xf32> -> vector<24x32xf32>
    %340 = arith.truncf %339 : vector<24x32xf32> to vector<24x32xbf16>
    %cst_90 = arith.constant dense<0.000000e+00> : vector<24x32xf32>
    %341 = tpu.matmul %340, %235, %cst_90 {dimension_numbers = #tpu.dot_dimension_numbers<[1], [0], [0], [1], [0, 0, 1, 1], [], []>} : vector<24x32xbf16>, vector<32x32xbf16>, vector<24x32xf32> -> vector<24x32xf32>
    %342 = tpu.concatenate %288, %341 in 0 : vector<24x32xf32>, vector<24x32xf32> -> vector<48x32xf32>
    %343 = arith.addf %204, %342 : vector<48x32xf32>
    %c35 = arith.constant 35 : index
    %c0_91 = arith.constant 0 : index
    %344 = vector.load %arg3[%c35, %c0_91] : memref<43x128xf32, #tpu.memory_space<vmem>>, vector<1x32xf32>
    %345 = vector.broadcast %344 : vector<1x32xf32> to vector<48x32xf32>
    %346 = arith.addf %343, %345 : vector<48x32xf32>
    %c36 = arith.constant 36 : index
    %c0_92 = arith.constant 0 : index
    %347 = vector.load %arg3[%c36, %c0_92] : memref<43x128xf32, #tpu.memory_space<vmem>>, vector<1x32xf32>
    %c37 = arith.constant 37 : index
    %c0_93 = arith.constant 0 : index
    %348 = vector.load %arg3[%c37, %c0_93] : memref<43x128xf32, #tpu.memory_space<vmem>>, vector<1x32xf32>
    %cst_94 = arith.constant dense<0.000000e+00> : vector<48xf32>
    %349 = vector.multi_reduction <add>, %346, %cst_94 [1] : vector<48x32xf32> to vector<48xf32>
    %350 = vector.shape_cast %349 : vector<48xf32> to vector<48x1xf32>
    %cst_95 = arith.constant 3.200000e+01 : f32
    %351 = vector.broadcast %cst_95 : f32 to vector<48x1xf32>
    %352 = arith.divf %350, %351 : vector<48x1xf32>
    %353 = vector.broadcast %352 : vector<48x1xf32> to vector<48x32xf32>
    %354 = arith.subf %346, %353 : vector<48x32xf32>
    %355 = arith.mulf %354, %354 : vector<48x32xf32>
    %cst_96 = arith.constant dense<0.000000e+00> : vector<48xf32>
    %356 = vector.multi_reduction <add>, %355, %cst_96 [1] : vector<48x32xf32> to vector<48xf32>
    %357 = vector.shape_cast %356 : vector<48xf32> to vector<48x1xf32>
    %cst_97 = arith.constant 3.200000e+01 : f32
    %358 = vector.broadcast %cst_97 : f32 to vector<48x1xf32>
    %359 = arith.divf %357, %358 : vector<48x1xf32>
    %360 = vector.broadcast %352 : vector<48x1xf32> to vector<48x32xf32>
    %361 = arith.subf %346, %360 : vector<48x32xf32>
    %cst_98 = arith.constant 9.99999996E-13 : f32
    %362 = vector.broadcast %cst_98 : f32 to vector<48x1xf32>
    %363 = arith.addf %359, %362 : vector<48x1xf32>
    %364 = math.rsqrt %363 : vector<48x1xf32>
    %365 = vector.broadcast %364 : vector<48x1xf32> to vector<48x32xf32>
    %366 = arith.mulf %361, %365 : vector<48x32xf32>
    %367 = vector.broadcast %347 : vector<1x32xf32> to vector<48x32xf32>
    %368 = arith.mulf %366, %367 : vector<48x32xf32>
    %369 = vector.broadcast %348 : vector<1x32xf32> to vector<48x32xf32>
    %370 = arith.addf %368, %369 : vector<48x32xf32>
    %371 = arith.truncf %370 : vector<48x32xf32> to vector<48x32xbf16>
    %c272 = arith.constant 272 : index
    %c0_99 = arith.constant 0 : index
    %372 = vector.load %arg2[%c272, %c0_99] : memref<400x128xbf16, #tpu.memory_space<vmem>>, vector<32x64xbf16>
    %cst_100 = arith.constant dense<0.000000e+00> : vector<48x64xf32>
    %373 = tpu.matmul %371, %372, %cst_100 {dimension_numbers = #tpu.dot_dimension_numbers<[1], [0], [0], [1], [0, 0, 1, 1], [], []>} : vector<48x32xbf16>, vector<32x64xbf16>, vector<48x64xf32> -> vector<48x64xf32>
    %c38 = arith.constant 38 : index
    %c0_101 = arith.constant 0 : index
    %374 = vector.load %arg3[%c38, %c0_101] : memref<43x128xf32, #tpu.memory_space<vmem>>, vector<1x64xf32>
    %375 = vector.broadcast %374 : vector<1x64xf32> to vector<48x64xf32>
    %376 = arith.addf %373, %375 : vector<48x64xf32>
    %377 = arith.mulf %376, %376 : vector<48x64xf32>
    %378 = arith.mulf %376, %377 : vector<48x64xf32>
    %cst_102 = arith.constant 4.471500e-02 : f32
    %379 = vector.broadcast %cst_102 : f32 to vector<48x64xf32>
    %380 = arith.mulf %379, %378 : vector<48x64xf32>
    %381 = arith.addf %376, %380 : vector<48x64xf32>
    %cst_103 = arith.constant 0.797884583 : f32
    %382 = vector.broadcast %cst_103 : f32 to vector<48x64xf32>
    %383 = arith.mulf %382, %381 : vector<48x64xf32>
    %384 = math.tanh %383 : vector<48x64xf32>
    %cst_104 = arith.constant 1.000000e+00 : f32
    %385 = vector.broadcast %cst_104 : f32 to vector<48x64xf32>
    %386 = arith.addf %385, %384 : vector<48x64xf32>
    %cst_105 = arith.constant 5.000000e-01 : f32
    %387 = vector.broadcast %cst_105 : f32 to vector<48x64xf32>
    %388 = arith.mulf %387, %386 : vector<48x64xf32>
    %389 = arith.mulf %376, %388 : vector<48x64xf32>
    %390 = arith.truncf %389 : vector<48x64xf32> to vector<48x64xbf16>
    %c304 = arith.constant 304 : index
    %c0_106 = arith.constant 0 : index
    %391 = vector.load %arg2[%c304, %c0_106] : memref<400x128xbf16, #tpu.memory_space<vmem>>, vector<64x32xbf16>
    %cst_107 = arith.constant dense<0.000000e+00> : vector<48x32xf32>
    %392 = tpu.matmul %390, %391, %cst_107 {dimension_numbers = #tpu.dot_dimension_numbers<[1], [0], [0], [1], [0, 0, 1, 1], [], []>} : vector<48x64xbf16>, vector<64x32xbf16>, vector<48x32xf32> -> vector<48x32xf32>
    %c39 = arith.constant 39 : index
    %c0_108 = arith.constant 0 : index
    %393 = vector.load %arg3[%c39, %c0_108] : memref<43x128xf32, #tpu.memory_space<vmem>>, vector<1x32xf32>
    %394 = vector.broadcast %393 : vector<1x32xf32> to vector<48x32xf32>
    %395 = arith.addf %392, %394 : vector<48x32xf32>
    %396 = arith.addf %346, %395 : vector<48x32xf32>
    %c40 = arith.constant 40 : index
    %c0_109 = arith.constant 0 : index
    %397 = vector.load %arg3[%c40, %c0_109] : memref<43x128xf32, #tpu.memory_space<vmem>>, vector<1x32xf32>
    %c41 = arith.constant 41 : index
    %c0_110 = arith.constant 0 : index
    %398 = vector.load %arg3[%c41, %c0_110] : memref<43x128xf32, #tpu.memory_space<vmem>>, vector<1x32xf32>
    %cst_111 = arith.constant dense<0.000000e+00> : vector<48xf32>
    %399 = vector.multi_reduction <add>, %396, %cst_111 [1] : vector<48x32xf32> to vector<48xf32>
    %400 = vector.shape_cast %399 : vector<48xf32> to vector<48x1xf32>
    %cst_112 = arith.constant 3.200000e+01 : f32
    %401 = vector.broadcast %cst_112 : f32 to vector<48x1xf32>
    %402 = arith.divf %400, %401 : vector<48x1xf32>
    %403 = vector.broadcast %402 : vector<48x1xf32> to vector<48x32xf32>
    %404 = arith.subf %396, %403 : vector<48x32xf32>
    %405 = arith.mulf %404, %404 : vector<48x32xf32>
    %cst_113 = arith.constant dense<0.000000e+00> : vector<48xf32>
    %406 = vector.multi_reduction <add>, %405, %cst_113 [1] : vector<48x32xf32> to vector<48xf32>
    %407 = vector.shape_cast %406 : vector<48xf32> to vector<48x1xf32>
    %cst_114 = arith.constant 3.200000e+01 : f32
    %408 = vector.broadcast %cst_114 : f32 to vector<48x1xf32>
    %409 = arith.divf %407, %408 : vector<48x1xf32>
    %410 = vector.broadcast %402 : vector<48x1xf32> to vector<48x32xf32>
    %411 = arith.subf %396, %410 : vector<48x32xf32>
    %cst_115 = arith.constant 9.99999996E-13 : f32
    %412 = vector.broadcast %cst_115 : f32 to vector<48x1xf32>
    %413 = arith.addf %409, %412 : vector<48x1xf32>
    %414 = math.rsqrt %413 : vector<48x1xf32>
    %415 = vector.broadcast %414 : vector<48x1xf32> to vector<48x32xf32>
    %416 = arith.mulf %411, %415 : vector<48x32xf32>
    %417 = vector.broadcast %397 : vector<1x32xf32> to vector<48x32xf32>
    %418 = arith.mulf %416, %417 : vector<48x32xf32>
    %419 = vector.broadcast %398 : vector<1x32xf32> to vector<48x32xf32>
    %420 = arith.addf %418, %419 : vector<48x32xf32>
    %421 = vector.extract_strided_slice %420 {offsets = [0, 0], sizes = [1, 32], strides = [1, 1]} : vector<48x32xf32> to vector<1x32xf32>
    %422 = vector.extract_strided_slice %420 {offsets = [24, 0], sizes = [1, 32], strides = [1, 1]} : vector<48x32xf32> to vector<1x32xf32>
    %423 = tpu.concatenate %421, %422 in 0 : vector<1x32xf32>, vector<1x32xf32> -> vector<2x32xf32>
    %424 = arith.truncf %423 : vector<2x32xf32> to vector<2x32xbf16>
    %c368 = arith.constant 368 : index
    %c0_116 = arith.constant 0 : index
    %425 = vector.load %arg2[%c368, %c0_116] : memref<400x128xbf16, #tpu.memory_space<vmem>>, vector<32x10xbf16>
    %cst_117 = arith.constant dense<0.000000e+00> : vector<2x10xf32>
    %426 = tpu.matmul %424, %425, %cst_117 {dimension_numbers = #tpu.dot_dimension_numbers<[1], [0], [0], [1], [0, 0, 1, 1], [], []>} : vector<2x32xbf16>, vector<32x10xbf16>, vector<2x10xf32> -> vector<2x10xf32>
    %c42 = arith.constant 42 : index
    %c0_118 = arith.constant 0 : index
    %427 = vector.load %arg3[%c42, %c0_118] : memref<43x128xf32, #tpu.memory_space<vmem>>, vector<1x10xf32>
    %428 = vector.broadcast %427 : vector<1x10xf32> to vector<2x10xf32>
    %429 = arith.addf %426, %428 : vector<2x10xf32>
    %cst_119 = arith.constant 0.000000e+00 : f32
    %430 = vector.broadcast %cst_119 : f32 to vector<2x86xf32>
    %431 = tpu.concatenate %423, %429, %430 in 1 : vector<2x32xf32>, vector<2x10xf32>, vector<2x86xf32> -> vector<2x128xf32>
    %432 = vector.shape_cast %431 : vector<2x128xf32> to vector<1x2x128xf32>
    %c0_120 = arith.constant 0 : index
    %c0_121 = arith.constant 0 : index
    %c0_122 = arith.constant 0 : index
    %433 = vector.load %arg4[%c0_120, %c0_121, %c0_122] : memref<1x2x128xf32, #tpu.memory_space<vmem>>, vector<1x2x128xf32>
    tpu.vector_store %arg4[%c0_120, %c0_121, %c0_122], %432 {strides = array<i32>} : memref<1x2x128xf32, #tpu.memory_space<vmem>>, vector<1x2x128xf32>,
    return
  }
  func.func @transform_0(%arg0: i32) -> (i32, i32) {
    %c0_i32 = arith.constant 0 : i32
    %c0_i32_0 = arith.constant 0 : i32
    return %arg0, %c0_i32 : i32, i32
  }
  func.func @transform_1(%arg0: i32) -> (i32, i32) {
    %c0_i32 = arith.constant 0 : i32
    %c0_i32_0 = arith.constant 0 : i32
    %c0_i32_1 = arith.constant 0 : i32
    return %c0_i32, %c0_i32_0 : i32, i32
  }
  func.func @transform_2(%arg0: i32) -> (i32, i32) {
    %c0_i32 = arith.constant 0 : i32
    %c0_i32_0 = arith.constant 0 : i32
    %c0_i32_1 = arith.constant 0 : i32
    return %c0_i32, %c0_i32_0 : i32, i32
  }
  func.func @transform_3(%arg0: i32) -> (i32, i32, i32) {
    %c0_i32 = arith.constant 0 : i32
    %c0_i32_0 = arith.constant 0 : i32
    %c0_i32_1 = arith.constant 0 : i32
    return %arg0, %c0_i32, %c0_i32_0 : i32, i32, i32
  }
}

</mosaic_0001>

<llo_original>
// kernel: vit_embedding_extractor.1
$region0: #{vit_embedding_extractor.1}
  #allocation0 [shape = 'u32[]', space=smem, size = 0x4, offset = 0x4, fixed_abs, tag = 'smem constant byte address 0x4 - core index']
  #allocation1 [shape = 'u32[144,128]{1,0:T(1,128)}', space=vmem, size = 0x12000, scoped, tag = 'internal scratch']
  %s0 = inlined_call_operand.vmem [shape: f32[96,48], index: 0, kind: input, shape index: {}]
  %s1 = inlined_call_operand.vmem [shape: bf16[400,128], index: 1, kind: input, shape index: {}]
  %s2 = inlined_call_operand.vmem [shape: f32[43,128], index: 2, kind: input, shape index: {}]
  %s3 = inlined_call_operand.vmem [shape: f32[2,2,128], index: 3, kind: output, shape index: {}]
  %s4 = sld [smem:[#allocation0]]
  $region45: #{vit_embedding_extractor.1} parent=0
    _
  %s6 = ssub.s32 1, %s4
  %s7 = scalar_select 0, %s6, %s4
  loop: start=0, step=1, limit=4
  $region2: #{vit_embedding_extractor.1} parent=0 // loop_pre_header
    _
  $region3: #{vit_embedding_extractor.1} parent=0 // loop_header
    %s9 = sphi 0, %s13
    %p10 = scmp.ge.s32.totalorder %s9, 4
    %s19 = sphi 0, %s21
    %s22 = sphi 0, %s19
    %s23 = sphi 0, %s22
    %s39 = sphi 0, %s23
    %s43 = sphi 0, %s43
    %s45 = sphi 0, %s43
    %s46 = sphi 0, %s45
    %s60 = sphi 0, %s46
    %s64 = sphi 0, %s64
    %s66 = sphi 0, %s64
    %s67 = sphi 0, %s66
    %s81 = sphi 0, %s67
    %s87 = sphi 0, %s89
    %s90 = sphi 0, %s87
    %s91 = sphi 0, %s90
    %s107 = sphi 0, %s91
  $region4: #{vit_embedding_extractor.1} parent=0 // loop_header_branch
    %12 = sbr.rel (%p10) target = $region8
  $region5: #{vit_embedding_extractor.1} parent=0 // loop_body
    %s14 = ssub.s32 %s9, 1
    %s15 = ssub.s32 %s9, 2
    %s16 = sadd.s32 %s9, 1
    %s17 = ssub.s32 %s9, %s16
    %p18 = scmp.eq.s32.totalorder %s17, 0
    %s20 = sadd.s32 %s19, 1
    %s21 = scalar_select %p18, %s19, %s20
    %p24 = pneg %p18
    %p25 = scmp.eq.s32.totalorder %s9, 1
    %p26 = por %p24, %p25
    %p27 = scmp.ne.s32.totalorder %s19, %s22
    %p28 = scmp.eq.s32.totalorder %s9, 0
    %p29 = por %p27, %p28
    %p30 = scmp.ne.s32.totalorder %s19, %s22
    %p31 = scmp.eq.s32.totalorder %s14, 1
    %p32 = por %p30, %p31
    %p33 = scmp.ne.s32.totalorder %s22, %s23
    %p34 = scmp.eq.s32.totalorder %s14, 0
    %p35 = por %p33, %p34
    %p36 = scmp.ne.s32.totalorder %s22, %s23
    %p37 = scmp.eq.s32.totalorder %s15, 1
    %p38 = por %p36, %p37
    %p40 = scmp.ne.s32.totalorder %s23, %s39
    %p41 = scmp.eq.s32.totalorder %s15, 0
    %p42 = por %p40, %p41
    %s44 = sadd.s32 %s43, 1
    %p47 = scmp.eq.s32.totalorder %s9, 1
    %p48 = scmp.ne.s32.totalorder %s43, %s45
    %p49 = scmp.eq.s32.totalorder %s9, 0
    %p50 = por %p48, %p49
    %p51 = scmp.ne.s32.totalorder %s43, %s45
    %p52 = scmp.eq.s32.totalorder %s14, 1
    %p53 = por %p51, %p52
    %p54 = scmp.ne.s32.totalorder %s45, %s46
    %p55 = scmp.eq.s32.totalorder %s14, 0
    %p56 = por %p54, %p55
    %p57 = scmp.ne.s32.totalorder %s45, %s46
    %p58 = scmp.eq.s32.totalorder %s15, 1
    %p59 = por %p57, %p58
    %p61 = scmp.ne.s32.totalorder %s46, %s60
    %p62 = scmp.eq.s32.totalorder %s15, 0
    %p63 = por %p61, %p62
    %s65 = sadd.s32 %s64, 1
    %p68 = scmp.eq.s32.totalorder %s9, 1
    %p69 = scmp.ne.s32.totalorder %s64, %s66
    %p70 = scmp.eq.s32.totalorder %s9, 0
    %p71 = por %p69, %p70
    %p72 = scmp.ne.s32.totalorder %s64, %s66
    %p73 = scmp.eq.s32.totalorder %s14, 1
    %p74 = por %p72, %p73
    %p75 = scmp.ne.s32.totalorder %s66, %s67
    %p76 = scmp.eq.s32.totalorder %s14, 0
    %p77 = por %p75, %p76
    %p78 = scmp.ne.s32.totalorder %s66, %s67
    %p79 = scmp.eq.s32.totalorder %s15, 1
    %p80 = por %p78, %p79
    %p82 = scmp.ne.s32.totalorder %s67, %s81
    %p83 = scmp.eq.s32.totalorder %s15, 0
    %p84 = por %p82, %p83
    %s85 = ssub.s32 %s9, %s16
    %p86 = scmp.eq.s32.totalorder %s85, 0
    %s88 = sadd.s32 %s87, 1
    %s89 = scalar_select %p86, %s87, %s88
    %p92 = pneg %p86
    %p93 = scmp.eq.s32.totalorder %s9, 1
    %p94 = por %p92, %p93
    %p95 = scmp.ne.s32.totalorder %s87, %s90
    %p96 = scmp.eq.s32.totalorder %s9, 0
    %p97 = por %p95, %p96
    %p98 = scmp.ne.s32.totalorder %s87, %s90
    %p99 = scmp.eq.s32.totalorder %s14, 1
    %p100 = por %p98, %p99
    %p101 = scmp.ne.s32.totalorder %s90, %s91
    %p102 = scmp.eq.s32.totalorder %s14, 0
    %p103 = por %p101, %p102
    %p104 = scmp.ne.s32.totalorder %s90, %s91
    %p105 = scmp.eq.s32.totalorder %s15, 1
    %p106 = por %p104, %p105
    %p108 = scmp.ne.s32.totalorder %s91, %s107
    %p109 = scmp.eq.s32.totalorder %s15, 0
    %p110 = por %p108, %p109
    %p111 = scmp.le.s32.totalorder 1, %s9
    %p112 = scmp.lt.s32.totalorder %s9, 3
    %p113 = pnand %p111, %p112
    %p114 = pneg %p113
    // Predicated region
    $region9: #{vit_embedding_extractor.1} parent=5 // pred_check
      _
    $region10: #{vit_embedding_extractor.1} parent=5 // pred_check_branch
      %116 = sbr.rel (%p113) target = $region12
    $region11: #{vit_embedding_extractor.1} parent=5 // pred_region
      %s117 = ssub.s32 %s9, 1
      // Predicated region
      $region13: #{vit_embedding_extractor.1} parent=11 // pred_check
        %p118 = pneg %p56
      $region14: #{vit_embedding_extractor.1} parent=11 // pred_check_branch
        %120 = sbr.rel (%p118) target = $region16
      $region15: #{vit_embedding_extractor.1} parent=11 // pred_region
        _
      $region16: #{vit_embedding_extractor.1} parent=11 // pred_fallthru
        _
      // Predicated region
      $region17: #{vit_embedding_extractor.1} parent=11 // pred_check
        %p121 = pneg %p77
      $region18: #{vit_embedding_extractor.1} parent=11 // pred_check_branch
        %123 = sbr.rel (%p121) target = $region20
      $region19: #{vit_embedding_extractor.1} parent=11 // pred_region
        _
      $region20: #{vit_embedding_extractor.1} parent=11 // pred_fallthru
        _
    $region12: #{vit_embedding_extractor.1} parent=5 // pred_fallthru
      _
    %p124 = scmp.lt.s32.totalorder %s9, 2
    // Predicated region
    $region21: #{vit_embedding_extractor.1} parent=5 // pred_check
      %p125 = pneg %p124
    $region22: #{vit_embedding_extractor.1} parent=5 // pred_check_branch
      %127 = sbr.rel (%p125) target = $region24
    $region23: #{vit_embedding_extractor.1} parent=5 // pred_region
      // Predicated region
      $region25: #{vit_embedding_extractor.1} parent=23 // pred_check
        %p128 = pneg %p29
      $region26: #{vit_embedding_extractor.1} parent=23 // pred_check_branch
        %130 = sbr.rel (%p128) target = $region28
      $region27: #{vit_embedding_extractor.1} parent=23 // pred_region
        %s131 = smul.u32 6, %s9
        %p132 = scmp.lt.s32.totalorder %s131, 11
        %s133 = scalar_select %p132, %s131, 11
        %s134 = smul.addr %s133, 8
        %s135 = scalar_lea.vmem %s0, %s134
        %s136 = smul.u32 6, %s9
      $region28: #{vit_embedding_extractor.1} parent=23 // pred_fallthru
        _
    $region24: #{vit_embedding_extractor.1} parent=5 // pred_fallthru
      _
    %p137 = scmp.le.s32.totalorder 1, %s9
    %p138 = scmp.lt.s32.totalorder %s9, 3
    %p139 = pnand %p137, %p138
    %p140 = pneg %p139
    // Predicated region
    $region29: #{vit_embedding_extractor.1} parent=5 // pred_check
      _
    $region30: #{vit_embedding_extractor.1} parent=5 // pred_check_branch
      %142 = sbr.rel (%p139) target = $region32
    $region31: #{vit_embedding_extractor.1} parent=5 // pred_region
      %s143 = ssub.s32 %s9, 1
      %s144 = smul.u32 6, %s14
      %p145 = scmp.lt.s32.totalorder %s144, 11
      %s146 = scalar_select %p145, %s144, 11
      %s147 = smul.addr %s146, 8
      %s148 = scalar_lea.vmem %s0, %s147
      %p149 = pneg %p35
      %p150 = pneg %p32
      %p151 = pneg %p56
      %p152 = pneg %p53
      %p153 = pneg %p77
      %p154 = pneg %p74
      %p155 = pneg %p103
      %p156 = pneg %p100
      %p157 = scmp.lt.s32.totalorder %s14, 1
      %s158 = scalar_select %p157, %s14, 1
      %s159 = smul.addr %s158, 2
      %s160 = scalar_lea.vmem %s3, %s159
      %s161 = smul.u32 6, %s14
      %p162 = scmp.lt.s32.totalorder %s161, 11
      %s163 = scalar_select %p162, %s161, 11
      %s164 = smul.addr %s163, 8
      %s165 = scalar_lea.vmem %s0, %s164
      %s166 = smul.u32 6, %s14
      %p167 = scmp.lt.s32.totalorder %s14, 1
      %s168 = scalar_select %p167, %s14, 1
      %s169 = smul.addr %s168, 2
      %s170 = scalar_lea.vmem %s3, %s169
      %v172 = vld [vmem:[%s165] sm:$0xff]
      %v173 = vld [vmem:[%s165 + $0x8] sm:$0xff]
      %v174 = vld [vmem:[%s165 + $0x10] sm:$0xff]
      %v175 = vld [vmem:[%s165 + $0x18] sm:$0xff]
      %v176 = vld [vmem:[%s165 + $0x20] sm:$0xff]
      %v177 = vld [vmem:[%s165 + $0x28] sm:$0xff]
      %v178 = vpack.c.bf16 %v173, %v172
      %v179 = vpack.c.bf16 %v175, %v174
      %v180 = vpack.c.bf16 %v177, %v176
      %v181 = vld [vmem:[%s1] sm:$0xf]
      %v182 = vld [vmem:[%s1 + $0x4] sm:$0xf]
      %v183 = vld [vmem:[%s1 + $0x8] sm:$0xf]
      %v184 = vld [vmem:[%s1 + $0xc] sm:$0xf]
      %v185 = vld [vmem:[%s1 + $0x10] sm:$0xf]
      %v186 = vld [vmem:[%s1 + $0x14] sm:$0xf]
      %v187 = vld [vmem:[%s2] sm:$0xff]
      %v188 = vld [vmem:[%s2 + $0x8] sm:$0xff]
      %v189 = vld [vmem:[%s2 + $0x10] sm:$0xff]
      %v196 = vunpack.c.l.b16 %v181
      %v197 = vunpack.c.l.b16 %v182
      %v198 = vunpack.c.l.b16 %v183
      %v199 = vunpack.c.l.b16 %v184
      %v200 = vunpack.c.l.b16 %v185
      %v201 = vunpack.c.l.b16 %v186
      %v202 = vpack.c.b16 %v197, %v196
      %v203 = vpack.c.b16 %v199, %v198
      %v204 = vpack.c.b16 %v201, %v200
      %vm208 = vcmask 392192
      %v210 = vsel %vm208, %v178, 0
      %v213 = vsel %vm208, %v179, 0
      %v216 = vsel %vm208, %v180, 0
      %218 = vmatprep.subr.bf16.mxu0 0
      %219 = vmatpush1.bf16.msra.mxu0 %v202
      %220 = vmatprep.subr.bf16.mxu0 0
      %221 = vmatpush1.bf16.msra.mxu0 %v203
      %222 = vmatprep.subr.bf16.mxu0 0
      %223 = vmatpush1.bf16.msra.mxu0 %v204
      %224 = vmatprep.subr.bf16.mxu0 0
      %225 = vmatpush1.bf16.msra.mxu0 0
      %226 = vmatprep.subr.bf16.mxu0 0
      %227 = vmatpush1.bf16.msra.mxu0 0
      %228 = vmatprep.subr.bf16.mxu0 0
      %229 = vmatpush1.bf16.msra.mxu0 0
      %230 = vmatprep.subr.bf16.mxu0 0
      %231 = vmatpush1.bf16.msra.mxu0 0
      %232 = vmatprep.subr.bf16.mxu0 0
      %233 = vmatpush1.bf16.msra.mxu0 0
      %234 = vmatprep.subr.bf16.mxu0 0
      %235 = vmatpush1.bf16.msra.mxu0 0
      %236 = vmatprep.subr.bf16.mxu0 0
      %237 = vmatpush1.bf16.msra.mxu0 0
      %238 = vmatprep.subr.bf16.mxu0 0
      %239 = vmatpush1.bf16.msra.mxu0 0
      %240 = vmatprep.subr.bf16.mxu0 0
      %241 = vmatpush1.bf16.msra.mxu0 0
      %242 = vmatprep.subr.bf16.mxu0 0
      %243 = vmatpush1.bf16.msra.mxu0 0
      %244 = vmatprep.subr.bf16.mxu0 0
      %245 = vmatpush1.bf16.msra.mxu0 0
      %246 = vmatprep.subr.bf16.mxu0 0
      %247 = vmatpush1.bf16.msra.mxu0 0
      %248 = vmatprep.subr.bf16.mxu0 0
      %249 = vmatpush1.bf16.msra.mxu0 0
      %250 = vmatprep.mubr.bf16.mxu0 0
      %251 = vmatmul.mubr.bf16.gmra.mrb[0].mxu0 %v210
      %v252 = vpop.f32.mrb[0].mxu0
      %v253 = vadd.f32 %v187, %v252
      %v254 = vpop.f32.mrb[0].mxu0
      %v255 = vpop.f32.mrb[0].mxu0
      %v256 = vadd.f32 %v188, %v255
      %v257 = vpop.f32.mrb[0].mxu0
      %258 = vmatprep.mubr.bf16.mxu0 0
      %259 = vmatmul.mubr.bf16.gmra.mrb[0].mxu0 %v213
      %v260 = vpop.f32.mrb[0].mxu0
      %v261 = vadd.f32 %v189, %v260
      %v262 = vpop.f32.mrb[0].mxu0
      %v263 = vpop.f32.mrb[0].mxu0
      %v264 = vadd.f32 %v187, %v263
      %v265 = vpop.f32.mrb[0].mxu0
      %266 = vmatprep.mubr.bf16.mxu0 0
      %267 = vmatmul.mubr.bf16.gmra.mrb[0].mxu0 %v216
      %v268 = vpop.f32.mrb[0].mxu0
      %v269 = vadd.f32 %v188, %v268
      %v270 = vpop.f32.mrb[0].mxu0
      %v271 = vpop.f32.mrb[0].mxu0
      %v272 = vadd.f32 %v189, %v271
      %v273 = vpop.f32.mrb[0].mxu0
      %274 = vdwg.mxu0
      %v275 = vlaneseq
      %v276 = vand.u32 %v275, 127
      %vm277 = vcmp.lt.s32.totalorder %v276, 17
      %v278 = vsel %vm277, 0.0, -1e+30
      %v279 = vld [vmem:[%s2 + $0x18] sm:$0x1]
      %v280 = vld [vmem:[%s2 + $0x19] sm:$0x1]
      %vm281 = vcmask 261120
      %v282 = vsel %vm281, %v253, 0.0
      %283 = vadd.xlane.f32.xlu0 %v282
      %v284 = vpop.xlane.xlu0 %283
      %v285 = vsel %vm281, %v256, 0.0
      %286 = vadd.xlane.f32.xlu0 %v285
      %v287 = vpop.xlane.xlu0 %286
      %v288 = vsel %vm281, %v261, 0.0
      %289 = vadd.xlane.f32.xlu0 %v288
      %v290 = vpop.xlane.xlu0 %289
      %v291 = vsel %vm281, %v264, 0.0
      %292 = vadd.xlane.f32.xlu0 %v291
      %v293 = vpop.xlane.xlu0 %292
      %v294 = vsel %vm281, %v269, 0.0
      %295 = vadd.xlane.f32.xlu0 %v294
      %v296 = vpop.xlane.xlu0 %295
      %v297 = vsel %vm281, %v272, 0.0
      %298 = vadd.xlane.f32.xlu0 %v297
      %v299 = vpop.xlane.xlu0 %298
      %v300 = vrcp.pop 32.0
      %v301 = vmul.f32 %v284, %v300
      %v302 = vmul.f32 %v287, %v300
      %v303 = vmul.f32 %v290, %v300
      %v304 = vmul.f32 %v293, %v300
      %v305 = vmul.f32 %v296, %v300
      %v306 = vmul.f32 %v299, %v300
      %v307 = vsub.f32 %v253, %v301
      %v308 = vsub.f32 %v256, %v302
      %v309 = vsub.f32 %v261, %v303
      %v310 = vsub.f32 %v264, %v304
      %v311 = vsub.f32 %v269, %v305
      %v312 = vsub.f32 %v272, %v306
      %v313 = vmul.f32 %v307, %v307
      %v314 = vmul.f32 %v308, %v308
      %v315 = vmul.f32 %v309, %v309
      %v316 = vmul.f32 %v310, %v310
      %v317 = vmul.f32 %v311, %v311
      %v318 = vmul.f32 %v312, %v312
      %v319 = vsel %vm281, %v313, 0.0
      %320 = vadd.xlane.f32.xlu0 %v319
      %v321 = vpop.xlane.xlu0 %320
      %v322 = vsel %vm281, %v314, 0.0
      %323 = vadd.xlane.f32.xlu0 %v322
      %v324 = vpop.xlane.xlu0 %323
      %v325 = vsel %vm281, %v315, 0.0
      %326 = vadd.xlane.f32.xlu0 %v325
      %v327 = vpop.xlane.xlu0 %326
      %v328 = vsel %vm281, %v316, 0.0
      %329 = vadd.xlane.f32.xlu0 %v328
      %v330 = vpop.xlane.xlu0 %329
      %v331 = vsel %vm281, %v317, 0.0
      %332 = vadd.xlane.f32.xlu0 %v331
      %v333 = vpop.xlane.xlu0 %332
      %v334 = vsel %vm281, %v318, 0.0
      %335 = vadd.xlane.f32.xlu0 %v334
      %v336 = vpop.xlane.xlu0 %335
      %v337 = vmul.f32 %v321, %v300
      %v338 = vmul.f32 %v324, %v300
      %v339 = vmul.f32 %v327, %v300
      %v340 = vmul.f32 %v330, %v300
      %v341 = vmul.f32 %v333, %v300
      %v342 = vmul.f32 %v336, %v300
      %v343 = vadd.f32 %v337, 1e-12
      %v344 = vadd.f32 %v338, 1e-12
      %v345 = vadd.f32 %v339, 1e-12
      %v346 = vadd.f32 %v340, 1e-12
      %v347 = vadd.f32 %v341, 1e-12
      %v348 = vadd.f32 %v342, 1e-12
      %v349 = vrsqrt.pop %v343
      %v350 = vrsqrt.pop %v344
      %v351 = vrsqrt.pop %v345
      %v352 = vrsqrt.pop %v346
      %v353 = vrsqrt.pop %v347
      %v354 = vrsqrt.pop %v348
      %v355 = vmul.f32 %v307, %v349
      %v356 = vmul.f32 %v308, %v350
      %v357 = vmul.f32 %v309, %v351
      %v358 = vmul.f32 %v310, %v352
      %v359 = vmul.f32 %v311, %v353
      %v360 = vmul.f32 %v312, %v354
      %v361 = vlaneseq
      %v362 = vshrl.u32 %v361, 7
      %v363 = vsub.s32 0, %v362
      %v364 = vrot.slane %v279, %v363
      %v365 = vmul.f32 %v355, %v364
      %v366 = vmul.f32 %v356, %v364
      %v367 = vmul.f32 %v357, %v364
      %v368 = vmul.f32 %v358, %v364
      %v369 = vmul.f32 %v359, %v364
      %v370 = vmul.f32 %v360, %v364
      %v371 = vlaneseq
      %v372 = vshrl.u32 %v371, 7
      %v373 = vsub.s32 0, %v372
      %v374 = vrot.slane %v280, %v373
      %v375 = vadd.f32 %v365, %v374
      %v376 = vadd.f32 %v366, %v374
      %v377 = vadd.f32 %v367, %v374
      %v378 = vadd.f32 %v368, %v374
      %v379 = vadd.f32 %v369, %v374
      %v380 = vadd.f32 %v370, %v374
      %v381 = vpack.c.bf16 %v376, %v375
      %v382 = vpack.c.bf16 %v378, %v377
      %v383 = vpack.c.bf16 %v380, %v379
      %v384 = vld [vmem:[%s1 + $0x18] sm:$0xf]
      %v385 = vld [vmem:[%s1 + $0x1c] sm:$0xf]
      %v386 = vld [vmem:[%s1 + $0x20] sm:$0xf]
      %v387 = vld [vmem:[%s1 + $0x24] sm:$0xf]
      %v388 = vld [vmem:[%s2 + $0x1a] sm:$0x1]
      %v389 = vlaneseq
      %v390 = vshrl.u32 %v389, 7
      %v391 = vsub.s32 0, %v390
      %v392 = vrot.slane %v388, %v391
      %v397 = vunpack.c.l.b16 %v384
      %v398 = vunpack.c.l.b16 %v385
      %v399 = vunpack.c.l.b16 %v386
      %v400 = vunpack.c.l.b16 %v387
      %v401 = vpack.c.b16 %v398, %v397
      %v402 = vpack.c.b16 %v400, %v399
      %v406 = vsel %vm281, %v381, 0
      %v409 = vsel %vm281, %v382, 0
      %v412 = vsel %vm281, %v383, 0
      %414 = vmatprep.subr.bf16.mxu0 0
      %415 = vmatpush1.bf16.msra.mxu0 %v401
      %416 = vmatprep.subr.bf16.mxu0 0
      %417 = vmatpush1.bf16.msra.mxu0 %v402
      %418 = vmatprep.subr.bf16.mxu0 0
      %419 = vmatpush1.bf16.msra.mxu0 0
      %420 = vmatprep.subr.bf16.mxu0 0
      %421 = vmatpush1.bf16.msra.mxu0 0
      %422 = vmatprep.subr.bf16.mxu0 0
      %423 = vmatpush1.bf16.msra.mxu0 0
      %424 = vmatprep.subr.bf16.mxu0 0
      %425 = vmatpush1.bf16.msra.mxu0 0
      %426 = vmatprep.subr.bf16.mxu0 0
      %427 = vmatpush1.bf16.msra.mxu0 0
      %428 = vmatprep.subr.bf16.mxu0 0
      %429 = vmatpush1.bf16.msra.mxu0 0
      %430 = vmatprep.subr.bf16.mxu0 0
      %431 = vmatpush1.bf16.msra.mxu0 0
      %432 = vmatprep.subr.bf16.mxu0 0
      %433 = vmatpush1.bf16.msra.mxu0 0
      %434 = vmatprep.subr.bf16.mxu0 0
      %435 = vmatpush1.bf16.msra.mxu0 0
      %436 = vmatprep.subr.bf16.mxu0 0
      %437 = vmatpush1.bf16.msra.mxu0 0
      %438 = vmatprep.subr.bf16.mxu0 0
      %439 = vmatpush1.bf16.msra.mxu0 0
      %440 = vmatprep.subr.bf16.mxu0 0
      %441 = vmatpush1.bf16.msra.mxu0 0
      %442 = vmatprep.subr.bf16.mxu0 0
      %443 = vmatpush1.bf16.msra.mxu0 0
      %444 = vmatprep.subr.bf16.mxu0 0
      %445 = vmatpush1.bf16.msra.mxu0 0
      %446 = vmatprep.mubr.bf16.mxu0 0
      %447 = vmatmul.mubr.bf16.gmra.mrb[0].mxu0 %v406
      %v448 = vpop.f32.mrb[0].mxu0
      %v449 = vadd.f32 %v392, %v448
      %v450 = vpop.f32.mrb[0].mxu0
      %v451 = vpop.f32.mrb[0].mxu0
      %v452 = vadd.f32 %v392, %v451
      %v453 = vpop.f32.mrb[0].mxu0
      %454 = vmatprep.mubr.bf16.mxu0 0
      %455 = vmatmul.mubr.bf16.gmra.mrb[0].mxu0 %v409
      %v456 = vpop.f32.mrb[0].mxu0
      %v457 = vadd.f32 %v392, %v456
      %v458 = vpop.f32.mrb[0].mxu0
      %v459 = vpop.f32.mrb[0].mxu0
      %v460 = vadd.f32 %v392, %v459
      %v461 = vpop.f32.mrb[0].mxu0
      %462 = vmatprep.mubr.bf16.mxu0 0
      %463 = vmatmul.mubr.bf16.gmra.mrb[0].mxu0 %v412
      %v464 = vpop.f32.mrb[0].mxu0
      %v465 = vadd.f32 %v392, %v464
      %v466 = vpop.f32.mrb[0].mxu0
      %v467 = vpop.f32.mrb[0].mxu0
      %v468 = vadd.f32 %v392, %v467
      %v469 = vpop.f32.mrb[0].mxu0
      %470 = vdwg.mxu0
      %v471 = vld [vmem:[%s1 + $0x28] sm:$0xf]
      %v472 = vld [vmem:[%s1 + $0x2c] sm:$0xf]
      %v473 = vld [vmem:[%s1 + $0x30] sm:$0xf]
      %v474 = vld [vmem:[%s1 + $0x34] sm:$0xf]
      %478 = vrot.lane.b32.xlu0 %v449, 96
      %v479 = vpop.permute.xlu0 %478
      %480 = vrot.lane.b32.xlu0 %v452, 96
      %v481 = vpop.permute.xlu0 %480
      %482 = vrot.lane.b32.xlu0 %v457, 96
      %v483 = vpop.permute.xlu0 %482
      %vm484 = vcmask 64512
      %v485 = vsel %vm484, %v449, 0
      %v487 = vsel %vm484, %v452, 0
      %v489 = vsel %vm484, %v457, 0
      %v491 = vsel %vm484, %v479, 0
      %v493 = vsel %vm484, %v481, 0
      %v495 = vsel %vm484, %v483, 0
      %497 = vmatprep.subr.mxu0 0.0
      %498 = vmatpush1.xpose.msra.mxu0 %v491
      %499 = vmatprep.subr.mxu0 0.0
      %500 = vmatpush1.xpose.msra.mxu0 %v493
      %501 = vmatprep.subr.mxu0 0.0
      %502 = vmatpush1.xpose.msra.mxu0 %v495
      %503 = vmatprep.subr.mxu0 0.0
      %504 = vmatpush1.xpose.msra.mxu0 0.0
      %505 = vmatprep.subr.mxu0 0.0
      %506 = vmatpush1.xpose.msra.mxu0 0.0
      %507 = vmatprep.subr.mxu0 0.0
      %508 = vmatpush1.xpose.msra.mxu0 0.0
      %509 = vmatprep.subr.mxu0 0.0
      %510 = vmatpush1.xpose.msra.mxu0 0.0
      %511 = vmatprep.subr.mxu0 0.0
      %512 = vmatpush1.xpose.msra.mxu0 0.0
      %513 = vmatprep.subr.mxu0 0.0
      %514 = vmatpush1.xpose.msra.mxu0 0.0
      %515 = vmatprep.subr.mxu0 0.0
      %516 = vmatpush1.xpose.msra.mxu0 0.0
      %517 = vmatprep.subr.mxu0 0.0
      %518 = vmatpush1.xpose.msra.mxu0 0.0
      %519 = vmatprep.subr.mxu0 0.0
      %520 = vmatpush1.xpose.msra.mxu0 0.0
      %521 = vmatprep.subr.mxu0 0.0
      %522 = vmatpush1.xpose.msra.mxu0 0.0
      %523 = vmatprep.subr.mxu0 0.0
      %524 = vmatpush1.xpose.msra.mxu0 0.0
      %525 = vmatprep.subr.mxu0 0.0
      %526 = vmatpush1.xpose.msra.mxu0 0.0
      %527 = vmatprep.subr.mxu0 0.0
      %528 = vmatpush1.xpose.msra.mxu0 0.0
      %529 = vmatprep.subr.mxu0 0.0
      %530 = vmatpush1.xpose.msra.mxu0 0.0
      %531 = vmatprep.subr.mxu0 0.0
      %532 = vmatpush1.xpose.msra.mxu0 0.0
      %533 = vmatprep.subr.mxu0 0.0
      %534 = vmatpush1.xpose.msra.mxu0 0.0
      %535 = vmatprep.subr.mxu0 0.0
      %536 = vmatpush1.xpose.msra.mxu0 0.0
      %537 = vmatprep.subr.mxu0 0.0
      %538 = vmatpush1.xpose.msra.mxu0 0.0
      %539 = vmatprep.subr.mxu0 0.0
      %540 = vmatpush1.xpose.msra.mxu0 0.0
      %541 = vmatprep.subr.mxu0 0.0
      %542 = vmatpush1.xpose.msra.mxu0 0.0
      %543 = vmatprep.subr.mxu0 0.0
      %544 = vmatpush1.xpose.msra.mxu0 0.0
      %545 = vmatprep.subr.mxu0 0.0
      %546 = vmatpush1.xpose.msra.mxu0 0.0
      %547 = vmatprep.subr.mxu0 0.0
      %548 = vmatpush1.xpose.msra.mxu0 0.0
      %549 = vmatprep.subr.mxu0 0.0
      %550 = vmatpush1.xpose.msra.mxu0 0.0
      %551 = vmatprep.subr.mxu0 0.0
      %552 = vmatpush1.xpose.msra.mxu0 0.0
      %553 = vmatprep.subr.mxu0 0.0
      %554 = vmatpush1.xpose.msra.mxu0 0.0
      %555 = vmatprep.subr.mxu0 0.0
      %556 = vmatpush1.xpose.msra.mxu0 0.0
      %557 = vmatprep.subr.mxu0 0.0
      %558 = vmatpush1.xpose.msra.mxu0 0.0
      %559 = vmatprep.subr.mxu0 0.0
      %560 = vmatpush1.xpose.msra.mxu0 0.0
      %561 = vmatprep.mubr.f32.mxu0 0.0
      %562 = vmatmul.mubr.f32.gmra.mrb[0].mxu0 %v485
      %v563 = vpop.f32.mrb[0].mxu0
      %v564 = vadd.f32 0.0, %v563
      %v565 = vpop.f32.mrb[0].mxu0
      %566 = vmatprep.mubr.f32.mxu0 0.0
      %567 = vmatmul.mubr.f32.gmra.mrb[0].mxu0 %v487
      %v568 = vpop.f32.mrb[0].mxu0
      %v569 = vadd.f32 0.0, %v568
      %v570 = vpop.f32.mrb[0].mxu0
      %571 = vmatprep.mubr.f32.mxu0 0.0
      %572 = vmatmul.mubr.f32.gmra.mrb[0].mxu0 %v489
      %v573 = vpop.f32.mrb[0].mxu0
      %v574 = vadd.f32 0.0, %v573
      %v575 = vpop.f32.mrb[0].mxu0
      %576 = vdwg.mxu0
      %577 = vrot.lane.b32.xlu0 %v449, 120
      %v578 = vpop.permute.xlu0 %577
      %579 = vrot.lane.b32.xlu0 %v452, 120
      %v580 = vpop.permute.xlu0 %579
      %581 = vrot.lane.b32.xlu0 %v457, 120
      %v582 = vpop.permute.xlu0 %581
      %583 = vrot.lane.b32.xlu0 %v449, 88
      %v584 = vpop.permute.xlu0 %583
      %585 = vrot.lane.b32.xlu0 %v452, 88
      %v586 = vpop.permute.xlu0 %585
      %587 = vrot.lane.b32.xlu0 %v457, 88
      %v588 = vpop.permute.xlu0 %587
      %v589 = vsel %vm484, %v578, 0
      %v591 = vsel %vm484, %v580, 0
      %v593 = vsel %vm484, %v582, 0
      %v595 = vsel %vm484, %v584, 0
      %v597 = vsel %vm484, %v586, 0
      %v599 = vsel %vm484, %v588, 0
      %601 = vmatprep.subr.mxu0 0.0
      %602 = vmatpush1.xpose.msra.mxu0 %v595
      %603 = vmatprep.subr.mxu0 0.0
      %604 = vmatpush1.xpose.msra.mxu0 %v597
      %605 = vmatprep.subr.mxu0 0.0
      %606 = vmatpush1.xpose.msra.mxu0 %v599
      %607 = vmatprep.subr.mxu0 0.0
      %608 = vmatpush1.xpose.msra.mxu0 0.0
      %609 = vmatprep.subr.mxu0 0.0
      %610 = vmatpush1.xpose.msra.mxu0 0.0
      %611 = vmatprep.subr.mxu0 0.0
      %612 = vmatpush1.xpose.msra.mxu0 0.0
      %613 = vmatprep.subr.mxu0 0.0
      %614 = vmatpush1.xpose.msra.mxu0 0.0
      %615 = vmatprep.subr.mxu0 0.0
      %616 = vmatpush1.xpose.msra.mxu0 0.0
      %617 = vmatprep.subr.mxu0 0.0
      %618 = vmatpush1.xpose.msra.mxu0 0.0
      %619 = vmatprep.subr.mxu0 0.0
      %620 = vmatpush1.xpose.msra.mxu0 0.0
      %621 = vmatprep.subr.mxu0 0.0
      %622 = vmatpush1.xpose.msra.mxu0 0.0
      %623 = vmatprep.subr.mxu0 0.0
      %624 = vmatpush1.xpose.msra.mxu0 0.0
      %625 = vmatprep.subr.mxu0 0.0
      %626 = vmatpush1.xpose.msra.mxu0 0.0
      %627 = vmatprep.subr.mxu0 0.0
      %628 = vmatpush1.xpose.msra.mxu0 0.0
      %629 = vmatprep.subr.mxu0 0.0
      %630 = vmatpush1.xpose.msra.mxu0 0.0
      %631 = vmatprep.subr.mxu0 0.0
      %632 = vmatpush1.xpose.msra.mxu0 0.0
      %633 = vmatprep.subr.mxu0 0.0
      %634 = vmatpush1.xpose.msra.mxu0 0.0
      %635 = vmatprep.subr.mxu0 0.0
      %636 = vmatpush1.xpose.msra.mxu0 0.0
      %637 = vmatprep.subr.mxu0 0.0
      %638 = vmatpush1.xpose.msra.mxu0 0.0
      %639 = vmatprep.subr.mxu0 0.0
      %640 = vmatpush1.xpose.msra.mxu0 0.0
      %641 = vmatprep.subr.mxu0 0.0
      %642 = vmatpush1.xpose.msra.mxu0 0.0
      %643 = vmatprep.subr.mxu0 0.0
      %644 = vmatpush1.xpose.msra.mxu0 0.0
      %645 = vmatprep.subr.mxu0 0.0
      %646 = vmatpush1.xpose.msra.mxu0 0.0
      %647 = vmatprep.subr.mxu0 0.0
      %648 = vmatpush1.xpose.msra.mxu0 0.0
      %649 = vmatprep.subr.mxu0 0.0
      %650 = vmatpush1.xpose.msra.mxu0 0.0
      %651 = vmatprep.subr.mxu0 0.0
      %652 = vmatpush1.xpose.msra.mxu0 0.0
      %653 = vmatprep.subr.mxu0 0.0
      %654 = vmatpush1.xpose.msra.mxu0 0.0
      %655 = vmatprep.subr.mxu0 0.0
      %656 = vmatpush1.xpose.msra.mxu0 0.0
      %657 = vmatprep.subr.mxu0 0.0
      %658 = vmatpush1.xpose.msra.mxu0 0.0
      %659 = vmatprep.subr.mxu0 0.0
      %660 = vmatpush1.xpose.msra.mxu0 0.0
      %661 = vmatprep.subr.mxu0 0.0
      %662 = vmatpush1.xpose.msra.mxu0 0.0
      %663 = vmatprep.subr.mxu0 0.0
      %664 = vmatpush1.xpose.msra.mxu0 0.0
      %665 = vmatprep.mubr.f32.mxu0 0.0
      %666 = vmatmul.mubr.f32.gmra.mrb[0].mxu0 %v589
      %v667 = vpop.f32.mrb[0].mxu0
      %v668 = vadd.f32 0.0, %v667
      %v669 = vpop.f32.mrb[0].mxu0
      %670 = vmatprep.mubr.f32.mxu0 0.0
      %671 = vmatmul.mubr.f32.gmra.mrb[0].mxu0 %v591
      %v672 = vpop.f32.mrb[0].mxu0
      %v673 = vadd.f32 0.0, %v672
      %v674 = vpop.f32.mrb[0].mxu0
      %675 = vmatprep.mubr.f32.mxu0 0.0
      %676 = vmatmul.mubr.f32.gmra.mrb[0].mxu0 %v593
      %v677 = vpop.f32.mrb[0].mxu0
      %v678 = vadd.f32 0.0, %v677
      %v679 = vpop.f32.mrb[0].mxu0
      %680 = vdwg.mxu0
      %681 = vrot.lane.b32.xlu0 %v449, 112
      %v682 = vpop.permute.xlu0 %681
      %683 = vrot.lane.b32.xlu0 %v452, 112
      %v684 = vpop.permute.xlu0 %683
      %685 = vrot.lane.b32.xlu0 %v457, 112
      %v686 = vpop.permute.xlu0 %685
      %687 = vrot.lane.b32.xlu0 %v449, 80
      %v688 = vpop.permute.xlu0 %687
      %689 = vrot.lane.b32.xlu0 %v452, 80
      %v690 = vpop.permute.xlu0 %689
      %691 = vrot.lane.b32.xlu0 %v457, 80
      %v692 = vpop.permute.xlu0 %691
      %v693 = vsel %vm484, %v682, 0
      %v695 = vsel %vm484, %v684, 0
      %v697 = vsel %vm484, %v686, 0
      %v699 = vsel %vm484, %v688, 0
      %v701 = vsel %vm484, %v690, 0
      %v703 = vsel %vm484, %v692, 0
      %705 = vmatprep.subr.mxu0 0.0
      %706 = vmatpush1.xpose.msra.mxu0 %v699
      %707 = vmatprep.subr.mxu0 0.0
      %708 = vmatpush1.xpose.msra.mxu0 %v701
      %709 = vmatprep.subr.mxu0 0.0
      %710 = vmatpush1.xpose.msra.mxu0 %v703
      %711 = vmatprep.subr.mxu0 0.0
      %712 = vmatpush1.xpose.msra.mxu0 0.0
      %713 = vmatprep.subr.mxu0 0.0
      %714 = vmatpush1.xpose.msra.mxu0 0.0
      %715 = vmatprep.subr.mxu0 0.0
      %716 = vmatpush1.xpose.msra.mxu0 0.0
      %717 = vmatprep.subr.mxu0 0.0
      %718 = vmatpush1.xpose.msra.mxu0 0.0
      %719 = vmatprep.subr.mxu0 0.0
      %720 = vmatpush1.xpose.msra.mxu0 0.0
      %721 = vmatprep.subr.mxu0 0.0
      %722 = vmatpush1.xpose.msra.mxu0 0.0
      %723 = vmatprep.subr.mxu0 0.0
      %724 = vmatpush1.xpose.msra.mxu0 0.0
      %725 = vmatprep.subr.mxu0 0.0
      %726 = vmatpush1.xpose.msra.mxu0 0.0
      %727 = vmatprep.subr.mxu0 0.0
      %728 = vmatpush1.xpose.msra.mxu0 0.0
      %729 = vmatprep.subr.mxu0 0.0
      %730 = vmatpush1.xpose.msra.mxu0 0.0
      %731 = vmatprep.subr.mxu0 0.0
      %732 = vmatpush1.xpose.msra.mxu0 0.0
      %733 = vmatprep.subr.mxu0 0.0
      %734 = vmatpush1.xpose.msra.mxu0 0.0
      %735 = vmatprep.subr.mxu0 0.0
      %736 = vmatpush1.xpose.msra.mxu0 0.0
      %737 = vmatprep.subr.mxu0 0.0
      %738 = vmatpush1.xpose.msra.mxu0 0.0
      %739 = vmatprep.subr.mxu0 0.0
      %740 = vmatpush1.xpose.msra.mxu0 0.0
      %741 = vmatprep.subr.mxu0 0.0
      %742 = vmatpush1.xpose.msra.mxu0 0.0
      %743 = vmatprep.subr.mxu0 0.0
      %744 = vmatpush1.xpose.msra.mxu0 0.0
      %745 = vmatprep.subr.mxu0 0.0
      %746 = vmatpush1.xpose.msra.mxu0 0.0
      %747 = vmatprep.subr.mxu0 0.0
      %748 = vmatpush1.xpose.msra.mxu0 0.0
      %749 = vmatprep.subr.mxu0 0.0
      %750 = vmatpush1.xpose.msra.mxu0 0.0
      %751 = vmatprep.subr.mxu0 0.0
      %752 = vmatpush1.xpose.msra.mxu0 0.0
      %753 = vmatprep.subr.mxu0 0.0
      %754 = vmatpush1.xpose.msra.mxu0 0.0
      %755 = vmatprep.subr.mxu0 0.0
      %756 = vmatpush1.xpose.msra.mxu0 0.0
      %757 = vmatprep.subr.mxu0 0.0
      %758 = vmatpush1.xpose.msra.mxu0 0.0
      %759 = vmatprep.subr.mxu0 0.0
      %760 = vmatpush1.xpose.msra.mxu0 0.0
      %761 = vmatprep.subr.mxu0 0.0
      %762 = vmatpush1.xpose.msra.mxu0 0.0
      %763 = vmatprep.subr.mxu0 0.0
      %764 = vmatpush1.xpose.msra.mxu0 0.0
      %765 = vmatprep.subr.mxu0 0.0
      %766 = vmatpush1.xpose.msra.mxu0 0.0
      %767 = vmatprep.subr.mxu0 0.0
      %768 = vmatpush1.xpose.msra.mxu0 0.0
      %769 = vmatprep.mubr.f32.mxu0 0.0
      %770 = vmatmul.mubr.f32.gmra.mrb[0].mxu0 %v693
      %v771 = vpop.f32.mrb[0].mxu0
      %v772 = vadd.f32 0.0, %v771
      %v773 = vpop.f32.mrb[0].mxu0
      %774 = vmatprep.mubr.f32.mxu0 0.0
      %775 = vmatmul.mubr.f32.gmra.mrb[0].mxu0 %v695
      %v776 = vpop.f32.mrb[0].mxu0
      %v777 = vadd.f32 0.0, %v776
      %v778 = vpop.f32.mrb[0].mxu0
      %779 = vmatprep.mubr.f32.mxu0 0.0
      %780 = vmatmul.mubr.f32.gmra.mrb[0].mxu0 %v697
      %v781 = vpop.f32.mrb[0].mxu0
      %v782 = vadd.f32 0.0, %v781
      %v783 = vpop.f32.mrb[0].mxu0
      %784 = vdwg.mxu0
      %785 = vrot.lane.b32.xlu0 %v449, 104
      %v786 = vpop.permute.xlu0 %785
      %787 = vrot.lane.b32.xlu0 %v452, 104
      %v788 = vpop.permute.xlu0 %787
      %789 = vrot.lane.b32.xlu0 %v457, 104
      %v790 = vpop.permute.xlu0 %789
      %791 = vrot.lane.b32.xlu0 %v449, 72
      %v792 = vpop.permute.xlu0 %791
      %793 = vrot.lane.b32.xlu0 %v452, 72
      %v794 = vpop.permute.xlu0 %793
      %795 = vrot.lane.b32.xlu0 %v457, 72
      %v796 = vpop.permute.xlu0 %795
      %v797 = vsel %vm484, %v786, 0
      %v799 = vsel %vm484, %v788, 0
      %v801 = vsel %vm484, %v790, 0
      %v803 = vsel %vm484, %v792, 0
      %v805 = vsel %vm484, %v794, 0
      %v807 = vsel %vm484, %v796, 0
      %809 = vmatprep.subr.mxu0 0.0
      %810 = vmatpush1.xpose.msra.mxu0 %v803
      %811 = vmatprep.subr.mxu0 0.0
      %812 = vmatpush1.xpose.msra.mxu0 %v805
      %813 = vmatprep.subr.mxu0 0.0
      %814 = vmatpush1.xpose.msra.mxu0 %v807
      %815 = vmatprep.subr.mxu0 0.0
      %816 = vmatpush1.xpose.msra.mxu0 0.0
      %817 = vmatprep.subr.mxu0 0.0
      %818 = vmatpush1.xpose.msra.mxu0 0.0
      %819 = vmatprep.subr.mxu0 0.0
      %820 = vmatpush1.xpose.msra.mxu0 0.0
      %821 = vmatprep.subr.mxu0 0.0
      %822 = vmatpush1.xpose.msra.mxu0 0.0
      %823 = vmatprep.subr.mxu0 0.0
      %824 = vmatpush1.xpose.msra.mxu0 0.0
      %825 = vmatprep.subr.mxu0 0.0
      %826 = vmatpush1.xpose.msra.mxu0 0.0
      %827 = vmatprep.subr.mxu0 0.0
      %828 = vmatpush1.xpose.msra.mxu0 0.0
      %829 = vmatprep.subr.mxu0 0.0
      %830 = vmatpush1.xpose.msra.mxu0 0.0
      %831 = vmatprep.subr.mxu0 0.0
      %832 = vmatpush1.xpose.msra.mxu0 0.0
      %833 = vmatprep.subr.mxu0 0.0
      %834 = vmatpush1.xpose.msra.mxu0 0.0
      %835 = vmatprep.subr.mxu0 0.0
      %836 = vmatpush1.xpose.msra.mxu0 0.0
      %837 = vmatprep.subr.mxu0 0.0
      %838 = vmatpush1.xpose.msra.mxu0 0.0
      %839 = vmatprep.subr.mxu0 0.0
      %840 = vmatpush1.xpose.msra.mxu0 0.0
      %841 = vmatprep.subr.mxu0 0.0
      %842 = vmatpush1.xpose.msra.mxu0 0.0
      %843 = vmatprep.subr.mxu0 0.0
      %844 = vmatpush1.xpose.msra.mxu0 0.0
      %845 = vmatprep.subr.mxu0 0.0
      %846 = vmatpush1.xpose.msra.mxu0 0.0
      %847 = vmatprep.subr.mxu0 0.0
      %848 = vmatpush1.xpose.msra.mxu0 0.0
      %849 = vmatprep.subr.mxu0 0.0
      %850 = vmatpush1.xpose.msra.mxu0 0.0
      %851 = vmatprep.subr.mxu0 0.0
      %852 = vmatpush1.xpose.msra.mxu0 0.0
      %853 = vmatprep.subr.mxu0 0.0
      %854 = vmatpush1.xpose.msra.mxu0 0.0
      %855 = vmatprep.subr.mxu0 0.0
      %856 = vmatpush1.xpose.msra.mxu0 0.0
      %857 = vmatprep.subr.mxu0 0.0
      %858 = vmatpush1.xpose.msra.mxu0 0.0
      %859 = vmatprep.subr.mxu0 0.0
      %860 = vmatpush1.xpose.msra.mxu0 0.0
      %861 = vmatprep.subr.mxu0 0.0
      %862 = vmatpush1.xpose.msra.mxu0 0.0
      %863 = vmatprep.subr.mxu0 0.0
      %864 = vmatpush1.xpose.msra.mxu0 0.0
      %865 = vmatprep.subr.mxu0 0.0
      %866 = vmatpush1.xpose.msra.mxu0 0.0
      %867 = vmatprep.subr.mxu0 0.0
      %868 = vmatpush1.xpose.msra.mxu0 0.0
      %869 = vmatprep.subr.mxu0 0.0
      %870 = vmatpush1.xpose.msra.mxu0 0.0
      %871 = vmatprep.subr.mxu0 0.0
      %872 = vmatpush1.xpose.msra.mxu0 0.0
      %873 = vmatprep.mubr.f32.mxu0 0.0
      %874 = vmatmul.mubr.f32.gmra.mrb[0].mxu0 %v797
      %v875 = vpop.f32.mrb[0].mxu0
      %v876 = vadd.f32 0.0, %v875
      %v877 = vpop.f32.mrb[0].mxu0
      %878 = vmatprep.mubr.f32.mxu0 0.0
      %879 = vmatmul.mubr.f32.gmra.mrb[0].mxu0 %v799
      %v880 = vpop.f32.mrb[0].mxu0
      %v881 = vadd.f32 0.0, %v880
      %v882 = vpop.f32.mrb[0].mxu0
      %883 = vmatprep.mubr.f32.mxu0 0.0
      %884 = vmatmul.mubr.f32.gmra.mrb[0].mxu0 %v801
      %v885 = vpop.f32.mrb[0].mxu0
      %v886 = vadd.f32 0.0, %v885
      %v887 = vpop.f32.mrb[0].mxu0
      %888 = vdwg.mxu0
      %v889 = vadd.f32 %v564, %v278
      %v890 = vadd.f32 %v569, %v278
      %v891 = vadd.f32 %v574, %v278
      %v892 = vadd.f32 %v668, %v278
      %v893 = vadd.f32 %v673, %v278
      %v894 = vadd.f32 %v678, %v278
      %v895 = vadd.f32 %v772, %v278
      %v896 = vadd.f32 %v777, %v278
      %v897 = vadd.f32 %v782, %v278
      %v898 = vadd.f32 %v876, %v278
      %v899 = vadd.f32 %v881, %v278
      %v900 = vadd.f32 %v886, %v278
      %vm901 = vcmask 195584
      %v902 = vsel %vm901, %v889, -inf
      %903 = vmax.xlane.f32.xlu0 %v902
      %v904 = vpop.xlane.xlu0 %903
      %v905 = vsel %vm901, %v890, -inf
      %906 = vmax.xlane.f32.xlu0 %v905
      %v907 = vpop.xlane.xlu0 %906
      %v908 = vsel %vm901, %v891, -inf
      %909 = vmax.xlane.f32.xlu0 %v908
      %v910 = vpop.xlane.xlu0 %909
      %v911 = vsel %vm901, %v892, -inf
      %912 = vmax.xlane.f32.xlu0 %v911
      %v913 = vpop.xlane.xlu0 %912
      %v914 = vsel %vm901, %v893, -inf
      %915 = vmax.xlane.f32.xlu0 %v914
      %v916 = vpop.xlane.xlu0 %915
      %v917 = vsel %vm901, %v894, -inf
      %918 = vmax.xlane.f32.xlu0 %v917
      %v919 = vpop.xlane.xlu0 %918
      %v920 = vsel %vm901, %v895, -inf
      %921 = vmax.xlane.f32.xlu0 %v920
      %v922 = vpop.xlane.xlu0 %921
      %v923 = vsel %vm901, %v896, -inf
      %924 = vmax.xlane.f32.xlu0 %v923
      %v925 = vpop.xlane.xlu0 %924
      %v926 = vsel %vm901, %v897, -inf
      %927 = vmax.xlane.f32.xlu0 %v926
      %v928 = vpop.xlane.xlu0 %927
      %v929 = vsel %vm901, %v898, -inf
      %930 = vmax.xlane.f32.xlu0 %v929
      %v931 = vpop.xlane.xlu0 %930
      %v932 = vsel %vm901, %v899, -inf
      %933 = vmax.xlane.f32.xlu0 %v932
      %v934 = vpop.xlane.xlu0 %933
      %v935 = vsel %vm901, %v900, -inf
      %936 = vmax.xlane.f32.xlu0 %v935
      %v937 = vpop.xlane.xlu0 %936
      %v938 = vsub.f32 %v889, %v904
      %v939 = vsub.f32 %v890, %v907
      %v940 = vsub.f32 %v891, %v910
      %v941 = vsub.f32 %v892, %v913
      %v942 = vsub.f32 %v893, %v916
      %v943 = vsub.f32 %v894, %v919
      %v944 = vsub.f32 %v895, %v922
      %v945 = vsub.f32 %v896, %v925
      %v946 = vsub.f32 %v897, %v928
      %v947 = vsub.f32 %v898, %v931
      %v948 = vsub.f32 %v899, %v934
      %v949 = vsub.f32 %v900, %v937
      %v950 = vmul.f32 %v938, 1.442695
      %v951 = vpow.pop %v950
      %v952 = vmul.f32 %v939, 1.442695
      %v953 = vpow.pop %v952
      %v954 = vmul.f32 %v940, 1.442695
      %v955 = vpow.pop %v954
      %v956 = vmul.f32 %v941, 1.442695
      %v957 = vpow.pop %v956
      %v958 = vmul.f32 %v942, 1.442695
      %v959 = vpow.pop %v958
      %v960 = vmul.f32 %v943, 1.442695
      %v961 = vpow.pop %v960
      %v962 = vmul.f32 %v944, 1.442695
      %v963 = vpow.pop %v962
      %v964 = vmul.f32 %v945, 1.442695
      %v965 = vpow.pop %v964
      %v966 = vmul.f32 %v946, 1.442695
      %v967 = vpow.pop %v966
      %v968 = vmul.f32 %v947, 1.442695
      %v969 = vpow.pop %v968
      %v970 = vmul.f32 %v948, 1.442695
      %v971 = vpow.pop %v970
      %v972 = vmul.f32 %v949, 1.442695
      %v973 = vpow.pop %v972
      %v974 = vsel %vm901, %v951, 0.0
      %975 = vadd.xlane.f32.xlu0 %v974
      %v976 = vpop.xlane.xlu0 %975
      %v977 = vsel %vm901, %v953, 0.0
      %978 = vadd.xlane.f32.xlu0 %v977
      %v979 = vpop.xlane.xlu0 %978
      %v980 = vsel %vm901, %v955, 0.0
      %981 = vadd.xlane.f32.xlu0 %v980
      %v982 = vpop.xlane.xlu0 %981
      %v983 = vsel %vm901, %v957, 0.0
      %984 = vadd.xlane.f32.xlu0 %v983
      %v985 = vpop.xlane.xlu0 %984
      %v986 = vsel %vm901, %v959, 0.0
      %987 = vadd.xlane.f32.xlu0 %v986
      %v988 = vpop.xlane.xlu0 %987
      %v989 = vsel %vm901, %v961, 0.0
      %990 = vadd.xlane.f32.xlu0 %v989
      %v991 = vpop.xlane.xlu0 %990
      %v992 = vsel %vm901, %v963, 0.0
      %993 = vadd.xlane.f32.xlu0 %v992
      %v994 = vpop.xlane.xlu0 %993
      %v995 = vsel %vm901, %v965, 0.0
      %996 = vadd.xlane.f32.xlu0 %v995
      %v997 = vpop.xlane.xlu0 %996
      %v998 = vsel %vm901, %v967, 0.0
      %999 = vadd.xlane.f32.xlu0 %v998
      %v1000 = vpop.xlane.xlu0 %999
      %v1001 = vsel %vm901, %v969, 0.0
      %1002 = vadd.xlane.f32.xlu0 %v1001
      %v1003 = vpop.xlane.xlu0 %1002
      %v1004 = vsel %vm901, %v971, 0.0
      %1005 = vadd.xlane.f32.xlu0 %v1004
      %v1006 = vpop.xlane.xlu0 %1005
      %v1007 = vsel %vm901, %v973, 0.0
      %1008 = vadd.xlane.f32.xlu0 %v1007
      %v1009 = vpop.xlane.xlu0 %1008
      %v1010 = vrcp.pop %v976
      %v1011 = vrcp.pop %v979
      %v1012 = vrcp.pop %v982
      %v1013 = vrcp.pop %v985
      %v1014 = vrcp.pop %v988
      %v1015 = vrcp.pop %v991
      %v1016 = vrcp.pop %v994
      %v1017 = vrcp.pop %v997
      %v1018 = vrcp.pop %v1000
      %v1019 = vrcp.pop %v1003
      %v1020 = vrcp.pop %v1006
      %v1021 = vrcp.pop %v1009
      %1022 = vrot.lane.b32.xlu0 %v449, 64
      %v1023 = vpop.permute.xlu0 %1022
      %1024 = vrot.lane.b32.xlu0 %v452, 64
      %v1025 = vpop.permute.xlu0 %1024
      %1026 = vrot.lane.b32.xlu0 %v457, 64
      %v1027 = vpop.permute.xlu0 %1026
      %v1032 = vsel %vm901, %v951, 0
      %v1035 = vsel %vm901, %v953, 0
      %v1038 = vsel %vm901, %v955, 0
      %1040 = vmatprep.subr.mxu0 0.0
      %1041 = vmatpush1.msra.mxu0 %v1023
      %1042 = vmatprep.subr.mxu0 0.0
      %1043 = vmatpush1.msra.mxu0 %v1025
      %1044 = vmatprep.subr.mxu0 0.0
      %1045 = vmatpush1.msra.mxu0 %v1027
      %1046 = vmatprep.subr.mxu0 0.0
      %1047 = vmatpush1.msra.mxu0 0.0
      %1048 = vmatprep.subr.mxu0 0.0
      %1049 = vmatpush1.msra.mxu0 0.0
      %1050 = vmatprep.subr.mxu0 0.0
      %1051 = vmatpush1.msra.mxu0 0.0
      %1052 = vmatprep.subr.mxu0 0.0
      %1053 = vmatpush1.msra.mxu0 0.0
      %1054 = vmatprep.subr.mxu0 0.0
      %1055 = vmatpush1.msra.mxu0 0.0
      %1056 = vmatprep.subr.mxu0 0.0
      %1057 = vmatpush1.msra.mxu0 0.0
      %1058 = vmatprep.subr.mxu0 0.0
      %1059 = vmatpush1.msra.mxu0 0.0
      %1060 = vmatprep.subr.mxu0 0.0
      %1061 = vmatpush1.msra.mxu0 0.0
      %1062 = vmatprep.subr.mxu0 0.0
      %1063 = vmatpush1.msra.mxu0 0.0
      %1064 = vmatprep.subr.mxu0 0.0
      %1065 = vmatpush1.msra.mxu0 0.0
      %1066 = vmatprep.subr.mxu0 0.0
      %1067 = vmatpush1.msra.mxu0 0.0
      %1068 = vmatprep.subr.mxu0 0.0
      %1069 = vmatpush1.msra.mxu0 0.0
      %1070 = vmatprep.subr.mxu0 0.0
      %1071 = vmatpush1.msra.mxu0 0.0
      %1072 = vmatprep.subr.mxu0 0.0
      %1073 = vmatpush1.msra.mxu0 0.0
      %1074 = vmatprep.subr.mxu0 0.0
      %1075 = vmatpush1.msra.mxu0 0.0
      %1076 = vmatprep.subr.mxu0 0.0
      %1077 = vmatpush1.msra.mxu0 0.0
      %1078 = vmatprep.subr.mxu0 0.0
      %1079 = vmatpush1.msra.mxu0 0.0
      %1080 = vmatprep.subr.mxu0 0.0
      %1081 = vmatpush1.msra.mxu0 0.0
      %1082 = vmatprep.subr.mxu0 0.0
      %1083 = vmatpush1.msra.mxu0 0.0
      %1084 = vmatprep.subr.mxu0 0.0
      %1085 = vmatpush1.msra.mxu0 0.0
      %1086 = vmatprep.subr.mxu0 0.0
      %1087 = vmatpush1.msra.mxu0 0.0
      %1088 = vmatprep.subr.mxu0 0.0
      %1089 = vmatpush1.msra.mxu0 0.0
      %1090 = vmatprep.subr.mxu0 0.0
      %1091 = vmatpush1.msra.mxu0 0.0
      %1092 = vmatprep.subr.mxu0 0.0
      %1093 = vmatpush1.msra.mxu0 0.0
      %1094 = vmatprep.subr.mxu0 0.0
      %1095 = vmatpush1.msra.mxu0 0.0
      %1096 = vmatprep.subr.mxu0 0.0
      %1097 = vmatpush1.msra.mxu0 0.0
      %1098 = vmatprep.subr.mxu0 0.0
      %1099 = vmatpush1.msra.mxu0 0.0
      %1100 = vmatprep.subr.mxu0 0.0
      %1101 = vmatpush1.msra.mxu0 0.0
      %1102 = vmatprep.subr.mxu0 0.0
      %1103 = vmatpush1.msra.mxu0 0.0
      %1104 = vmatprep.mubr.f32.mxu0 0.0
      %1105 = vmatmul.mubr.f32.gmra.mrb[0].mxu0 %v1032
      %v1106 = vpop.f32.mrb[0].mxu0
      %v1107 = vadd.f32 0.0, %v1106
      %v1108 = vpop.f32.mrb[0].mxu0
      %1109 = vmatprep.mubr.f32.mxu0 0.0
      %1110 = vmatmul.mubr.f32.gmra.mrb[0].mxu0 %v1035
      %v1111 = vpop.f32.mrb[0].mxu0
      %v1112 = vadd.f32 0.0, %v1111
      %v1113 = vpop.f32.mrb[0].mxu0
      %1114 = vmatprep.mubr.f32.mxu0 0.0
      %1115 = vmatmul.mubr.f32.gmra.mrb[0].mxu0 %v1038
      %v1116 = vpop.f32.mrb[0].mxu0
      %v1117 = vadd.f32 0.0, %v1116
      %v1118 = vpop.f32.mrb[0].mxu0
      %1119 = vdwg.mxu0
      %v1120 = vmul.f32 %v1107, %v1010
      %v1121 = vmul.f32 %v1112, %v1011
      %v1122 = vmul.f32 %v1117, %v1012
      %1123 = vrot.lane.b32.xlu0 %v449, 56
      %v1124 = vpop.permute.xlu0 %1123
      %1125 = vrot.lane.b32.xlu0 %v452, 56
      %v1126 = vpop.permute.xlu0 %1125
      %1127 = vrot.lane.b32.xlu0 %v457, 56
      %v1128 = vpop.permute.xlu0 %1127
      %v1133 = vsel %vm901, %v957, 0
      %v1136 = vsel %vm901, %v959, 0
      %v1139 = vsel %vm901, %v961, 0
      %1141 = vmatprep.subr.mxu0 0.0
      %1142 = vmatpush1.msra.mxu0 %v1124
      %1143 = vmatprep.subr.mxu0 0.0
      %1144 = vmatpush1.msra.mxu0 %v1126
      %1145 = vmatprep.subr.mxu0 0.0
      %1146 = vmatpush1.msra.mxu0 %v1128
      %1147 = vmatprep.subr.mxu0 0.0
      %1148 = vmatpush1.msra.mxu0 0.0
      %1149 = vmatprep.subr.mxu0 0.0
      %1150 = vmatpush1.msra.mxu0 0.0
      %1151 = vmatprep.subr.mxu0 0.0
      %1152 = vmatpush1.msra.mxu0 0.0
      %1153 = vmatprep.subr.mxu0 0.0
      %1154 = vmatpush1.msra.mxu0 0.0
      %1155 = vmatprep.subr.mxu0 0.0
      %1156 = vmatpush1.msra.mxu0 0.0
      %1157 = vmatprep.subr.mxu0 0.0
      %1158 = vmatpush1.msra.mxu0 0.0
      %1159 = vmatprep.subr.mxu0 0.0
      %1160 = vmatpush1.msra.mxu0 0.0
      %1161 = vmatprep.subr.mxu0 0.0
      %1162 = vmatpush1.msra.mxu0 0.0
      %1163 = vmatprep.subr.mxu0 0.0
      %1164 = vmatpush1.msra.mxu0 0.0
      %1165 = vmatprep.subr.mxu0 0.0
      %1166 = vmatpush1.msra.mxu0 0.0
      %1167 = vmatprep.subr.mxu0 0.0
      %1168 = vmatpush1.msra.mxu0 0.0
      %1169 = vmatprep.subr.mxu0 0.0
      %1170 = vmatpush1.msra.mxu0 0.0
      %1171 = vmatprep.subr.mxu0 0.0
      %1172 = vmatpush1.msra.mxu0 0.0
      %1173 = vmatprep.subr.mxu0 0.0
      %1174 = vmatpush1.msra.mxu0 0.0
      %1175 = vmatprep.subr.mxu0 0.0
      %1176 = vmatpush1.msra.mxu0 0.0
      %1177 = vmatprep.subr.mxu0 0.0
      %1178 = vmatpush1.msra.mxu0 0.0
      %1179 = vmatprep.subr.mxu0 0.0
      %1180 = vmatpush1.msra.mxu0 0.0
      %1181 = vmatprep.subr.mxu0 0.0
      %1182 = vmatpush1.msra.mxu0 0.0
      %1183 = vmatprep.subr.mxu0 0.0
      %1184 = vmatpush1.msra.mxu0 0.0
      %1185 = vmatprep.subr.mxu0 0.0
      %1186 = vmatpush1.msra.mxu0 0.0
      %1187 = vmatprep.subr.mxu0 0.0
      %1188 = vmatpush1.msra.mxu0 0.0
      %1189 = vmatprep.subr.mxu0 0.0
      %1190 = vmatpush1.msra.mxu0 0.0
      %1191 = vmatprep.subr.mxu0 0.0
      %1192 = vmatpush1.msra.mxu0 0.0
      %1193 = vmatprep.subr.mxu0 0.0
      %1194 = vmatpush1.msra.mxu0 0.0
      %1195 = vmatprep.subr.mxu0 0.0
      %1196 = vmatpush1.msra.mxu0 0.0
      %1197 = vmatprep.subr.mxu0 0.0
      %1198 = vmatpush1.msra.mxu0 0.0
      %1199 = vmatprep.subr.mxu0 0.0
      %1200 = vmatpush1.msra.mxu0 0.0
      %1201 = vmatprep.subr.mxu0 0.0
      %1202 = vmatpush1.msra.mxu0 0.0
      %1203 = vmatprep.subr.mxu0 0.0
      %1204 = vmatpush1.msra.mxu0 0.0
      %1205 = vmatprep.mubr.f32.mxu0 0.0
      %1206 = vmatmul.mubr.f32.gmra.mrb[0].mxu0 %v1133
      %v1207 = vpop.f32.mrb[0].mxu0
      %v1208 = vadd.f32 0.0, %v1207
      %v1209 = vpop.f32.mrb[0].mxu0
      %1210 = vmatprep.mubr.f32.mxu0 0.0
      %1211 = vmatmul.mubr.f32.gmra.mrb[0].mxu0 %v1136
      %v1212 = vpop.f32.mrb[0].mxu0
      %v1213 = vadd.f32 0.0, %v1212
      %v1214 = vpop.f32.mrb[0].mxu0
      %1215 = vmatprep.mubr.f32.mxu0 0.0
      %1216 = vmatmul.mubr.f32.gmra.mrb[0].mxu0 %v1139
      %v1217 = vpop.f32.mrb[0].mxu0
      %v1218 = vadd.f32 0.0, %v1217
      %v1219 = vpop.f32.mrb[0].mxu0
      %1220 = vdwg.mxu0
      %v1221 = vmul.f32 %v1208, %v1013
      %v1222 = vmul.f32 %v1213, %v1014
      %v1223 = vmul.f32 %v1218, %v1015
      %1224 = vrot.lane.b32.xlu0 %v449, 48
      %v1225 = vpop.permute.xlu0 %1224
      %1226 = vrot.lane.b32.xlu0 %v452, 48
      %v1227 = vpop.permute.xlu0 %1226
      %1228 = vrot.lane.b32.xlu0 %v457, 48
      %v1229 = vpop.permute.xlu0 %1228
      %v1234 = vsel %vm901, %v963, 0
      %v1237 = vsel %vm901, %v965, 0
      %v1240 = vsel %vm901, %v967, 0
      %1242 = vmatprep.subr.mxu0 0.0
      %1243 = vmatpush1.msra.mxu0 %v1225
      %1244 = vmatprep.subr.mxu0 0.0
      %1245 = vmatpush1.msra.mxu0 %v1227
      %1246 = vmatprep.subr.mxu0 0.0
      %1247 = vmatpush1.msra.mxu0 %v1229
      %1248 = vmatprep.subr.mxu0 0.0
      %1249 = vmatpush1.msra.mxu0 0.0
      %1250 = vmatprep.subr.mxu0 0.0
      %1251 = vmatpush1.msra.mxu0 0.0
      %1252 = vmatprep.subr.mxu0 0.0
      %1253 = vmatpush1.msra.mxu0 0.0
      %1254 = vmatprep.subr.mxu0 0.0
      %1255 = vmatpush1.msra.mxu0 0.0
      %1256 = vmatprep.subr.mxu0 0.0
      %1257 = vmatpush1.msra.mxu0 0.0
      %1258 = vmatprep.subr.mxu0 0.0
      %1259 = vmatpush1.msra.mxu0 0.0
      %1260 = vmatprep.subr.mxu0 0.0
      %1261 = vmatpush1.msra.mxu0 0.0
      %1262 = vmatprep.subr.mxu0 0.0
      %1263 = vmatpush1.msra.mxu0 0.0
      %1264 = vmatprep.subr.mxu0 0.0
      %1265 = vmatpush1.msra.mxu0 0.0
      %1266 = vmatprep.subr.mxu0 0.0
      %1267 = vmatpush1.msra.mxu0 0.0
      %1268 = vmatprep.subr.mxu0 0.0
      %1269 = vmatpush1.msra.mxu0 0.0
      %1270 = vmatprep.subr.mxu0 0.0
      %1271 = vmatpush1.msra.mxu0 0.0
      %1272 = vmatprep.subr.mxu0 0.0
      %1273 = vmatpush1.msra.mxu0 0.0
      %1274 = vmatprep.subr.mxu0 0.0
      %1275 = vmatpush1.msra.mxu0 0.0
      %1276 = vmatprep.subr.mxu0 0.0
      %1277 = vmatpush1.msra.mxu0 0.0
      %1278 = vmatprep.subr.mxu0 0.0
      %1279 = vmatpush1.msra.mxu0 0.0
      %1280 = vmatprep.subr.mxu0 0.0
      %1281 = vmatpush1.msra.mxu0 0.0
      %1282 = vmatprep.subr.mxu0 0.0
      %1283 = vmatpush1.msra.mxu0 0.0
      %1284 = vmatprep.subr.mxu0 0.0
      %1285 = vmatpush1.msra.mxu0 0.0
      %1286 = vmatprep.subr.mxu0 0.0
      %1287 = vmatpush1.msra.mxu0 0.0
      %1288 = vmatprep.subr.mxu0 0.0
      %1289 = vmatpush1.msra.mxu0 0.0
      %1290 = vmatprep.subr.mxu0 0.0
      %1291 = vmatpush1.msra.mxu0 0.0
      %1292 = vmatprep.subr.mxu0 0.0
      %1293 = vmatpush1.msra.mxu0 0.0
      %1294 = vmatprep.subr.mxu0 0.0
      %1295 = vmatpush1.msra.mxu0 0.0
      %1296 = vmatprep.subr.mxu0 0.0
      %1297 = vmatpush1.msra.mxu0 0.0
      %1298 = vmatprep.subr.mxu0 0.0
      %1299 = vmatpush1.msra.mxu0 0.0
      %1300 = vmatprep.subr.mxu0 0.0
      %1301 = vmatpush1.msra.mxu0 0.0
      %1302 = vmatprep.subr.mxu0 0.0
      %1303 = vmatpush1.msra.mxu0 0.0
      %1304 = vmatprep.subr.mxu0 0.0
      %1305 = vmatpush1.msra.mxu0 0.0
      %1306 = vmatprep.mubr.f32.mxu0 0.0
      %1307 = vmatmul.mubr.f32.gmra.mrb[0].mxu0 %v1234
      %v1308 = vpop.f32.mrb[0].mxu0
      %v1309 = vadd.f32 0.0, %v1308
      %v1310 = vpop.f32.mrb[0].mxu0
      %1311 = vmatprep.mubr.f32.mxu0 0.0
      %1312 = vmatmul.mubr.f32.gmra.mrb[0].mxu0 %v1237
      %v1313 = vpop.f32.mrb[0].mxu0
      %v1314 = vadd.f32 0.0, %v1313
      %v1315 = vpop.f32.mrb[0].mxu0
      %1316 = vmatprep.mubr.f32.mxu0 0.0
      %1317 = vmatmul.mubr.f32.gmra.mrb[0].mxu0 %v1240
      %v1318 = vpop.f32.mrb[0].mxu0
      %v1319 = vadd.f32 0.0, %v1318
      %v1320 = vpop.f32.mrb[0].mxu0
      %1321 = vdwg.mxu0
      %v1322 = vmul.f32 %v1309, %v1016
      %v1323 = vmul.f32 %v1314, %v1017
      %v1324 = vmul.f32 %v1319, %v1018
      %1325 = vrot.lane.b32.xlu0 %v449, 40
      %v1326 = vpop.permute.xlu0 %1325
      %1327 = vrot.lane.b32.xlu0 %v452, 40
      %v1328 = vpop.permute.xlu0 %1327
      %1329 = vrot.lane.b32.xlu0 %v457, 40
      %v1330 = vpop.permute.xlu0 %1329
      %v1335 = vsel %vm901, %v969, 0
      %v1338 = vsel %vm901, %v971, 0
      %v1341 = vsel %vm901, %v973, 0
      %1343 = vmatprep.subr.mxu0 0.0
      %1344 = vmatpush1.msra.mxu0 %v1326
      %1345 = vmatprep.subr.mxu0 0.0
      %1346 = vmatpush1.msra.mxu0 %v1328
      %1347 = vmatprep.subr.mxu0 0.0
      %1348 = vmatpush1.msra.mxu0 %v1330
      %1349 = vmatprep.subr.mxu0 0.0
      %1350 = vmatpush1.msra.mxu0 0.0
      %1351 = vmatprep.subr.mxu0 0.0
      %1352 = vmatpush1.msra.mxu0 0.0
      %1353 = vmatprep.subr.mxu0 0.0
      %1354 = vmatpush1.msra.mxu0 0.0
      %1355 = vmatprep.subr.mxu0 0.0
      %1356 = vmatpush1.msra.mxu0 0.0
      %1357 = vmatprep.subr.mxu0 0.0
      %1358 = vmatpush1.msra.mxu0 0.0
      %1359 = vmatprep.subr.mxu0 0.0
      %1360 = vmatpush1.msra.mxu0 0.0
      %1361 = vmatprep.subr.mxu0 0.0
      %1362 = vmatpush1.msra.mxu0 0.0
      %1363 = vmatprep.subr.mxu0 0.0
      %1364 = vmatpush1.msra.mxu0 0.0
      %1365 = vmatprep.subr.mxu0 0.0
      %1366 = vmatpush1.msra.mxu0 0.0
      %1367 = vmatprep.subr.mxu0 0.0
      %1368 = vmatpush1.msra.mxu0 0.0
      %1369 = vmatprep.subr.mxu0 0.0
      %1370 = vmatpush1.msra.mxu0 0.0
      %1371 = vmatprep.subr.mxu0 0.0
      %1372 = vmatpush1.msra.mxu0 0.0
      %1373 = vmatprep.subr.mxu0 0.0
      %1374 = vmatpush1.msra.mxu0 0.0
      %1375 = vmatprep.subr.mxu0 0.0
      %1376 = vmatpush1.msra.mxu0 0.0
      %1377 = vmatprep.subr.mxu0 0.0
      %1378 = vmatpush1.msra.mxu0 0.0
      %1379 = vmatprep.subr.mxu0 0.0
      %1380 = vmatpush1.msra.mxu0 0.0
      %1381 = vmatprep.subr.mxu0 0.0
      %1382 = vmatpush1.msra.mxu0 0.0
      %1383 = vmatprep.subr.mxu0 0.0
      %1384 = vmatpush1.msra.mxu0 0.0
      %1385 = vmatprep.subr.mxu0 0.0
      %1386 = vmatpush1.msra.mxu0 0.0
      %1387 = vmatprep.subr.mxu0 0.0
      %1388 = vmatpush1.msra.mxu0 0.0
      %1389 = vmatprep.subr.mxu0 0.0
      %1390 = vmatpush1.msra.mxu0 0.0
      %1391 = vmatprep.subr.mxu0 0.0
      %1392 = vmatpush1.msra.mxu0 0.0
      %1393 = vmatprep.subr.mxu0 0.0
      %1394 = vmatpush1.msra.mxu0 0.0
      %1395 = vmatprep.subr.mxu0 0.0
      %1396 = vmatpush1.msra.mxu0 0.0
      %1397 = vmatprep.subr.mxu0 0.0
      %1398 = vmatpush1.msra.mxu0 0.0
      %1399 = vmatprep.subr.mxu0 0.0
      %1400 = vmatpush1.msra.mxu0 0.0
      %1401 = vmatprep.subr.mxu0 0.0
      %1402 = vmatpush1.msra.mxu0 0.0
      %1403 = vmatprep.subr.mxu0 0.0
      %1404 = vmatpush1.msra.mxu0 0.0
      %1405 = vmatprep.subr.mxu0 0.0
      %1406 = vmatpush1.msra.mxu0 0.0
      %1407 = vmatprep.mubr.f32.mxu0 0.0
      %1408 = vmatmul.mubr.f32.gmra.mrb[0].mxu0 %v1335
      %v1409 = vpop.f32.mrb[0].mxu0
      %v1410 = vadd.f32 0.0, %v1409
      %v1411 = vpop.f32.mrb[0].mxu0
      %1412 = vmatprep.mubr.f32.mxu0 0.0
      %1413 = vmatmul.mubr.f32.gmra.mrb[0].mxu0 %v1338
      %v1414 = vpop.f32.mrb[0].mxu0
      %v1415 = vadd.f32 0.0, %v1414
      %v1416 = vpop.f32.mrb[0].mxu0
      %1417 = vmatprep.mubr.f32.mxu0 0.0
      %1418 = vmatmul.mubr.f32.gmra.mrb[0].mxu0 %v1341
      %v1419 = vpop.f32.mrb[0].mxu0
      %v1420 = vadd.f32 0.0, %v1419
      %v1421 = vpop.f32.mrb[0].mxu0
      %1422 = vdwg.mxu0
      %v1423 = vmul.f32 %v1410, %v1019
      %v1424 = vmul.f32 %v1415, %v1020
      %v1425 = vmul.f32 %v1420, %v1021
      %1429 = vrot.lane.b32.xlu0 %v1221, 8
      %v1430 = vpop.permute.xlu0 %1429
      %1431 = vrot.lane.b32.xlu0 %v1222, 8
      %v1432 = vpop.permute.xlu0 %1431
      %1433 = vrot.lane.b32.xlu0 %v1223, 8
      %v1434 = vpop.permute.xlu0 %1433
      %1441 = vrot.lane.b32.xlu0 %v1322, 16
      %v1442 = vpop.permute.xlu0 %1441
      %1443 = vrot.lane.b32.xlu0 %v1323, 16
      %v1444 = vpop.permute.xlu0 %1443
      %1445 = vrot.lane.b32.xlu0 %v1324, 16
      %v1446 = vpop.permute.xlu0 %1445
      %1453 = vrot.lane.b32.xlu0 %v1423, 24
      %v1454 = vpop.permute.xlu0 %1453
      %1455 = vrot.lane.b32.xlu0 %v1424, 24
      %v1456 = vpop.permute.xlu0 %1455
      %1457 = vrot.lane.b32.xlu0 %v1425, 24
      %v1458 = vpop.permute.xlu0 %1457
      %v1462 = vsel %vm484, %v1120, %v1430
      %v1463 = vsel %vm484, %v1121, %v1432
      %v1464 = vsel %vm484, %v1122, %v1434
      %vm1465 = vcmask 130048
      %v1466 = vsel %vm1465, %v1462, %v1442
      %v1467 = vsel %vm1465, %v1463, %v1444
      %v1468 = vsel %vm1465, %v1464, %v1446
      %v1469 = vsel %vm901, %v1466, %v1454
      %v1470 = vsel %vm901, %v1467, %v1456
      %v1471 = vsel %vm901, %v1468, %v1458
      %v1472 = vpack.c.bf16 %v1470, %v1469
      %v1473 = vpack.c.bf16 %v1471, %v1471
      %v1478 = vunpack.c.l.b16 %v471
      %v1479 = vunpack.c.l.b16 %v472
      %v1480 = vunpack.c.l.b16 %v473
      %v1481 = vunpack.c.l.b16 %v474
      %v1482 = vpack.c.b16 %v1479, %v1478
      %v1483 = vpack.c.b16 %v1481, %v1480
      %v1487 = vsel %vm281, %v1472, 0
      %v1490 = vsel %vm281, %v1473, 0
      %1492 = vmatprep.subr.bf16.mxu0 0
      %1493 = vmatpush1.bf16.msra.mxu0 %v1482
      %1494 = vmatprep.subr.bf16.mxu0 0
      %1495 = vmatpush1.bf16.msra.mxu0 %v1483
      %1496 = vmatprep.subr.bf16.mxu0 0
      %1497 = vmatpush1.bf16.msra.mxu0 0
      %1498 = vmatprep.subr.bf16.mxu0 0
      %1499 = vmatpush1.bf16.msra.mxu0 0
      %1500 = vmatprep.subr.bf16.mxu0 0
      %1501 = vmatpush1.bf16.msra.mxu0 0
      %1502 = vmatprep.subr.bf16.mxu0 0
      %1503 = vmatpush1.bf16.msra.mxu0 0
      %1504 = vmatprep.subr.bf16.mxu0 0
      %1505 = vmatpush1.bf16.msra.mxu0 0
      %1506 = vmatprep.subr.bf16.mxu0 0
      %1507 = vmatpush1.bf16.msra.mxu0 0
      %1508 = vmatprep.subr.bf16.mxu0 0
      %1509 = vmatpush1.bf16.msra.mxu0 0
      %1510 = vmatprep.subr.bf16.mxu0 0
      %1511 = vmatpush1.bf16.msra.mxu0 0
      %1512 = vmatprep.subr.bf16.mxu0 0
      %1513 = vmatpush1.bf16.msra.mxu0 0
      %1514 = vmatprep.subr.bf16.mxu0 0
      %1515 = vmatpush1.bf16.msra.mxu0 0
      %1516 = vmatprep.subr.bf16.mxu0 0
      %1517 = vmatpush1.bf16.msra.mxu0 0
      %1518 = vmatprep.subr.bf16.mxu0 0
      %1519 = vmatpush1.bf16.msra.mxu0 0
      %1520 = vmatprep.subr.bf16.mxu0 0
      %1521 = vmatpush1.bf16.msra.mxu0 0
      %1522 = vmatprep.subr.bf16.mxu0 0
      %1523 = vmatpush1.bf16.msra.mxu0 0
      %1524 = vmatprep.mubr.bf16.mxu0 0
      %1525 = vmatmul.mubr.bf16.gmra.mrb[0].mxu0 %v1487
      %v1526 = vpop.f32.mrb[0].mxu0
      %v1527 = vadd.f32 0.0, %v1526
      %v1528 = vpop.f32.mrb[0].mxu0
      %v1529 = vpop.f32.mrb[0].mxu0
      %v1530 = vadd.f32 0.0, %v1529
      %v1531 = vpop.f32.mrb[0].mxu0
      %1532 = vmatprep.mubr.bf16.mxu0 0
      %1533 = vmatmul.mubr.bf16.gmra.mrb[0].mxu0 %v1490
      %v1534 = vpop.f32.mrb[0].mxu0
      %v1535 = vadd.f32 0.0, %v1534
      %v1536 = vpop.f32.mrb[0].mxu0
      %v1537 = vpop.f32.mrb[0].mxu0
      %v1538 = vpop.f32.mrb[0].mxu0
      %1539 = vdwg.mxu0
      %1543 = vrot.lane.b32.xlu0 %v460, 96
      %v1544 = vpop.permute.xlu0 %1543
      %1545 = vrot.lane.b32.xlu0 %v465, 96
      %v1546 = vpop.permute.xlu0 %1545
      %1547 = vrot.lane.b32.xlu0 %v468, 96
      %v1548 = vpop.permute.xlu0 %1547
      %v1549 = vsel %vm484, %v460, 0
      %v1551 = vsel %vm484, %v465, 0
      %v1553 = vsel %vm484, %v468, 0
      %v1555 = vsel %vm484, %v1544, 0
      %v1557 = vsel %vm484, %v1546, 0
      %v1559 = vsel %vm484, %v1548, 0
      %1561 = vmatprep.subr.mxu0 0.0
      %1562 = vmatpush1.xpose.msra.mxu0 %v1555
      %1563 = vmatprep.subr.mxu0 0.0
      %1564 = vmatpush1.xpose.msra.mxu0 %v1557
      %1565 = vmatprep.subr.mxu0 0.0
      %1566 = vmatpush1.xpose.msra.mxu0 %v1559
      %1567 = vmatprep.subr.mxu0 0.0
      %1568 = vmatpush1.xpose.msra.mxu0 0.0
      %1569 = vmatprep.subr.mxu0 0.0
      %1570 = vmatpush1.xpose.msra.mxu0 0.0
      %1571 = vmatprep.subr.mxu0 0.0
      %1572 = vmatpush1.xpose.msra.mxu0 0.0
      %1573 = vmatprep.subr.mxu0 0.0
      %1574 = vmatpush1.xpose.msra.mxu0 0.0
      %1575 = vmatprep.subr.mxu0 0.0
      %1576 = vmatpush1.xpose.msra.mxu0 0.0
      %1577 = vmatprep.subr.mxu0 0.0
      %1578 = vmatpush1.xpose.msra.mxu0 0.0
      %1579 = vmatprep.subr.mxu0 0.0
      %1580 = vmatpush1.xpose.msra.mxu0 0.0
      %1581 = vmatprep.subr.mxu0 0.0
      %1582 = vmatpush1.xpose.msra.mxu0 0.0
      %1583 = vmatprep.subr.mxu0 0.0
      %1584 = vmatpush1.xpose.msra.mxu0 0.0
      %1585 = vmatprep.subr.mxu0 0.0
      %1586 = vmatpush1.xpose.msra.mxu0 0.0
      %1587 = vmatprep.subr.mxu0 0.0
      %1588 = vmatpush1.xpose.msra.mxu0 0.0
      %1589 = vmatprep.subr.mxu0 0.0
      %1590 = vmatpush1.xpose.msra.mxu0 0.0
      %1591 = vmatprep.subr.mxu0 0.0
      %1592 = vmatpush1.xpose.msra.mxu0 0.0
      %1593 = vmatprep.subr.mxu0 0.0
      %1594 = vmatpush1.xpose.msra.mxu0 0.0
      %1595 = vmatprep.subr.mxu0 0.0
      %1596 = vmatpush1.xpose.msra.mxu0 0.0
      %1597 = vmatprep.subr.mxu0 0.0
      %1598 = vmatpush1.xpose.msra.mxu0 0.0
      %1599 = vmatprep.subr.mxu0 0.0
      %1600 = vmatpush1.xpose.msra.mxu0 0.0
      %1601 = vmatprep.subr.mxu0 0.0
      %1602 = vmatpush1.xpose.msra.mxu0 0.0
      %1603 = vmatprep.subr.mxu0 0.0
      %1604 = vmatpush1.xpose.msra.mxu0 0.0
      %1605 = vmatprep.subr.mxu0 0.0
      %1606 = vmatpush1.xpose.msra.mxu0 0.0
      %1607 = vmatprep.subr.mxu0 0.0
      %1608 = vmatpush1.xpose.msra.mxu0 0.0
      %1609 = vmatprep.subr.mxu0 0.0
      %1610 = vmatpush1.xpose.msra.mxu0 0.0
      %1611 = vmatprep.subr.mxu0 0.0
      %1612 = vmatpush1.xpose.msra.mxu0 0.0
      %1613 = vmatprep.subr.mxu0 0.0
      %1614 = vmatpush1.xpose.msra.mxu0 0.0
      %1615 = vmatprep.subr.mxu0 0.0
      %1616 = vmatpush1.xpose.msra.mxu0 0.0
      %1617 = vmatprep.subr.mxu0 0.0
      %1618 = vmatpush1.xpose.msra.mxu0 0.0
      %1619 = vmatprep.subr.mxu0 0.0
      %1620 = vmatpush1.xpose.msra.mxu0 0.0
      %1621 = vmatprep.subr.mxu0 0.0
      %1622 = vmatpush1.xpose.msra.mxu0 0.0
      %1623 = vmatprep.subr.mxu0 0.0
      %1624 = vmatpush1.xpose.msra.mxu0 0.0
      %1625 = vmatprep.mubr.f32.mxu0 0.0
      %1626 = vmatmul.mubr.f32.gmra.mrb[0].mxu0 %v1549
      %v1627 = vpop.f32.mrb[0].mxu0
      %v1628 = vadd.f32 0.0, %v1627
      %v1629 = vpop.f32.mrb[0].mxu0
      %1630 = vmatprep.mubr.f32.mxu0 0.0
      %1631 = vmatmul.mubr.f32.gmra.mrb[0].mxu0 %v1551
      %v1632 = vpop.f32.mrb[0].mxu0
      %v1633 = vadd.f32 0.0, %v1632
      %v1634 = vpop.f32.mrb[0].mxu0
      %1635 = vmatprep.mubr.f32.mxu0 0.0
      %1636 = vmatmul.mubr.f32.gmra.mrb[0].mxu0 %v1553
      %v1637 = vpop.f32.mrb[0].mxu0
      %v1638 = vadd.f32 0.0, %v1637
      %v1639 = vpop.f32.mrb[0].mxu0
      %1640 = vdwg.mxu0
      %1641 = vrot.lane.b32.xlu0 %v460, 120
      %v1642 = vpop.permute.xlu0 %1641
      %1643 = vrot.lane.b32.xlu0 %v465, 120
      %v1644 = vpop.permute.xlu0 %1643
      %1645 = vrot.lane.b32.xlu0 %v468, 120
      %v1646 = vpop.permute.xlu0 %1645
      %1647 = vrot.lane.b32.xlu0 %v460, 88
      %v1648 = vpop.permute.xlu0 %1647
      %1649 = vrot.lane.b32.xlu0 %v465, 88
      %v1650 = vpop.permute.xlu0 %1649
      %1651 = vrot.lane.b32.xlu0 %v468, 88
      %v1652 = vpop.permute.xlu0 %1651
      %v1653 = vsel %vm484, %v1642, 0
      %v1655 = vsel %vm484, %v1644, 0
      %v1657 = vsel %vm484, %v1646, 0
      %v1659 = vsel %vm484, %v1648, 0
      %v1661 = vsel %vm484, %v1650, 0
      %v1663 = vsel %vm484, %v1652, 0
      %1665 = vmatprep.subr.mxu0 0.0
      %1666 = vmatpush1.xpose.msra.mxu0 %v1659
      %1667 = vmatprep.subr.mxu0 0.0
      %1668 = vmatpush1.xpose.msra.mxu0 %v1661
      %1669 = vmatprep.subr.mxu0 0.0
      %1670 = vmatpush1.xpose.msra.mxu0 %v1663
      %1671 = vmatprep.subr.mxu0 0.0
      %1672 = vmatpush1.xpose.msra.mxu0 0.0
      %1673 = vmatprep.subr.mxu0 0.0
      %1674 = vmatpush1.xpose.msra.mxu0 0.0
      %1675 = vmatprep.subr.mxu0 0.0
      %1676 = vmatpush1.xpose.msra.mxu0 0.0
      %1677 = vmatprep.subr.mxu0 0.0
      %1678 = vmatpush1.xpose.msra.mxu0 0.0
      %1679 = vmatprep.subr.mxu0 0.0
      %1680 = vmatpush1.xpose.msra.mxu0 0.0
      %1681 = vmatprep.subr.mxu0 0.0
      %1682 = vmatpush1.xpose.msra.mxu0 0.0
      %1683 = vmatprep.subr.mxu0 0.0
      %1684 = vmatpush1.xpose.msra.mxu0 0.0
      %1685 = vmatprep.subr.mxu0 0.0
      %1686 = vmatpush1.xpose.msra.mxu0 0.0
      %1687 = vmatprep.subr.mxu0 0.0
      %1688 = vmatpush1.xpose.msra.mxu0 0.0
      %1689 = vmatprep.subr.mxu0 0.0
      %1690 = vmatpush1.xpose.msra.mxu0 0.0
      %1691 = vmatprep.subr.mxu0 0.0
      %1692 = vmatpush1.xpose.msra.mxu0 0.0
      %1693 = vmatprep.subr.mxu0 0.0
      %1694 = vmatpush1.xpose.msra.mxu0 0.0
      %1695 = vmatprep.subr.mxu0 0.0
      %1696 = vmatpush1.xpose.msra.mxu0 0.0
      %1697 = vmatprep.subr.mxu0 0.0
      %1698 = vmatpush1.xpose.msra.mxu0 0.0
      %1699 = vmatprep.subr.mxu0 0.0
      %1700 = vmatpush1.xpose.msra.mxu0 0.0
      %1701 = vmatprep.subr.mxu0 0.0
      %1702 = vmatpush1.xpose.msra.mxu0 0.0
      %1703 = vmatprep.subr.mxu0 0.0
      %1704 = vmatpush1.xpose.msra.mxu0 0.0
      %1705 = vmatprep.subr.mxu0 0.0
      %1706 = vmatpush1.xpose.msra.mxu0 0.0
      %1707 = vmatprep.subr.mxu0 0.0
      %1708 = vmatpush1.xpose.msra.mxu0 0.0
      %1709 = vmatprep.subr.mxu0 0.0
      %1710 = vmatpush1.xpose.msra.mxu0 0.0
      %1711 = vmatprep.subr.mxu0 0.0
      %1712 = vmatpush1.xpose.msra.mxu0 0.0
      %1713 = vmatprep.subr.mxu0 0.0
      %1714 = vmatpush1.xpose.msra.mxu0 0.0
      %1715 = vmatprep.subr.mxu0 0.0
      %1716 = vmatpush1.xpose.msra.mxu0 0.0
      %1717 = vmatprep.subr.mxu0 0.0
      %1718 = vmatpush1.xpose.msra.mxu0 0.0
      %1719 = vmatprep.subr.mxu0 0.0
      %1720 = vmatpush1.xpose.msra.mxu0 0.0
      %1721 = vmatprep.subr.mxu0 0.0
      %1722 = vmatpush1.xpose.msra.mxu0 0.0
      %1723 = vmatprep.subr.mxu0 0.0
      %1724 = vmatpush1.xpose.msra.mxu0 0.0
      %1725 = vmatprep.subr.mxu0 0.0
      %1726 = vmatpush1.xpose.msra.mxu0 0.0
      %1727 = vmatprep.subr.mxu0 0.0
      %1728 = vmatpush1.xpose.msra.mxu0 0.0
      %1729 = vmatprep.mubr.f32.mxu0 0.0
      %1730 = vmatmul.mubr.f32.gmra.mrb[0].mxu0 %v1653
      %v1731 = vpop.f32.mrb[0].mxu0
      %v1732 = vadd.f32 0.0, %v1731
      %v1733 = vpop.f32.mrb[0].mxu0
      %1734 = vmatprep.mubr.f32.mxu0 0.0
      %1735 = vmatmul.mubr.f32.gmra.mrb[0].mxu0 %v1655
      %v1736 = vpop.f32.mrb[0].mxu0
      %v1737 = vadd.f32 0.0, %v1736
      %v1738 = vpop.f32.mrb[0].mxu0
      %1739 = vmatprep.mubr.f32.mxu0 0.0
      %1740 = vmatmul.mubr.f32.gmra.mrb[0].mxu0 %v1657
      %v1741 = vpop.f32.mrb[0].mxu0
      %v1742 = vadd.f32 0.0, %v1741
      %v1743 = vpop.f32.mrb[0].mxu0
      %1744 = vdwg.mxu0
      %1745 = vrot.lane.b32.xlu0 %v460, 112
      %v1746 = vpop.permute.xlu0 %1745
      %1747 = vrot.lane.b32.xlu0 %v465, 112
      %v1748 = vpop.permute.xlu0 %1747
      %1749 = vrot.lane.b32.xlu0 %v468, 112
      %v1750 = vpop.permute.xlu0 %1749
      %1751 = vrot.lane.b32.xlu0 %v460, 80
      %v1752 = vpop.permute.xlu0 %1751
      %1753 = vrot.lane.b32.xlu0 %v465, 80
      %v1754 = vpop.permute.xlu0 %1753
      %1755 = vrot.lane.b32.xlu0 %v468, 80
      %v1756 = vpop.permute.xlu0 %1755
      %v1757 = vsel %vm484, %v1746, 0
      %v1759 = vsel %vm484, %v1748, 0
      %v1761 = vsel %vm484, %v1750, 0
      %v1763 = vsel %vm484, %v1752, 0
      %v1765 = vsel %vm484, %v1754, 0
      %v1767 = vsel %vm484, %v1756, 0
      %1769 = vmatprep.subr.mxu0 0.0
      %1770 = vmatpush1.xpose.msra.mxu0 %v1763
      %1771 = vmatprep.subr.mxu0 0.0
      %1772 = vmatpush1.xpose.msra.mxu0 %v1765
      %1773 = vmatprep.subr.mxu0 0.0
      %1774 = vmatpush1.xpose.msra.mxu0 %v1767
      %1775 = vmatprep.subr.mxu0 0.0
      %1776 = vmatpush1.xpose.msra.mxu0 0.0
      %1777 = vmatprep.subr.mxu0 0.0
      %1778 = vmatpush1.xpose.msra.mxu0 0.0
      %1779 = vmatprep.subr.mxu0 0.0
      %1780 = vmatpush1.xpose.msra.mxu0 0.0
      %1781 = vmatprep.subr.mxu0 0.0
      %1782 = vmatpush1.xpose.msra.mxu0 0.0
      %1783 = vmatprep.subr.mxu0 0.0
      %1784 = vmatpush1.xpose.msra.mxu0 0.0
      %1785 = vmatprep.subr.mxu0 0.0
      %1786 = vmatpush1.xpose.msra.mxu0 0.0
      %1787 = vmatprep.subr.mxu0 0.0
      %1788 = vmatpush1.xpose.msra.mxu0 0.0
      %1789 = vmatprep.subr.mxu0 0.0
      %1790 = vmatpush1.xpose.msra.mxu0 0.0
      %1791 = vmatprep.subr.mxu0 0.0
      %1792 = vmatpush1.xpose.msra.mxu0 0.0
      %1793 = vmatprep.subr.mxu0 0.0
      %1794 = vmatpush1.xpose.msra.mxu0 0.0
      %1795 = vmatprep.subr.mxu0 0.0
      %1796 = vmatpush1.xpose.msra.mxu0 0.0
      %1797 = vmatprep.subr.mxu0 0.0
      %1798 = vmatpush1.xpose.msra.mxu0 0.0
      %1799 = vmatprep.subr.mxu0 0.0
      %1800 = vmatpush1.xpose.msra.mxu0 0.0
      %1801 = vmatprep.subr.mxu0 0.0
      %1802 = vmatpush1.xpose.msra.mxu0 0.0
      %1803 = vmatprep.subr.mxu0 0.0
      %1804 = vmatpush1.xpose.msra.mxu0 0.0
      %1805 = vmatprep.subr.mxu0 0.0
      %1806 = vmatpush1.xpose.msra.mxu0 0.0
      %1807 = vmatprep.subr.mxu0 0.0
      %1808 = vmatpush1.xpose.msra.mxu0 0.0
      %1809 = vmatprep.subr.mxu0 0.0
      %1810 = vmatpush1.xpose.msra.mxu0 0.0
      %1811 = vmatprep.subr.mxu0 0.0
      %1812 = vmatpush1.xpose.msra.mxu0 0.0
      %1813 = vmatprep.subr.mxu0 0.0
      %1814 = vmatpush1.xpose.msra.mxu0 0.0
      %1815 = vmatprep.subr.mxu0 0.0
      %1816 = vmatpush1.xpose.msra.mxu0 0.0
      %1817 = vmatprep.subr.mxu0 0.0
      %1818 = vmatpush1.xpose.msra.mxu0 0.0
      %1819 = vmatprep.subr.mxu0 0.0
      %1820 = vmatpush1.xpose.msra.mxu0 0.0
      %1821 = vmatprep.subr.mxu0 0.0
      %1822 = vmatpush1.xpose.msra.mxu0 0.0
      %1823 = vmatprep.subr.mxu0 0.0
      %1824 = vmatpush1.xpose.msra.mxu0 0.0
      %1825 = vmatprep.subr.mxu0 0.0
      %1826 = vmatpush1.xpose.msra.mxu0 0.0
      %1827 = vmatprep.subr.mxu0 0.0
      %1828 = vmatpush1.xpose.msra.mxu0 0.0
      %1829 = vmatprep.subr.mxu0 0.0
      %1830 = vmatpush1.xpose.msra.mxu0 0.0
      %1831 = vmatprep.subr.mxu0 0.0
      %1832 = vmatpush1.xpose.msra.mxu0 0.0
      %1833 = vmatprep.mubr.f32.mxu0 0.0
      %1834 = vmatmul.mubr.f32.gmra.mrb[0].mxu0 %v1757
      %v1835 = vpop.f32.mrb[0].mxu0
      %v1836 = vadd.f32 0.0, %v1835
      %v1837 = vpop.f32.mrb[0].mxu0
      %1838 = vmatprep.mubr.f32.mxu0 0.0
      %1839 = vmatmul.mubr.f32.gmra.mrb[0].mxu0 %v1759
      %v1840 = vpop.f32.mrb[0].mxu0
      %v1841 = vadd.f32 0.0, %v1840
      %v1842 = vpop.f32.mrb[0].mxu0
      %1843 = vmatprep.mubr.f32.mxu0 0.0
      %1844 = vmatmul.mubr.f32.gmra.mrb[0].mxu0 %v1761
      %v1845 = vpop.f32.mrb[0].mxu0
      %v1846 = vadd.f32 0.0, %v1845
      %v1847 = vpop.f32.mrb[0].mxu0
      %1848 = vdwg.mxu0
      %1849 = vrot.lane.b32.xlu0 %v460, 104
      %v1850 = vpop.permute.xlu0 %1849
      %1851 = vrot.lane.b32.xlu0 %v465, 104
      %v1852 = vpop.permute.xlu0 %1851
      %1853 = vrot.lane.b32.xlu0 %v468, 104
      %v1854 = vpop.permute.xlu0 %1853
      %1855 = vrot.lane.b32.xlu0 %v460, 72
      %v1856 = vpop.permute.xlu0 %1855
      %1857 = vrot.lane.b32.xlu0 %v465, 72
      %v1858 = vpop.permute.xlu0 %1857
      %1859 = vrot.lane.b32.xlu0 %v468, 72
      %v1860 = vpop.permute.xlu0 %1859
      %v1861 = vsel %vm484, %v1850, 0
      %v1863 = vsel %vm484, %v1852, 0
      %v1865 = vsel %vm484, %v1854, 0
      %v1867 = vsel %vm484, %v1856, 0
      %v1869 = vsel %vm484, %v1858, 0
      %v1871 = vsel %vm484, %v1860, 0
      %1873 = vmatprep.subr.mxu0 0.0
      %1874 = vmatpush1.xpose.msra.mxu0 %v1867
      %1875 = vmatprep.subr.mxu0 0.0
      %1876 = vmatpush1.xpose.msra.mxu0 %v1869
      %1877 = vmatprep.subr.mxu0 0.0
      %1878 = vmatpush1.xpose.msra.mxu0 %v1871
      %1879 = vmatprep.subr.mxu0 0.0
      %1880 = vmatpush1.xpose.msra.mxu0 0.0
      %1881 = vmatprep.subr.mxu0 0.0
      %1882 = vmatpush1.xpose.msra.mxu0 0.0
      %1883 = vmatprep.subr.mxu0 0.0
      %1884 = vmatpush1.xpose.msra.mxu0 0.0
      %1885 = vmatprep.subr.mxu0 0.0
      %1886 = vmatpush1.xpose.msra.mxu0 0.0
      %1887 = vmatprep.subr.mxu0 0.0
      %1888 = vmatpush1.xpose.msra.mxu0 0.0
      %1889 = vmatprep.subr.mxu0 0.0
      %1890 = vmatpush1.xpose.msra.mxu0 0.0
      %1891 = vmatprep.subr.mxu0 0.0
      %1892 = vmatpush1.xpose.msra.mxu0 0.0
      %1893 = vmatprep.subr.mxu0 0.0
      %1894 = vmatpush1.xpose.msra.mxu0 0.0
      %1895 = vmatprep.subr.mxu0 0.0
      %1896 = vmatpush1.xpose.msra.mxu0 0.0
      %1897 = vmatprep.subr.mxu0 0.0
      %1898 = vmatpush1.xpose.msra.mxu0 0.0
      %1899 = vmatprep.subr.mxu0 0.0
      %1900 = vmatpush1.xpose.msra.mxu0 0.0
      %1901 = vmatprep.subr.mxu0 0.0
      %1902 = vmatpush1.xpose.msra.mxu0 0.0
      %1903 = vmatprep.subr.mxu0 0.0
      %1904 = vmatpush1.xpose.msra.mxu0 0.0
      %1905 = vmatprep.subr.mxu0 0.0
      %1906 = vmatpush1.xpose.msra.mxu0 0.0
      %1907 = vmatprep.subr.mxu0 0.0
      %1908 = vmatpush1.xpose.msra.mxu0 0.0
      %1909 = vmatprep.subr.mxu0 0.0
      %1910 = vmatpush1.xpose.msra.mxu0 0.0
      %1911 = vmatprep.subr.mxu0 0.0
      %1912 = vmatpush1.xpose.msra.mxu0 0.0
      %1913 = vmatprep.subr.mxu0 0.0
      %1914 = vmatpush1.xpose.msra.mxu0 0.0
      %1915 = vmatprep.subr.mxu0 0.0
      %1916 = vmatpush1.xpose.msra.mxu0 0.0
      %1917 = vmatprep.subr.mxu0 0.0
      %1918 = vmatpush1.xpose.msra.mxu0 0.0
      %1919 = vmatprep.subr.mxu0 0.0
      %1920 = vmatpush1.xpose.msra.mxu0 0.0
      %1921 = vmatprep.subr.mxu0 0.0
      %1922 = vmatpush1.xpose.msra.mxu0 0.0
      %1923 = vmatprep.subr.mxu0 0.0
      %1924 = vmatpush1.xpose.msra.mxu0 0.0
      %1925 = vmatprep.subr.mxu0 0.0
      %1926 = vmatpush1.xpose.msra.mxu0 0.0
      %1927 = vmatprep.subr.mxu0 0.0
      %1928 = vmatpush1.xpose.msra.mxu0 0.0
      %1929 = vmatprep.subr.mxu0 0.0
      %1930 = vmatpush1.xpose.msra.mxu0 0.0
      %1931 = vmatprep.subr.mxu0 0.0
      %1932 = vmatpush1.xpose.msra.mxu0 0.0
      %1933 = vmatprep.subr.mxu0 0.0
      %1934 = vmatpush1.xpose.msra.mxu0 0.0
      %1935 = vmatprep.subr.mxu0 0.0
      %1936 = vmatpush1.xpose.msra.mxu0 0.0
      %1937 = vmatprep.mubr.f32.mxu0 0.0
      %1938 = vmatmul.mubr.f32.gmra.mrb[0].mxu0 %v1861
      %v1939 = vpop.f32.mrb[0].mxu0
      %v1940 = vadd.f32 0.0, %v1939
      %v1941 = vpop.f32.mrb[0].mxu0
      %1942 = vmatprep.mubr.f32.mxu0 0.0
      %1943 = vmatmul.mubr.f32.gmra.mrb[0].mxu0 %v1863
      %v1944 = vpop.f32.mrb[0].mxu0
      %v1945 = vadd.f32 0.0, %v1944
      %v1946 = vpop.f32.mrb[0].mxu0
      %1947 = vmatprep.mubr.f32.mxu0 0.0
      %1948 = vmatmul.mubr.f32.gmra.mrb[0].mxu0 %v1865
      %v1949 = vpop.f32.mrb[0].mxu0
      %v1950 = vadd.f32 0.0, %v1949
      %v1951 = vpop.f32.mrb[0].mxu0
      %1952 = vdwg.mxu0
      %v1953 = vadd.f32 %v1628, %v278
      %v1954 = vadd.f32 %v1633, %v278
      %v1955 = vadd.f32 %v1638, %v278
      %v1956 = vadd.f32 %v1732, %v278
      %v1957 = vadd.f32 %v1737, %v278
      %v1958 = vadd.f32 %v1742, %v278
      %v1959 = vadd.f32 %v1836, %v278
      %v1960 = vadd.f32 %v1841, %v278
      %v1961 = vadd.f32 %v1846, %v278
      %v1962 = vadd.f32 %v1940, %v278
      %v1963 = vadd.f32 %v1945, %v278
      %v1964 = vadd.f32 %v1950, %v278
      %v1965 = vsel %vm901, %v1953, -inf
      %1966 = vmax.xlane.f32.xlu0 %v1965
      %v1967 = vpop.xlane.xlu0 %1966
      %v1968 = vsel %vm901, %v1954, -inf
      %1969 = vmax.xlane.f32.xlu0 %v1968
      %v1970 = vpop.xlane.xlu0 %1969
      %v1971 = vsel %vm901, %v1955, -inf
      %1972 = vmax.xlane.f32.xlu0 %v1971
      %v1973 = vpop.xlane.xlu0 %1972
      %v1974 = vsel %vm901, %v1956, -inf
      %1975 = vmax.xlane.f32.xlu0 %v1974
      %v1976 = vpop.xlane.xlu0 %1975
      %v1977 = vsel %vm901, %v1957, -inf
      %1978 = vmax.xlane.f32.xlu0 %v1977
      %v1979 = vpop.xlane.xlu0 %1978
      %v1980 = vsel %vm901, %v1958, -inf
      %1981 = vmax.xlane.f32.xlu0 %v1980
      %v1982 = vpop.xlane.xlu0 %1981
      %v1983 = vsel %vm901, %v1959, -inf
      %1984 = vmax.xlane.f32.xlu0 %v1983
      %v1985 = vpop.xlane.xlu0 %1984
      %v1986 = vsel %vm901, %v1960, -inf
      %1987 = vmax.xlane.f32.xlu0 %v1986
      %v1988 = vpop.xlane.xlu0 %1987
      %v1989 = vsel %vm901, %v1961, -inf
      %1990 = vmax.xlane.f32.xlu0 %v1989
      %v1991 = vpop.xlane.xlu0 %1990
      %v1992 = vsel %vm901, %v1962, -inf
      %1993 = vmax.xlane.f32.xlu0 %v1992
      %v1994 = vpop.xlane.xlu0 %1993
      %v1995 = vsel %vm901, %v1963, -inf
      %1996 = vmax.xlane.f32.xlu0 %v1995
      %v1997 = vpop.xlane.xlu0 %1996
      %v1998 = vsel %vm901, %v1964, -inf
      %1999 = vmax.xlane.f32.xlu0 %v1998
      %v2000 = vpop.xlane.xlu0 %1999
      %v2001 = vsub.f32 %v1953, %v1967
      %v2002 = vsub.f32 %v1954, %v1970
      %v2003 = vsub.f32 %v1955, %v1973
      %v2004 = vsub.f32 %v1956, %v1976
      %v2005 = vsub.f32 %v1957, %v1979
      %v2006 = vsub.f32 %v1958, %v1982
      %v2007 = vsub.f32 %v1959, %v1985
      %v2008 = vsub.f32 %v1960, %v1988
      %v2009 = vsub.f32 %v1961, %v1991
      %v2010 = vsub.f32 %v1962, %v1994
      %v2011 = vsub.f32 %v1963, %v1997
      %v2012 = vsub.f32 %v1964, %v2000
      %v2013 = vmul.f32 %v2001, 1.442695
      %v2014 = vpow.pop %v2013
      %v2015 = vmul.f32 %v2002, 1.442695
      %v2016 = vpow.pop %v2015
      %v2017 = vmul.f32 %v2003, 1.442695
      %v2018 = vpow.pop %v2017
      %v2019 = vmul.f32 %v2004, 1.442695
      %v2020 = vpow.pop %v2019
      %v2021 = vmul.f32 %v2005, 1.442695
      %v2022 = vpow.pop %v2021
      %v2023 = vmul.f32 %v2006, 1.442695
      %v2024 = vpow.pop %v2023
      %v2025 = vmul.f32 %v2007, 1.442695
      %v2026 = vpow.pop %v2025
      %v2027 = vmul.f32 %v2008, 1.442695
      %v2028 = vpow.pop %v2027
      %v2029 = vmul.f32 %v2009, 1.442695
      %v2030 = vpow.pop %v2029
      %v2031 = vmul.f32 %v2010, 1.442695
      %v2032 = vpow.pop %v2031
      %v2033 = vmul.f32 %v2011, 1.442695
      %v2034 = vpow.pop %v2033
      %v2035 = vmul.f32 %v2012, 1.442695
      %v2036 = vpow.pop %v2035
      %v2037 = vsel %vm901, %v2014, 0.0
      %2038 = vadd.xlane.f32.xlu0 %v2037
      %v2039 = vpop.xlane.xlu0 %2038
      %v2040 = vsel %vm901, %v2016, 0.0
      %2041 = vadd.xlane.f32.xlu0 %v2040
      %v2042 = vpop.xlane.xlu0 %2041
      %v2043 = vsel %vm901, %v2018, 0.0
      %2044 = vadd.xlane.f32.xlu0 %v2043
      %v2045 = vpop.xlane.xlu0 %2044
      %v2046 = vsel %vm901, %v2020, 0.0
      %2047 = vadd.xlane.f32.xlu0 %v2046
      %v2048 = vpop.xlane.xlu0 %2047
      %v2049 = vsel %vm901, %v2022, 0.0
      %2050 = vadd.xlane.f32.xlu0 %v2049
      %v2051 = vpop.xlane.xlu0 %2050
      %v2052 = vsel %vm901, %v2024, 0.0
      %2053 = vadd.xlane.f32.xlu0 %v2052
      %v2054 = vpop.xlane.xlu0 %2053
      %v2055 = vsel %vm901, %v2026, 0.0
      %2056 = vadd.xlane.f32.xlu0 %v2055
      %v2057 = vpop.xlane.xlu0 %2056
      %v2058 = vsel %vm901, %v2028, 0.0
      %2059 = vadd.xlane.f32.xlu0 %v2058
      %v2060 = vpop.xlane.xlu0 %2059
      %v2061 = vsel %vm901, %v2030, 0.0
      %2062 = vadd.xlane.f32.xlu0 %v2061
      %v2063 = vpop.xlane.xlu0 %2062
      %v2064 = vsel %vm901, %v2032, 0.0
      %2065 = vadd.xlane.f32.xlu0 %v2064
      %v2066 = vpop.xlane.xlu0 %2065
      %v2067 = vsel %vm901, %v2034, 0.0
      %2068 = vadd.xlane.f32.xlu0 %v2067
      %v2069 = vpop.xlane.xlu0 %2068
      %v2070 = vsel %vm901, %v2036, 0.0
      %2071 = vadd.xlane.f32.xlu0 %v2070
      %v2072 = vpop.xlane.xlu0 %2071
      %v2073 = vrcp.pop %v2039
      %v2074 = vrcp.pop %v2042
      %v2075 = vrcp.pop %v2045
      %v2076 = vrcp.pop %v2048
      %v2077 = vrcp.pop %v2051
      %v2078 = vrcp.pop %v2054
      %v2079 = vrcp.pop %v2057
      %v2080 = vrcp.pop %v2060
      %v2081 = vrcp.pop %v2063
      %v2082 = vrcp.pop %v2066
      %v2083 = vrcp.pop %v2069
      %v2084 = vrcp.pop %v2072
      %2085 = vrot.lane.b32.xlu0 %v460, 64
      %v2086 = vpop.permute.xlu0 %2085
      %2087 = vrot.lane.b32.xlu0 %v465, 64
      %v2088 = vpop.permute.xlu0 %2087
      %2089 = vrot.lane.b32.xlu0 %v468, 64
      %v2090 = vpop.permute.xlu0 %2089
      %v2095 = vsel %vm901, %v2014, 0
      %v2098 = vsel %vm901, %v2016, 0
      %v2101 = vsel %vm901, %v2018, 0
      %2103 = vmatprep.subr.mxu0 0.0
      %2104 = vmatpush1.msra.mxu0 %v2086
      %2105 = vmatprep.subr.mxu0 0.0
      %2106 = vmatpush1.msra.mxu0 %v2088
      %2107 = vmatprep.subr.mxu0 0.0
      %2108 = vmatpush1.msra.mxu0 %v2090
      %2109 = vmatprep.subr.mxu0 0.0
      %2110 = vmatpush1.msra.mxu0 0.0
      %2111 = vmatprep.subr.mxu0 0.0
      %2112 = vmatpush1.msra.mxu0 0.0
      %2113 = vmatprep.subr.mxu0 0.0
      %2114 = vmatpush1.msra.mxu0 0.0
      %2115 = vmatprep.subr.mxu0 0.0
      %2116 = vmatpush1.msra.mxu0 0.0
      %2117 = vmatprep.subr.mxu0 0.0
      %2118 = vmatpush1.msra.mxu0 0.0
      %2119 = vmatprep.subr.mxu0 0.0
      %2120 = vmatpush1.msra.mxu0 0.0
      %2121 = vmatprep.subr.mxu0 0.0
      %2122 = vmatpush1.msra.mxu0 0.0
      %2123 = vmatprep.subr.mxu0 0.0
      %2124 = vmatpush1.msra.mxu0 0.0
      %2125 = vmatprep.subr.mxu0 0.0
      %2126 = vmatpush1.msra.mxu0 0.0
      %2127 = vmatprep.subr.mxu0 0.0
      %2128 = vmatpush1.msra.mxu0 0.0
      %2129 = vmatprep.subr.mxu0 0.0
      %2130 = vmatpush1.msra.mxu0 0.0
      %2131 = vmatprep.subr.mxu0 0.0
      %2132 = vmatpush1.msra.mxu0 0.0
      %2133 = vmatprep.subr.mxu0 0.0
      %2134 = vmatpush1.msra.mxu0 0.0
      %2135 = vmatprep.subr.mxu0 0.0
      %2136 = vmatpush1.msra.mxu0 0.0
      %2137 = vmatprep.subr.mxu0 0.0
      %2138 = vmatpush1.msra.mxu0 0.0
      %2139 = vmatprep.subr.mxu0 0.0
      %2140 = vmatpush1.msra.mxu0 0.0
      %2141 = vmatprep.subr.mxu0 0.0
      %2142 = vmatpush1.msra.mxu0 0.0
      %2143 = vmatprep.subr.mxu0 0.0
      %2144 = vmatpush1.msra.mxu0 0.0
      %2145 = vmatprep.subr.mxu0 0.0
      %2146 = vmatpush1.msra.mxu0 0.0
      %2147 = vmatprep.subr.mxu0 0.0
      %2148 = vmatpush1.msra.mxu0 0.0
      %2149 = vmatprep.subr.mxu0 0.0
      %2150 = vmatpush1.msra.mxu0 0.0
      %2151 = vmatprep.subr.mxu0 0.0
      %2152 = vmatpush1.msra.mxu0 0.0
      %2153 = vmatprep.subr.mxu0 0.0
      %2154 = vmatpush1.msra.mxu0 0.0
      %2155 = vmatprep.subr.mxu0 0.0
      %2156 = vmatpush1.msra.mxu0 0.0
      %2157 = vmatprep.subr.mxu0 0.0
      %2158 = vmatpush1.msra.mxu0 0.0
      %2159 = vmatprep.subr.mxu0 0.0
      %2160 = vmatpush1.msra.mxu0 0.0
      %2161 = vmatprep.subr.mxu0 0.0
      %2162 = vmatpush1.msra.mxu0 0.0
      %2163 = vmatprep.subr.mxu0 0.0
      %2164 = vmatpush1.msra.mxu0 0.0
      %2165 = vmatprep.subr.mxu0 0.0
      %2166 = vmatpush1.msra.mxu0 0.0
      %2167 = vmatprep.mubr.f32.mxu0 0.0
      %2168 = vmatmul.mubr.f32.gmra.mrb[0].mxu0 %v2095
      %v2169 = vpop.f32.mrb[0].mxu0
      %v2170 = vadd.f32 0.0, %v2169
      %v2171 = vpop.f32.mrb[0].mxu0
      %2172 = vmatprep.mubr.f32.mxu0 0.0
      %2173 = vmatmul.mubr.f32.gmra.mrb[0].mxu0 %v2098
      %v2174 = vpop.f32.mrb[0].mxu0
      %v2175 = vadd.f32 0.0, %v2174
      %v2176 = vpop.f32.mrb[0].mxu0
      %2177 = vmatprep.mubr.f32.mxu0 0.0
      %2178 = vmatmul.mubr.f32.gmra.mrb[0].mxu0 %v2101
      %v2179 = vpop.f32.mrb[0].mxu0
      %v2180 = vadd.f32 0.0, %v2179
      %v2181 = vpop.f32.mrb[0].mxu0
      %2182 = vdwg.mxu0
      %v2183 = vmul.f32 %v2170, %v2073
      %v2184 = vmul.f32 %v2175, %v2074
      %v2185 = vmul.f32 %v2180, %v2075
      %2186 = vrot.lane.b32.xlu0 %v460, 56
      %v2187 = vpop.permute.xlu0 %2186
      %2188 = vrot.lane.b32.xlu0 %v465, 56
      %v2189 = vpop.permute.xlu0 %2188
      %2190 = vrot.lane.b32.xlu0 %v468, 56
      %v2191 = vpop.permute.xlu0 %2190
      %v2196 = vsel %vm901, %v2020, 0
      %v2199 = vsel %vm901, %v2022, 0
      %v2202 = vsel %vm901, %v2024, 0
      %2204 = vmatprep.subr.mxu0 0.0
      %2205 = vmatpush1.msra.mxu0 %v2187
      %2206 = vmatprep.subr.mxu0 0.0
      %2207 = vmatpush1.msra.mxu0 %v2189
      %2208 = vmatprep.subr.mxu0 0.0
      %2209 = vmatpush1.msra.mxu0 %v2191
      %2210 = vmatprep.subr.mxu0 0.0
      %2211 = vmatpush1.msra.mxu0 0.0
      %2212 = vmatprep.subr.mxu0 0.0
      %2213 = vmatpush1.msra.mxu0 0.0
      %2214 = vmatprep.subr.mxu0 0.0
      %2215 = vmatpush1.msra.mxu0 0.0
      %2216 = vmatprep.subr.mxu0 0.0
      %2217 = vmatpush1.msra.mxu0 0.0
      %2218 = vmatprep.subr.mxu0 0.0
      %2219 = vmatpush1.msra.mxu0 0.0
      %2220 = vmatprep.subr.mxu0 0.0
      %2221 = vmatpush1.msra.mxu0 0.0
      %2222 = vmatprep.subr.mxu0 0.0
      %2223 = vmatpush1.msra.mxu0 0.0
      %2224 = vmatprep.subr.mxu0 0.0
      %2225 = vmatpush1.msra.mxu0 0.0
      %2226 = vmatprep.subr.mxu0 0.0
      %2227 = vmatpush1.msra.mxu0 0.0
      %2228 = vmatprep.subr.mxu0 0.0
      %2229 = vmatpush1.msra.mxu0 0.0
      %2230 = vmatprep.subr.mxu0 0.0
      %2231 = vmatpush1.msra.mxu0 0.0
      %2232 = vmatprep.subr.mxu0 0.0
      %2233 = vmatpush1.msra.mxu0 0.0
      %2234 = vmatprep.subr.mxu0 0.0
      %2235 = vmatpush1.msra.mxu0 0.0
      %2236 = vmatprep.subr.mxu0 0.0
      %2237 = vmatpush1.msra.mxu0 0.0
      %2238 = vmatprep.subr.mxu0 0.0
      %2239 = vmatpush1.msra.mxu0 0.0
      %2240 = vmatprep.subr.mxu0 0.0
      %2241 = vmatpush1.msra.mxu0 0.0
      %2242 = vmatprep.subr.mxu0 0.0
      %2243 = vmatpush1.msra.mxu0 0.0
      %2244 = vmatprep.subr.mxu0 0.0
      %2245 = vmatpush1.msra.mxu0 0.0
      %2246 = vmatprep.subr.mxu0 0.0
      %2247 = vmatpush1.msra.mxu0 0.0
      %2248 = vmatprep.subr.mxu0 0.0
      %2249 = vmatpush1.msra.mxu0 0.0
      %2250 = vmatprep.subr.mxu0 0.0
      %2251 = vmatpush1.msra.mxu0 0.0
      %2252 = vmatprep.subr.mxu0 0.0
      %2253 = vmatpush1.msra.mxu0 0.0
      %2254 = vmatprep.subr.mxu0 0.0
      %2255 = vmatpush1.msra.mxu0 0.0
      %2256 = vmatprep.subr.mxu0 0.0
      %2257 = vmatpush1.msra.mxu0 0.0
      %2258 = vmatprep.subr.mxu0 0.0
      %2259 = vmatpush1.msra.mxu0 0.0
      %2260 = vmatprep.subr.mxu0 0.0
      %2261 = vmatpush1.msra.mxu0 0.0
      %2262 = vmatprep.subr.mxu0 0.0
      %2263 = vmatpush1.msra.mxu0 0.0
      %2264 = vmatprep.subr.mxu0 0.0
      %2265 = vmatpush1.msra.mxu0 0.0
      %2266 = vmatprep.subr.mxu0 0.0
      %2267 = vmatpush1.msra.mxu0 0.0
      %2268 = vmatprep.mubr.f32.mxu0 0.0
      %2269 = vmatmul.mubr.f32.gmra.mrb[0].mxu0 %v2196
      %v2270 = vpop.f32.mrb[0].mxu0
      %v2271 = vadd.f32 0.0, %v2270
      %v2272 = vpop.f32.mrb[0].mxu0
      %2273 = vmatprep.mubr.f32.mxu0 0.0
      %2274 = vmatmul.mubr.f32.gmra.mrb[0].mxu0 %v2199
      %v2275 = vpop.f32.mrb[0].mxu0
      %v2276 = vadd.f32 0.0, %v2275
      %v2277 = vpop.f32.mrb[0].mxu0
      %2278 = vmatprep.mubr.f32.mxu0 0.0
      %2279 = vmatmul.mubr.f32.gmra.mrb[0].mxu0 %v2202
      %v2280 = vpop.f32.mrb[0].mxu0
      %v2281 = vadd.f32 0.0, %v2280
      %v2282 = vpop.f32.mrb[0].mxu0
      %2283 = vdwg.mxu0
      %v2284 = vmul.f32 %v2271, %v2076
      %v2285 = vmul.f32 %v2276, %v2077
      %v2286 = vmul.f32 %v2281, %v2078
      %2287 = vrot.lane.b32.xlu0 %v460, 48
      %v2288 = vpop.permute.xlu0 %2287
      %2289 = vrot.lane.b32.xlu0 %v465, 48
      %v2290 = vpop.permute.xlu0 %2289
      %2291 = vrot.lane.b32.xlu0 %v468, 48
      %v2292 = vpop.permute.xlu0 %2291
      %v2297 = vsel %vm901, %v2026, 0
      %v2300 = vsel %vm901, %v2028, 0
      %v2303 = vsel %vm901, %v2030, 0
      %2305 = vmatprep.subr.mxu0 0.0
      %2306 = vmatpush1.msra.mxu0 %v2288
      %2307 = vmatprep.subr.mxu0 0.0
      %2308 = vmatpush1.msra.mxu0 %v2290
      %2309 = vmatprep.subr.mxu0 0.0
      %2310 = vmatpush1.msra.mxu0 %v2292
      %2311 = vmatprep.subr.mxu0 0.0
      %2312 = vmatpush1.msra.mxu0 0.0
      %2313 = vmatprep.subr.mxu0 0.0
      %2314 = vmatpush1.msra.mxu0 0.0
      %2315 = vmatprep.subr.mxu0 0.0
      %2316 = vmatpush1.msra.mxu0 0.0
      %2317 = vmatprep.subr.mxu0 0.0
      %2318 = vmatpush1.msra.mxu0 0.0
      %2319 = vmatprep.subr.mxu0 0.0
      %2320 = vmatpush1.msra.mxu0 0.0
      %2321 = vmatprep.subr.mxu0 0.0
      %2322 = vmatpush1.msra.mxu0 0.0
      %2323 = vmatprep.subr.mxu0 0.0
      %2324 = vmatpush1.msra.mxu0 0.0
      %2325 = vmatprep.subr.mxu0 0.0
      %2326 = vmatpush1.msra.mxu0 0.0
      %2327 = vmatprep.subr.mxu0 0.0
      %2328 = vmatpush1.msra.mxu0 0.0
      %2329 = vmatprep.subr.mxu0 0.0
      %2330 = vmatpush1.msra.mxu0 0.0
      %2331 = vmatprep.subr.mxu0 0.0
      %2332 = vmatpush1.msra.mxu0 0.0
      %2333 = vmatprep.subr.mxu0 0.0
      %2334 = vmatpush1.msra.mxu0 0.0
      %2335 = vmatprep.subr.mxu0 0.0
      %2336 = vmatpush1.msra.mxu0 0.0
      %2337 = vmatprep.subr.mxu0 0.0
      %2338 = vmatpush1.msra.mxu0 0.0
      %2339 = vmatprep.subr.mxu0 0.0
      %2340 = vmatpush1.msra.mxu0 0.0
      %2341 = vmatprep.subr.mxu0 0.0
      %2342 = vmatpush1.msra.mxu0 0.0
      %2343 = vmatprep.subr.mxu0 0.0
      %2344 = vmatpush1.msra.mxu0 0.0
      %2345 = vmatprep.subr.mxu0 0.0
      %2346 = vmatpush1.msra.mxu0 0.0
      %2347 = vmatprep.subr.mxu0 0.0
      %2348 = vmatpush1.msra.mxu0 0.0
      %2349 = vmatprep.subr.mxu0 0.0
      %2350 = vmatpush1.msra.mxu0 0.0
      %2351 = vmatprep.subr.mxu0 0.0
      %2352 = vmatpush1.msra.mxu0 0.0
      %2353 = vmatprep.subr.mxu0 0.0
      %2354 = vmatpush1.msra.mxu0 0.0
      %2355 = vmatprep.subr.mxu0 0.0
      %2356 = vmatpush1.msra.mxu0 0.0
      %2357 = vmatprep.subr.mxu0 0.0
      %2358 = vmatpush1.msra.mxu0 0.0
      %2359 = vmatprep.subr.mxu0 0.0
      %2360 = vmatpush1.msra.mxu0 0.0
      %2361 = vmatprep.subr.mxu0 0.0
      %2362 = vmatpush1.msra.mxu0 0.0
      %2363 = vmatprep.subr.mxu0 0.0
      %2364 = vmatpush1.msra.mxu0 0.0
      %2365 = vmatprep.subr.mxu0 0.0
      %2366 = vmatpush1.msra.mxu0 0.0
      %2367 = vmatprep.subr.mxu0 0.0
      %2368 = vmatpush1.msra.mxu0 0.0
      %2369 = vmatprep.mubr.f32.mxu0 0.0
      %2370 = vmatmul.mubr.f32.gmra.mrb[0].mxu0 %v2297
      %v2371 = vpop.f32.mrb[0].mxu0
      %v2372 = vadd.f32 0.0, %v2371
      %v2373 = vpop.f32.mrb[0].mxu0
      %2374 = vmatprep.mubr.f32.mxu0 0.0
      %2375 = vmatmul.mubr.f32.gmra.mrb[0].mxu0 %v2300
      %v2376 = vpop.f32.mrb[0].mxu0
      %v2377 = vadd.f32 0.0, %v2376
      %v2378 = vpop.f32.mrb[0].mxu0
      %2379 = vmatprep.mubr.f32.mxu0 0.0
      %2380 = vmatmul.mubr.f32.gmra.mrb[0].mxu0 %v2303
      %v2381 = vpop.f32.mrb[0].mxu0
      %v2382 = vadd.f32 0.0, %v2381
      %v2383 = vpop.f32.mrb[0].mxu0
      %2384 = vdwg.mxu0
      %v2385 = vmul.f32 %v2372, %v2079
      %v2386 = vmul.f32 %v2377, %v2080
      %v2387 = vmul.f32 %v2382, %v2081
      %2388 = vrot.lane.b32.xlu0 %v460, 40
      %v2389 = vpop.permute.xlu0 %2388
      %2390 = vrot.lane.b32.xlu0 %v465, 40
      %v2391 = vpop.permute.xlu0 %2390
      %2392 = vrot.lane.b32.xlu0 %v468, 40
      %v2393 = vpop.permute.xlu0 %2392
      %v2398 = vsel %vm901, %v2032, 0
      %v2401 = vsel %vm901, %v2034, 0
      %v2404 = vsel %vm901, %v2036, 0
      %2406 = vmatprep.subr.mxu0 0.0
      %2407 = vmatpush1.msra.mxu0 %v2389
      %2408 = vmatprep.subr.mxu0 0.0
      %2409 = vmatpush1.msra.mxu0 %v2391
      %2410 = vmatprep.subr.mxu0 0.0
      %2411 = vmatpush1.msra.mxu0 %v2393
      %2412 = vmatprep.subr.mxu0 0.0
      %2413 = vmatpush1.msra.mxu0 0.0
      %2414 = vmatprep.subr.mxu0 0.0
      %2415 = vmatpush1.msra.mxu0 0.0
      %2416 = vmatprep.subr.mxu0 0.0
      %2417 = vmatpush1.msra.mxu0 0.0
      %2418 = vmatprep.subr.mxu0 0.0
      %2419 = vmatpush1.msra.mxu0 0.0
      %2420 = vmatprep.subr.mxu0 0.0
      %2421 = vmatpush1.msra.mxu0 0.0
      %2422 = vmatprep.subr.mxu0 0.0
      %2423 = vmatpush1.msra.mxu0 0.0
      %2424 = vmatprep.subr.mxu0 0.0
      %2425 = vmatpush1.msra.mxu0 0.0
      %2426 = vmatprep.subr.mxu0 0.0
      %2427 = vmatpush1.msra.mxu0 0.0
      %2428 = vmatprep.subr.mxu0 0.0
      %2429 = vmatpush1.msra.mxu0 0.0
      %2430 = vmatprep.subr.mxu0 0.0
      %2431 = vmatpush1.msra.mxu0 0.0
      %2432 = vmatprep.subr.mxu0 0.0
      %2433 = vmatpush1.msra.mxu0 0.0
      %2434 = vmatprep.subr.mxu0 0.0
      %2435 = vmatpush1.msra.mxu0 0.0
      %2436 = vmatprep.subr.mxu0 0.0
      %2437 = vmatpush1.msra.mxu0 0.0
      %2438 = vmatprep.subr.mxu0 0.0
      %2439 = vmatpush1.msra.mxu0 0.0
      %2440 = vmatprep.subr.mxu0 0.0
      %2441 = vmatpush1.msra.mxu0 0.0
      %2442 = vmatprep.subr.mxu0 0.0
      %2443 = vmatpush1.msra.mxu0 0.0
      %2444 = vmatprep.subr.mxu0 0.0
      %2445 = vmatpush1.msra.mxu0 0.0
      %2446 = vmatprep.subr.mxu0 0.0
      %2447 = vmatpush1.msra.mxu0 0.0
      %2448 = vmatprep.subr.mxu0 0.0
      %2449 = vmatpush1.msra.mxu0 0.0
      %2450 = vmatprep.subr.mxu0 0.0
      %2451 = vmatpush1.msra.mxu0 0.0
      %2452 = vmatprep.subr.mxu0 0.0
      %2453 = vmatpush1.msra.mxu0 0.0
      %2454 = vmatprep.subr.mxu0 0.0
      %2455 = vmatpush1.msra.mxu0 0.0
      %2456 = vmatprep.subr.mxu0 0.0
      %2457 = vmatpush1.msra.mxu0 0.0
      %2458 = vmatprep.subr.mxu0 0.0
      %2459 = vmatpush1.msra.mxu0 0.0
      %2460 = vmatprep.subr.mxu0 0.0
      %2461 = vmatpush1.msra.mxu0 0.0
      %2462 = vmatprep.subr.mxu0 0.0
      %2463 = vmatpush1.msra.mxu0 0.0
      %2464 = vmatprep.subr.mxu0 0.0
      %2465 = vmatpush1.msra.mxu0 0.0
      %2466 = vmatprep.subr.mxu0 0.0
      %2467 = vmatpush1.msra.mxu0 0.0
      %2468 = vmatprep.subr.mxu0 0.0
      %2469 = vmatpush1.msra.mxu0 0.0
      %2470 = vmatprep.mubr.f32.mxu0 0.0
      %2471 = vmatmul.mubr.f32.gmra.mrb[0].mxu0 %v2398
      %v2472 = vpop.f32.mrb[0].mxu0
      %v2473 = vadd.f32 0.0, %v2472
      %v2474 = vpop.f32.mrb[0].mxu0
      %2475 = vmatprep.mubr.f32.mxu0 0.0
      %2476 = vmatmul.mubr.f32.gmra.mrb[0].mxu0 %v2401
      %v2477 = vpop.f32.mrb[0].mxu0
      %v2478 = vadd.f32 0.0, %v2477
      %v2479 = vpop.f32.mrb[0].mxu0
      %2480 = vmatprep.mubr.f32.mxu0 0.0
      %2481 = vmatmul.mubr.f32.gmra.mrb[0].mxu0 %v2404
      %v2482 = vpop.f32.mrb[0].mxu0
      %v2483 = vadd.f32 0.0, %v2482
      %v2484 = vpop.f32.mrb[0].mxu0
      %2485 = vdwg.mxu0
      %v2486 = vmul.f32 %v2473, %v2082
      %v2487 = vmul.f32 %v2478, %v2083
      %v2488 = vmul.f32 %v2483, %v2084
      %2492 = vrot.lane.b32.xlu0 %v2284, 8
      %v2493 = vpop.permute.xlu0 %2492
      %2494 = vrot.lane.b32.xlu0 %v2285, 8
      %v2495 = vpop.permute.xlu0 %2494
      %2496 = vrot.lane.b32.xlu0 %v2286, 8
      %v2497 = vpop.permute.xlu0 %2496
      %2504 = vrot.lane.b32.xlu0 %v2385, 16
      %v2505 = vpop.permute.xlu0 %2504
      %2506 = vrot.lane.b32.xlu0 %v2386, 16
      %v2507 = vpop.permute.xlu0 %2506
      %2508 = vrot.lane.b32.xlu0 %v2387, 16
      %v2509 = vpop.permute.xlu0 %2508
      %2516 = vrot.lane.b32.xlu0 %v2486, 24
      %v2517 = vpop.permute.xlu0 %2516
      %2518 = vrot.lane.b32.xlu0 %v2487, 24
      %v2519 = vpop.permute.xlu0 %2518
      %2520 = vrot.lane.b32.xlu0 %v2488, 24
      %v2521 = vpop.permute.xlu0 %2520
      %v2525 = vsel %vm484, %v2183, %v2493
      %v2526 = vsel %vm484, %v2184, %v2495
      %v2527 = vsel %vm484, %v2185, %v2497
      %v2528 = vsel %vm1465, %v2525, %v2505
      %v2529 = vsel %vm1465, %v2526, %v2507
      %v2530 = vsel %vm1465, %v2527, %v2509
      %v2531 = vsel %vm901, %v2528, %v2517
      %v2532 = vsel %vm901, %v2529, %v2519
      %v2533 = vsel %vm901, %v2530, %v2521
      %v2534 = vpack.c.bf16 %v2532, %v2531
      %v2535 = vpack.c.bf16 %v2533, %v2533
      %v2537 = vsel %vm281, %v2534, 0
      %v2540 = vsel %vm281, %v2535, 0
      %2542 = vmatprep.subr.bf16.mxu0 0
      %2543 = vmatpush1.bf16.msra.mxu0 %v1482
      %2544 = vmatprep.subr.bf16.mxu0 0
      %2545 = vmatpush1.bf16.msra.mxu0 %v1483
      %2546 = vmatprep.subr.bf16.mxu0 0
      %2547 = vmatpush1.bf16.msra.mxu0 0
      %2548 = vmatprep.subr.bf16.mxu0 0
      %2549 = vmatpush1.bf16.msra.mxu0 0
      %2550 = vmatprep.subr.bf16.mxu0 0
      %2551 = vmatpush1.bf16.msra.mxu0 0
      %2552 = vmatprep.subr.bf16.mxu0 0
      %2553 = vmatpush1.bf16.msra.mxu0 0
      %2554 = vmatprep.subr.bf16.mxu0 0
      %2555 = vmatpush1.bf16.msra.mxu0 0
      %2556 = vmatprep.subr.bf16.mxu0 0
      %2557 = vmatpush1.bf16.msra.mxu0 0
      %2558 = vmatprep.subr.bf16.mxu0 0
      %2559 = vmatpush1.bf16.msra.mxu0 0
      %2560 = vmatprep.subr.bf16.mxu0 0
      %2561 = vmatpush1.bf16.msra.mxu0 0
      %2562 = vmatprep.subr.bf16.mxu0 0
      %2563 = vmatpush1.bf16.msra.mxu0 0
      %2564 = vmatprep.subr.bf16.mxu0 0
      %2565 = vmatpush1.bf16.msra.mxu0 0
      %2566 = vmatprep.subr.bf16.mxu0 0
      %2567 = vmatpush1.bf16.msra.mxu0 0
      %2568 = vmatprep.subr.bf16.mxu0 0
      %2569 = vmatpush1.bf16.msra.mxu0 0
      %2570 = vmatprep.subr.bf16.mxu0 0
      %2571 = vmatpush1.bf16.msra.mxu0 0
      %2572 = vmatprep.subr.bf16.mxu0 0
      %2573 = vmatpush1.bf16.msra.mxu0 0
      %2574 = vmatprep.mubr.bf16.mxu0 0
      %2575 = vmatmul.mubr.bf16.gmra.mrb[0].mxu0 %v2537
      %v2576 = vpop.f32.mrb[0].mxu0
      %v2577 = vadd.f32 0.0, %v2576
      %v2578 = vpop.f32.mrb[0].mxu0
      %v2579 = vpop.f32.mrb[0].mxu0
      %v2580 = vadd.f32 0.0, %v2579
      %v2581 = vpop.f32.mrb[0].mxu0
      %2582 = vmatprep.mubr.bf16.mxu0 0
      %2583 = vmatmul.mubr.bf16.gmra.mrb[0].mxu0 %v2540
      %v2584 = vpop.f32.mrb[0].mxu0
      %v2585 = vadd.f32 0.0, %v2584
      %v2586 = vpop.f32.mrb[0].mxu0
      %v2587 = vpop.f32.mrb[0].mxu0
      %v2588 = vpop.f32.mrb[0].mxu0
      %2589 = vdwg.mxu0
      %v2590 = vadd.f32 %v253, %v1527
      %v2591 = vadd.f32 %v256, %v1530
      %v2592 = vadd.f32 %v261, %v1535
      %v2593 = vadd.f32 %v264, %v2577
      %v2594 = vadd.f32 %v269, %v2580
      %v2595 = vadd.f32 %v272, %v2585
      %v2596 = vld [vmem:[%s2 + $0x1b] sm:$0x1]
      %v2597 = vlaneseq
      %v2598 = vshrl.u32 %v2597, 7
      %v2599 = vsub.s32 0, %v2598
      %v2600 = vrot.slane %v2596, %v2599
      %v2601 = vadd.f32 %v2590, %v2600
      %v2602 = vadd.f32 %v2591, %v2600
      %v2603 = vadd.f32 %v2592, %v2600
      %v2604 = vadd.f32 %v2593, %v2600
      %v2605 = vadd.f32 %v2594, %v2600
      %v2606 = vadd.f32 %v2595, %v2600
      %v2607 = vld [vmem:[%s2 + $0x1c] sm:$0x1]
      %v2608 = vld [vmem:[%s2 + $0x1d] sm:$0x1]
      %v2609 = vsel %vm281, %v2601, 0.0
      %2610 = vadd.xlane.f32.xlu0 %v2609
      %v2611 = vpop.xlane.xlu0 %2610
      %v2612 = vsel %vm281, %v2602, 0.0
      %2613 = vadd.xlane.f32.xlu0 %v2612
      %v2614 = vpop.xlane.xlu0 %2613
      %v2615 = vsel %vm281, %v2603, 0.0
      %2616 = vadd.xlane.f32.xlu0 %v2615
      %v2617 = vpop.xlane.xlu0 %2616
      %v2618 = vsel %vm281, %v2604, 0.0
      %2619 = vadd.xlane.f32.xlu0 %v2618
      %v2620 = vpop.xlane.xlu0 %2619
      %v2621 = vsel %vm281, %v2605, 0.0
      %2622 = vadd.xlane.f32.xlu0 %v2621
      %v2623 = vpop.xlane.xlu0 %2622
      %v2624 = vsel %vm281, %v2606, 0.0
      %2625 = vadd.xlane.f32.xlu0 %v2624
      %v2626 = vpop.xlane.xlu0 %2625
      %v2627 = vmul.f32 %v2611, %v300
      %v2628 = vmul.f32 %v2614, %v300
      %v2629 = vmul.f32 %v2617, %v300
      %v2630 = vmul.f32 %v2620, %v300
      %v2631 = vmul.f32 %v2623, %v300
      %v2632 = vmul.f32 %v2626, %v300
      %v2633 = vsub.f32 %v2601, %v2627
      %v2634 = vsub.f32 %v2602, %v2628
      %v2635 = vsub.f32 %v2603, %v2629
      %v2636 = vsub.f32 %v2604, %v2630
      %v2637 = vsub.f32 %v2605, %v2631
      %v2638 = vsub.f32 %v2606, %v2632
      %v2639 = vmul.f32 %v2633, %v2633
      %v2640 = vmul.f32 %v2634, %v2634
      %v2641 = vmul.f32 %v2635, %v2635
      %v2642 = vmul.f32 %v2636, %v2636
      %v2643 = vmul.f32 %v2637, %v2637
      %v2644 = vmul.f32 %v2638, %v2638
      %v2645 = vsel %vm281, %v2639, 0.0
      %2646 = vadd.xlane.f32.xlu0 %v2645
      %v2647 = vpop.xlane.xlu0 %2646
      %v2648 = vsel %vm281, %v2640, 0.0
      %2649 = vadd.xlane.f32.xlu0 %v2648
      %v2650 = vpop.xlane.xlu0 %2649
      %v2651 = vsel %vm281, %v2641, 0.0
      %2652 = vadd.xlane.f32.xlu0 %v2651
      %v2653 = vpop.xlane.xlu0 %2652
      %v2654 = vsel %vm281, %v2642, 0.0
      %2655 = vadd.xlane.f32.xlu0 %v2654
      %v2656 = vpop.xlane.xlu0 %2655
      %v2657 = vsel %vm281, %v2643, 0.0
      %2658 = vadd.xlane.f32.xlu0 %v2657
      %v2659 = vpop.xlane.xlu0 %2658
      %v2660 = vsel %vm281, %v2644, 0.0
      %2661 = vadd.xlane.f32.xlu0 %v2660
      %v2662 = vpop.xlane.xlu0 %2661
      %v2663 = vmul.f32 %v2647, %v300
      %v2664 = vmul.f32 %v2650, %v300
      %v2665 = vmul.f32 %v2653, %v300
      %v2666 = vmul.f32 %v2656, %v300
      %v2667 = vmul.f32 %v2659, %v300
      %v2668 = vmul.f32 %v2662, %v300
      %v2669 = vadd.f32 %v2663, 1e-12
      %v2670 = vadd.f32 %v2664, 1e-12
      %v2671 = vadd.f32 %v2665, 1e-12
      %v2672 = vadd.f32 %v2666, 1e-12
      %v2673 = vadd.f32 %v2667, 1e-12
      %v2674 = vadd.f32 %v2668, 1e-12
      %v2675 = vrsqrt.pop %v2669
      %v2676 = vrsqrt.pop %v2670
      %v2677 = vrsqrt.pop %v2671
      %v2678 = vrsqrt.pop %v2672
      %v2679 = vrsqrt.pop %v2673
      %v2680 = vrsqrt.pop %v2674
      %v2681 = vmul.f32 %v2633, %v2675
      %v2682 = vmul.f32 %v2634, %v2676
      %v2683 = vmul.f32 %v2635, %v2677
      %v2684 = vmul.f32 %v2636, %v2678
      %v2685 = vmul.f32 %v2637, %v2679
      %v2686 = vmul.f32 %v2638, %v2680
      %v2687 = vlaneseq
      %v2688 = vshrl.u32 %v2687, 7
      %v2689 = vsub.s32 0, %v2688
      %v2690 = vrot.slane %v2607, %v2689
      %v2691 = vmul.f32 %v2681, %v2690
      %v2692 = vmul.f32 %v2682, %v2690
      %v2693 = vmul.f32 %v2683, %v2690
      %v2694 = vmul.f32 %v2684, %v2690
      %v2695 = vmul.f32 %v2685, %v2690
      %v2696 = vmul.f32 %v2686, %v2690
      %v2697 = vlaneseq
      %v2698 = vshrl.u32 %v2697, 7
      %v2699 = vsub.s32 0, %v2698
      %v2700 = vrot.slane %v2608, %v2699
      %v2701 = vadd.f32 %v2691, %v2700
      %v2702 = vadd.f32 %v2692, %v2700
      %v2703 = vadd.f32 %v2693, %v2700
      %v2704 = vadd.f32 %v2694, %v2700
      %v2705 = vadd.f32 %v2695, %v2700
      %v2706 = vadd.f32 %v2696, %v2700
      %v2707 = vpack.c.bf16 %v2702, %v2701
      %v2708 = vpack.c.bf16 %v2704, %v2703
      %v2709 = vpack.c.bf16 %v2706, %v2705
      %v2710 = vld [vmem:[%s1 + $0x38] sm:$0xf]
      %v2711 = vld [vmem:[%s1 + $0x3c] sm:$0xf]
      %v2712 = vld [vmem:[%s1 + $0x40] sm:$0xf]
      %v2713 = vld [vmem:[%s1 + $0x44] sm:$0xf]
      %v2714 = vld [vmem:[%s2 + $0x1e] sm:$0x1]
      %v2715 = vlaneseq
      %v2716 = vshrl.u32 %v2715, 7
      %v2717 = vsub.s32 0, %v2716
      %v2718 = vrot.slane %v2714, %v2717
      %v2723 = vunpack.c.l.b16 %v2710
      %v2724 = vunpack.c.l.b16 %v2711
      %v2725 = vunpack.c.l.b16 %v2712
      %v2726 = vunpack.c.l.b16 %v2713
      %v2727 = vpack.c.b16 %v2724, %v2723
      %v2728 = vpack.c.b16 %v2726, %v2725
      %v2732 = vsel %vm281, %v2707, 0
      %v2735 = vsel %vm281, %v2708, 0
      %v2738 = vsel %vm281, %v2709, 0
      %2740 = vmatprep.subr.bf16.mxu0 0
      %2741 = vmatpush1.bf16.msra.mxu0 %v2727
      %2742 = vmatprep.subr.bf16.mxu0 0
      %2743 = vmatpush1.bf16.msra.mxu0 %v2728
      %2744 = vmatprep.subr.bf16.mxu0 0
      %2745 = vmatpush1.bf16.msra.mxu0 0
      %2746 = vmatprep.subr.bf16.mxu0 0
      %2747 = vmatpush1.bf16.msra.mxu0 0
      %2748 = vmatprep.subr.bf16.mxu0 0
      %2749 = vmatpush1.bf16.msra.mxu0 0
      %2750 = vmatprep.subr.bf16.mxu0 0
      %2751 = vmatpush1.bf16.msra.mxu0 0
      %2752 = vmatprep.subr.bf16.mxu0 0
      %2753 = vmatpush1.bf16.msra.mxu0 0
      %2754 = vmatprep.subr.bf16.mxu0 0
      %2755 = vmatpush1.bf16.msra.mxu0 0
      %2756 = vmatprep.subr.bf16.mxu0 0
      %2757 = vmatpush1.bf16.msra.mxu0 0
      %2758 = vmatprep.subr.bf16.mxu0 0
      %2759 = vmatpush1.bf16.msra.mxu0 0
      %2760 = vmatprep.subr.bf16.mxu0 0
      %2761 = vmatpush1.bf16.msra.mxu0 0
      %2762 = vmatprep.subr.bf16.mxu0 0
      %2763 = vmatpush1.bf16.msra.mxu0 0
      %2764 = vmatprep.subr.bf16.mxu0 0
      %2765 = vmatpush1.bf16.msra.mxu0 0
      %2766 = vmatprep.subr.bf16.mxu0 0
      %2767 = vmatpush1.bf16.msra.mxu0 0
      %2768 = vmatprep.subr.bf16.mxu0 0
      %2769 = vmatpush1.bf16.msra.mxu0 0
      %2770 = vmatprep.subr.bf16.mxu0 0
      %2771 = vmatpush1.bf16.msra.mxu0 0
      %2772 = vmatprep.mubr.bf16.mxu0 0
      %2773 = vmatmul.mubr.bf16.gmra.mrb[0].mxu0 %v2732
      %v2774 = vpop.f32.mrb[0].mxu0
      %v2775 = vadd.f32 %v2718, %v2774
      %v2776 = vpop.f32.mrb[0].mxu0
      %v2777 = vpop.f32.mrb[0].mxu0
      %v2778 = vadd.f32 %v2718, %v2777
      %v2779 = vpop.f32.mrb[0].mxu0
      %2780 = vmatprep.mubr.bf16.mxu0 0
      %2781 = vmatmul.mubr.bf16.gmra.mrb[0].mxu0 %v2735
      %v2782 = vpop.f32.mrb[0].mxu0
      %v2783 = vadd.f32 %v2718, %v2782
      %v2784 = vpop.f32.mrb[0].mxu0
      %v2785 = vpop.f32.mrb[0].mxu0
      %v2786 = vadd.f32 %v2718, %v2785
      %v2787 = vpop.f32.mrb[0].mxu0
      %2788 = vmatprep.mubr.bf16.mxu0 0
      %2789 = vmatmul.mubr.bf16.gmra.mrb[0].mxu0 %v2738
      %v2790 = vpop.f32.mrb[0].mxu0
      %v2791 = vadd.f32 %v2718, %v2790
      %v2792 = vpop.f32.mrb[0].mxu0
      %v2793 = vpop.f32.mrb[0].mxu0
      %v2794 = vadd.f32 %v2718, %v2793
      %v2795 = vpop.f32.mrb[0].mxu0
      %2796 = vdwg.mxu0
      %v2797 = vmul.f32 %v2775, %v2775
      %v2798 = vmul.f32 %v2778, %v2778
      %v2799 = vmul.f32 %v2783, %v2783
      %v2800 = vmul.f32 %v2786, %v2786
      %v2801 = vmul.f32 %v2791, %v2791
      %v2802 = vmul.f32 %v2794, %v2794
      %v2803 = vmul.f32 %v2775, %v2797
      %v2804 = vmul.f32 %v2778, %v2798
      %v2805 = vmul.f32 %v2783, %v2799
      %v2806 = vmul.f32 %v2786, %v2800
      %v2807 = vmul.f32 %v2791, %v2801
      %v2808 = vmul.f32 %v2794, %v2802
      %v2809 = vmul.f32 %v2803, 0.044715
      %v2810 = vmul.f32 %v2804, 0.044715
      %v2811 = vmul.f32 %v2805, 0.044715
      %v2812 = vmul.f32 %v2806, 0.044715
      %v2813 = vmul.f32 %v2807, 0.044715
      %v2814 = vmul.f32 %v2808, 0.044715
      %v2815 = vadd.f32 %v2775, %v2809
      %v2816 = vadd.f32 %v2778, %v2810
      %v2817 = vadd.f32 %v2783, %v2811
      %v2818 = vadd.f32 %v2786, %v2812
      %v2819 = vadd.f32 %v2791, %v2813
      %v2820 = vadd.f32 %v2794, %v2814
      %v2821 = vmul.f32 %v2815, 0.7978846
      %v2822 = vmul.f32 %v2816, 0.7978846
      %v2823 = vmul.f32 %v2817, 0.7978846
      %v2824 = vmul.f32 %v2818, 0.7978846
      %v2825 = vmul.f32 %v2819, 0.7978846
      %v2826 = vmul.f32 %v2820, 0.7978846
      %v2827 = vtanh.pop %v2821
      %v2828 = vtanh.pop %v2822
      %v2829 = vtanh.pop %v2823
      %v2830 = vtanh.pop %v2824
      %v2831 = vtanh.pop %v2825
      %v2832 = vtanh.pop %v2826
      %v2833 = vadd.f32 %v2827, 1.0
      %v2834 = vadd.f32 %v2828, 1.0
      %v2835 = vadd.f32 %v2829, 1.0
      %v2836 = vadd.f32 %v2830, 1.0
      %v2837 = vadd.f32 %v2831, 1.0
      %v2838 = vadd.f32 %v2832, 1.0
      %v2839 = vmul.f32 %v2833, 0.5
      %v2840 = vmul.f32 %v2834, 0.5
      %v2841 = vmul.f32 %v2835, 0.5
      %v2842 = vmul.f32 %v2836, 0.5
      %v2843 = vmul.f32 %v2837, 0.5
      %v2844 = vmul.f32 %v2838, 0.5
      %v2845 = vmul.f32 %v2775, %v2839
      %v2846 = vmul.f32 %v2778, %v2840
      %v2847 = vmul.f32 %v2783, %v2841
      %v2848 = vmul.f32 %v2786, %v2842
      %v2849 = vmul.f32 %v2791, %v2843
      %v2850 = vmul.f32 %v2794, %v2844
      %v2851 = vpack.c.bf16 %v2846, %v2845
      %v2852 = vpack.c.bf16 %v2848, %v2847
      %v2853 = vpack.c.bf16 %v2850, %v2849
      %v2854 = vld [vmem:[%s1 + $0x48] sm:$0xf]
      %v2855 = vld [vmem:[%s1 + $0x4c] sm:$0xf]
      %v2856 = vld [vmem:[%s1 + $0x50] sm:$0xf]
      %v2857 = vld [vmem:[%s1 + $0x54] sm:$0xf]
      %v2858 = vld [vmem:[%s1 + $0x58] sm:$0xf]
      %v2859 = vld [vmem:[%s1 + $0x5c] sm:$0xf]
      %v2860 = vld [vmem:[%s1 + $0x60] sm:$0xf]
      %v2861 = vld [vmem:[%s1 + $0x64] sm:$0xf]
      %v2862 = vld [vmem:[%s2 + $0x1f] sm:$0x1]
      %v2863 = vlaneseq
      %v2864 = vshrl.u32 %v2863, 7
      %v2865 = vsub.s32 0, %v2864
      %v2866 = vrot.slane %v2862, %v2865
      %v2875 = vunpack.c.l.b16 %v2854
      %v2876 = vunpack.c.l.b16 %v2855
      %v2877 = vunpack.c.l.b16 %v2856
      %v2878 = vunpack.c.l.b16 %v2857
      %v2879 = vunpack.c.l.b16 %v2858
      %v2880 = vunpack.c.l.b16 %v2859
      %v2881 = vunpack.c.l.b16 %v2860
      %v2882 = vunpack.c.l.b16 %v2861
      %v2883 = vpack.c.b16 %v2876, %v2875
      %v2884 = vpack.c.b16 %v2878, %v2877
      %v2885 = vpack.c.b16 %v2880, %v2879
      %v2886 = vpack.c.b16 %v2882, %v2881
      %vm2891 = vcmask 523264
      %v2893 = vsel %vm2891, %v2851, 0
      %v2896 = vsel %vm2891, %v2852, 0
      %v2899 = vsel %vm2891, %v2853, 0
      %2901 = vmatprep.subr.bf16.mxu0 0
      %2902 = vmatpush1.bf16.msra.mxu0 %v2883
      %2903 = vmatprep.subr.bf16.mxu0 0
      %2904 = vmatpush1.bf16.msra.mxu0 %v2884
      %2905 = vmatprep.subr.bf16.mxu0 0
      %2906 = vmatpush1.bf16.msra.mxu0 %v2885
      %2907 = vmatprep.subr.bf16.mxu0 0
      %2908 = vmatpush1.bf16.msra.mxu0 %v2886
      %2909 = vmatprep.subr.bf16.mxu0 0
      %2910 = vmatpush1.bf16.msra.mxu0 0
      %2911 = vmatprep.subr.bf16.mxu0 0
      %2912 = vmatpush1.bf16.msra.mxu0 0
      %2913 = vmatprep.subr.bf16.mxu0 0
      %2914 = vmatpush1.bf16.msra.mxu0 0
      %2915 = vmatprep.subr.bf16.mxu0 0
      %2916 = vmatpush1.bf16.msra.mxu0 0
      %2917 = vmatprep.subr.bf16.mxu0 0
      %2918 = vmatpush1.bf16.msra.mxu0 0
      %2919 = vmatprep.subr.bf16.mxu0 0
      %2920 = vmatpush1.bf16.msra.mxu0 0
      %2921 = vmatprep.subr.bf16.mxu0 0
      %2922 = vmatpush1.bf16.msra.mxu0 0
      %2923 = vmatprep.subr.bf16.mxu0 0
      %2924 = vmatpush1.bf16.msra.mxu0 0
      %2925 = vmatprep.subr.bf16.mxu0 0
      %2926 = vmatpush1.bf16.msra.mxu0 0
      %2927 = vmatprep.subr.bf16.mxu0 0
      %2928 = vmatpush1.bf16.msra.mxu0 0
      %2929 = vmatprep.subr.bf16.mxu0 0
      %2930 = vmatpush1.bf16.msra.mxu0 0
      %2931 = vmatprep.subr.bf16.mxu0 0
      %2932 = vmatpush1.bf16.msra.mxu0 0
      %2933 = vmatprep.mubr.bf16.mxu0 0
      %2934 = vmatmul.mubr.bf16.gmra.mrb[0].mxu0 %v2893
      %v2935 = vpop.f32.mrb[0].mxu0
      %v2936 = vadd.f32 %v2866, %v2935
      %v2937 = vpop.f32.mrb[0].mxu0
      %v2938 = vpop.f32.mrb[0].mxu0
      %v2939 = vadd.f32 %v2866, %v2938
      %v2940 = vpop.f32.mrb[0].mxu0
      %2941 = vmatprep.mubr.bf16.mxu0 0
      %2942 = vmatmul.mubr.bf16.gmra.mrb[0].mxu0 %v2896
      %v2943 = vpop.f32.mrb[0].mxu0
      %v2944 = vadd.f32 %v2866, %v2943
      %v2945 = vpop.f32.mrb[0].mxu0
      %v2946 = vpop.f32.mrb[0].mxu0
      %v2947 = vadd.f32 %v2866, %v2946
      %v2948 = vpop.f32.mrb[0].mxu0
      %2949 = vmatprep.mubr.bf16.mxu0 0
      %2950 = vmatmul.mubr.bf16.gmra.mrb[0].mxu0 %v2899
      %v2951 = vpop.f32.mrb[0].mxu0
      %v2952 = vadd.f32 %v2866, %v2951
      %v2953 = vpop.f32.mrb[0].mxu0
      %v2954 = vpop.f32.mrb[0].mxu0
      %v2955 = vadd.f32 %v2866, %v2954
      %v2956 = vpop.f32.mrb[0].mxu0
      %2957 = vdwg.mxu0
      %v2958 = vadd.f32 %v2601, %v2936
      %v2959 = vadd.f32 %v2602, %v2939
      %v2960 = vadd.f32 %v2603, %v2944
      %v2961 = vadd.f32 %v2604, %v2947
      %v2962 = vadd.f32 %v2605, %v2952
      %v2963 = vadd.f32 %v2606, %v2955
      %v2964 = vld [vmem:[%s2 + $0x20] sm:$0x1]
      %v2965 = vld [vmem:[%s2 + $0x21] sm:$0x1]
      %v2966 = vsel %vm281, %v2958, 0.0
      %2967 = vadd.xlane.f32.xlu0 %v2966
      %v2968 = vpop.xlane.xlu0 %2967
      %v2969 = vsel %vm281, %v2959, 0.0
      %2970 = vadd.xlane.f32.xlu0 %v2969
      %v2971 = vpop.xlane.xlu0 %2970
      %v2972 = vsel %vm281, %v2960, 0.0
      %2973 = vadd.xlane.f32.xlu0 %v2972
      %v2974 = vpop.xlane.xlu0 %2973
      %v2975 = vsel %vm281, %v2961, 0.0
      %2976 = vadd.xlane.f32.xlu0 %v2975
      %v2977 = vpop.xlane.xlu0 %2976
      %v2978 = vsel %vm281, %v2962, 0.0
      %2979 = vadd.xlane.f32.xlu0 %v2978
      %v2980 = vpop.xlane.xlu0 %2979
      %v2981 = vsel %vm281, %v2963, 0.0
      %2982 = vadd.xlane.f32.xlu0 %v2981
      %v2983 = vpop.xlane.xlu0 %2982
      %v2984 = vmul.f32 %v2968, %v300
      %v2985 = vmul.f32 %v2971, %v300
      %v2986 = vmul.f32 %v2974, %v300
      %v2987 = vmul.f32 %v2977, %v300
      %v2988 = vmul.f32 %v2980, %v300
      %v2989 = vmul.f32 %v2983, %v300
      %v2990 = vsub.f32 %v2958, %v2984
      %v2991 = vsub.f32 %v2959, %v2985
      %v2992 = vsub.f32 %v2960, %v2986
      %v2993 = vsub.f32 %v2961, %v2987
      %v2994 = vsub.f32 %v2962, %v2988
      %v2995 = vsub.f32 %v2963, %v2989
      %v2996 = vmul.f32 %v2990, %v2990
      %v2997 = vmul.f32 %v2991, %v2991
      %v2998 = vmul.f32 %v2992, %v2992
      %v2999 = vmul.f32 %v2993, %v2993
      %v3000 = vmul.f32 %v2994, %v2994
      %v3001 = vmul.f32 %v2995, %v2995
      %v3002 = vsel %vm281, %v2996, 0.0
      %3003 = vadd.xlane.f32.xlu0 %v3002
      %v3004 = vpop.xlane.xlu0 %3003
      %v3005 = vsel %vm281, %v2997, 0.0
      %3006 = vadd.xlane.f32.xlu0 %v3005
      %v3007 = vpop.xlane.xlu0 %3006
      %v3008 = vsel %vm281, %v2998, 0.0
      %3009 = vadd.xlane.f32.xlu0 %v3008
      %v3010 = vpop.xlane.xlu0 %3009
      %v3011 = vsel %vm281, %v2999, 0.0
      %3012 = vadd.xlane.f32.xlu0 %v3011
      %v3013 = vpop.xlane.xlu0 %3012
      %v3014 = vsel %vm281, %v3000, 0.0
      %3015 = vadd.xlane.f32.xlu0 %v3014
      %v3016 = vpop.xlane.xlu0 %3015
      %v3017 = vsel %vm281, %v3001, 0.0
      %3018 = vadd.xlane.f32.xlu0 %v3017
      %v3019 = vpop.xlane.xlu0 %3018
      %v3020 = vmul.f32 %v3004, %v300
      %v3021 = vmul.f32 %v3007, %v300
      %v3022 = vmul.f32 %v3010, %v300
      %v3023 = vmul.f32 %v3013, %v300
      %v3024 = vmul.f32 %v3016, %v300
      %v3025 = vmul.f32 %v3019, %v300
      %v3026 = vadd.f32 %v3020, 1e-12
      %v3027 = vadd.f32 %v3021, 1e-12
      %v3028 = vadd.f32 %v3022, 1e-12
      %v3029 = vadd.f32 %v3023, 1e-12
      %v3030 = vadd.f32 %v3024, 1e-12
      %v3031 = vadd.f32 %v3025, 1e-12
      %v3032 = vrsqrt.pop %v3026
      %v3033 = vrsqrt.pop %v3027
      %v3034 = vrsqrt.pop %v3028
      %v3035 = vrsqrt.pop %v3029
      %v3036 = vrsqrt.pop %v3030
      %v3037 = vrsqrt.pop %v3031
      %v3038 = vmul.f32 %v2990, %v3032
      %v3039 = vmul.f32 %v2991, %v3033
      %v3040 = vmul.f32 %v2992, %v3034
      %v3041 = vmul.f32 %v2993, %v3035
      %v3042 = vmul.f32 %v2994, %v3036
      %v3043 = vmul.f32 %v2995, %v3037
      %v3044 = vlaneseq
      %v3045 = vshrl.u32 %v3044, 7
      %v3046 = vsub.s32 0, %v3045
      %v3047 = vrot.slane %v2964, %v3046
      %v3048 = vmul.f32 %v3038, %v3047
      %v3049 = vmul.f32 %v3039, %v3047
      %v3050 = vmul.f32 %v3040, %v3047
      %v3051 = vmul.f32 %v3041, %v3047
      %v3052 = vmul.f32 %v3042, %v3047
      %v3053 = vmul.f32 %v3043, %v3047
      %v3054 = vlaneseq
      %v3055 = vshrl.u32 %v3054, 7
      %v3056 = vsub.s32 0, %v3055
      %v3057 = vrot.slane %v2965, %v3056
      %v3058 = vadd.f32 %v3048, %v3057
      %v3059 = vadd.f32 %v3049, %v3057
      %v3060 = vadd.f32 %v3050, %v3057
      %v3061 = vadd.f32 %v3051, %v3057
      %v3062 = vadd.f32 %v3052, %v3057
      %v3063 = vadd.f32 %v3053, %v3057
      %v3064 = vpack.c.bf16 %v3059, %v3058
      %v3065 = vpack.c.bf16 %v3061, %v3060
      %v3066 = vpack.c.bf16 %v3063, %v3062
      %v3067 = vld [vmem:[%s1 + $0x68] sm:$0xf]
      %v3068 = vld [vmem:[%s1 + $0x6c] sm:$0xf]
      %v3069 = vld [vmem:[%s1 + $0x70] sm:$0xf]
      %v3070 = vld [vmem:[%s1 + $0x74] sm:$0xf]
      %v3071 = vld [vmem:[%s2 + $0x22] sm:$0x1]
      %v3072 = vlaneseq
      %v3073 = vshrl.u32 %v3072, 7
      %v3074 = vsub.s32 0, %v3073
      %v3075 = vrot.slane %v3071, %v3074
      %v3080 = vunpack.c.l.b16 %v3067
      %v3081 = vunpack.c.l.b16 %v3068
      %v3082 = vunpack.c.l.b16 %v3069
      %v3083 = vunpack.c.l.b16 %v3070
      %v3084 = vpack.c.b16 %v3081, %v3080
      %v3085 = vpack.c.b16 %v3083, %v3082
      %v3089 = vsel %vm281, %v3064, 0
      %v3092 = vsel %vm281, %v3065, 0
      %v3095 = vsel %vm281, %v3066, 0
      %3097 = vmatprep.subr.bf16.mxu0 0
      %3098 = vmatpush1.bf16.msra.mxu0 %v3084
      %3099 = vmatprep.subr.bf16.mxu0 0
      %3100 = vmatpush1.bf16.msra.mxu0 %v3085
      %3101 = vmatprep.subr.bf16.mxu0 0
      %3102 = vmatpush1.bf16.msra.mxu0 0
      %3103 = vmatprep.subr.bf16.mxu0 0
      %3104 = vmatpush1.bf16.msra.mxu0 0
      %3105 = vmatprep.subr.bf16.mxu0 0
      %3106 = vmatpush1.bf16.msra.mxu0 0
      %3107 = vmatprep.subr.bf16.mxu0 0
      %3108 = vmatpush1.bf16.msra.mxu0 0
      %3109 = vmatprep.subr.bf16.mxu0 0
      %3110 = vmatpush1.bf16.msra.mxu0 0
      %3111 = vmatprep.subr.bf16.mxu0 0
      %3112 = vmatpush1.bf16.msra.mxu0 0
      %3113 = vmatprep.subr.bf16.mxu0 0
      %3114 = vmatpush1.bf16.msra.mxu0 0
      %3115 = vmatprep.subr.bf16.mxu0 0
      %3116 = vmatpush1.bf16.msra.mxu0 0
      %3117 = vmatprep.subr.bf16.mxu0 0
      %3118 = vmatpush1.bf16.msra.mxu0 0
      %3119 = vmatprep.subr.bf16.mxu0 0
      %3120 = vmatpush1.bf16.msra.mxu0 0
      %3121 = vmatprep.subr.bf16.mxu0 0
      %3122 = vmatpush1.bf16.msra.mxu0 0
      %3123 = vmatprep.subr.bf16.mxu0 0
      %3124 = vmatpush1.bf16.msra.mxu0 0
      %3125 = vmatprep.subr.bf16.mxu0 0
      %3126 = vmatpush1.bf16.msra.mxu0 0
      %3127 = vmatprep.subr.bf16.mxu0 0
      %3128 = vmatpush1.bf16.msra.mxu0 0
      %3129 = vmatprep.mubr.bf16.mxu0 0
      %3130 = vmatmul.mubr.bf16.gmra.mrb[0].mxu0 %v3089
      %v3131 = vpop.f32.mrb[0].mxu0
      %v3132 = vadd.f32 %v3075, %v3131
      %v3133 = vpop.f32.mrb[0].mxu0
      %v3134 = vpop.f32.mrb[0].mxu0
      %v3135 = vadd.f32 %v3075, %v3134
      %v3136 = vpop.f32.mrb[0].mxu0
      %3137 = vmatprep.mubr.bf16.mxu0 0
      %3138 = vmatmul.mubr.bf16.gmra.mrb[0].mxu0 %v3092
      %v3139 = vpop.f32.mrb[0].mxu0
      %v3140 = vadd.f32 %v3075, %v3139
      %v3141 = vpop.f32.mrb[0].mxu0
      %v3142 = vpop.f32.mrb[0].mxu0
      %v3143 = vadd.f32 %v3075, %v3142
      %v3144 = vpop.f32.mrb[0].mxu0
      %3145 = vmatprep.mubr.bf16.mxu0 0
      %3146 = vmatmul.mubr.bf16.gmra.mrb[0].mxu0 %v3095
      %v3147 = vpop.f32.mrb[0].mxu0
      %v3148 = vadd.f32 %v3075, %v3147
      %v3149 = vpop.f32.mrb[0].mxu0
      %v3150 = vpop.f32.mrb[0].mxu0
      %v3151 = vadd.f32 %v3075, %v3150
      %v3152 = vpop.f32.mrb[0].mxu0
      %3153 = vdwg.mxu0
      %v3154 = vld [vmem:[%s1 + $0x78] sm:$0xf]
      %v3155 = vld [vmem:[%s1 + $0x7c] sm:$0xf]
      %v3156 = vld [vmem:[%s1 + $0x80] sm:$0xf]
      %v3157 = vld [vmem:[%s1 + $0x84] sm:$0xf]
      %3161 = vrot.lane.b32.xlu0 %v3132, 96
      %v3162 = vpop.permute.xlu0 %3161
      %3163 = vrot.lane.b32.xlu0 %v3135, 96
      %v3164 = vpop.permute.xlu0 %3163
      %3165 = vrot.lane.b32.xlu0 %v3140, 96
      %v3166 = vpop.permute.xlu0 %3165
      %v3167 = vsel %vm484, %v3132, 0
      %v3169 = vsel %vm484, %v3135, 0
      %v3171 = vsel %vm484, %v3140, 0
      %v3173 = vsel %vm484, %v3162, 0
      %v3175 = vsel %vm484, %v3164, 0
      %v3177 = vsel %vm484, %v3166, 0
      %3179 = vmatprep.subr.mxu0 0.0
      %3180 = vmatpush1.xpose.msra.mxu0 %v3173
      %3181 = vmatprep.subr.mxu0 0.0
      %3182 = vmatpush1.xpose.msra.mxu0 %v3175
      %3183 = vmatprep.subr.mxu0 0.0
      %3184 = vmatpush1.xpose.msra.mxu0 %v3177
      %3185 = vmatprep.subr.mxu0 0.0
      %3186 = vmatpush1.xpose.msra.mxu0 0.0
      %3187 = vmatprep.subr.mxu0 0.0
      %3188 = vmatpush1.xpose.msra.mxu0 0.0
      %3189 = vmatprep.subr.mxu0 0.0
      %3190 = vmatpush1.xpose.msra.mxu0 0.0
      %3191 = vmatprep.subr.mxu0 0.0
      %3192 = vmatpush1.xpose.msra.mxu0 0.0
      %3193 = vmatprep.subr.mxu0 0.0
      %3194 = vmatpush1.xpose.msra.mxu0 0.0
      %3195 = vmatprep.subr.mxu0 0.0
      %3196 = vmatpush1.xpose.msra.mxu0 0.0
      %3197 = vmatprep.subr.mxu0 0.0
      %3198 = vmatpush1.xpose.msra.mxu0 0.0
      %3199 = vmatprep.subr.mxu0 0.0
      %3200 = vmatpush1.xpose.msra.mxu0 0.0
      %3201 = vmatprep.subr.mxu0 0.0
      %3202 = vmatpush1.xpose.msra.mxu0 0.0
      %3203 = vmatprep.subr.mxu0 0.0
      %3204 = vmatpush1.xpose.msra.mxu0 0.0
      %3205 = vmatprep.subr.mxu0 0.0
      %3206 = vmatpush1.xpose.msra.mxu0 0.0
      %3207 = vmatprep.subr.mxu0 0.0
      %3208 = vmatpush1.xpose.msra.mxu0 0.0
      %3209 = vmatprep.subr.mxu0 0.0
      %3210 = vmatpush1.xpose.msra.mxu0 0.0
      %3211 = vmatprep.subr.mxu0 0.0
      %3212 = vmatpush1.xpose.msra.mxu0 0.0
      %3213 = vmatprep.subr.mxu0 0.0
      %3214 = vmatpush1.xpose.msra.mxu0 0.0
      %3215 = vmatprep.subr.mxu0 0.0
      %3216 = vmatpush1.xpose.msra.mxu0 0.0
      %3217 = vmatprep.subr.mxu0 0.0
      %3218 = vmatpush1.xpose.msra.mxu0 0.0
      %3219 = vmatprep.subr.mxu0 0.0
      %3220 = vmatpush1.xpose.msra.mxu0 0.0
      %3221 = vmatprep.subr.mxu0 0.0
      %3222 = vmatpush1.xpose.msra.mxu0 0.0
      %3223 = vmatprep.subr.mxu0 0.0
      %3224 = vmatpush1.xpose.msra.mxu0 0.0
      %3225 = vmatprep.subr.mxu0 0.0
      %3226 = vmatpush1.xpose.msra.mxu0 0.0
      %3227 = vmatprep.subr.mxu0 0.0
      %3228 = vmatpush1.xpose.msra.mxu0 0.0
      %3229 = vmatprep.subr.mxu0 0.0
      %3230 = vmatpush1.xpose.msra.mxu0 0.0
      %3231 = vmatprep.subr.mxu0 0.0
      %3232 = vmatpush1.xpose.msra.mxu0 0.0
      %3233 = vmatprep.subr.mxu0 0.0
      %3234 = vmatpush1.xpose.msra.mxu0 0.0
      %3235 = vmatprep.subr.mxu0 0.0
      %3236 = vmatpush1.xpose.msra.mxu0 0.0
      %3237 = vmatprep.subr.mxu0 0.0
      %3238 = vmatpush1.xpose.msra.mxu0 0.0
      %3239 = vmatprep.subr.mxu0 0.0
      %3240 = vmatpush1.xpose.msra.mxu0 0.0
      %3241 = vmatprep.subr.mxu0 0.0
      %3242 = vmatpush1.xpose.msra.mxu0 0.0
      %3243 = vmatprep.mubr.f32.mxu0 0.0
      %3244 = vmatmul.mubr.f32.gmra.mrb[0].mxu0 %v3167
      %v3245 = vpop.f32.mrb[0].mxu0
      %v3246 = vadd.f32 0.0, %v3245
      %v3247 = vpop.f32.mrb[0].mxu0
      %3248 = vmatprep.mubr.f32.mxu0 0.0
      %3249 = vmatmul.mubr.f32.gmra.mrb[0].mxu0 %v3169
      %v3250 = vpop.f32.mrb[0].mxu0
      %v3251 = vadd.f32 0.0, %v3250
      %v3252 = vpop.f32.mrb[0].mxu0
      %3253 = vmatprep.mubr.f32.mxu0 0.0
      %3254 = vmatmul.mubr.f32.gmra.mrb[0].mxu0 %v3171
      %v3255 = vpop.f32.mrb[0].mxu0
      %v3256 = vadd.f32 0.0, %v3255
      %v3257 = vpop.f32.mrb[0].mxu0
      %3258 = vdwg.mxu0
      %3259 = vrot.lane.b32.xlu0 %v3132, 120
      %v3260 = vpop.permute.xlu0 %3259
      %3261 = vrot.lane.b32.xlu0 %v3135, 120
      %v3262 = vpop.permute.xlu0 %3261
      %3263 = vrot.lane.b32.xlu0 %v3140, 120
      %v3264 = vpop.permute.xlu0 %3263
      %3265 = vrot.lane.b32.xlu0 %v3132, 88
      %v3266 = vpop.permute.xlu0 %3265
      %3267 = vrot.lane.b32.xlu0 %v3135, 88
      %v3268 = vpop.permute.xlu0 %3267
      %3269 = vrot.lane.b32.xlu0 %v3140, 88
      %v3270 = vpop.permute.xlu0 %3269
      %v3271 = vsel %vm484, %v3260, 0
      %v3273 = vsel %vm484, %v3262, 0
      %v3275 = vsel %vm484, %v3264, 0
      %v3277 = vsel %vm484, %v3266, 0
      %v3279 = vsel %vm484, %v3268, 0
      %v3281 = vsel %vm484, %v3270, 0
      %3283 = vmatprep.subr.mxu0 0.0
      %3284 = vmatpush1.xpose.msra.mxu0 %v3277
      %3285 = vmatprep.subr.mxu0 0.0
      %3286 = vmatpush1.xpose.msra.mxu0 %v3279
      %3287 = vmatprep.subr.mxu0 0.0
      %3288 = vmatpush1.xpose.msra.mxu0 %v3281
      %3289 = vmatprep.subr.mxu0 0.0
      %3290 = vmatpush1.xpose.msra.mxu0 0.0
      %3291 = vmatprep.subr.mxu0 0.0
      %3292 = vmatpush1.xpose.msra.mxu0 0.0
      %3293 = vmatprep.subr.mxu0 0.0
      %3294 = vmatpush1.xpose.msra.mxu0 0.0
      %3295 = vmatprep.subr.mxu0 0.0
      %3296 = vmatpush1.xpose.msra.mxu0 0.0
      %3297 = vmatprep.subr.mxu0 0.0
      %3298 = vmatpush1.xpose.msra.mxu0 0.0
      %3299 = vmatprep.subr.mxu0 0.0
      %3300 = vmatpush1.xpose.msra.mxu0 0.0
      %3301 = vmatprep.subr.mxu0 0.0
      %3302 = vmatpush1.xpose.msra.mxu0 0.0
      %3303 = vmatprep.subr.mxu0 0.0
      %3304 = vmatpush1.xpose.msra.mxu0 0.0
      %3305 = vmatprep.subr.mxu0 0.0
      %3306 = vmatpush1.xpose.msra.mxu0 0.0
      %3307 = vmatprep.subr.mxu0 0.0
      %3308 = vmatpush1.xpose.msra.mxu0 0.0
      %3309 = vmatprep.subr.mxu0 0.0
      %3310 = vmatpush1.xpose.msra.mxu0 0.0
      %3311 = vmatprep.subr.mxu0 0.0
      %3312 = vmatpush1.xpose.msra.mxu0 0.0
      %3313 = vmatprep.subr.mxu0 0.0
      %3314 = vmatpush1.xpose.msra.mxu0 0.0
      %3315 = vmatprep.subr.mxu0 0.0
      %3316 = vmatpush1.xpose.msra.mxu0 0.0
      %3317 = vmatprep.subr.mxu0 0.0
      %3318 = vmatpush1.xpose.msra.mxu0 0.0
      %3319 = vmatprep.subr.mxu0 0.0
      %3320 = vmatpush1.xpose.msra.mxu0 0.0
      %3321 = vmatprep.subr.mxu0 0.0
      %3322 = vmatpush1.xpose.msra.mxu0 0.0
      %3323 = vmatprep.subr.mxu0 0.0
      %3324 = vmatpush1.xpose.msra.mxu0 0.0
      %3325 = vmatprep.subr.mxu0 0.0
      %3326 = vmatpush1.xpose.msra.mxu0 0.0
      %3327 = vmatprep.subr.mxu0 0.0
      %3328 = vmatpush1.xpose.msra.mxu0 0.0
      %3329 = vmatprep.subr.mxu0 0.0
      %3330 = vmatpush1.xpose.msra.mxu0 0.0
      %3331 = vmatprep.subr.mxu0 0.0
      %3332 = vmatpush1.xpose.msra.mxu0 0.0
      %3333 = vmatprep.subr.mxu0 0.0
      %3334 = vmatpush1.xpose.msra.mxu0 0.0
      %3335 = vmatprep.subr.mxu0 0.0
      %3336 = vmatpush1.xpose.msra.mxu0 0.0
      %3337 = vmatprep.subr.mxu0 0.0
      %3338 = vmatpush1.xpose.msra.mxu0 0.0
      %3339 = vmatprep.subr.mxu0 0.0
      %3340 = vmatpush1.xpose.msra.mxu0 0.0
      %3341 = vmatprep.subr.mxu0 0.0
      %3342 = vmatpush1.xpose.msra.mxu0 0.0
      %3343 = vmatprep.subr.mxu0 0.0
      %3344 = vmatpush1.xpose.msra.mxu0 0.0
      %3345 = vmatprep.subr.mxu0 0.0
      %3346 = vmatpush1.xpose.msra.mxu0 0.0
      %3347 = vmatprep.mubr.f32.mxu0 0.0
      %3348 = vmatmul.mubr.f32.gmra.mrb[0].mxu0 %v3271
      %v3349 = vpop.f32.mrb[0].mxu0
      %v3350 = vadd.f32 0.0, %v3349
      %v3351 = vpop.f32.mrb[0].mxu0
      %3352 = vmatprep.mubr.f32.mxu0 0.0
      %3353 = vmatmul.mubr.f32.gmra.mrb[0].mxu0 %v3273
      %v3354 = vpop.f32.mrb[0].mxu0
      %v3355 = vadd.f32 0.0, %v3354
      %v3356 = vpop.f32.mrb[0].mxu0
      %3357 = vmatprep.mubr.f32.mxu0 0.0
      %3358 = vmatmul.mubr.f32.gmra.mrb[0].mxu0 %v3275
      %v3359 = vpop.f32.mrb[0].mxu0
      %v3360 = vadd.f32 0.0, %v3359
      %v3361 = vpop.f32.mrb[0].mxu0
      %3362 = vdwg.mxu0
      %3363 = vrot.lane.b32.xlu0 %v3132, 112
      %v3364 = vpop.permute.xlu0 %3363
      %3365 = vrot.lane.b32.xlu0 %v3135, 112
      %v3366 = vpop.permute.xlu0 %3365
      %3367 = vrot.lane.b32.xlu0 %v3140, 112
      %v3368 = vpop.permute.xlu0 %3367
      %3369 = vrot.lane.b32.xlu0 %v3132, 80
      %v3370 = vpop.permute.xlu0 %3369
      %3371 = vrot.lane.b32.xlu0 %v3135, 80
      %v3372 = vpop.permute.xlu0 %3371
      %3373 = vrot.lane.b32.xlu0 %v3140, 80
      %v3374 = vpop.permute.xlu0 %3373
      %v3375 = vsel %vm484, %v3364, 0
      %v3377 = vsel %vm484, %v3366, 0
      %v3379 = vsel %vm484, %v3368, 0
      %v3381 = vsel %vm484, %v3370, 0
      %v3383 = vsel %vm484, %v3372, 0
      %v3385 = vsel %vm484, %v3374, 0
      %3387 = vmatprep.subr.mxu0 0.0
      %3388 = vmatpush1.xpose.msra.mxu0 %v3381
      %3389 = vmatprep.subr.mxu0 0.0
      %3390 = vmatpush1.xpose.msra.mxu0 %v3383
      %3391 = vmatprep.subr.mxu0 0.0
      %3392 = vmatpush1.xpose.msra.mxu0 %v3385
      %3393 = vmatprep.subr.mxu0 0.0
      %3394 = vmatpush1.xpose.msra.mxu0 0.0
      %3395 = vmatprep.subr.mxu0 0.0
      %3396 = vmatpush1.xpose.msra.mxu0 0.0
      %3397 = vmatprep.subr.mxu0 0.0
      %3398 = vmatpush1.xpose.msra.mxu0 0.0
      %3399 = vmatprep.subr.mxu0 0.0
      %3400 = vmatpush1.xpose.msra.mxu0 0.0
      %3401 = vmatprep.subr.mxu0 0.0
      %3402 = vmatpush1.xpose.msra.mxu0 0.0
      %3403 = vmatprep.subr.mxu0 0.0
      %3404 = vmatpush1.xpose.msra.mxu0 0.0
      %3405 = vmatprep.subr.mxu0 0.0
      %3406 = vmatpush1.xpose.msra.mxu0 0.0
      %3407 = vmatprep.subr.mxu0 0.0
      %3408 = vmatpush1.xpose.msra.mxu0 0.0
      %3409 = vmatprep.subr.mxu0 0.0
      %3410 = vmatpush1.xpose.msra.mxu0 0.0
      %3411 = vmatprep.subr.mxu0 0.0
      %3412 = vmatpush1.xpose.msra.mxu0 0.0
      %3413 = vmatprep.subr.mxu0 0.0
      %3414 = vmatpush1.xpose.msra.mxu0 0.0
      %3415 = vmatprep.subr.mxu0 0.0
      %3416 = vmatpush1.xpose.msra.mxu0 0.0
      %3417 = vmatprep.subr.mxu0 0.0
      %3418 = vmatpush1.xpose.msra.mxu0 0.0
      %3419 = vmatprep.subr.mxu0 0.0
      %3420 = vmatpush1.xpose.msra.mxu0 0.0
      %3421 = vmatprep.subr.mxu0 0.0
      %3422 = vmatpush1.xpose.msra.mxu0 0.0
      %3423 = vmatprep.subr.mxu0 0.0
      %3424 = vmatpush1.xpose.msra.mxu0 0.0
      %3425 = vmatprep.subr.mxu0 0.0
      %3426 = vmatpush1.xpose.msra.mxu0 0.0
      %3427 = vmatprep.subr.mxu0 0.0
      %3428 = vmatpush1.xpose.msra.mxu0 0.0
      %3429 = vmatprep.subr.mxu0 0.0
      %3430 = vmatpush1.xpose.msra.mxu0 0.0
      %3431 = vmatprep.subr.mxu0 0.0
      %3432 = vmatpush1.xpose.msra.mxu0 0.0
      %3433 = vmatprep.subr.mxu0 0.0
      %3434 = vmatpush1.xpose.msra.mxu0 0.0
      %3435 = vmatprep.subr.mxu0 0.0
      %3436 = vmatpush1.xpose.msra.mxu0 0.0
      %3437 = vmatprep.subr.mxu0 0.0
      %3438 = vmatpush1.xpose.msra.mxu0 0.0
      %3439 = vmatprep.subr.mxu0 0.0
      %3440 = vmatpush1.xpose.msra.mxu0 0.0
      %3441 = vmatprep.subr.mxu0 0.0
      %3442 = vmatpush1.xpose.msra.mxu0 0.0
      %3443 = vmatprep.subr.mxu0 0.0
      %3444 = vmatpush1.xpose.msra.mxu0 0.0
      %3445 = vmatprep.subr.mxu0 0.0
      %3446 = vmatpush1.xpose.msra.mxu0 0.0
      %3447 = vmatprep.subr.mxu0 0.0
      %3448 = vmatpush1.xpose.msra.mxu0 0.0
      %3449 = vmatprep.subr.mxu0 0.0
      %3450 = vmatpush1.xpose.msra.mxu0 0.0
      %3451 = vmatprep.mubr.f32.mxu0 0.0
      %3452 = vmatmul.mubr.f32.gmra.mrb[0].mxu0 %v3375
      %v3453 = vpop.f32.mrb[0].mxu0
      %v3454 = vadd.f32 0.0, %v3453
      %v3455 = vpop.f32.mrb[0].mxu0
      %3456 = vmatprep.mubr.f32.mxu0 0.0
      %3457 = vmatmul.mubr.f32.gmra.mrb[0].mxu0 %v3377
      %v3458 = vpop.f32.mrb[0].mxu0
      %v3459 = vadd.f32 0.0, %v3458
      %v3460 = vpop.f32.mrb[0].mxu0
      %3461 = vmatprep.mubr.f32.mxu0 0.0
      %3462 = vmatmul.mubr.f32.gmra.mrb[0].mxu0 %v3379
      %v3463 = vpop.f32.mrb[0].mxu0
      %v3464 = vadd.f32 0.0, %v3463
      %v3465 = vpop.f32.mrb[0].mxu0
      %3466 = vdwg.mxu0
      %3467 = vrot.lane.b32.xlu0 %v3132, 104
      %v3468 = vpop.permute.xlu0 %3467
      %3469 = vrot.lane.b32.xlu0 %v3135, 104
      %v3470 = vpop.permute.xlu0 %3469
      %3471 = vrot.lane.b32.xlu0 %v3140, 104
      %v3472 = vpop.permute.xlu0 %3471
      %3473 = vrot.lane.b32.xlu0 %v3132, 72
      %v3474 = vpop.permute.xlu0 %3473
      %3475 = vrot.lane.b32.xlu0 %v3135, 72
      %v3476 = vpop.permute.xlu0 %3475
      %3477 = vrot.lane.b32.xlu0 %v3140, 72
      %v3478 = vpop.permute.xlu0 %3477
      %v3479 = vsel %vm484, %v3468, 0
      %v3481 = vsel %vm484, %v3470, 0
      %v3483 = vsel %vm484, %v3472, 0
      %v3485 = vsel %vm484, %v3474, 0
      %v3487 = vsel %vm484, %v3476, 0
      %v3489 = vsel %vm484, %v3478, 0
      %3491 = vmatprep.subr.mxu0 0.0
      %3492 = vmatpush1.xpose.msra.mxu0 %v3485
      %3493 = vmatprep.subr.mxu0 0.0
      %3494 = vmatpush1.xpose.msra.mxu0 %v3487
      %3495 = vmatprep.subr.mxu0 0.0
      %3496 = vmatpush1.xpose.msra.mxu0 %v3489
      %3497 = vmatprep.subr.mxu0 0.0
      %3498 = vmatpush1.xpose.msra.mxu0 0.0
      %3499 = vmatprep.subr.mxu0 0.0
      %3500 = vmatpush1.xpose.msra.mxu0 0.0
      %3501 = vmatprep.subr.mxu0 0.0
      %3502 = vmatpush1.xpose.msra.mxu0 0.0
      %3503 = vmatprep.subr.mxu0 0.0
      %3504 = vmatpush1.xpose.msra.mxu0 0.0
      %3505 = vmatprep.subr.mxu0 0.0
      %3506 = vmatpush1.xpose.msra.mxu0 0.0
      %3507 = vmatprep.subr.mxu0 0.0
      %3508 = vmatpush1.xpose.msra.mxu0 0.0
      %3509 = vmatprep.subr.mxu0 0.0
      %3510 = vmatpush1.xpose.msra.mxu0 0.0
      %3511 = vmatprep.subr.mxu0 0.0
      %3512 = vmatpush1.xpose.msra.mxu0 0.0
      %3513 = vmatprep.subr.mxu0 0.0
      %3514 = vmatpush1.xpose.msra.mxu0 0.0
      %3515 = vmatprep.subr.mxu0 0.0
      %3516 = vmatpush1.xpose.msra.mxu0 0.0
      %3517 = vmatprep.subr.mxu0 0.0
      %3518 = vmatpush1.xpose.msra.mxu0 0.0
      %3519 = vmatprep.subr.mxu0 0.0
      %3520 = vmatpush1.xpose.msra.mxu0 0.0
      %3521 = vmatprep.subr.mxu0 0.0
      %3522 = vmatpush1.xpose.msra.mxu0 0.0
      %3523 = vmatprep.subr.mxu0 0.0
      %3524 = vmatpush1.xpose.msra.mxu0 0.0
      %3525 = vmatprep.subr.mxu0 0.0
      %3526 = vmatpush1.xpose.msra.mxu0 0.0
      %3527 = vmatprep.subr.mxu0 0.0
      %3528 = vmatpush1.xpose.msra.mxu0 0.0
      %3529 = vmatprep.subr.mxu0 0.0
      %3530 = vmatpush1.xpose.msra.mxu0 0.0
      %3531 = vmatprep.subr.mxu0 0.0
      %3532 = vmatpush1.xpose.msra.mxu0 0.0
      %3533 = vmatprep.subr.mxu0 0.0
      %3534 = vmatpush1.xpose.msra.mxu0 0.0
      %3535 = vmatprep.subr.mxu0 0.0
      %3536 = vmatpush1.xpose.msra.mxu0 0.0
      %3537 = vmatprep.subr.mxu0 0.0
      %3538 = vmatpush1.xpose.msra.mxu0 0.0
      %3539 = vmatprep.subr.mxu0 0.0
      %3540 = vmatpush1.xpose.msra.mxu0 0.0
      %3541 = vmatprep.subr.mxu0 0.0
      %3542 = vmatpush1.xpose.msra.mxu0 0.0
      %3543 = vmatprep.subr.mxu0 0.0
      %3544 = vmatpush1.xpose.msra.mxu0 0.0
      %3545 = vmatprep.subr.mxu0 0.0
      %3546 = vmatpush1.xpose.msra.mxu0 0.0
      %3547 = vmatprep.subr.mxu0 0.0
      %3548 = vmatpush1.xpose.msra.mxu0 0.0
      %3549 = vmatprep.subr.mxu0 0.0
      %3550 = vmatpush1.xpose.msra.mxu0 0.0
      %3551 = vmatprep.subr.mxu0 0.0
      %3552 = vmatpush1.xpose.msra.mxu0 0.0
      %3553 = vmatprep.subr.mxu0 0.0
      %3554 = vmatpush1.xpose.msra.mxu0 0.0
      %3555 = vmatprep.mubr.f32.mxu0 0.0
      %3556 = vmatmul.mubr.f32.gmra.mrb[0].mxu0 %v3479
      %v3557 = vpop.f32.mrb[0].mxu0
      %v3558 = vadd.f32 0.0, %v3557
      %v3559 = vpop.f32.mrb[0].mxu0
      %3560 = vmatprep.mubr.f32.mxu0 0.0
      %3561 = vmatmul.mubr.f32.gmra.mrb[0].mxu0 %v3481
      %v3562 = vpop.f32.mrb[0].mxu0
      %v3563 = vadd.f32 0.0, %v3562
      %v3564 = vpop.f32.mrb[0].mxu0
      %3565 = vmatprep.mubr.f32.mxu0 0.0
      %3566 = vmatmul.mubr.f32.gmra.mrb[0].mxu0 %v3483
      %v3567 = vpop.f32.mrb[0].mxu0
      %v3568 = vadd.f32 0.0, %v3567
      %v3569 = vpop.f32.mrb[0].mxu0
      %3570 = vdwg.mxu0
      %v3571 = vadd.f32 %v3246, %v278
      %v3572 = vadd.f32 %v3251, %v278
      %v3573 = vadd.f32 %v3256, %v278
      %v3574 = vadd.f32 %v3350, %v278
      %v3575 = vadd.f32 %v3355, %v278
      %v3576 = vadd.f32 %v3360, %v278
      %v3577 = vadd.f32 %v3454, %v278
      %v3578 = vadd.f32 %v3459, %v278
      %v3579 = vadd.f32 %v3464, %v278
      %v3580 = vadd.f32 %v3558, %v278
      %v3581 = vadd.f32 %v3563, %v278
      %v3582 = vadd.f32 %v3568, %v278
      %v3583 = vsel %vm901, %v3571, -inf
      %3584 = vmax.xlane.f32.xlu0 %v3583
      %v3585 = vpop.xlane.xlu0 %3584
      %v3586 = vsel %vm901, %v3572, -inf
      %3587 = vmax.xlane.f32.xlu0 %v3586
      %v3588 = vpop.xlane.xlu0 %3587
      %v3589 = vsel %vm901, %v3573, -inf
      %3590 = vmax.xlane.f32.xlu0 %v3589
      %v3591 = vpop.xlane.xlu0 %3590
      %v3592 = vsel %vm901, %v3574, -inf
      %3593 = vmax.xlane.f32.xlu0 %v3592
      %v3594 = vpop.xlane.xlu0 %3593
      %v3595 = vsel %vm901, %v3575, -inf
      %3596 = vmax.xlane.f32.xlu0 %v3595
      %v3597 = vpop.xlane.xlu0 %3596
      %v3598 = vsel %vm901, %v3576, -inf
      %3599 = vmax.xlane.f32.xlu0 %v3598
      %v3600 = vpop.xlane.xlu0 %3599
      %v3601 = vsel %vm901, %v3577, -inf
      %3602 = vmax.xlane.f32.xlu0 %v3601
      %v3603 = vpop.xlane.xlu0 %3602
      %v3604 = vsel %vm901, %v3578, -inf
      %3605 = vmax.xlane.f32.xlu0 %v3604
      %v3606 = vpop.xlane.xlu0 %3605
      %v3607 = vsel %vm901, %v3579, -inf
      %3608 = vmax.xlane.f32.xlu0 %v3607
      %v3609 = vpop.xlane.xlu0 %3608
      %v3610 = vsel %vm901, %v3580, -inf
      %3611 = vmax.xlane.f32.xlu0 %v3610
      %v3612 = vpop.xlane.xlu0 %3611
      %v3613 = vsel %vm901, %v3581, -inf
      %3614 = vmax.xlane.f32.xlu0 %v3613
      %v3615 = vpop.xlane.xlu0 %3614
      %v3616 = vsel %vm901, %v3582, -inf
      %3617 = vmax.xlane.f32.xlu0 %v3616
      %v3618 = vpop.xlane.xlu0 %3617
      %v3619 = vsub.f32 %v3571, %v3585
      %v3620 = vsub.f32 %v3572, %v3588
      %v3621 = vsub.f32 %v3573, %v3591
      %v3622 = vsub.f32 %v3574, %v3594
      %v3623 = vsub.f32 %v3575, %v3597
      %v3624 = vsub.f32 %v3576, %v3600
      %v3625 = vsub.f32 %v3577, %v3603
      %v3626 = vsub.f32 %v3578, %v3606
      %v3627 = vsub.f32 %v3579, %v3609
      %v3628 = vsub.f32 %v3580, %v3612
      %v3629 = vsub.f32 %v3581, %v3615
      %v3630 = vsub.f32 %v3582, %v3618
      %v3631 = vmul.f32 %v3619, 1.442695
      %v3632 = vpow.pop %v3631
      %v3633 = vmul.f32 %v3620, 1.442695
      %v3634 = vpow.pop %v3633
      %v3635 = vmul.f32 %v3621, 1.442695
      %v3636 = vpow.pop %v3635
      %v3637 = vmul.f32 %v3622, 1.442695
      %v3638 = vpow.pop %v3637
      %v3639 = vmul.f32 %v3623, 1.442695
      %v3640 = vpow.pop %v3639
      %v3641 = vmul.f32 %v3624, 1.442695
      %v3642 = vpow.pop %v3641
      %v3643 = vmul.f32 %v3625, 1.442695
      %v3644 = vpow.pop %v3643
      %v3645 = vmul.f32 %v3626, 1.442695
      %v3646 = vpow.pop %v3645
      %v3647 = vmul.f32 %v3627, 1.442695
      %v3648 = vpow.pop %v3647
      %v3649 = vmul.f32 %v3628, 1.442695
      %v3650 = vpow.pop %v3649
      %v3651 = vmul.f32 %v3629, 1.442695
      %v3652 = vpow.pop %v3651
      %v3653 = vmul.f32 %v3630, 1.442695
      %v3654 = vpow.pop %v3653
      %v3655 = vsel %vm901, %v3632, 0.0
      %3656 = vadd.xlane.f32.xlu0 %v3655
      %v3657 = vpop.xlane.xlu0 %3656
      %v3658 = vsel %vm901, %v3634, 0.0
      %3659 = vadd.xlane.f32.xlu0 %v3658
      %v3660 = vpop.xlane.xlu0 %3659
      %v3661 = vsel %vm901, %v3636, 0.0
      %3662 = vadd.xlane.f32.xlu0 %v3661
      %v3663 = vpop.xlane.xlu0 %3662
      %v3664 = vsel %vm901, %v3638, 0.0
      %3665 = vadd.xlane.f32.xlu0 %v3664
      %v3666 = vpop.xlane.xlu0 %3665
      %v3667 = vsel %vm901, %v3640, 0.0
      %3668 = vadd.xlane.f32.xlu0 %v3667
      %v3669 = vpop.xlane.xlu0 %3668
      %v3670 = vsel %vm901, %v3642, 0.0
      %3671 = vadd.xlane.f32.xlu0 %v3670
      %v3672 = vpop.xlane.xlu0 %3671
      %v3673 = vsel %vm901, %v3644, 0.0
      %3674 = vadd.xlane.f32.xlu0 %v3673
      %v3675 = vpop.xlane.xlu0 %3674
      %v3676 = vsel %vm901, %v3646, 0.0
      %3677 = vadd.xlane.f32.xlu0 %v3676
      %v3678 = vpop.xlane.xlu0 %3677
      %v3679 = vsel %vm901, %v3648, 0.0
      %3680 = vadd.xlane.f32.xlu0 %v3679
      %v3681 = vpop.xlane.xlu0 %3680
      %v3682 = vsel %vm901, %v3650, 0.0
      %3683 = vadd.xlane.f32.xlu0 %v3682
      %v3684 = vpop.xlane.xlu0 %3683
      %v3685 = vsel %vm901, %v3652, 0.0
      %3686 = vadd.xlane.f32.xlu0 %v3685
      %v3687 = vpop.xlane.xlu0 %3686
      %v3688 = vsel %vm901, %v3654, 0.0
      %3689 = vadd.xlane.f32.xlu0 %v3688
      %v3690 = vpop.xlane.xlu0 %3689
      %v3691 = vrcp.pop %v3657
      %v3692 = vrcp.pop %v3660
      %v3693 = vrcp.pop %v3663
      %v3694 = vrcp.pop %v3666
      %v3695 = vrcp.pop %v3669
      %v3696 = vrcp.pop %v3672
      %v3697 = vrcp.pop %v3675
      %v3698 = vrcp.pop %v3678
      %v3699 = vrcp.pop %v3681
      %v3700 = vrcp.pop %v3684
      %v3701 = vrcp.pop %v3687
      %v3702 = vrcp.pop %v3690
      %3703 = vrot.lane.b32.xlu0 %v3132, 64
      %v3704 = vpop.permute.xlu0 %3703
      %3705 = vrot.lane.b32.xlu0 %v3135, 64
      %v3706 = vpop.permute.xlu0 %3705
      %3707 = vrot.lane.b32.xlu0 %v3140, 64
      %v3708 = vpop.permute.xlu0 %3707
      %v3713 = vsel %vm901, %v3632, 0
      %v3716 = vsel %vm901, %v3634, 0
      %v3719 = vsel %vm901, %v3636, 0
      %3721 = vmatprep.subr.mxu0 0.0
      %3722 = vmatpush1.msra.mxu0 %v3704
      %3723 = vmatprep.subr.mxu0 0.0
      %3724 = vmatpush1.msra.mxu0 %v3706
      %3725 = vmatprep.subr.mxu0 0.0
      %3726 = vmatpush1.msra.mxu0 %v3708
      %3727 = vmatprep.subr.mxu0 0.0
      %3728 = vmatpush1.msra.mxu0 0.0
      %3729 = vmatprep.subr.mxu0 0.0
      %3730 = vmatpush1.msra.mxu0 0.0
      %3731 = vmatprep.subr.mxu0 0.0
      %3732 = vmatpush1.msra.mxu0 0.0
      %3733 = vmatprep.subr.mxu0 0.0
      %3734 = vmatpush1.msra.mxu0 0.0
      %3735 = vmatprep.subr.mxu0 0.0
      %3736 = vmatpush1.msra.mxu0 0.0
      %3737 = vmatprep.subr.mxu0 0.0
      %3738 = vmatpush1.msra.mxu0 0.0
      %3739 = vmatprep.subr.mxu0 0.0
      %3740 = vmatpush1.msra.mxu0 0.0
      %3741 = vmatprep.subr.mxu0 0.0
      %3742 = vmatpush1.msra.mxu0 0.0
      %3743 = vmatprep.subr.mxu0 0.0
      %3744 = vmatpush1.msra.mxu0 0.0
      %3745 = vmatprep.subr.mxu0 0.0
      %3746 = vmatpush1.msra.mxu0 0.0
      %3747 = vmatprep.subr.mxu0 0.0
      %3748 = vmatpush1.msra.mxu0 0.0
      %3749 = vmatprep.subr.mxu0 0.0
      %3750 = vmatpush1.msra.mxu0 0.0
      %3751 = vmatprep.subr.mxu0 0.0
      %3752 = vmatpush1.msra.mxu0 0.0
      %3753 = vmatprep.subr.mxu0 0.0
      %3754 = vmatpush1.msra.mxu0 0.0
      %3755 = vmatprep.subr.mxu0 0.0
      %3756 = vmatpush1.msra.mxu0 0.0
      %3757 = vmatprep.subr.mxu0 0.0
      %3758 = vmatpush1.msra.mxu0 0.0
      %3759 = vmatprep.subr.mxu0 0.0
      %3760 = vmatpush1.msra.mxu0 0.0
      %3761 = vmatprep.subr.mxu0 0.0
      %3762 = vmatpush1.msra.mxu0 0.0
      %3763 = vmatprep.subr.mxu0 0.0
      %3764 = vmatpush1.msra.mxu0 0.0
      %3765 = vmatprep.subr.mxu0 0.0
      %3766 = vmatpush1.msra.mxu0 0.0
      %3767 = vmatprep.subr.mxu0 0.0
      %3768 = vmatpush1.msra.mxu0 0.0
      %3769 = vmatprep.subr.mxu0 0.0
      %3770 = vmatpush1.msra.mxu0 0.0
      %3771 = vmatprep.subr.mxu0 0.0
      %3772 = vmatpush1.msra.mxu0 0.0
      %3773 = vmatprep.subr.mxu0 0.0
      %3774 = vmatpush1.msra.mxu0 0.0
      %3775 = vmatprep.subr.mxu0 0.0
      %3776 = vmatpush1.msra.mxu0 0.0
      %3777 = vmatprep.subr.mxu0 0.0
      %3778 = vmatpush1.msra.mxu0 0.0
      %3779 = vmatprep.subr.mxu0 0.0
      %3780 = vmatpush1.msra.mxu0 0.0
      %3781 = vmatprep.subr.mxu0 0.0
      %3782 = vmatpush1.msra.mxu0 0.0
      %3783 = vmatprep.subr.mxu0 0.0
      %3784 = vmatpush1.msra.mxu0 0.0
      %3785 = vmatprep.mubr.f32.mxu0 0.0
      %3786 = vmatmul.mubr.f32.gmra.mrb[0].mxu0 %v3713
      %v3787 = vpop.f32.mrb[0].mxu0
      %v3788 = vadd.f32 0.0, %v3787
      %v3789 = vpop.f32.mrb[0].mxu0
      %3790 = vmatprep.mubr.f32.mxu0 0.0
      %3791 = vmatmul.mubr.f32.gmra.mrb[0].mxu0 %v3716
      %v3792 = vpop.f32.mrb[0].mxu0
      %v3793 = vadd.f32 0.0, %v3792
      %v3794 = vpop.f32.mrb[0].mxu0
      %3795 = vmatprep.mubr.f32.mxu0 0.0
      %3796 = vmatmul.mubr.f32.gmra.mrb[0].mxu0 %v3719
      %v3797 = vpop.f32.mrb[0].mxu0
      %v3798 = vadd.f32 0.0, %v3797
      %v3799 = vpop.f32.mrb[0].mxu0
      %3800 = vdwg.mxu0
      %v3801 = vmul.f32 %v3788, %v3691
      %v3802 = vmul.f32 %v3793, %v3692
      %v3803 = vmul.f32 %v3798, %v3693
      %3804 = vrot.lane.b32.xlu0 %v3132, 56
      %v3805 = vpop.permute.xlu0 %3804
      %3806 = vrot.lane.b32.xlu0 %v3135, 56
      %v3807 = vpop.permute.xlu0 %3806
      %3808 = vrot.lane.b32.xlu0 %v3140, 56
      %v3809 = vpop.permute.xlu0 %3808
      %v3814 = vsel %vm901, %v3638, 0
      %v3817 = vsel %vm901, %v3640, 0
      %v3820 = vsel %vm901, %v3642, 0
      %3822 = vmatprep.subr.mxu0 0.0
      %3823 = vmatpush1.msra.mxu0 %v3805
      %3824 = vmatprep.subr.mxu0 0.0
      %3825 = vmatpush1.msra.mxu0 %v3807
      %3826 = vmatprep.subr.mxu0 0.0
      %3827 = vmatpush1.msra.mxu0 %v3809
      %3828 = vmatprep.subr.mxu0 0.0
      %3829 = vmatpush1.msra.mxu0 0.0
      %3830 = vmatprep.subr.mxu0 0.0
      %3831 = vmatpush1.msra.mxu0 0.0
      %3832 = vmatprep.subr.mxu0 0.0
      %3833 = vmatpush1.msra.mxu0 0.0
      %3834 = vmatprep.subr.mxu0 0.0
      %3835 = vmatpush1.msra.mxu0 0.0
      %3836 = vmatprep.subr.mxu0 0.0
      %3837 = vmatpush1.msra.mxu0 0.0
      %3838 = vmatprep.subr.mxu0 0.0
      %3839 = vmatpush1.msra.mxu0 0.0
      %3840 = vmatprep.subr.mxu0 0.0
      %3841 = vmatpush1.msra.mxu0 0.0
      %3842 = vmatprep.subr.mxu0 0.0
      %3843 = vmatpush1.msra.mxu0 0.0
      %3844 = vmatprep.subr.mxu0 0.0
      %3845 = vmatpush1.msra.mxu0 0.0
      %3846 = vmatprep.subr.mxu0 0.0
      %3847 = vmatpush1.msra.mxu0 0.0
      %3848 = vmatprep.subr.mxu0 0.0
      %3849 = vmatpush1.msra.mxu0 0.0
      %3850 = vmatprep.subr.mxu0 0.0
      %3851 = vmatpush1.msra.mxu0 0.0
      %3852 = vmatprep.subr.mxu0 0.0
      %3853 = vmatpush1.msra.mxu0 0.0
      %3854 = vmatprep.subr.mxu0 0.0
      %3855 = vmatpush1.msra.mxu0 0.0
      %3856 = vmatprep.subr.mxu0 0.0
      %3857 = vmatpush1.msra.mxu0 0.0
      %3858 = vmatprep.subr.mxu0 0.0
      %3859 = vmatpush1.msra.mxu0 0.0
      %3860 = vmatprep.subr.mxu0 0.0
      %3861 = vmatpush1.msra.mxu0 0.0
      %3862 = vmatprep.subr.mxu0 0.0
      %3863 = vmatpush1.msra.mxu0 0.0
      %3864 = vmatprep.subr.mxu0 0.0
      %3865 = vmatpush1.msra.mxu0 0.0
      %3866 = vmatprep.subr.mxu0 0.0
      %3867 = vmatpush1.msra.mxu0 0.0
      %3868 = vmatprep.subr.mxu0 0.0
      %3869 = vmatpush1.msra.mxu0 0.0
      %3870 = vmatprep.subr.mxu0 0.0
      %3871 = vmatpush1.msra.mxu0 0.0
      %3872 = vmatprep.subr.mxu0 0.0
      %3873 = vmatpush1.msra.mxu0 0.0
      %3874 = vmatprep.subr.mxu0 0.0
      %3875 = vmatpush1.msra.mxu0 0.0
      %3876 = vmatprep.subr.mxu0 0.0
      %3877 = vmatpush1.msra.mxu0 0.0
      %3878 = vmatprep.subr.mxu0 0.0
      %3879 = vmatpush1.msra.mxu0 0.0
      %3880 = vmatprep.subr.mxu0 0.0
      %3881 = vmatpush1.msra.mxu0 0.0
      %3882 = vmatprep.subr.mxu0 0.0
      %3883 = vmatpush1.msra.mxu0 0.0
      %3884 = vmatprep.subr.mxu0 0.0
      %3885 = vmatpush1.msra.mxu0 0.0
      %3886 = vmatprep.mubr.f32.mxu0 0.0
      %3887 = vmatmul.mubr.f32.gmra.mrb[0].mxu0 %v3814
      %v3888 = vpop.f32.mrb[0].mxu0
      %v3889 = vadd.f32 0.0, %v3888
      %v3890 = vpop.f32.mrb[0].mxu0
      %3891 = vmatprep.mubr.f32.mxu0 0.0
      %3892 = vmatmul.mubr.f32.gmra.mrb[0].mxu0 %v3817
      %v3893 = vpop.f32.mrb[0].mxu0
      %v3894 = vadd.f32 0.0, %v3893
      %v3895 = vpop.f32.mrb[0].mxu0
      %3896 = vmatprep.mubr.f32.mxu0 0.0
      %3897 = vmatmul.mubr.f32.gmra.mrb[0].mxu0 %v3820
      %v3898 = vpop.f32.mrb[0].mxu0
      %v3899 = vadd.f32 0.0, %v3898
      %v3900 = vpop.f32.mrb[0].mxu0
      %3901 = vdwg.mxu0
      %v3902 = vmul.f32 %v3889, %v3694
      %v3903 = vmul.f32 %v3894, %v3695
      %v3904 = vmul.f32 %v3899, %v3696
      %3905 = vrot.lane.b32.xlu0 %v3132, 48
      %v3906 = vpop.permute.xlu0 %3905
      %3907 = vrot.lane.b32.xlu0 %v3135, 48
      %v3908 = vpop.permute.xlu0 %3907
      %3909 = vrot.lane.b32.xlu0 %v3140, 48
      %v3910 = vpop.permute.xlu0 %3909
      %v3915 = vsel %vm901, %v3644, 0
      %v3918 = vsel %vm901, %v3646, 0
      %v3921 = vsel %vm901, %v3648, 0
      %3923 = vmatprep.subr.mxu0 0.0
      %3924 = vmatpush1.msra.mxu0 %v3906
      %3925 = vmatprep.subr.mxu0 0.0
      %3926 = vmatpush1.msra.mxu0 %v3908
      %3927 = vmatprep.subr.mxu0 0.0
      %3928 = vmatpush1.msra.mxu0 %v3910
      %3929 = vmatprep.subr.mxu0 0.0
      %3930 = vmatpush1.msra.mxu0 0.0
      %3931 = vmatprep.subr.mxu0 0.0
      %3932 = vmatpush1.msra.mxu0 0.0
      %3933 = vmatprep.subr.mxu0 0.0
      %3934 = vmatpush1.msra.mxu0 0.0
      %3935 = vmatprep.subr.mxu0 0.0
      %3936 = vmatpush1.msra.mxu0 0.0
      %3937 = vmatprep.subr.mxu0 0.0
      %3938 = vmatpush1.msra.mxu0 0.0
      %3939 = vmatprep.subr.mxu0 0.0
      %3940 = vmatpush1.msra.mxu0 0.0
      %3941 = vmatprep.subr.mxu0 0.0
      %3942 = vmatpush1.msra.mxu0 0.0
      %3943 = vmatprep.subr.mxu0 0.0
      %3944 = vmatpush1.msra.mxu0 0.0
      %3945 = vmatprep.subr.mxu0 0.0
      %3946 = vmatpush1.msra.mxu0 0.0
      %3947 = vmatprep.subr.mxu0 0.0
      %3948 = vmatpush1.msra.mxu0 0.0
      %3949 = vmatprep.subr.mxu0 0.0
      %3950 = vmatpush1.msra.mxu0 0.0
      %3951 = vmatprep.subr.mxu0 0.0
      %3952 = vmatpush1.msra.mxu0 0.0
      %3953 = vmatprep.subr.mxu0 0.0
      %3954 = vmatpush1.msra.mxu0 0.0
      %3955 = vmatprep.subr.mxu0 0.0
      %3956 = vmatpush1.msra.mxu0 0.0
      %3957 = vmatprep.subr.mxu0 0.0
      %3958 = vmatpush1.msra.mxu0 0.0
      %3959 = vmatprep.subr.mxu0 0.0
      %3960 = vmatpush1.msra.mxu0 0.0
      %3961 = vmatprep.subr.mxu0 0.0
      %3962 = vmatpush1.msra.mxu0 0.0
      %3963 = vmatprep.subr.mxu0 0.0
      %3964 = vmatpush1.msra.mxu0 0.0
      %3965 = vmatprep.subr.mxu0 0.0
      %3966 = vmatpush1.msra.mxu0 0.0
      %3967 = vmatprep.subr.mxu0 0.0
      %3968 = vmatpush1.msra.mxu0 0.0
      %3969 = vmatprep.subr.mxu0 0.0
      %3970 = vmatpush1.msra.mxu0 0.0
      %3971 = vmatprep.subr.mxu0 0.0
      %3972 = vmatpush1.msra.mxu0 0.0
      %3973 = vmatprep.subr.mxu0 0.0
      %3974 = vmatpush1.msra.mxu0 0.0
      %3975 = vmatprep.subr.mxu0 0.0
      %3976 = vmatpush1.msra.mxu0 0.0
      %3977 = vmatprep.subr.mxu0 0.0
      %3978 = vmatpush1.msra.mxu0 0.0
      %3979 = vmatprep.subr.mxu0 0.0
      %3980 = vmatpush1.msra.mxu0 0.0
      %3981 = vmatprep.subr.mxu0 0.0
      %3982 = vmatpush1.msra.mxu0 0.0
      %3983 = vmatprep.subr.mxu0 0.0
      %3984 = vmatpush1.msra.mxu0 0.0
      %3985 = vmatprep.subr.mxu0 0.0
      %3986 = vmatpush1.msra.mxu0 0.0
      %3987 = vmatprep.mubr.f32.mxu0 0.0
      %3988 = vmatmul.mubr.f32.gmra.mrb[0].mxu0 %v3915
      %v3989 = vpop.f32.mrb[0].mxu0
      %v3990 = vadd.f32 0.0, %v3989
      %v3991 = vpop.f32.mrb[0].mxu0
      %3992 = vmatprep.mubr.f32.mxu0 0.0
      %3993 = vmatmul.mubr.f32.gmra.mrb[0].mxu0 %v3918
      %v3994 = vpop.f32.mrb[0].mxu0
      %v3995 = vadd.f32 0.0, %v3994
      %v3996 = vpop.f32.mrb[0].mxu0
      %3997 = vmatprep.mubr.f32.mxu0 0.0
      %3998 = vmatmul.mubr.f32.gmra.mrb[0].mxu0 %v3921
      %v3999 = vpop.f32.mrb[0].mxu0
      %v4000 = vadd.f32 0.0, %v3999
      %v4001 = vpop.f32.mrb[0].mxu0
      %4002 = vdwg.mxu0
      %v4003 = vmul.f32 %v3990, %v3697
      %v4004 = vmul.f32 %v3995, %v3698
      %v4005 = vmul.f32 %v4000, %v3699
      %4006 = vrot.lane.b32.xlu0 %v3132, 40
      %v4007 = vpop.permute.xlu0 %4006
      %4008 = vrot.lane.b32.xlu0 %v3135, 40
      %v4009 = vpop.permute.xlu0 %4008
      %4010 = vrot.lane.b32.xlu0 %v3140, 40
      %v4011 = vpop.permute.xlu0 %4010
      %v4016 = vsel %vm901, %v3650, 0
      %v4019 = vsel %vm901, %v3652, 0
      %v4022 = vsel %vm901, %v3654, 0
      %4024 = vmatprep.subr.mxu0 0.0
      %4025 = vmatpush1.msra.mxu0 %v4007
      %4026 = vmatprep.subr.mxu0 0.0
      %4027 = vmatpush1.msra.mxu0 %v4009
      %4028 = vmatprep.subr.mxu0 0.0
      %4029 = vmatpush1.msra.mxu0 %v4011
      %4030 = vmatprep.subr.mxu0 0.0
      %4031 = vmatpush1.msra.mxu0 0.0
      %4032 = vmatprep.subr.mxu0 0.0
      %4033 = vmatpush1.msra.mxu0 0.0
      %4034 = vmatprep.subr.mxu0 0.0
      %4035 = vmatpush1.msra.mxu0 0.0
      %4036 = vmatprep.subr.mxu0 0.0
      %4037 = vmatpush1.msra.mxu0 0.0
      %4038 = vmatprep.subr.mxu0 0.0
      %4039 = vmatpush1.msra.mxu0 0.0
      %4040 = vmatprep.subr.mxu0 0.0
      %4041 = vmatpush1.msra.mxu0 0.0
      %4042 = vmatprep.subr.mxu0 0.0
      %4043 = vmatpush1.msra.mxu0 0.0
      %4044 = vmatprep.subr.mxu0 0.0
      %4045 = vmatpush1.msra.mxu0 0.0
      %4046 = vmatprep.subr.mxu0 0.0
      %4047 = vmatpush1.msra.mxu0 0.0
      %4048 = vmatprep.subr.mxu0 0.0
      %4049 = vmatpush1.msra.mxu0 0.0
      %4050 = vmatprep.subr.mxu0 0.0
      %4051 = vmatpush1.msra.mxu0 0.0
      %4052 = vmatprep.subr.mxu0 0.0
      %4053 = vmatpush1.msra.mxu0 0.0
      %4054 = vmatprep.subr.mxu0 0.0
      %4055 = vmatpush1.msra.mxu0 0.0
      %4056 = vmatprep.subr.mxu0 0.0
      %4057 = vmatpush1.msra.mxu0 0.0
      %4058 = vmatprep.subr.mxu0 0.0
      %4059 = vmatpush1.msra.mxu0 0.0
      %4060 = vmatprep.subr.mxu0 0.0
      %4061 = vmatpush1.msra.mxu0 0.0
      %4062 = vmatprep.subr.mxu0 0.0
      %4063 = vmatpush1.msra.mxu0 0.0
      %4064 = vmatprep.subr.mxu0 0.0
      %4065 = vmatpush1.msra.mxu0 0.0
      %4066 = vmatprep.subr.mxu0 0.0
      %4067 = vmatpush1.msra.mxu0 0.0
      %4068 = vmatprep.subr.mxu0 0.0
      %4069 = vmatpush1.msra.mxu0 0.0
      %4070 = vmatprep.subr.mxu0 0.0
      %4071 = vmatpush1.msra.mxu0 0.0
      %4072 = vmatprep.subr.mxu0 0.0
      %4073 = vmatpush1.msra.mxu0 0.0
      %4074 = vmatprep.subr.mxu0 0.0
      %4075 = vmatpush1.msra.mxu0 0.0
      %4076 = vmatprep.subr.mxu0 0.0
      %4077 = vmatpush1.msra.mxu0 0.0
      %4078 = vmatprep.subr.mxu0 0.0
      %4079 = vmatpush1.msra.mxu0 0.0
      %4080 = vmatprep.subr.mxu0 0.0
      %4081 = vmatpush1.msra.mxu0 0.0
      %4082 = vmatprep.subr.mxu0 0.0
      %4083 = vmatpush1.msra.mxu0 0.0
      %4084 = vmatprep.subr.mxu0 0.0
      %4085 = vmatpush1.msra.mxu0 0.0
      %4086 = vmatprep.subr.mxu0 0.0
      %4087 = vmatpush1.msra.mxu0 0.0
      %4088 = vmatprep.mubr.f32.mxu0 0.0
      %4089 = vmatmul.mubr.f32.gmra.mrb[0].mxu0 %v4016
      %v4090 = vpop.f32.mrb[0].mxu0
      %v4091 = vadd.f32 0.0, %v4090
      %v4092 = vpop.f32.mrb[0].mxu0
      %4093 = vmatprep.mubr.f32.mxu0 0.0
      %4094 = vmatmul.mubr.f32.gmra.mrb[0].mxu0 %v4019
      %v4095 = vpop.f32.mrb[0].mxu0
      %v4096 = vadd.f32 0.0, %v4095
      %v4097 = vpop.f32.mrb[0].mxu0
      %4098 = vmatprep.mubr.f32.mxu0 0.0
      %4099 = vmatmul.mubr.f32.gmra.mrb[0].mxu0 %v4022
      %v4100 = vpop.f32.mrb[0].mxu0
      %v4101 = vadd.f32 0.0, %v4100
      %v4102 = vpop.f32.mrb[0].mxu0
      %4103 = vdwg.mxu0
      %v4104 = vmul.f32 %v4091, %v3700
      %v4105 = vmul.f32 %v4096, %v3701
      %v4106 = vmul.f32 %v4101, %v3702
      %4110 = vrot.lane.b32.xlu0 %v3902, 8
      %v4111 = vpop.permute.xlu0 %4110
      %4112 = vrot.lane.b32.xlu0 %v3903, 8
      %v4113 = vpop.permute.xlu0 %4112
      %4114 = vrot.lane.b32.xlu0 %v3904, 8
      %v4115 = vpop.permute.xlu0 %4114
      %4122 = vrot.lane.b32.xlu0 %v4003, 16
      %v4123 = vpop.permute.xlu0 %4122
      %4124 = vrot.lane.b32.xlu0 %v4004, 16
      %v4125 = vpop.permute.xlu0 %4124
      %4126 = vrot.lane.b32.xlu0 %v4005, 16
      %v4127 = vpop.permute.xlu0 %4126
      %4134 = vrot.lane.b32.xlu0 %v4104, 24
      %v4135 = vpop.permute.xlu0 %4134
      %4136 = vrot.lane.b32.xlu0 %v4105, 24
      %v4137 = vpop.permute.xlu0 %4136
      %4138 = vrot.lane.b32.xlu0 %v4106, 24
      %v4139 = vpop.permute.xlu0 %4138
      %v4143 = vsel %vm484, %v3801, %v4111
      %v4144 = vsel %vm484, %v3802, %v4113
      %v4145 = vsel %vm484, %v3803, %v4115
      %v4146 = vsel %vm1465, %v4143, %v4123
      %v4147 = vsel %vm1465, %v4144, %v4125
      %v4148 = vsel %vm1465, %v4145, %v4127
      %v4149 = vsel %vm901, %v4146, %v4135
      %v4150 = vsel %vm901, %v4147, %v4137
      %v4151 = vsel %vm901, %v4148, %v4139
      %v4152 = vpack.c.bf16 %v4150, %v4149
      %v4153 = vpack.c.bf16 %v4151, %v4151
      %v4158 = vunpack.c.l.b16 %v3154
      %v4159 = vunpack.c.l.b16 %v3155
      %v4160 = vunpack.c.l.b16 %v3156
      %v4161 = vunpack.c.l.b16 %v3157
      %v4162 = vpack.c.b16 %v4159, %v4158
      %v4163 = vpack.c.b16 %v4161, %v4160
      %v4167 = vsel %vm281, %v4152, 0
      %v4170 = vsel %vm281, %v4153, 0
      %4172 = vmatprep.subr.bf16.mxu0 0
      %4173 = vmatpush1.bf16.msra.mxu0 %v4162
      %4174 = vmatprep.subr.bf16.mxu0 0
      %4175 = vmatpush1.bf16.msra.mxu0 %v4163
      %4176 = vmatprep.subr.bf16.mxu0 0
      %4177 = vmatpush1.bf16.msra.mxu0 0
      %4178 = vmatprep.subr.bf16.mxu0 0
      %4179 = vmatpush1.bf16.msra.mxu0 0
      %4180 = vmatprep.subr.bf16.mxu0 0
      %4181 = vmatpush1.bf16.msra.mxu0 0
      %4182 = vmatprep.subr.bf16.mxu0 0
      %4183 = vmatpush1.bf16.msra.mxu0 0
      %4184 = vmatprep.subr.bf16.mxu0 0
      %4185 = vmatpush1.bf16.msra.mxu0 0
      %4186 = vmatprep.subr.bf16.mxu0 0
      %4187 = vmatpush1.bf16.msra.mxu0 0
      %4188 = vmatprep.subr.bf16.mxu0 0
      %4189 = vmatpush1.bf16.msra.mxu0 0
      %4190 = vmatprep.subr.bf16.mxu0 0
      %4191 = vmatpush1.bf16.msra.mxu0 0
      %4192 = vmatprep.subr.bf16.mxu0 0
      %4193 = vmatpush1.bf16.msra.mxu0 0
      %4194 = vmatprep.subr.bf16.mxu0 0
      %4195 = vmatpush1.bf16.msra.mxu0 0
      %4196 = vmatprep.subr.bf16.mxu0 0
      %4197 = vmatpush1.bf16.msra.mxu0 0
      %4198 = vmatprep.subr.bf16.mxu0 0
      %4199 = vmatpush1.bf16.msra.mxu0 0
      %4200 = vmatprep.subr.bf16.mxu0 0
      %4201 = vmatpush1.bf16.msra.mxu0 0
      %4202 = vmatprep.subr.bf16.mxu0 0
      %4203 = vmatpush1.bf16.msra.mxu0 0
      %4204 = vmatprep.mubr.bf16.mxu0 0
      %4205 = vmatmul.mubr.bf16.gmra.mrb[0].mxu0 %v4167
      %v4206 = vpop.f32.mrb[0].mxu0
      %v4207 = vadd.f32 0.0, %v4206
      %v4208 = vpop.f32.mrb[0].mxu0
      %v4209 = vpop.f32.mrb[0].mxu0
      %v4210 = vadd.f32 0.0, %v4209
      %v4211 = vpop.f32.mrb[0].mxu0
      %4212 = vmatprep.mubr.bf16.mxu0 0
      %4213 = vmatmul.mubr.bf16.gmra.mrb[0].mxu0 %v4170
      %v4214 = vpop.f32.mrb[0].mxu0
      %v4215 = vadd.f32 0.0, %v4214
      %v4216 = vpop.f32.mrb[0].mxu0
      %v4217 = vpop.f32.mrb[0].mxu0
      %v4218 = vpop.f32.mrb[0].mxu0
      %4219 = vdwg.mxu0
      %4223 = vrot.lane.b32.xlu0 %v3143, 96
      %v4224 = vpop.permute.xlu0 %4223
      %4225 = vrot.lane.b32.xlu0 %v3148, 96
      %v4226 = vpop.permute.xlu0 %4225
      %4227 = vrot.lane.b32.xlu0 %v3151, 96
      %v4228 = vpop.permute.xlu0 %4227
      %v4229 = vsel %vm484, %v3143, 0
      %v4231 = vsel %vm484, %v3148, 0
      %v4233 = vsel %vm484, %v3151, 0
      %v4235 = vsel %vm484, %v4224, 0
      %v4237 = vsel %vm484, %v4226, 0
      %v4239 = vsel %vm484, %v4228, 0
      %4241 = vmatprep.subr.mxu0 0.0
      %4242 = vmatpush1.xpose.msra.mxu0 %v4235
      %4243 = vmatprep.subr.mxu0 0.0
      %4244 = vmatpush1.xpose.msra.mxu0 %v4237
      %4245 = vmatprep.subr.mxu0 0.0
      %4246 = vmatpush1.xpose.msra.mxu0 %v4239
      %4247 = vmatprep.subr.mxu0 0.0
      %4248 = vmatpush1.xpose.msra.mxu0 0.0
      %4249 = vmatprep.subr.mxu0 0.0
      %4250 = vmatpush1.xpose.msra.mxu0 0.0
      %4251 = vmatprep.subr.mxu0 0.0
      %4252 = vmatpush1.xpose.msra.mxu0 0.0
      %4253 = vmatprep.subr.mxu0 0.0
      %4254 = vmatpush1.xpose.msra.mxu0 0.0
      %4255 = vmatprep.subr.mxu0 0.0
      %4256 = vmatpush1.xpose.msra.mxu0 0.0
      %4257 = vmatprep.subr.mxu0 0.0
      %4258 = vmatpush1.xpose.msra.mxu0 0.0
      %4259 = vmatprep.subr.mxu0 0.0
      %4260 = vmatpush1.xpose.msra.mxu0 0.0
      %4261 = vmatprep.subr.mxu0 0.0
      %4262 = vmatpush1.xpose.msra.mxu0 0.0
      %4263 = vmatprep.subr.mxu0 0.0
      %4264 = vmatpush1.xpose.msra.mxu0 0.0
      %4265 = vmatprep.subr.mxu0 0.0
      %4266 = vmatpush1.xpose.msra.mxu0 0.0
      %4267 = vmatprep.subr.mxu0 0.0
      %4268 = vmatpush1.xpose.msra.mxu0 0.0
      %4269 = vmatprep.subr.mxu0 0.0
      %4270 = vmatpush1.xpose.msra.mxu0 0.0
      %4271 = vmatprep.subr.mxu0 0.0
      %4272 = vmatpush1.xpose.msra.mxu0 0.0
      %4273 = vmatprep.subr.mxu0 0.0
      %4274 = vmatpush1.xpose.msra.mxu0 0.0
      %4275 = vmatprep.subr.mxu0 0.0
      %4276 = vmatpush1.xpose.msra.mxu0 0.0
      %4277 = vmatprep.subr.mxu0 0.0
      %4278 = vmatpush1.xpose.msra.mxu0 0.0
      %4279 = vmatprep.subr.mxu0 0.0
      %4280 = vmatpush1.xpose.msra.mxu0 0.0
      %4281 = vmatprep.subr.mxu0 0.0
      %4282 = vmatpush1.xpose.msra.mxu0 0.0
      %4283 = vmatprep.subr.mxu0 0.0
      %4284 = vmatpush1.xpose.msra.mxu0 0.0
      %4285 = vmatprep.subr.mxu0 0.0
      %4286 = vmatpush1.xpose.msra.mxu0 0.0
      %4287 = vmatprep.subr.mxu0 0.0
      %4288 = vmatpush1.xpose.msra.mxu0 0.0
      %4289 = vmatprep.subr.mxu0 0.0
      %4290 = vmatpush1.xpose.msra.mxu0 0.0
      %4291 = vmatprep.subr.mxu0 0.0
      %4292 = vmatpush1.xpose.msra.mxu0 0.0
      %4293 = vmatprep.subr.mxu0 0.0
      %4294 = vmatpush1.xpose.msra.mxu0 0.0
      %4295 = vmatprep.subr.mxu0 0.0
      %4296 = vmatpush1.xpose.msra.mxu0 0.0
      %4297 = vmatprep.subr.mxu0 0.0
      %4298 = vmatpush1.xpose.msra.mxu0 0.0
      %4299 = vmatprep.subr.mxu0 0.0
      %4300 = vmatpush1.xpose.msra.mxu0 0.0
      %4301 = vmatprep.subr.mxu0 0.0
      %4302 = vmatpush1.xpose.msra.mxu0 0.0
      %4303 = vmatprep.subr.mxu0 0.0
      %4304 = vmatpush1.xpose.msra.mxu0 0.0
      %4305 = vmatprep.mubr.f32.mxu0 0.0
      %4306 = vmatmul.mubr.f32.gmra.mrb[0].mxu0 %v4229
      %v4307 = vpop.f32.mrb[0].mxu0
      %v4308 = vadd.f32 0.0, %v4307
      %v4309 = vpop.f32.mrb[0].mxu0
      %4310 = vmatprep.mubr.f32.mxu0 0.0
      %4311 = vmatmul.mubr.f32.gmra.mrb[0].mxu0 %v4231
      %v4312 = vpop.f32.mrb[0].mxu0
      %v4313 = vadd.f32 0.0, %v4312
      %v4314 = vpop.f32.mrb[0].mxu0
      %4315 = vmatprep.mubr.f32.mxu0 0.0
      %4316 = vmatmul.mubr.f32.gmra.mrb[0].mxu0 %v4233
      %v4317 = vpop.f32.mrb[0].mxu0
      %v4318 = vadd.f32 0.0, %v4317
      %v4319 = vpop.f32.mrb[0].mxu0
      %4320 = vdwg.mxu0
      %4321 = vrot.lane.b32.xlu0 %v3143, 120
      %v4322 = vpop.permute.xlu0 %4321
      %4323 = vrot.lane.b32.xlu0 %v3148, 120
      %v4324 = vpop.permute.xlu0 %4323
      %4325 = vrot.lane.b32.xlu0 %v3151, 120
      %v4326 = vpop.permute.xlu0 %4325
      %4327 = vrot.lane.b32.xlu0 %v3143, 88
      %v4328 = vpop.permute.xlu0 %4327
      %4329 = vrot.lane.b32.xlu0 %v3148, 88
      %v4330 = vpop.permute.xlu0 %4329
      %4331 = vrot.lane.b32.xlu0 %v3151, 88
      %v4332 = vpop.permute.xlu0 %4331
      %v4333 = vsel %vm484, %v4322, 0
      %v4335 = vsel %vm484, %v4324, 0
      %v4337 = vsel %vm484, %v4326, 0
      %v4339 = vsel %vm484, %v4328, 0
      %v4341 = vsel %vm484, %v4330, 0
      %v4343 = vsel %vm484, %v4332, 0
      %4345 = vmatprep.subr.mxu0 0.0
      %4346 = vmatpush1.xpose.msra.mxu0 %v4339
      %4347 = vmatprep.subr.mxu0 0.0
      %4348 = vmatpush1.xpose.msra.mxu0 %v4341
      %4349 = vmatprep.subr.mxu0 0.0
      %4350 = vmatpush1.xpose.msra.mxu0 %v4343
      %4351 = vmatprep.subr.mxu0 0.0
      %4352 = vmatpush1.xpose.msra.mxu0 0.0
      %4353 = vmatprep.subr.mxu0 0.0
      %4354 = vmatpush1.xpose.msra.mxu0 0.0
      %4355 = vmatprep.subr.mxu0 0.0
      %4356 = vmatpush1.xpose.msra.mxu0 0.0
      %4357 = vmatprep.subr.mxu0 0.0
      %4358 = vmatpush1.xpose.msra.mxu0 0.0
      %4359 = vmatprep.subr.mxu0 0.0
      %4360 = vmatpush1.xpose.msra.mxu0 0.0
      %4361 = vmatprep.subr.mxu0 0.0
      %4362 = vmatpush1.xpose.msra.mxu0 0.0
      %4363 = vmatprep.subr.mxu0 0.0
      %4364 = vmatpush1.xpose.msra.mxu0 0.0
      %4365 = vmatprep.subr.mxu0 0.0
      %4366 = vmatpush1.xpose.msra.mxu0 0.0
      %4367 = vmatprep.subr.mxu0 0.0
      %4368 = vmatpush1.xpose.msra.mxu0 0.0
      %4369 = vmatprep.subr.mxu0 0.0
      %4370 = vmatpush1.xpose.msra.mxu0 0.0
      %4371 = vmatprep.subr.mxu0 0.0
      %4372 = vmatpush1.xpose.msra.mxu0 0.0
      %4373 = vmatprep.subr.mxu0 0.0
      %4374 = vmatpush1.xpose.msra.mxu0 0.0
      %4375 = vmatprep.subr.mxu0 0.0
      %4376 = vmatpush1.xpose.msra.mxu0 0.0
      %4377 = vmatprep.subr.mxu0 0.0
      %4378 = vmatpush1.xpose.msra.mxu0 0.0
      %4379 = vmatprep.subr.mxu0 0.0
      %4380 = vmatpush1.xpose.msra.mxu0 0.0
      %4381 = vmatprep.subr.mxu0 0.0
      %4382 = vmatpush1.xpose.msra.mxu0 0.0
      %4383 = vmatprep.subr.mxu0 0.0
      %4384 = vmatpush1.xpose.msra.mxu0 0.0
      %4385 = vmatprep.subr.mxu0 0.0
      %4386 = vmatpush1.xpose.msra.mxu0 0.0
      %4387 = vmatprep.subr.mxu0 0.0
      %4388 = vmatpush1.xpose.msra.mxu0 0.0
      %4389 = vmatprep.subr.mxu0 0.0
      %4390 = vmatpush1.xpose.msra.mxu0 0.0
      %4391 = vmatprep.subr.mxu0 0.0
      %4392 = vmatpush1.xpose.msra.mxu0 0.0
      %4393 = vmatprep.subr.mxu0 0.0
      %4394 = vmatpush1.xpose.msra.mxu0 0.0
      %4395 = vmatprep.subr.mxu0 0.0
      %4396 = vmatpush1.xpose.msra.mxu0 0.0
      %4397 = vmatprep.subr.mxu0 0.0
      %4398 = vmatpush1.xpose.msra.mxu0 0.0
      %4399 = vmatprep.subr.mxu0 0.0
      %4400 = vmatpush1.xpose.msra.mxu0 0.0
      %4401 = vmatprep.subr.mxu0 0.0
      %4402 = vmatpush1.xpose.msra.mxu0 0.0
      %4403 = vmatprep.subr.mxu0 0.0
      %4404 = vmatpush1.xpose.msra.mxu0 0.0
      %4405 = vmatprep.subr.mxu0 0.0
      %4406 = vmatpush1.xpose.msra.mxu0 0.0
      %4407 = vmatprep.subr.mxu0 0.0
      %4408 = vmatpush1.xpose.msra.mxu0 0.0
      %4409 = vmatprep.mubr.f32.mxu0 0.0
      %4410 = vmatmul.mubr.f32.gmra.mrb[0].mxu0 %v4333
      %v4411 = vpop.f32.mrb[0].mxu0
      %v4412 = vadd.f32 0.0, %v4411
      %v4413 = vpop.f32.mrb[0].mxu0
      %4414 = vmatprep.mubr.f32.mxu0 0.0
      %4415 = vmatmul.mubr.f32.gmra.mrb[0].mxu0 %v4335
      %v4416 = vpop.f32.mrb[0].mxu0
      %v4417 = vadd.f32 0.0, %v4416
      %v4418 = vpop.f32.mrb[0].mxu0
      %4419 = vmatprep.mubr.f32.mxu0 0.0
      %4420 = vmatmul.mubr.f32.gmra.mrb[0].mxu0 %v4337
      %v4421 = vpop.f32.mrb[0].mxu0
      %v4422 = vadd.f32 0.0, %v4421
      %v4423 = vpop.f32.mrb[0].mxu0
      %4424 = vdwg.mxu0
      %4425 = vrot.lane.b32.xlu0 %v3143, 112
      %v4426 = vpop.permute.xlu0 %4425
      %4427 = vrot.lane.b32.xlu0 %v3148, 112
      %v4428 = vpop.permute.xlu0 %4427
      %4429 = vrot.lane.b32.xlu0 %v3151, 112
      %v4430 = vpop.permute.xlu0 %4429
      %4431 = vrot.lane.b32.xlu0 %v3143, 80
      %v4432 = vpop.permute.xlu0 %4431
      %4433 = vrot.lane.b32.xlu0 %v3148, 80
      %v4434 = vpop.permute.xlu0 %4433
      %4435 = vrot.lane.b32.xlu0 %v3151, 80
      %v4436 = vpop.permute.xlu0 %4435
      %v4437 = vsel %vm484, %v4426, 0
      %v4439 = vsel %vm484, %v4428, 0
      %v4441 = vsel %vm484, %v4430, 0
      %v4443 = vsel %vm484, %v4432, 0
      %v4445 = vsel %vm484, %v4434, 0
      %v4447 = vsel %vm484, %v4436, 0
      %4449 = vmatprep.subr.mxu0 0.0
      %4450 = vmatpush1.xpose.msra.mxu0 %v4443
      %4451 = vmatprep.subr.mxu0 0.0
      %4452 = vmatpush1.xpose.msra.mxu0 %v4445
      %4453 = vmatprep.subr.mxu0 0.0
      %4454 = vmatpush1.xpose.msra.mxu0 %v4447
      %4455 = vmatprep.subr.mxu0 0.0
      %4456 = vmatpush1.xpose.msra.mxu0 0.0
      %4457 = vmatprep.subr.mxu0 0.0
      %4458 = vmatpush1.xpose.msra.mxu0 0.0
      %4459 = vmatprep.subr.mxu0 0.0
      %4460 = vmatpush1.xpose.msra.mxu0 0.0
      %4461 = vmatprep.subr.mxu0 0.0
      %4462 = vmatpush1.xpose.msra.mxu0 0.0
      %4463 = vmatprep.subr.mxu0 0.0
      %4464 = vmatpush1.xpose.msra.mxu0 0.0
      %4465 = vmatprep.subr.mxu0 0.0
      %4466 = vmatpush1.xpose.msra.mxu0 0.0
      %4467 = vmatprep.subr.mxu0 0.0
      %4468 = vmatpush1.xpose.msra.mxu0 0.0
      %4469 = vmatprep.subr.mxu0 0.0
      %4470 = vmatpush1.xpose.msra.mxu0 0.0
      %4471 = vmatprep.subr.mxu0 0.0
      %4472 = vmatpush1.xpose.msra.mxu0 0.0
      %4473 = vmatprep.subr.mxu0 0.0
      %4474 = vmatpush1.xpose.msra.mxu0 0.0
      %4475 = vmatprep.subr.mxu0 0.0
      %4476 = vmatpush1.xpose.msra.mxu0 0.0
      %4477 = vmatprep.subr.mxu0 0.0
      %4478 = vmatpush1.xpose.msra.mxu0 0.0
      %4479 = vmatprep.subr.mxu0 0.0
      %4480 = vmatpush1.xpose.msra.mxu0 0.0
      %4481 = vmatprep.subr.mxu0 0.0
      %4482 = vmatpush1.xpose.msra.mxu0 0.0
      %4483 = vmatprep.subr.mxu0 0.0
      %4484 = vmatpush1.xpose.msra.mxu0 0.0
      %4485 = vmatprep.subr.mxu0 0.0
      %4486 = vmatpush1.xpose.msra.mxu0 0.0
      %4487 = vmatprep.subr.mxu0 0.0
      %4488 = vmatpush1.xpose.msra.mxu0 0.0
      %4489 = vmatprep.subr.mxu0 0.0
      %4490 = vmatpush1.xpose.msra.mxu0 0.0
      %4491 = vmatprep.subr.mxu0 0.0
      %4492 = vmatpush1.xpose.msra.mxu0 0.0
      %4493 = vmatprep.subr.mxu0 0.0
      %4494 = vmatpush1.xpose.msra.mxu0 0.0
      %4495 = vmatprep.subr.mxu0 0.0
      %4496 = vmatpush1.xpose.msra.mxu0 0.0
      %4497 = vmatprep.subr.mxu0 0.0
      %4498 = vmatpush1.xpose.msra.mxu0 0.0
      %4499 = vmatprep.subr.mxu0 0.0
      %4500 = vmatpush1.xpose.msra.mxu0 0.0
      %4501 = vmatprep.subr.mxu0 0.0
      %4502 = vmatpush1.xpose.msra.mxu0 0.0
      %4503 = vmatprep.subr.mxu0 0.0
      %4504 = vmatpush1.xpose.msra.mxu0 0.0
      %4505 = vmatprep.subr.mxu0 0.0
      %4506 = vmatpush1.xpose.msra.mxu0 0.0
      %4507 = vmatprep.subr.mxu0 0.0
      %4508 = vmatpush1.xpose.msra.mxu0 0.0
      %4509 = vmatprep.subr.mxu0 0.0
      %4510 = vmatpush1.xpose.msra.mxu0 0.0
      %4511 = vmatprep.subr.mxu0 0.0
      %4512 = vmatpush1.xpose.msra.mxu0 0.0
      %4513 = vmatprep.mubr.f32.mxu0 0.0
      %4514 = vmatmul.mubr.f32.gmra.mrb[0].mxu0 %v4437
      %v4515 = vpop.f32.mrb[0].mxu0
      %v4516 = vadd.f32 0.0, %v4515
      %v4517 = vpop.f32.mrb[0].mxu0
      %4518 = vmatprep.mubr.f32.mxu0 0.0
      %4519 = vmatmul.mubr.f32.gmra.mrb[0].mxu0 %v4439
      %v4520 = vpop.f32.mrb[0].mxu0
      %v4521 = vadd.f32 0.0, %v4520
      %v4522 = vpop.f32.mrb[0].mxu0
      %4523 = vmatprep.mubr.f32.mxu0 0.0
      %4524 = vmatmul.mubr.f32.gmra.mrb[0].mxu0 %v4441
      %v4525 = vpop.f32.mrb[0].mxu0
      %v4526 = vadd.f32 0.0, %v4525
      %v4527 = vpop.f32.mrb[0].mxu0
      %4528 = vdwg.mxu0
      %4529 = vrot.lane.b32.xlu0 %v3143, 104
      %v4530 = vpop.permute.xlu0 %4529
      %4531 = vrot.lane.b32.xlu0 %v3148, 104
      %v4532 = vpop.permute.xlu0 %4531
      %4533 = vrot.lane.b32.xlu0 %v3151, 104
      %v4534 = vpop.permute.xlu0 %4533
      %4535 = vrot.lane.b32.xlu0 %v3143, 72
      %v4536 = vpop.permute.xlu0 %4535
      %4537 = vrot.lane.b32.xlu0 %v3148, 72
      %v4538 = vpop.permute.xlu0 %4537
      %4539 = vrot.lane.b32.xlu0 %v3151, 72
      %v4540 = vpop.permute.xlu0 %4539
      %v4541 = vsel %vm484, %v4530, 0
      %v4543 = vsel %vm484, %v4532, 0
      %v4545 = vsel %vm484, %v4534, 0
      %v4547 = vsel %vm484, %v4536, 0
      %v4549 = vsel %vm484, %v4538, 0
      %v4551 = vsel %vm484, %v4540, 0
      %4553 = vmatprep.subr.mxu0 0.0
      %4554 = vmatpush1.xpose.msra.mxu0 %v4547
      %4555 = vmatprep.subr.mxu0 0.0
      %4556 = vmatpush1.xpose.msra.mxu0 %v4549
      %4557 = vmatprep.subr.mxu0 0.0
      %4558 = vmatpush1.xpose.msra.mxu0 %v4551
      %4559 = vmatprep.subr.mxu0 0.0
      %4560 = vmatpush1.xpose.msra.mxu0 0.0
      %4561 = vmatprep.subr.mxu0 0.0
      %4562 = vmatpush1.xpose.msra.mxu0 0.0
      %4563 = vmatprep.subr.mxu0 0.0
      %4564 = vmatpush1.xpose.msra.mxu0 0.0
      %4565 = vmatprep.subr.mxu0 0.0
      %4566 = vmatpush1.xpose.msra.mxu0 0.0
      %4567 = vmatprep.subr.mxu0 0.0
      %4568 = vmatpush1.xpose.msra.mxu0 0.0
      %4569 = vmatprep.subr.mxu0 0.0
      %4570 = vmatpush1.xpose.msra.mxu0 0.0
      %4571 = vmatprep.subr.mxu0 0.0
      %4572 = vmatpush1.xpose.msra.mxu0 0.0
      %4573 = vmatprep.subr.mxu0 0.0
      %4574 = vmatpush1.xpose.msra.mxu0 0.0
      %4575 = vmatprep.subr.mxu0 0.0
      %4576 = vmatpush1.xpose.msra.mxu0 0.0
      %4577 = vmatprep.subr.mxu0 0.0
      %4578 = vmatpush1.xpose.msra.mxu0 0.0
      %4579 = vmatprep.subr.mxu0 0.0
      %4580 = vmatpush1.xpose.msra.mxu0 0.0
      %4581 = vmatprep.subr.mxu0 0.0
      %4582 = vmatpush1.xpose.msra.mxu0 0.0
      %4583 = vmatprep.subr.mxu0 0.0
      %4584 = vmatpush1.xpose.msra.mxu0 0.0
      %4585 = vmatprep.subr.mxu0 0.0
      %4586 = vmatpush1.xpose.msra.mxu0 0.0
      %4587 = vmatprep.subr.mxu0 0.0
      %4588 = vmatpush1.xpose.msra.mxu0 0.0
      %4589 = vmatprep.subr.mxu0 0.0
      %4590 = vmatpush1.xpose.msra.mxu0 0.0
      %4591 = vmatprep.subr.mxu0 0.0
      %4592 = vmatpush1.xpose.msra.mxu0 0.0
      %4593 = vmatprep.subr.mxu0 0.0
      %4594 = vmatpush1.xpose.msra.mxu0 0.0
      %4595 = vmatprep.subr.mxu0 0.0
      %4596 = vmatpush1.xpose.msra.mxu0 0.0
      %4597 = vmatprep.subr.mxu0 0.0
      %4598 = vmatpush1.xpose.msra.mxu0 0.0
      %4599 = vmatprep.subr.mxu0 0.0
      %4600 = vmatpush1.xpose.msra.mxu0 0.0
      %4601 = vmatprep.subr.mxu0 0.0
      %4602 = vmatpush1.xpose.msra.mxu0 0.0
      %4603 = vmatprep.subr.mxu0 0.0
      %4604 = vmatpush1.xpose.msra.mxu0 0.0
      %4605 = vmatprep.subr.mxu0 0.0
      %4606 = vmatpush1.xpose.msra.mxu0 0.0
      %4607 = vmatprep.subr.mxu0 0.0
      %4608 = vmatpush1.xpose.msra.mxu0 0.0
      %4609 = vmatprep.subr.mxu0 0.0
      %4610 = vmatpush1.xpose.msra.mxu0 0.0
      %4611 = vmatprep.subr.mxu0 0.0
      %4612 = vmatpush1.xpose.msra.mxu0 0.0
      %4613 = vmatprep.subr.mxu0 0.0
      %4614 = vmatpush1.xpose.msra.mxu0 0.0
      %4615 = vmatprep.subr.mxu0 0.0
      %4616 = vmatpush1.xpose.msra.mxu0 0.0
      %4617 = vmatprep.mubr.f32.mxu0 0.0
      %4618 = vmatmul.mubr.f32.gmra.mrb[0].mxu0 %v4541
      %v4619 = vpop.f32.mrb[0].mxu0
      %v4620 = vadd.f32 0.0, %v4619
      %v4621 = vpop.f32.mrb[0].mxu0
      %4622 = vmatprep.mubr.f32.mxu0 0.0
      %4623 = vmatmul.mubr.f32.gmra.mrb[0].mxu0 %v4543
      %v4624 = vpop.f32.mrb[0].mxu0
      %v4625 = vadd.f32 0.0, %v4624
      %v4626 = vpop.f32.mrb[0].mxu0
      %4627 = vmatprep.mubr.f32.mxu0 0.0
      %4628 = vmatmul.mubr.f32.gmra.mrb[0].mxu0 %v4545
      %v4629 = vpop.f32.mrb[0].mxu0
      %v4630 = vadd.f32 0.0, %v4629
      %v4631 = vpop.f32.mrb[0].mxu0
      %4632 = vdwg.mxu0
      %v4633 = vadd.f32 %v4308, %v278
      %v4634 = vadd.f32 %v4313, %v278
      %v4635 = vadd.f32 %v4318, %v278
      %v4636 = vadd.f32 %v4412, %v278
      %v4637 = vadd.f32 %v4417, %v278
      %v4638 = vadd.f32 %v4422, %v278
      %v4639 = vadd.f32 %v4516, %v278
      %v4640 = vadd.f32 %v4521, %v278
      %v4641 = vadd.f32 %v4526, %v278
      %v4642 = vadd.f32 %v4620, %v278
      %v4643 = vadd.f32 %v4625, %v278
      %v4644 = vadd.f32 %v4630, %v278
      %v4645 = vsel %vm901, %v4633, -inf
      %4646 = vmax.xlane.f32.xlu0 %v4645
      %v4647 = vpop.xlane.xlu0 %4646
      %v4648 = vsel %vm901, %v4634, -inf
      %4649 = vmax.xlane.f32.xlu0 %v4648
      %v4650 = vpop.xlane.xlu0 %4649
      %v4651 = vsel %vm901, %v4635, -inf
      %4652 = vmax.xlane.f32.xlu0 %v4651
      %v4653 = vpop.xlane.xlu0 %4652
      %v4654 = vsel %vm901, %v4636, -inf
      %4655 = vmax.xlane.f32.xlu0 %v4654
      %v4656 = vpop.xlane.xlu0 %4655
      %v4657 = vsel %vm901, %v4637, -inf
      %4658 = vmax.xlane.f32.xlu0 %v4657
      %v4659 = vpop.xlane.xlu0 %4658
      %v4660 = vsel %vm901, %v4638, -inf
      %4661 = vmax.xlane.f32.xlu0 %v4660
      %v4662 = vpop.xlane.xlu0 %4661
      %v4663 = vsel %vm901, %v4639, -inf
      %4664 = vmax.xlane.f32.xlu0 %v4663
      %v4665 = vpop.xlane.xlu0 %4664
      %v4666 = vsel %vm901, %v4640, -inf
      %4667 = vmax.xlane.f32.xlu0 %v4666
      %v4668 = vpop.xlane.xlu0 %4667
      %v4669 = vsel %vm901, %v4641, -inf
      %4670 = vmax.xlane.f32.xlu0 %v4669
      %v4671 = vpop.xlane.xlu0 %4670
      %v4672 = vsel %vm901, %v4642, -inf
      %4673 = vmax.xlane.f32.xlu0 %v4672
      %v4674 = vpop.xlane.xlu0 %4673
      %v4675 = vsel %vm901, %v4643, -inf
      %4676 = vmax.xlane.f32.xlu0 %v4675
      %v4677 = vpop.xlane.xlu0 %4676
      %v4678 = vsel %vm901, %v4644, -inf
      %4679 = vmax.xlane.f32.xlu0 %v4678
      %v4680 = vpop.xlane.xlu0 %4679
      %v4681 = vsub.f32 %v4633, %v4647
      %v4682 = vsub.f32 %v4634, %v4650
      %v4683 = vsub.f32 %v4635, %v4653
      %v4684 = vsub.f32 %v4636, %v4656
      %v4685 = vsub.f32 %v4637, %v4659
      %v4686 = vsub.f32 %v4638, %v4662
      %v4687 = vsub.f32 %v4639, %v4665
      %v4688 = vsub.f32 %v4640, %v4668
      %v4689 = vsub.f32 %v4641, %v4671
      %v4690 = vsub.f32 %v4642, %v4674
      %v4691 = vsub.f32 %v4643, %v4677
      %v4692 = vsub.f32 %v4644, %v4680
      %v4693 = vmul.f32 %v4681, 1.442695
      %v4694 = vpow.pop %v4693
      %v4695 = vmul.f32 %v4682, 1.442695
      %v4696 = vpow.pop %v4695
      %v4697 = vmul.f32 %v4683, 1.442695
      %v4698 = vpow.pop %v4697
      %v4699 = vmul.f32 %v4684, 1.442695
      %v4700 = vpow.pop %v4699
      %v4701 = vmul.f32 %v4685, 1.442695
      %v4702 = vpow.pop %v4701
      %v4703 = vmul.f32 %v4686, 1.442695
      %v4704 = vpow.pop %v4703
      %v4705 = vmul.f32 %v4687, 1.442695
      %v4706 = vpow.pop %v4705
      %v4707 = vmul.f32 %v4688, 1.442695
      %v4708 = vpow.pop %v4707
      %v4709 = vmul.f32 %v4689, 1.442695
      %v4710 = vpow.pop %v4709
      %v4711 = vmul.f32 %v4690, 1.442695
      %v4712 = vpow.pop %v4711
      %v4713 = vmul.f32 %v4691, 1.442695
      %v4714 = vpow.pop %v4713
      %v4715 = vmul.f32 %v4692, 1.442695
      %v4716 = vpow.pop %v4715
      %v4717 = vsel %vm901, %v4694, 0.0
      %4718 = vadd.xlane.f32.xlu0 %v4717
      %v4719 = vpop.xlane.xlu0 %4718
      %v4720 = vsel %vm901, %v4696, 0.0
      %4721 = vadd.xlane.f32.xlu0 %v4720
      %v4722 = vpop.xlane.xlu0 %4721
      %v4723 = vsel %vm901, %v4698, 0.0
      %4724 = vadd.xlane.f32.xlu0 %v4723
      %v4725 = vpop.xlane.xlu0 %4724
      %v4726 = vsel %vm901, %v4700, 0.0
      %4727 = vadd.xlane.f32.xlu0 %v4726
      %v4728 = vpop.xlane.xlu0 %4727
      %v4729 = vsel %vm901, %v4702, 0.0
      %4730 = vadd.xlane.f32.xlu0 %v4729
      %v4731 = vpop.xlane.xlu0 %4730
      %v4732 = vsel %vm901, %v4704, 0.0
      %4733 = vadd.xlane.f32.xlu0 %v4732
      %v4734 = vpop.xlane.xlu0 %4733
      %v4735 = vsel %vm901, %v4706, 0.0
      %4736 = vadd.xlane.f32.xlu0 %v4735
      %v4737 = vpop.xlane.xlu0 %4736
      %v4738 = vsel %vm901, %v4708, 0.0
      %4739 = vadd.xlane.f32.xlu0 %v4738
      %v4740 = vpop.xlane.xlu0 %4739
      %v4741 = vsel %vm901, %v4710, 0.0
      %4742 = vadd.xlane.f32.xlu0 %v4741
      %v4743 = vpop.xlane.xlu0 %4742
      %v4744 = vsel %vm901, %v4712, 0.0
      %4745 = vadd.xlane.f32.xlu0 %v4744
      %v4746 = vpop.xlane.xlu0 %4745
      %v4747 = vsel %vm901, %v4714, 0.0
      %4748 = vadd.xlane.f32.xlu0 %v4747
      %v4749 = vpop.xlane.xlu0 %4748
      %v4750 = vsel %vm901, %v4716, 0.0
      %4751 = vadd.xlane.f32.xlu0 %v4750
      %v4752 = vpop.xlane.xlu0 %4751
      %v4753 = vrcp.pop %v4719
      %v4754 = vrcp.pop %v4722
      %v4755 = vrcp.pop %v4725
      %v4756 = vrcp.pop %v4728
      %v4757 = vrcp.pop %v4731
      %v4758 = vrcp.pop %v4734
      %v4759 = vrcp.pop %v4737
      %v4760 = vrcp.pop %v4740
      %v4761 = vrcp.pop %v4743
      %v4762 = vrcp.pop %v4746
      %v4763 = vrcp.pop %v4749
      %v4764 = vrcp.pop %v4752
      %4765 = vrot.lane.b32.xlu0 %v3143, 64
      %v4766 = vpop.permute.xlu0 %4765
      %4767 = vrot.lane.b32.xlu0 %v3148, 64
      %v4768 = vpop.permute.xlu0 %4767
      %4769 = vrot.lane.b32.xlu0 %v3151, 64
      %v4770 = vpop.permute.xlu0 %4769
      %v4775 = vsel %vm901, %v4694, 0
      %v4778 = vsel %vm901, %v4696, 0
      %v4781 = vsel %vm901, %v4698, 0
      %4783 = vmatprep.subr.mxu0 0.0
      %4784 = vmatpush1.msra.mxu0 %v4766
      %4785 = vmatprep.subr.mxu0 0.0
      %4786 = vmatpush1.msra.mxu0 %v4768
      %4787 = vmatprep.subr.mxu0 0.0
      %4788 = vmatpush1.msra.mxu0 %v4770
      %4789 = vmatprep.subr.mxu0 0.0
      %4790 = vmatpush1.msra.mxu0 0.0
      %4791 = vmatprep.subr.mxu0 0.0
      %4792 = vmatpush1.msra.mxu0 0.0
      %4793 = vmatprep.subr.mxu0 0.0
      %4794 = vmatpush1.msra.mxu0 0.0
      %4795 = vmatprep.subr.mxu0 0.0
      %4796 = vmatpush1.msra.mxu0 0.0
      %4797 = vmatprep.subr.mxu0 0.0
      %4798 = vmatpush1.msra.mxu0 0.0
      %4799 = vmatprep.subr.mxu0 0.0
      %4800 = vmatpush1.msra.mxu0 0.0
      %4801 = vmatprep.subr.mxu0 0.0
      %4802 = vmatpush1.msra.mxu0 0.0
      %4803 = vmatprep.subr.mxu0 0.0
      %4804 = vmatpush1.msra.mxu0 0.0
      %4805 = vmatprep.subr.mxu0 0.0
      %4806 = vmatpush1.msra.mxu0 0.0
      %4807 = vmatprep.subr.mxu0 0.0
      %4808 = vmatpush1.msra.mxu0 0.0
      %4809 = vmatprep.subr.mxu0 0.0
      %4810 = vmatpush1.msra.mxu0 0.0
      %4811 = vmatprep.subr.mxu0 0.0
      %4812 = vmatpush1.msra.mxu0 0.0
      %4813 = vmatprep.subr.mxu0 0.0
      %4814 = vmatpush1.msra.mxu0 0.0
      %4815 = vmatprep.subr.mxu0 0.0
      %4816 = vmatpush1.msra.mxu0 0.0
      %4817 = vmatprep.subr.mxu0 0.0
      %4818 = vmatpush1.msra.mxu0 0.0
      %4819 = vmatprep.subr.mxu0 0.0
      %4820 = vmatpush1.msra.mxu0 0.0
      %4821 = vmatprep.subr.mxu0 0.0
      %4822 = vmatpush1.msra.mxu0 0.0
      %4823 = vmatprep.subr.mxu0 0.0
      %4824 = vmatpush1.msra.mxu0 0.0
      %4825 = vmatprep.subr.mxu0 0.0
      %4826 = vmatpush1.msra.mxu0 0.0
      %4827 = vmatprep.subr.mxu0 0.0
      %4828 = vmatpush1.msra.mxu0 0.0
      %4829 = vmatprep.subr.mxu0 0.0
      %4830 = vmatpush1.msra.mxu0 0.0
      %4831 = vmatprep.subr.mxu0 0.0
      %4832 = vmatpush1.msra.mxu0 0.0
      %4833 = vmatprep.subr.mxu0 0.0
      %4834 = vmatpush1.msra.mxu0 0.0
      %4835 = vmatprep.subr.mxu0 0.0
      %4836 = vmatpush1.msra.mxu0 0.0
      %4837 = vmatprep.subr.mxu0 0.0
      %4838 = vmatpush1.msra.mxu0 0.0
      %4839 = vmatprep.subr.mxu0 0.0
      %4840 = vmatpush1.msra.mxu0 0.0
      %4841 = vmatprep.subr.mxu0 0.0
      %4842 = vmatpush1.msra.mxu0 0.0
      %4843 = vmatprep.subr.mxu0 0.0
      %4844 = vmatpush1.msra.mxu0 0.0
      %4845 = vmatprep.subr.mxu0 0.0
      %4846 = vmatpush1.msra.mxu0 0.0
      %4847 = vmatprep.mubr.f32.mxu0 0.0
      %4848 = vmatmul.mubr.f32.gmra.mrb[0].mxu0 %v4775
      %v4849 = vpop.f32.mrb[0].mxu0
      %v4850 = vadd.f32 0.0, %v4849
      %v4851 = vpop.f32.mrb[0].mxu0
      %4852 = vmatprep.mubr.f32.mxu0 0.0
      %4853 = vmatmul.mubr.f32.gmra.mrb[0].mxu0 %v4778
      %v4854 = vpop.f32.mrb[0].mxu0
      %v4855 = vadd.f32 0.0, %v4854
      %v4856 = vpop.f32.mrb[0].mxu0
      %4857 = vmatprep.mubr.f32.mxu0 0.0
      %4858 = vmatmul.mubr.f32.gmra.mrb[0].mxu0 %v4781
      %v4859 = vpop.f32.mrb[0].mxu0
      %v4860 = vadd.f32 0.0, %v4859
      %v4861 = vpop.f32.mrb[0].mxu0
      %4862 = vdwg.mxu0
      %v4863 = vmul.f32 %v4850, %v4753
      %v4864 = vmul.f32 %v4855, %v4754
      %v4865 = vmul.f32 %v4860, %v4755
      %4866 = vrot.lane.b32.xlu0 %v3143, 56
      %v4867 = vpop.permute.xlu0 %4866
      %4868 = vrot.lane.b32.xlu0 %v3148, 56
      %v4869 = vpop.permute.xlu0 %4868
      %4870 = vrot.lane.b32.xlu0 %v3151, 56
      %v4871 = vpop.permute.xlu0 %4870
      %v4876 = vsel %vm901, %v4700, 0
      %v4879 = vsel %vm901, %v4702, 0
      %v4882 = vsel %vm901, %v4704, 0
      %4884 = vmatprep.subr.mxu0 0.0
      %4885 = vmatpush1.msra.mxu0 %v4867
      %4886 = vmatprep.subr.mxu0 0.0
      %4887 = vmatpush1.msra.mxu0 %v4869
      %4888 = vmatprep.subr.mxu0 0.0
      %4889 = vmatpush1.msra.mxu0 %v4871
      %4890 = vmatprep.subr.mxu0 0.0
      %4891 = vmatpush1.msra.mxu0 0.0
      %4892 = vmatprep.subr.mxu0 0.0
      %4893 = vmatpush1.msra.mxu0 0.0
      %4894 = vmatprep.subr.mxu0 0.0
      %4895 = vmatpush1.msra.mxu0 0.0
      %4896 = vmatprep.subr.mxu0 0.0
      %4897 = vmatpush1.msra.mxu0 0.0
      %4898 = vmatprep.subr.mxu0 0.0
      %4899 = vmatpush1.msra.mxu0 0.0
      %4900 = vmatprep.subr.mxu0 0.0
      %4901 = vmatpush1.msra.mxu0 0.0
      %4902 = vmatprep.subr.mxu0 0.0
      %4903 = vmatpush1.msra.mxu0 0.0
      %4904 = vmatprep.subr.mxu0 0.0
      %4905 = vmatpush1.msra.mxu0 0.0
      %4906 = vmatprep.subr.mxu0 0.0
      %4907 = vmatpush1.msra.mxu0 0.0
      %4908 = vmatprep.subr.mxu0 0.0
      %4909 = vmatpush1.msra.mxu0 0.0
      %4910 = vmatprep.subr.mxu0 0.0
      %4911 = vmatpush1.msra.mxu0 0.0
      %4912 = vmatprep.subr.mxu0 0.0
      %4913 = vmatpush1.msra.mxu0 0.0
      %4914 = vmatprep.subr.mxu0 0.0
      %4915 = vmatpush1.msra.mxu0 0.0
      %4916 = vmatprep.subr.mxu0 0.0
      %4917 = vmatpush1.msra.mxu0 0.0
      %4918 = vmatprep.subr.mxu0 0.0
      %4919 = vmatpush1.msra.mxu0 0.0
      %4920 = vmatprep.subr.mxu0 0.0
      %4921 = vmatpush1.msra.mxu0 0.0
      %4922 = vmatprep.subr.mxu0 0.0
      %4923 = vmatpush1.msra.mxu0 0.0
      %4924 = vmatprep.subr.mxu0 0.0
      %4925 = vmatpush1.msra.mxu0 0.0
      %4926 = vmatprep.subr.mxu0 0.0
      %4927 = vmatpush1.msra.mxu0 0.0
      %4928 = vmatprep.subr.mxu0 0.0
      %4929 = vmatpush1.msra.mxu0 0.0
      %4930 = vmatprep.subr.mxu0 0.0
      %4931 = vmatpush1.msra.mxu0 0.0
      %4932 = vmatprep.subr.mxu0 0.0
      %4933 = vmatpush1.msra.mxu0 0.0
      %4934 = vmatprep.subr.mxu0 0.0
      %4935 = vmatpush1.msra.mxu0 0.0
      %4936 = vmatprep.subr.mxu0 0.0
      %4937 = vmatpush1.msra.mxu0 0.0
      %4938 = vmatprep.subr.mxu0 0.0
      %4939 = vmatpush1.msra.mxu0 0.0
      %4940 = vmatprep.subr.mxu0 0.0
      %4941 = vmatpush1.msra.mxu0 0.0
      %4942 = vmatprep.subr.mxu0 0.0
      %4943 = vmatpush1.msra.mxu0 0.0
      %4944 = vmatprep.subr.mxu0 0.0
      %4945 = vmatpush1.msra.mxu0 0.0
      %4946 = vmatprep.subr.mxu0 0.0
      %4947 = vmatpush1.msra.mxu0 0.0
      %4948 = vmatprep.mubr.f32.mxu0 0.0
      %4949 = vmatmul.mubr.f32.gmra.mrb[0].mxu0 %v4876
      %v4950 = vpop.f32.mrb[0].mxu0
      %v4951 = vadd.f32 0.0, %v4950
      %v4952 = vpop.f32.mrb[0].mxu0
      %4953 = vmatprep.mubr.f32.mxu0 0.0
      %4954 = vmatmul.mubr.f32.gmra.mrb[0].mxu0 %v4879
      %v4955 = vpop.f32.mrb[0].mxu0
      %v4956 = vadd.f32 0.0, %v4955
      %v4957 = vpop.f32.mrb[0].mxu0
      %4958 = vmatprep.mubr.f32.mxu0 0.0
      %4959 = vmatmul.mubr.f32.gmra.mrb[0].mxu0 %v4882
      %v4960 = vpop.f32.mrb[0].mxu0
      %v4961 = vadd.f32 0.0, %v4960
      %v4962 = vpop.f32.mrb[0].mxu0
      %4963 = vdwg.mxu0
      %v4964 = vmul.f32 %v4951, %v4756
      %v4965 = vmul.f32 %v4956, %v4757
      %v4966 = vmul.f32 %v4961, %v4758
      %4967 = vrot.lane.b32.xlu0 %v3143, 48
      %v4968 = vpop.permute.xlu0 %4967
      %4969 = vrot.lane.b32.xlu0 %v3148, 48
      %v4970 = vpop.permute.xlu0 %4969
      %4971 = vrot.lane.b32.xlu0 %v3151, 48
      %v4972 = vpop.permute.xlu0 %4971
      %v4977 = vsel %vm901, %v4706, 0
      %v4980 = vsel %vm901, %v4708, 0
      %v4983 = vsel %vm901, %v4710, 0
      %4985 = vmatprep.subr.mxu0 0.0
      %4986 = vmatpush1.msra.mxu0 %v4968
      %4987 = vmatprep.subr.mxu0 0.0
      %4988 = vmatpush1.msra.mxu0 %v4970
      %4989 = vmatprep.subr.mxu0 0.0
      %4990 = vmatpush1.msra.mxu0 %v4972
      %4991 = vmatprep.subr.mxu0 0.0
      %4992 = vmatpush1.msra.mxu0 0.0
      %4993 = vmatprep.subr.mxu0 0.0
      %4994 = vmatpush1.msra.mxu0 0.0
      %4995 = vmatprep.subr.mxu0 0.0
      %4996 = vmatpush1.msra.mxu0 0.0
      %4997 = vmatprep.subr.mxu0 0.0
      %4998 = vmatpush1.msra.mxu0 0.0
      %4999 = vmatprep.subr.mxu0 0.0
      %5000 = vmatpush1.msra.mxu0 0.0
      %5001 = vmatprep.subr.mxu0 0.0
      %5002 = vmatpush1.msra.mxu0 0.0
      %5003 = vmatprep.subr.mxu0 0.0
      %5004 = vmatpush1.msra.mxu0 0.0
      %5005 = vmatprep.subr.mxu0 0.0
      %5006 = vmatpush1.msra.mxu0 0.0
      %5007 = vmatprep.subr.mxu0 0.0
      %5008 = vmatpush1.msra.mxu0 0.0
      %5009 = vmatprep.subr.mxu0 0.0
      %5010 = vmatpush1.msra.mxu0 0.0
      %5011 = vmatprep.subr.mxu0 0.0
      %5012 = vmatpush1.msra.mxu0 0.0
      %5013 = vmatprep.subr.mxu0 0.0
      %5014 = vmatpush1.msra.mxu0 0.0
      %5015 = vmatprep.subr.mxu0 0.0
      %5016 = vmatpush1.msra.mxu0 0.0
      %5017 = vmatprep.subr.mxu0 0.0
      %5018 = vmatpush1.msra.mxu0 0.0
      %5019 = vmatprep.subr.mxu0 0.0
      %5020 = vmatpush1.msra.mxu0 0.0
      %5021 = vmatprep.subr.mxu0 0.0
      %5022 = vmatpush1.msra.mxu0 0.0
      %5023 = vmatprep.subr.mxu0 0.0
      %5024 = vmatpush1.msra.mxu0 0.0
      %5025 = vmatprep.subr.mxu0 0.0
      %5026 = vmatpush1.msra.mxu0 0.0
      %5027 = vmatprep.subr.mxu0 0.0
      %5028 = vmatpush1.msra.mxu0 0.0
      %5029 = vmatprep.subr.mxu0 0.0
      %5030 = vmatpush1.msra.mxu0 0.0
      %5031 = vmatprep.subr.mxu0 0.0
      %5032 = vmatpush1.msra.mxu0 0.0
      %5033 = vmatprep.subr.mxu0 0.0
      %5034 = vmatpush1.msra.mxu0 0.0
      %5035 = vmatprep.subr.mxu0 0.0
      %5036 = vmatpush1.msra.mxu0 0.0
      %5037 = vmatprep.subr.mxu0 0.0
      %5038 = vmatpush1.msra.mxu0 0.0
      %5039 = vmatprep.subr.mxu0 0.0
      %5040 = vmatpush1.msra.mxu0 0.0
      %5041 = vmatprep.subr.mxu0 0.0
      %5042 = vmatpush1.msra.mxu0 0.0
      %5043 = vmatprep.subr.mxu0 0.0
      %5044 = vmatpush1.msra.mxu0 0.0
      %5045 = vmatprep.subr.mxu0 0.0
      %5046 = vmatpush1.msra.mxu0 0.0
      %5047 = vmatprep.subr.mxu0 0.0
      %5048 = vmatpush1.msra.mxu0 0.0
      %5049 = vmatprep.mubr.f32.mxu0 0.0
      %5050 = vmatmul.mubr.f32.gmra.mrb[0].mxu0 %v4977
      %v5051 = vpop.f32.mrb[0].mxu0
      %v5052 = vadd.f32 0.0, %v5051
      %v5053 = vpop.f32.mrb[0].mxu0
      %5054 = vmatprep.mubr.f32.mxu0 0.0
      %5055 = vmatmul.mubr.f32.gmra.mrb[0].mxu0 %v4980
      %v5056 = vpop.f32.mrb[0].mxu0
      %v5057 = vadd.f32 0.0, %v5056
      %v5058 = vpop.f32.mrb[0].mxu0
      %5059 = vmatprep.mubr.f32.mxu0 0.0
      %5060 = vmatmul.mubr.f32.gmra.mrb[0].mxu0 %v4983
      %v5061 = vpop.f32.mrb[0].mxu0
      %v5062 = vadd.f32 0.0, %v5061
      %v5063 = vpop.f32.mrb[0].mxu0
      %5064 = vdwg.mxu0
      %v5065 = vmul.f32 %v5052, %v4759
      %v5066 = vmul.f32 %v5057, %v4760
      %v5067 = vmul.f32 %v5062, %v4761
      %5068 = vrot.lane.b32.xlu0 %v3143, 40
      %v5069 = vpop.permute.xlu0 %5068
      %5070 = vrot.lane.b32.xlu0 %v3148, 40
      %v5071 = vpop.permute.xlu0 %5070
      %5072 = vrot.lane.b32.xlu0 %v3151, 40
      %v5073 = vpop.permute.xlu0 %5072
      %v5078 = vsel %vm901, %v4712, 0
      %v5081 = vsel %vm901, %v4714, 0
      %v5084 = vsel %vm901, %v4716, 0
      %5086 = vmatprep.subr.mxu0 0.0
      %5087 = vmatpush1.msra.mxu0 %v5069
      %5088 = vmatprep.subr.mxu0 0.0
      %5089 = vmatpush1.msra.mxu0 %v5071
      %5090 = vmatprep.subr.mxu0 0.0
      %5091 = vmatpush1.msra.mxu0 %v5073
      %5092 = vmatprep.subr.mxu0 0.0
      %5093 = vmatpush1.msra.mxu0 0.0
      %5094 = vmatprep.subr.mxu0 0.0
      %5095 = vmatpush1.msra.mxu0 0.0
      %5096 = vmatprep.subr.mxu0 0.0
      %5097 = vmatpush1.msra.mxu0 0.0
      %5098 = vmatprep.subr.mxu0 0.0
      %5099 = vmatpush1.msra.mxu0 0.0
      %5100 = vmatprep.subr.mxu0 0.0
      %5101 = vmatpush1.msra.mxu0 0.0
      %5102 = vmatprep.subr.mxu0 0.0
      %5103 = vmatpush1.msra.mxu0 0.0
      %5104 = vmatprep.subr.mxu0 0.0
      %5105 = vmatpush1.msra.mxu0 0.0
      %5106 = vmatprep.subr.mxu0 0.0
      %5107 = vmatpush1.msra.mxu0 0.0
      %5108 = vmatprep.subr.mxu0 0.0
      %5109 = vmatpush1.msra.mxu0 0.0
      %5110 = vmatprep.subr.mxu0 0.0
      %5111 = vmatpush1.msra.mxu0 0.0
      %5112 = vmatprep.subr.mxu0 0.0
      %5113 = vmatpush1.msra.mxu0 0.0
      %5114 = vmatprep.subr.mxu0 0.0
      %5115 = vmatpush1.msra.mxu0 0.0
      %5116 = vmatprep.subr.mxu0 0.0
      %5117 = vmatpush1.msra.mxu0 0.0
      %5118 = vmatprep.subr.mxu0 0.0
      %5119 = vmatpush1.msra.mxu0 0.0
      %5120 = vmatprep.subr.mxu0 0.0
      %5121 = vmatpush1.msra.mxu0 0.0
      %5122 = vmatprep.subr.mxu0 0.0
      %5123 = vmatpush1.msra.mxu0 0.0
      %5124 = vmatprep.subr.mxu0 0.0
      %5125 = vmatpush1.msra.mxu0 0.0
      %5126 = vmatprep.subr.mxu0 0.0
      %5127 = vmatpush1.msra.mxu0 0.0
      %5128 = vmatprep.subr.mxu0 0.0
      %5129 = vmatpush1.msra.mxu0 0.0
      %5130 = vmatprep.subr.mxu0 0.0
      %5131 = vmatpush1.msra.mxu0 0.0
      %5132 = vmatprep.subr.mxu0 0.0
      %5133 = vmatpush1.msra.mxu0 0.0
      %5134 = vmatprep.subr.mxu0 0.0
      %5135 = vmatpush1.msra.mxu0 0.0
      %5136 = vmatprep.subr.mxu0 0.0
      %5137 = vmatpush1.msra.mxu0 0.0
      %5138 = vmatprep.subr.mxu0 0.0
      %5139 = vmatpush1.msra.mxu0 0.0
      %5140 = vmatprep.subr.mxu0 0.0
      %5141 = vmatpush1.msra.mxu0 0.0
      %5142 = vmatprep.subr.mxu0 0.0
      %5143 = vmatpush1.msra.mxu0 0.0
      %5144 = vmatprep.subr.mxu0 0.0
      %5145 = vmatpush1.msra.mxu0 0.0
      %5146 = vmatprep.subr.mxu0 0.0
      %5147 = vmatpush1.msra.mxu0 0.0
      %5148 = vmatprep.subr.mxu0 0.0
      %5149 = vmatpush1.msra.mxu0 0.0
      %5150 = vmatprep.mubr.f32.mxu0 0.0
      %5151 = vmatmul.mubr.f32.gmra.mrb[0].mxu0 %v5078
      %v5152 = vpop.f32.mrb[0].mxu0
      %v5153 = vadd.f32 0.0, %v5152
      %v5154 = vpop.f32.mrb[0].mxu0
      %5155 = vmatprep.mubr.f32.mxu0 0.0
      %5156 = vmatmul.mubr.f32.gmra.mrb[0].mxu0 %v5081
      %v5157 = vpop.f32.mrb[0].mxu0
      %v5158 = vadd.f32 0.0, %v5157
      %v5159 = vpop.f32.mrb[0].mxu0
      %5160 = vmatprep.mubr.f32.mxu0 0.0
      %5161 = vmatmul.mubr.f32.gmra.mrb[0].mxu0 %v5084
      %v5162 = vpop.f32.mrb[0].mxu0
      %v5163 = vadd.f32 0.0, %v5162
      %v5164 = vpop.f32.mrb[0].mxu0
      %5165 = vdwg.mxu0
      %v5166 = vmul.f32 %v5153, %v4762
      %v5167 = vmul.f32 %v5158, %v4763
      %v5168 = vmul.f32 %v5163, %v4764
      %5172 = vrot.lane.b32.xlu0 %v4964, 8
      %v5173 = vpop.permute.xlu0 %5172
      %5174 = vrot.lane.b32.xlu0 %v4965, 8
      %v5175 = vpop.permute.xlu0 %5174
      %5176 = vrot.lane.b32.xlu0 %v4966, 8
      %v5177 = vpop.permute.xlu0 %5176
      %5184 = vrot.lane.b32.xlu0 %v5065, 16
      %v5185 = vpop.permute.xlu0 %5184
      %5186 = vrot.lane.b32.xlu0 %v5066, 16
      %v5187 = vpop.permute.xlu0 %5186
      %5188 = vrot.lane.b32.xlu0 %v5067, 16
      %v5189 = vpop.permute.xlu0 %5188
      %5196 = vrot.lane.b32.xlu0 %v5166, 24
      %v5197 = vpop.permute.xlu0 %5196
      %5198 = vrot.lane.b32.xlu0 %v5167, 24
      %v5199 = vpop.permute.xlu0 %5198
      %5200 = vrot.lane.b32.xlu0 %v5168, 24
      %v5201 = vpop.permute.xlu0 %5200
      %v5205 = vsel %vm484, %v4863, %v5173
      %v5206 = vsel %vm484, %v4864, %v5175
      %v5207 = vsel %vm484, %v4865, %v5177
      %v5208 = vsel %vm1465, %v5205, %v5185
      %v5209 = vsel %vm1465, %v5206, %v5187
      %v5210 = vsel %vm1465, %v5207, %v5189
      %v5211 = vsel %vm901, %v5208, %v5197
      %v5212 = vsel %vm901, %v5209, %v5199
      %v5213 = vsel %vm901, %v5210, %v5201
      %v5214 = vpack.c.bf16 %v5212, %v5211
      %v5215 = vpack.c.bf16 %v5213, %v5213
      %v5217 = vsel %vm281, %v5214, 0
      %v5220 = vsel %vm281, %v5215, 0
      %5222 = vmatprep.subr.bf16.mxu0 0
      %5223 = vmatpush1.bf16.msra.mxu0 %v4162
      %5224 = vmatprep.subr.bf16.mxu0 0
      %5225 = vmatpush1.bf16.msra.mxu0 %v4163
      %5226 = vmatprep.subr.bf16.mxu0 0
      %5227 = vmatpush1.bf16.msra.mxu0 0
      %5228 = vmatprep.subr.bf16.mxu0 0
      %5229 = vmatpush1.bf16.msra.mxu0 0
      %5230 = vmatprep.subr.bf16.mxu0 0
      %5231 = vmatpush1.bf16.msra.mxu0 0
      %5232 = vmatprep.subr.bf16.mxu0 0
      %5233 = vmatpush1.bf16.msra.mxu0 0
      %5234 = vmatprep.subr.bf16.mxu0 0
      %5235 = vmatpush1.bf16.msra.mxu0 0
      %5236 = vmatprep.subr.bf16.mxu0 0
      %5237 = vmatpush1.bf16.msra.mxu0 0
      %5238 = vmatprep.subr.bf16.mxu0 0
      %5239 = vmatpush1.bf16.msra.mxu0 0
      %5240 = vmatprep.subr.bf16.mxu0 0
      %5241 = vmatpush1.bf16.msra.mxu0 0
      %5242 = vmatprep.subr.bf16.mxu0 0
      %5243 = vmatpush1.bf16.msra.mxu0 0
      %5244 = vmatprep.subr.bf16.mxu0 0
      %5245 = vmatpush1.bf16.msra.mxu0 0
      %5246 = vmatprep.subr.bf16.mxu0 0
      %5247 = vmatpush1.bf16.msra.mxu0 0
      %5248 = vmatprep.subr.bf16.mxu0 0
      %5249 = vmatpush1.bf16.msra.mxu0 0
      %5250 = vmatprep.subr.bf16.mxu0 0
      %5251 = vmatpush1.bf16.msra.mxu0 0
      %5252 = vmatprep.subr.bf16.mxu0 0
      %5253 = vmatpush1.bf16.msra.mxu0 0
      %5254 = vmatprep.mubr.bf16.mxu0 0
      %5255 = vmatmul.mubr.bf16.gmra.mrb[0].mxu0 %v5217
      %v5256 = vpop.f32.mrb[0].mxu0
      %v5257 = vadd.f32 0.0, %v5256
      %v5258 = vpop.f32.mrb[0].mxu0
      %v5259 = vpop.f32.mrb[0].mxu0
      %v5260 = vadd.f32 0.0, %v5259
      %v5261 = vpop.f32.mrb[0].mxu0
      %5262 = vmatprep.mubr.bf16.mxu0 0
      %5263 = vmatmul.mubr.bf16.gmra.mrb[0].mxu0 %v5220
      %v5264 = vpop.f32.mrb[0].mxu0
      %v5265 = vadd.f32 0.0, %v5264
      %v5266 = vpop.f32.mrb[0].mxu0
      %v5267 = vpop.f32.mrb[0].mxu0
      %v5268 = vpop.f32.mrb[0].mxu0
      %5269 = vdwg.mxu0
      %v5270 = vadd.f32 %v2958, %v4207
      %v5271 = vadd.f32 %v2959, %v4210
      %v5272 = vadd.f32 %v2960, %v4215
      %v5273 = vadd.f32 %v2961, %v5257
      %v5274 = vadd.f32 %v2962, %v5260
      %v5275 = vadd.f32 %v2963, %v5265
      %v5276 = vld [vmem:[%s2 + $0x23] sm:$0x1]
      %v5277 = vlaneseq
      %v5278 = vshrl.u32 %v5277, 7
      %v5279 = vsub.s32 0, %v5278
      %v5280 = vrot.slane %v5276, %v5279
      %v5281 = vadd.f32 %v5270, %v5280
      %v5282 = vadd.f32 %v5271, %v5280
      %v5283 = vadd.f32 %v5272, %v5280
      %v5284 = vadd.f32 %v5273, %v5280
      %v5285 = vadd.f32 %v5274, %v5280
      %v5286 = vadd.f32 %v5275, %v5280
      %v5287 = vld [vmem:[%s2 + $0x24] sm:$0x1]
      %v5288 = vld [vmem:[%s2 + $0x25] sm:$0x1]
      %v5289 = vsel %vm281, %v5281, 0.0
      %5290 = vadd.xlane.f32.xlu0 %v5289
      %v5291 = vpop.xlane.xlu0 %5290
      %v5292 = vsel %vm281, %v5282, 0.0
      %5293 = vadd.xlane.f32.xlu0 %v5292
      %v5294 = vpop.xlane.xlu0 %5293
      %v5295 = vsel %vm281, %v5283, 0.0
      %5296 = vadd.xlane.f32.xlu0 %v5295
      %v5297 = vpop.xlane.xlu0 %5296
      %v5298 = vsel %vm281, %v5284, 0.0
      %5299 = vadd.xlane.f32.xlu0 %v5298
      %v5300 = vpop.xlane.xlu0 %5299
      %v5301 = vsel %vm281, %v5285, 0.0
      %5302 = vadd.xlane.f32.xlu0 %v5301
      %v5303 = vpop.xlane.xlu0 %5302
      %v5304 = vsel %vm281, %v5286, 0.0
      %5305 = vadd.xlane.f32.xlu0 %v5304
      %v5306 = vpop.xlane.xlu0 %5305
      %v5307 = vmul.f32 %v5291, %v300
      %v5308 = vmul.f32 %v5294, %v300
      %v5309 = vmul.f32 %v5297, %v300
      %v5310 = vmul.f32 %v5300, %v300
      %v5311 = vmul.f32 %v5303, %v300
      %v5312 = vmul.f32 %v5306, %v300
      %v5313 = vsub.f32 %v5281, %v5307
      %v5314 = vsub.f32 %v5282, %v5308
      %v5315 = vsub.f32 %v5283, %v5309
      %v5316 = vsub.f32 %v5284, %v5310
      %v5317 = vsub.f32 %v5285, %v5311
      %v5318 = vsub.f32 %v5286, %v5312
      %v5319 = vmul.f32 %v5313, %v5313
      %v5320 = vmul.f32 %v5314, %v5314
      %v5321 = vmul.f32 %v5315, %v5315
      %v5322 = vmul.f32 %v5316, %v5316
      %v5323 = vmul.f32 %v5317, %v5317
      %v5324 = vmul.f32 %v5318, %v5318
      %v5325 = vsel %vm281, %v5319, 0.0
      %5326 = vadd.xlane.f32.xlu0 %v5325
      %v5327 = vpop.xlane.xlu0 %5326
      %v5328 = vsel %vm281, %v5320, 0.0
      %5329 = vadd.xlane.f32.xlu0 %v5328
      %v5330 = vpop.xlane.xlu0 %5329
      %v5331 = vsel %vm281, %v5321, 0.0
      %5332 = vadd.xlane.f32.xlu0 %v5331
      %v5333 = vpop.xlane.xlu0 %5332
      %v5334 = vsel %vm281, %v5322, 0.0
      %5335 = vadd.xlane.f32.xlu0 %v5334
      %v5336 = vpop.xlane.xlu0 %5335
      %v5337 = vsel %vm281, %v5323, 0.0
      %5338 = vadd.xlane.f32.xlu0 %v5337
      %v5339 = vpop.xlane.xlu0 %5338
      %v5340 = vsel %vm281, %v5324, 0.0
      %5341 = vadd.xlane.f32.xlu0 %v5340
      %v5342 = vpop.xlane.xlu0 %5341
      %v5343 = vmul.f32 %v5327, %v300
      %v5344 = vmul.f32 %v5330, %v300
      %v5345 = vmul.f32 %v5333, %v300
      %v5346 = vmul.f32 %v5336, %v300
      %v5347 = vmul.f32 %v5339, %v300
      %v5348 = vmul.f32 %v5342, %v300
      %v5349 = vadd.f32 %v5343, 1e-12
      %v5350 = vadd.f32 %v5344, 1e-12
      %v5351 = vadd.f32 %v5345, 1e-12
      %v5352 = vadd.f32 %v5346, 1e-12
      %v5353 = vadd.f32 %v5347, 1e-12
      %v5354 = vadd.f32 %v5348, 1e-12
      %v5355 = vrsqrt.pop %v5349
      %v5356 = vrsqrt.pop %v5350
      %v5357 = vrsqrt.pop %v5351
      %v5358 = vrsqrt.pop %v5352
      %v5359 = vrsqrt.pop %v5353
      %v5360 = vrsqrt.pop %v5354
      %v5361 = vmul.f32 %v5313, %v5355
      %v5362 = vmul.f32 %v5314, %v5356
      %v5363 = vmul.f32 %v5315, %v5357
      %v5364 = vmul.f32 %v5316, %v5358
      %v5365 = vmul.f32 %v5317, %v5359
      %v5366 = vmul.f32 %v5318, %v5360
      %v5367 = vlaneseq
      %v5368 = vshrl.u32 %v5367, 7
      %v5369 = vsub.s32 0, %v5368
      %v5370 = vrot.slane %v5287, %v5369
      %v5371 = vmul.f32 %v5361, %v5370
      %v5372 = vmul.f32 %v5362, %v5370
      %v5373 = vmul.f32 %v5363, %v5370
      %v5374 = vmul.f32 %v5364, %v5370
      %v5375 = vmul.f32 %v5365, %v5370
      %v5376 = vmul.f32 %v5366, %v5370
      %v5377 = vlaneseq
      %v5378 = vshrl.u32 %v5377, 7
      %v5379 = vsub.s32 0, %v5378
      %v5380 = vrot.slane %v5288, %v5379
      %v5381 = vadd.f32 %v5371, %v5380
      %v5382 = vadd.f32 %v5372, %v5380
      %v5383 = vadd.f32 %v5373, %v5380
      %v5384 = vadd.f32 %v5374, %v5380
      %v5385 = vadd.f32 %v5375, %v5380
      %v5386 = vadd.f32 %v5376, %v5380
      %v5387 = vpack.c.bf16 %v5382, %v5381
      %v5388 = vpack.c.bf16 %v5384, %v5383
      %v5389 = vpack.c.bf16 %v5386, %v5385
      %v5390 = vld [vmem:[%s1 + $0x88] sm:$0xf]
      %v5391 = vld [vmem:[%s1 + $0x8c] sm:$0xf]
      %v5392 = vld [vmem:[%s1 + $0x90] sm:$0xf]
      %v5393 = vld [vmem:[%s1 + $0x94] sm:$0xf]
      %v5394 = vld [vmem:[%s2 + $0x26] sm:$0x1]
      %v5395 = vlaneseq
      %v5396 = vshrl.u32 %v5395, 7
      %v5397 = vsub.s32 0, %v5396
      %v5398 = vrot.slane %v5394, %v5397
      %v5403 = vunpack.c.l.b16 %v5390
      %v5404 = vunpack.c.l.b16 %v5391
      %v5405 = vunpack.c.l.b16 %v5392
      %v5406 = vunpack.c.l.b16 %v5393
      %v5407 = vpack.c.b16 %v5404, %v5403
      %v5408 = vpack.c.b16 %v5406, %v5405
      %v5412 = vsel %vm281, %v5387, 0
      %v5415 = vsel %vm281, %v5388, 0
      %v5418 = vsel %vm281, %v5389, 0
      %5420 = vmatprep.subr.bf16.mxu0 0
      %5421 = vmatpush1.bf16.msra.mxu0 %v5407
      %5422 = vmatprep.subr.bf16.mxu0 0
      %5423 = vmatpush1.bf16.msra.mxu0 %v5408
      %5424 = vmatprep.subr.bf16.mxu0 0
      %5425 = vmatpush1.bf16.msra.mxu0 0
      %5426 = vmatprep.subr.bf16.mxu0 0
      %5427 = vmatpush1.bf16.msra.mxu0 0
      %5428 = vmatprep.subr.bf16.mxu0 0
      %5429 = vmatpush1.bf16.msra.mxu0 0
      %5430 = vmatprep.subr.bf16.mxu0 0
      %5431 = vmatpush1.bf16.msra.mxu0 0
      %5432 = vmatprep.subr.bf16.mxu0 0
      %5433 = vmatpush1.bf16.msra.mxu0 0
      %5434 = vmatprep.subr.bf16.mxu0 0
      %5435 = vmatpush1.bf16.msra.mxu0 0
      %5436 = vmatprep.subr.bf16.mxu0 0
      %5437 = vmatpush1.bf16.msra.mxu0 0
      %5438 = vmatprep.subr.bf16.mxu0 0
      %5439 = vmatpush1.bf16.msra.mxu0 0
      %5440 = vmatprep.subr.bf16.mxu0 0
      %5441 = vmatpush1.bf16.msra.mxu0 0
      %5442 = vmatprep.subr.bf16.mxu0 0
      %5443 = vmatpush1.bf16.msra.mxu0 0
      %5444 = vmatprep.subr.bf16.mxu0 0
      %5445 = vmatpush1.bf16.msra.mxu0 0
      %5446 = vmatprep.subr.bf16.mxu0 0
      %5447 = vmatpush1.bf16.msra.mxu0 0
      %5448 = vmatprep.subr.bf16.mxu0 0
      %5449 = vmatpush1.bf16.msra.mxu0 0
      %5450 = vmatprep.subr.bf16.mxu0 0
      %5451 = vmatpush1.bf16.msra.mxu0 0
      %5452 = vmatprep.mubr.bf16.mxu0 0
      %5453 = vmatmul.mubr.bf16.gmra.mrb[0].mxu0 %v5412
      %v5454 = vpop.f32.mrb[0].mxu0
      %v5455 = vadd.f32 %v5398, %v5454
      %v5456 = vpop.f32.mrb[0].mxu0
      %v5457 = vpop.f32.mrb[0].mxu0
      %v5458 = vadd.f32 %v5398, %v5457
      %v5459 = vpop.f32.mrb[0].mxu0
      %5460 = vmatprep.mubr.bf16.mxu0 0
      %5461 = vmatmul.mubr.bf16.gmra.mrb[0].mxu0 %v5415
      %v5462 = vpop.f32.mrb[0].mxu0
      %v5463 = vadd.f32 %v5398, %v5462
      %v5464 = vpop.f32.mrb[0].mxu0
      %v5465 = vpop.f32.mrb[0].mxu0
      %v5466 = vadd.f32 %v5398, %v5465
      %v5467 = vpop.f32.mrb[0].mxu0
      %5468 = vmatprep.mubr.bf16.mxu0 0
      %5469 = vmatmul.mubr.bf16.gmra.mrb[0].mxu0 %v5418
      %v5470 = vpop.f32.mrb[0].mxu0
      %v5471 = vadd.f32 %v5398, %v5470
      %v5472 = vpop.f32.mrb[0].mxu0
      %v5473 = vpop.f32.mrb[0].mxu0
      %v5474 = vadd.f32 %v5398, %v5473
      %v5475 = vpop.f32.mrb[0].mxu0
      %5476 = vdwg.mxu0
      %v5477 = vmul.f32 %v5455, %v5455
      %v5478 = vmul.f32 %v5458, %v5458
      %v5479 = vmul.f32 %v5463, %v5463
      %v5480 = vmul.f32 %v5466, %v5466
      %v5481 = vmul.f32 %v5471, %v5471
      %v5482 = vmul.f32 %v5474, %v5474
      %v5483 = vmul.f32 %v5455, %v5477
      %v5484 = vmul.f32 %v5458, %v5478
      %v5485 = vmul.f32 %v5463, %v5479
      %v5486 = vmul.f32 %v5466, %v5480
      %v5487 = vmul.f32 %v5471, %v5481
      %v5488 = vmul.f32 %v5474, %v5482
      %v5489 = vmul.f32 %v5483, 0.044715
      %v5490 = vmul.f32 %v5484, 0.044715
      %v5491 = vmul.f32 %v5485, 0.044715
      %v5492 = vmul.f32 %v5486, 0.044715
      %v5493 = vmul.f32 %v5487, 0.044715
      %v5494 = vmul.f32 %v5488, 0.044715
      %v5495 = vadd.f32 %v5455, %v5489
      %v5496 = vadd.f32 %v5458, %v5490
      %v5497 = vadd.f32 %v5463, %v5491
      %v5498 = vadd.f32 %v5466, %v5492
      %v5499 = vadd.f32 %v5471, %v5493
      %v5500 = vadd.f32 %v5474, %v5494
      %v5501 = vmul.f32 %v5495, 0.7978846
      %v5502 = vmul.f32 %v5496, 0.7978846
      %v5503 = vmul.f32 %v5497, 0.7978846
      %v5504 = vmul.f32 %v5498, 0.7978846
      %v5505 = vmul.f32 %v5499, 0.7978846
      %v5506 = vmul.f32 %v5500, 0.7978846
      %v5507 = vtanh.pop %v5501
      %v5508 = vtanh.pop %v5502
      %v5509 = vtanh.pop %v5503
      %v5510 = vtanh.pop %v5504
      %v5511 = vtanh.pop %v5505
      %v5512 = vtanh.pop %v5506
      %v5513 = vadd.f32 %v5507, 1.0
      %v5514 = vadd.f32 %v5508, 1.0
      %v5515 = vadd.f32 %v5509, 1.0
      %v5516 = vadd.f32 %v5510, 1.0
      %v5517 = vadd.f32 %v5511, 1.0
      %v5518 = vadd.f32 %v5512, 1.0
      %v5519 = vmul.f32 %v5513, 0.5
      %v5520 = vmul.f32 %v5514, 0.5
      %v5521 = vmul.f32 %v5515, 0.5
      %v5522 = vmul.f32 %v5516, 0.5
      %v5523 = vmul.f32 %v5517, 0.5
      %v5524 = vmul.f32 %v5518, 0.5
      %v5525 = vmul.f32 %v5455, %v5519
      %v5526 = vmul.f32 %v5458, %v5520
      %v5527 = vmul.f32 %v5463, %v5521
      %v5528 = vmul.f32 %v5466, %v5522
      %v5529 = vmul.f32 %v5471, %v5523
      %v5530 = vmul.f32 %v5474, %v5524
      %v5531 = vpack.c.bf16 %v5526, %v5525
      %v5532 = vpack.c.bf16 %v5528, %v5527
      %v5533 = vpack.c.bf16 %v5530, %v5529
      %v5534 = vld [vmem:[%s1 + $0x98] sm:$0xf]
      %v5535 = vld [vmem:[%s1 + $0x9c] sm:$0xf]
      %v5536 = vld [vmem:[%s1 + $0xa0] sm:$0xf]
      %v5537 = vld [vmem:[%s1 + $0xa4] sm:$0xf]
      %v5538 = vld [vmem:[%s1 + $0xa8] sm:$0xf]
      %v5539 = vld [vmem:[%s1 + $0xac] sm:$0xf]
      %v5540 = vld [vmem:[%s1 + $0xb0] sm:$0xf]
      %v5541 = vld [vmem:[%s1 + $0xb4] sm:$0xf]
      %v5542 = vld [vmem:[%s2 + $0x27] sm:$0x1]
      %v5543 = vlaneseq
      %v5544 = vshrl.u32 %v5543, 7
      %v5545 = vsub.s32 0, %v5544
      %v5546 = vrot.slane %v5542, %v5545
      %v5555 = vunpack.c.l.b16 %v5534
      %v5556 = vunpack.c.l.b16 %v5535
      %v5557 = vunpack.c.l.b16 %v5536
      %v5558 = vunpack.c.l.b16 %v5537
      %v5559 = vunpack.c.l.b16 %v5538
      %v5560 = vunpack.c.l.b16 %v5539
      %v5561 = vunpack.c.l.b16 %v5540
      %v5562 = vunpack.c.l.b16 %v5541
      %v5563 = vpack.c.b16 %v5556, %v5555
      %v5564 = vpack.c.b16 %v5558, %v5557
      %v5565 = vpack.c.b16 %v5560, %v5559
      %v5566 = vpack.c.b16 %v5562, %v5561
      %v5572 = vsel %vm2891, %v5531, 0
      %v5575 = vsel %vm2891, %v5532, 0
      %v5578 = vsel %vm2891, %v5533, 0
      %5580 = vmatprep.subr.bf16.mxu0 0
      %5581 = vmatpush1.bf16.msra.mxu0 %v5563
      %5582 = vmatprep.subr.bf16.mxu0 0
      %5583 = vmatpush1.bf16.msra.mxu0 %v5564
      %5584 = vmatprep.subr.bf16.mxu0 0
      %5585 = vmatpush1.bf16.msra.mxu0 %v5565
      %5586 = vmatprep.subr.bf16.mxu0 0
      %5587 = vmatpush1.bf16.msra.mxu0 %v5566
      %5588 = vmatprep.subr.bf16.mxu0 0
      %5589 = vmatpush1.bf16.msra.mxu0 0
      %5590 = vmatprep.subr.bf16.mxu0 0
      %5591 = vmatpush1.bf16.msra.mxu0 0
      %5592 = vmatprep.subr.bf16.mxu0 0
      %5593 = vmatpush1.bf16.msra.mxu0 0
      %5594 = vmatprep.subr.bf16.mxu0 0
      %5595 = vmatpush1.bf16.msra.mxu0 0
      %5596 = vmatprep.subr.bf16.mxu0 0
      %5597 = vmatpush1.bf16.msra.mxu0 0
      %5598 = vmatprep.subr.bf16.mxu0 0
      %5599 = vmatpush1.bf16.msra.mxu0 0
      %5600 = vmatprep.subr.bf16.mxu0 0
      %5601 = vmatpush1.bf16.msra.mxu0 0
      %5602 = vmatprep.subr.bf16.mxu0 0
      %5603 = vmatpush1.bf16.msra.mxu0 0
      %5604 = vmatprep.subr.bf16.mxu0 0
      %5605 = vmatpush1.bf16.msra.mxu0 0
      %5606 = vmatprep.subr.bf16.mxu0 0
      %5607 = vmatpush1.bf16.msra.mxu0 0
      %5608 = vmatprep.subr.bf16.mxu0 0
      %5609 = vmatpush1.bf16.msra.mxu0 0
      %5610 = vmatprep.subr.bf16.mxu0 0
      %5611 = vmatpush1.bf16.msra.mxu0 0
      %5612 = vmatprep.mubr.bf16.mxu0 0
      %5613 = vmatmul.mubr.bf16.gmra.mrb[0].mxu0 %v5572
      %v5614 = vpop.f32.mrb[0].mxu0
      %v5615 = vadd.f32 %v5546, %v5614
      %v5616 = vpop.f32.mrb[0].mxu0
      %v5617 = vpop.f32.mrb[0].mxu0
      %v5618 = vpop.f32.mrb[0].mxu0
      %5619 = vmatprep.mubr.bf16.mxu0 0
      %5620 = vmatmul.mubr.bf16.gmra.mrb[0].mxu0 %v5575
      %v5621 = vpop.f32.mrb[0].mxu0
      %v5622 = vpop.f32.mrb[0].mxu0
      %v5623 = vpop.f32.mrb[0].mxu0
      %v5624 = vadd.f32 %v5546, %v5623
      %v5625 = vpop.f32.mrb[0].mxu0
      %5626 = vmatprep.mubr.bf16.mxu0 0
      %5627 = vmatmul.mubr.bf16.gmra.mrb[0].mxu0 %v5578
      %v5628 = vpop.f32.mrb[0].mxu0
      %v5629 = vpop.f32.mrb[0].mxu0
      %v5630 = vpop.f32.mrb[0].mxu0
      %v5631 = vpop.f32.mrb[0].mxu0
      %5632 = vdwg.mxu0
      %v5633 = vadd.f32 %v5281, %v5615
      %v5634 = vadd.f32 %v5284, %v5624
      %v5635 = vld [vmem:[%s2 + $0x28] sm:$0x1]
      %v5636 = vld [vmem:[%s2 + $0x29] sm:$0x1]
      %v5637 = vsel %vm281, %v5633, 0.0
      %5638 = vadd.xlane.f32.xlu0 %v5637
      %v5639 = vpop.xlane.xlu0 %5638
      %v5640 = vsel %vm281, %v5634, 0.0
      %5641 = vadd.xlane.f32.xlu0 %v5640
      %v5642 = vpop.xlane.xlu0 %5641
      %v5643 = vmul.f32 %v5639, %v300
      %v5644 = vmul.f32 %v5642, %v300
      %v5645 = vsub.f32 %v5633, %v5643
      %v5646 = vsub.f32 %v5634, %v5644
      %v5647 = vmul.f32 %v5645, %v5645
      %v5648 = vmul.f32 %v5646, %v5646
      %v5649 = vsel %vm281, %v5647, 0.0
      %5650 = vadd.xlane.f32.xlu0 %v5649
      %v5651 = vpop.xlane.xlu0 %5650
      %v5652 = vsel %vm281, %v5648, 0.0
      %5653 = vadd.xlane.f32.xlu0 %v5652
      %v5654 = vpop.xlane.xlu0 %5653
      %v5655 = vmul.f32 %v5651, %v300
      %v5656 = vmul.f32 %v5654, %v300
      %v5657 = vadd.f32 %v5655, 1e-12
      %v5658 = vadd.f32 %v5656, 1e-12
      %v5659 = vrsqrt.pop %v5657
      %v5660 = vrsqrt.pop %v5658
      %v5661 = vmul.f32 %v5645, %v5659
      %v5662 = vmul.f32 %v5646, %v5660
      %v5663 = vlaneseq
      %v5664 = vshrl.u32 %v5663, 7
      %v5665 = vsub.s32 0, %v5664
      %v5666 = vrot.slane %v5635, %v5665
      %v5667 = vmul.f32 %v5661, %v5666
      %v5668 = vmul.f32 %v5662, %v5666
      %v5669 = vlaneseq
      %v5670 = vshrl.u32 %v5669, 7
      %v5671 = vsub.s32 0, %v5670
      %v5672 = vrot.slane %v5636, %v5671
      %v5673 = vadd.f32 %v5667, %v5672
      %v5674 = vadd.f32 %v5668, %v5672
      %v5676 = vrot.slane %v5674, 7
      %vm5678 = vcmask 1040384
      %v5679 = vsel %vm5678, %v5673, %v5676
      %v5680 = vpack.c.bf16 %v5679, %v5679
      %v5681 = vld [vmem:[%s1 + $0xb8] sm:$0xf]
      %v5682 = vld [vmem:[%s1 + $0xbc] sm:$0xf]
      %v5683 = vld [vmem:[%s1 + $0xc0] sm:$0xf]
      %v5684 = vld [vmem:[%s1 + $0xc4] sm:$0xf]
      %v5685 = vld [vmem:[%s2 + $0x2a] sm:$0x1]
      %v5686 = vlaneseq
      %v5687 = vshrl.u32 %v5686, 7
      %v5688 = vsub.s32 0, %v5687
      %v5689 = vrot.slane %v5685, %v5688
      %v5694 = vunpack.c.l.b16 %v5681
      %v5695 = vunpack.c.l.b16 %v5682
      %v5696 = vunpack.c.l.b16 %v5683
      %v5697 = vunpack.c.l.b16 %v5684
      %v5698 = vpack.c.b16 %v5695, %v5694
      %v5699 = vpack.c.b16 %v5697, %v5696
      %v5703 = vsel %vm281, %v5680, 0
      %5705 = vmatprep.subr.bf16.mxu0 0
      %5706 = vmatpush1.bf16.msra.mxu0 %v5698
      %5707 = vmatprep.subr.bf16.mxu0 0
      %5708 = vmatpush1.bf16.msra.mxu0 %v5699
      %5709 = vmatprep.subr.bf16.mxu0 0
      %5710 = vmatpush1.bf16.msra.mxu0 0
      %5711 = vmatprep.subr.bf16.mxu0 0
      %5712 = vmatpush1.bf16.msra.mxu0 0
      %5713 = vmatprep.subr.bf16.mxu0 0
      %5714 = vmatpush1.bf16.msra.mxu0 0
      %5715 = vmatprep.subr.bf16.mxu0 0
      %5716 = vmatpush1.bf16.msra.mxu0 0
      %5717 = vmatprep.subr.bf16.mxu0 0
      %5718 = vmatpush1.bf16.msra.mxu0 0
      %5719 = vmatprep.subr.bf16.mxu0 0
      %5720 = vmatpush1.bf16.msra.mxu0 0
      %5721 = vmatprep.subr.bf16.mxu0 0
      %5722 = vmatpush1.bf16.msra.mxu0 0
      %5723 = vmatprep.subr.bf16.mxu0 0
      %5724 = vmatpush1.bf16.msra.mxu0 0
      %5725 = vmatprep.subr.bf16.mxu0 0
      %5726 = vmatpush1.bf16.msra.mxu0 0
      %5727 = vmatprep.subr.bf16.mxu0 0
      %5728 = vmatpush1.bf16.msra.mxu0 0
      %5729 = vmatprep.subr.bf16.mxu0 0
      %5730 = vmatpush1.bf16.msra.mxu0 0
      %5731 = vmatprep.subr.bf16.mxu0 0
      %5732 = vmatpush1.bf16.msra.mxu0 0
      %5733 = vmatprep.subr.bf16.mxu0 0
      %5734 = vmatpush1.bf16.msra.mxu0 0
      %5735 = vmatprep.subr.bf16.mxu0 0
      %5736 = vmatpush1.bf16.msra.mxu0 0
      %5737 = vmatprep.mubr.bf16.mxu0 0
      %5738 = vmatmul.mubr.bf16.gmra.mrb[0].mxu0 %v5703
      %v5739 = vpop.f32.mrb[0].mxu0
      %v5740 = vadd.f32 %v5689, %v5739
      %v5741 = vpop.f32.mrb[0].mxu0
      %v5742 = vpop.f32.mrb[0].mxu0
      %v5743 = vpop.f32.mrb[0].mxu0
      %5744 = vdwg.mxu0
      %5746 = vrot.lane.b32.xlu0 %v5740, 32
      %v5747 = vpop.permute.xlu0 %5746
      %v5749 = vsel %vm281, %v5679, %v5747
      %vm5750 = vcmask 343040
      %v5751 = vsel %vm5750, %v5749, 0.0
      %5752 = vst [vmem:[%s170] sm:$0x3] %v5751
      %p5753 = scmp.lt.s32.totalorder %s14, 1
      %s5754 = scalar_select %p5753, %s14, 1
      %s5755 = smul.addr %s5754, 2
      %s5756 = scalar_lea.vmem %s3, %s5755
      // Predicated region
      $region33: #{vit_embedding_extractor.1} parent=31 // pred_check
        %p5757 = pneg %p100
      $region34: #{vit_embedding_extractor.1} parent=31 // pred_check_branch
        %5759 = sbr.rel (%p5757) target = $region36
      $region35: #{vit_embedding_extractor.1} parent=31 // pred_region
        _
      $region36: #{vit_embedding_extractor.1} parent=31 // pred_fallthru
        _
    $region32: #{vit_embedding_extractor.1} parent=5 // pred_fallthru
      _
    %p5760 = scmp.le.s32.totalorder 2, %s9
    // Predicated region
    $region37: #{vit_embedding_extractor.1} parent=5 // pred_check
      %p5761 = pneg %p5760
    $region38: #{vit_embedding_extractor.1} parent=5 // pred_check_branch
      %5763 = sbr.rel (%p5761) target = $region40
    $region39: #{vit_embedding_extractor.1} parent=5 // pred_region
      %s5764 = ssub.s32 %s9, 2
      // Predicated region
      $region41: #{vit_embedding_extractor.1} parent=39 // pred_check
        %p5765 = pneg %p106
      $region42: #{vit_embedding_extractor.1} parent=39 // pred_check_branch
        %5767 = sbr.rel (%p5765) target = $region44
      $region43: #{vit_embedding_extractor.1} parent=39 // pred_region
        %p5768 = scmp.lt.s32.totalorder %s15, 1
        %s5769 = scalar_select %p5768, %s15, 1
        %s5770 = smul.addr %s5769, 2
        %s5771 = scalar_lea.vmem %s3, %s5770
      $region44: #{vit_embedding_extractor.1} parent=39 // pred_fallthru
        _
    $region40: #{vit_embedding_extractor.1} parent=5 // pred_fallthru
      _
  $region6: #{vit_embedding_extractor.1} parent=0 // loop_footer
    %s13 = sadd.s32 1, %s9
  $region7: #{vit_embedding_extractor.1} parent=0 // loop_footer_branch
    %8 = sbr.rel target = $region3
  $region8: #{vit_embedding_extractor.1} parent=0 // loop_exit
    _

</llo_original>
